<compile_context>
chip_gen: v5e
topology: v5e:2x2
jax: 0.10.0
libtpu: 0.0.40
codegen_flags: <defaults>
</compile_context>

<pallas_src>
from functools import partial

import jax
import jax.numpy as jnp
import numpy as np
from jax.experimental import pallas as pl
from jax.experimental.pallas import tpu as pltpu

# Fixed by the PyTorch module
C_IN, C_OUT = 512, 576
KH, KW = 7, 1
PAD_H, PAD_W = 521, 0


def convt_tanh_kernel(x_ref, w_ref, o_ref):
    # x_ref: [h_win, C_IN]         f32   (only the input rows the output depends on)
    # w_ref: [KH * C_IN, n_blk]    bf16  (row kh*C_IN + ic  ==  weight[ic, oc, kh, 0])
    # o_ref: [h_out, n_blk]        f32
    h_out = o_ref.shape[0]                      # static python int
    x = x_ref[...]                              # [h_win, C_IN] f32

    # 7 accumulating MXU dots (one per kernel-height tap).  Tap kh reads window rows
    # [(KH-1)-kh : (KH-1)-kh + h_out] and multiplies by weight rows [kh*C_IN:(kh+1)*C_IN].
    acc = None
    for kh in range(KH):
        r0 = (KH - 1) - kh
        part = jnp.dot(
            x[r0:r0 + h_out, :].astype(w_ref.dtype),   # [h_out, C_IN] bf16
            w_ref[kh * C_IN:(kh + 1) * C_IN, :],        # [C_IN, n_blk] bf16
            preferred_element_type=jnp.float32,
        )
        acc = part if acc is None else acc + part

    o_ref[...] = jnp.tanh(acc).astype(o_ref.dtype)


def prepare_weight(weight, dtype=jnp.bfloat16, pad_cout_to=None):
    """One-time (offline) weight prep — NOT in the per-call hot path.

    PyTorch ConvTranspose2d layout [C_in, C_out, KH, KW=1] -> [KH*C_in, C_out], cast to
    `dtype` (bf16: halves the dominant weight HBM stream; accumulation stays f32).
    Optionally zero-pads C_out (e.g. 576 -> 640) so the lane axis splits into 128-wide
    blocks for the multi-TensorCore grid.
    """
    w_kio = jnp.transpose(weight[:, :, :, 0], (2, 0, 1))        # [KH, C_in, C_out]
    w2d = w_kio.reshape(KH * C_IN, C_OUT).astype(dtype)
    if pad_cout_to is not None and pad_cout_to > C_OUT:
        w2d = jnp.pad(w2d, ((0, 0), (0, pad_cout_to - C_OUT)))
    return w2d


def _num_output_splits():
    """5 lane-blocks (parallel grid) on multi-TensorCore chips (v7x, megacore v4/v5p) so the
    weight DMA is sharded across both cores; 1 (no grid, single buffer) on v5e/v6e where a
    split only adds per-step overhead with no bandwidth gain.  Misdetection is perf-only."""
    try:
        kind = jax.devices()[0].device_kind.lower().replace(" ", "")
    except Exception:  # pragma: no cover
        return 1
    multi_tc = ("v7" in kind) or ("7x" in kind) or ("v4" in kind) or ("v5p" in kind)
    return 5 if multi_tc else 1


@partial(jax.jit, static_argnames=("n_split",))
def conv_transpose_tanh(x_nchw, w_prepped, n_split=1):
    """x_nchw: [1, C_IN, H_in, 1] f32; w_prepped: [KH*C_IN, C_out_padded] bf16."""
    n, c_in, h_in, w_in = x_nchw.shape
    assert n == 1 and w_in == 1 and c_in == C_IN
    h_out = h_in - 2 * PAD_H + KH - 1
    assert h_out > 0, "padding=521 requires H_in >= 1037"
    h_win = h_out + KH - 1
    ih_start = PAD_H - (KH - 1)                              # = 515

    # Slice BEFORE transposing: one tiny (~28 KB) fused prep op for the 14 rows the
    # output reads.  (Moving this transpose in-kernel would not remove the prep dispatch
    # — the NCHW slice is needed either way — and a non-128-aligned in-kernel transpose
    # is a lowering risk with zero roofline benefit.)
    x_win = jnp.transpose(x_nchw[0, :, ih_start:ih_start + h_win, 0], (1, 0))  # [h_win, C_IN] f32

    cout_pad = w_prepped.shape[1]
    w_bytes = int(w_prepped.size) * int(jnp.dtype(w_prepped.dtype).itemsize)
    cost = pl.CostEstimate(
        flops=int(2 * h_out * cout_pad * KH * C_IN),
        transcendentals=int(h_out * cout_pad),
        bytes_accessed=int(w_bytes + x_win.size * 4 + h_out * cout_pad * 4),
    )

    if n_split == 1:
        # Single invocation, full arrays VMEM-resident, single-buffered (no grid =>
        # no wasted second pipeline buffer for the 4 MB weight).
        out = pl.pallas_call(
            convt_tanh_kernel,
            out_shape=jax.ShapeDtypeStruct((h_out, cout_pad), jnp.float32),
            in_specs=[
                pl.BlockSpec(memory_space=pltpu.MemorySpace.VMEM),
                pl.BlockSpec(memory_space=pltpu.MemorySpace.VMEM),
            ],
            out_specs=pl.BlockSpec(memory_space=pltpu.MemorySpace.VMEM),
            cost_estimate=cost,
        )(x_win, w_prepped)
    else:
        # Multi-TensorCore: shard the lane (C_out) axis; each grid step streams a
        # [KH*C_IN, tn] weight block so the dominant DMA splits across cores.
        assert cout_pad % n_split == 0
        tn = cout_pad // n_split
        assert tn % 128 == 0, "lane block must be a multiple of 128"
        out = pl.pallas_call(
            convt_tanh_kernel,
            out_shape=jax.ShapeDtypeStruct((h_out, cout_pad), jnp.float32),
            grid_spec=pltpu.PrefetchScalarGridSpec(
                num_scalar_prefetch=0,
                grid=(n_split,),
                in_specs=[
                    pl.BlockSpec((h_win, C_IN), lambda j: (0, 0)),       # reused, not re-DMA'd
                    pl.BlockSpec((KH * C_IN, tn), lambda j: (0, j)),
                ],
                out_specs=pl.BlockSpec((h_out, tn), lambda j: (0, j)),
            ),
            compiler_params=pltpu.CompilerParams(
                dimension_semantics=("parallel",)),
            cost_estimate=cost,
        )(x_win, w_prepped)

    out = out[:, :C_OUT]                                     # drop lane padding (if any)
    # back to NCHW: [1, C_OUT, H_out, 1]  (tiny 18 KB transpose)
    return jnp.transpose(out, (1, 0))[None, :, :, None]


def ref_impl_f32(x_nchw, weight):
    """Exact f32 reference of ConvTranspose2d(stride=1, pad=(521,0), no bias) + tanh."""
    x_hc = jnp.transpose(x_nchw[0, :, :, 0], (1, 0))          # [H_in, C_in]
    h_in = x_hc.shape[0]
    h_out = h_in - 2 * PAD_H + KH - 1
    acc = jnp.zeros((h_out, C_OUT), jnp.float32)
    for kh in range(KH):
        start = PAD_H - kh                                    # ih = oh + PAD_H - kh
        acc = acc + x_hc[start:start + h_out, :] @ weight[:, :, kh, 0]
    out = jnp.tanh(acc)
    return jnp.transpose(out, (1, 0))[None, :, :, None]


def ref_impl_matched(x_nchw, w_prepped):
    """Pure-JAX reference with the SAME numerics as the kernel (bf16 operands, f32 accum,
    7 per-tap dots)."""
    h_in = x_nchw.shape[2]
    h_out = h_in - 2 * PAD_H + KH - 1
    h_win = h_out + KH - 1
    ih_start = PAD_H - (KH - 1)
    x_win = jnp.transpose(x_nchw[0, :, ih_start:ih_start + h_win, 0], (1, 0))   # [h_win, C_IN]
    w = w_prepped[:, :C_OUT]
    acc = jnp.zeros((h_out, C_OUT), jnp.float32)
    for kh in range(KH):
        r0 = (KH - 1) - kh
        acc = acc + jnp.dot(x_win[r0:r0 + h_out, :].astype(w.dtype),
                            w[kh * C_IN:(kh + 1) * C_IN, :],
                            preferred_element_type=jnp.float32)
    out = jnp.tanh(acc)
    return jnp.transpose(out, (1, 0))[None, :, :, None]


if __name__ == "__main__":
    key = jax.random.PRNGKey(0)
    kx, kw = jax.random.split(key)

    H_IN = 1044                      # smallest convenient valid height -> H_out = 8
    x = jax.random.normal(kx, (1, C_IN, H_IN, 1), dtype=jnp.float32)

    # deterministic weight init, ConvTranspose2d layout [C_in, C_out, kH, kW]
    bound = float(1.0 / np.sqrt(C_OUT * KH * KW))
    w = jax.random.uniform(kw, (C_IN, C_OUT, KH, KW), dtype=jnp.float32,
                           minval=-bound, maxval=bound)

    # Strategy selection + one-time weight prep (outside the per-call hot path).
    n_split = _num_output_splits()
    cout_pad = 128 * n_split if n_split > 1 else C_OUT
    w_prepped = jax.block_until_ready(
        prepare_weight(w, dtype=jnp.bfloat16, pad_cout_to=cout_pad))

    out = jax.block_until_ready(conv_transpose_tanh(x, w_prepped, n_split=n_split))

    h_out = H_IN - 2 * PAD_H + KH - 1
    assert out.shape == (1, C_OUT, h_out, 1)

    # 1) Tight check vs a pure-JAX reference with identical bf16-operand / f32-accum numerics.
    matched = jax.block_until_ready(ref_impl_matched(x, w_prepped))
    np.testing.assert_allclose(np.asarray(out), np.asarray(matched), rtol=2e-3, atol=2e-3)

    # 2) Fidelity check vs the exact f32 module semantics (bf16 operand stream -> ~1e-2 post-tanh err).
    exact = jax.block_until_ready(ref_impl_f32(x, w))
    np.testing.assert_allclose(np.asarray(out), np.asarray(exact), rtol=0.0, atol=2e-2)

    print("KERNEL_OK")
</pallas_src>

<mosaic_0001>
module attributes {stable_mosaic.version = 11 : i64} {
  func.func @convt_tanh_kernel(%arg0: memref<14x512xf32, #tpu.memory_space<vmem>>, %arg1: memref<3584x576xbf16, #tpu.memory_space<vmem>>, %arg2: memref<8x576xf32, #tpu.memory_space<vmem>>) attributes {dimension_semantics = [], scalar_prefetch = 0 : i64, scratch_operands = 0 : i64, tpu.core_type = #tpu.core_type<tc>} {
    %c0 = arith.constant 0 : index
    %c0_0 = arith.constant 0 : index
    %0 = vector.load %arg0[%c0, %c0_0] : memref<14x512xf32, #tpu.memory_space<vmem>>, vector<14x512xf32>
    %1 = vector.extract_strided_slice %0 {offsets = [6, 0], sizes = [8, 512], strides = [1, 1]} : vector<14x512xf32> to vector<8x512xf32>
    %2 = arith.truncf %1 : vector<8x512xf32> to vector<8x512xbf16>
    %c0_1 = arith.constant 0 : index
    %c0_2 = arith.constant 0 : index
    %3 = vector.load %arg1[%c0_1, %c0_2] : memref<3584x576xbf16, #tpu.memory_space<vmem>>, vector<512x576xbf16>
    %cst = arith.constant dense<0.000000e+00> : vector<8x576xf32>
    %4 = tpu.matmul %2, %3, %cst {dimension_numbers = #tpu.dot_dimension_numbers<[1], [0], [0], [1], [0, 0, 1, 1], [], []>} : vector<8x512xbf16>, vector<512x576xbf16>, vector<8x576xf32> -> vector<8x576xf32>
    %5 = vector.extract_strided_slice %0 {offsets = [5, 0], sizes = [8, 512], strides = [1, 1]} : vector<14x512xf32> to vector<8x512xf32>
    %6 = arith.truncf %5 : vector<8x512xf32> to vector<8x512xbf16>
    %c512 = arith.constant 512 : index
    %c0_3 = arith.constant 0 : index
    %7 = vector.load %arg1[%c512, %c0_3] : memref<3584x576xbf16, #tpu.memory_space<vmem>>, vector<512x576xbf16>
    %cst_4 = arith.constant dense<0.000000e+00> : vector<8x576xf32>
    %8 = tpu.matmul %6, %7, %cst_4 {dimension_numbers = #tpu.dot_dimension_numbers<[1], [0], [0], [1], [0, 0, 1, 1], [], []>} : vector<8x512xbf16>, vector<512x576xbf16>, vector<8x576xf32> -> vector<8x576xf32>
    %9 = arith.addf %4, %8 : vector<8x576xf32>
    %10 = vector.extract_strided_slice %0 {offsets = [4, 0], sizes = [8, 512], strides = [1, 1]} : vector<14x512xf32> to vector<8x512xf32>
    %11 = arith.truncf %10 : vector<8x512xf32> to vector<8x512xbf16>
    %c1024 = arith.constant 1024 : index
    %c0_5 = arith.constant 0 : index
    %12 = vector.load %arg1[%c1024, %c0_5] : memref<3584x576xbf16, #tpu.memory_space<vmem>>, vector<512x576xbf16>
    %cst_6 = arith.constant dense<0.000000e+00> : vector<8x576xf32>
    %13 = tpu.matmul %11, %12, %cst_6 {dimension_numbers = #tpu.dot_dimension_numbers<[1], [0], [0], [1], [0, 0, 1, 1], [], []>} : vector<8x512xbf16>, vector<512x576xbf16>, vector<8x576xf32> -> vector<8x576xf32>
    %14 = arith.addf %9, %13 : vector<8x576xf32>
    %15 = vector.extract_strided_slice %0 {offsets = [3, 0], sizes = [8, 512], strides = [1, 1]} : vector<14x512xf32> to vector<8x512xf32>
    %16 = arith.truncf %15 : vector<8x512xf32> to vector<8x512xbf16>
    %c1536 = arith.constant 1536 : index
    %c0_7 = arith.constant 0 : index
    %17 = vector.load %arg1[%c1536, %c0_7] : memref<3584x576xbf16, #tpu.memory_space<vmem>>, vector<512x576xbf16>
    %cst_8 = arith.constant dense<0.000000e+00> : vector<8x576xf32>
    %18 = tpu.matmul %16, %17, %cst_8 {dimension_numbers = #tpu.dot_dimension_numbers<[1], [0], [0], [1], [0, 0, 1, 1], [], []>} : vector<8x512xbf16>, vector<512x576xbf16>, vector<8x576xf32> -> vector<8x576xf32>
    %19 = arith.addf %14, %18 : vector<8x576xf32>
    %20 = vector.extract_strided_slice %0 {offsets = [2, 0], sizes = [8, 512], strides = [1, 1]} : vector<14x512xf32> to vector<8x512xf32>
    %21 = arith.truncf %20 : vector<8x512xf32> to vector<8x512xbf16>
    %c2048 = arith.constant 2048 : index
    %c0_9 = arith.constant 0 : index
    %22 = vector.load %arg1[%c2048, %c0_9] : memref<3584x576xbf16, #tpu.memory_space<vmem>>, vector<512x576xbf16>
    %cst_10 = arith.constant dense<0.000000e+00> : vector<8x576xf32>
    %23 = tpu.matmul %21, %22, %cst_10 {dimension_numbers = #tpu.dot_dimension_numbers<[1], [0], [0], [1], [0, 0, 1, 1], [], []>} : vector<8x512xbf16>, vector<512x576xbf16>, vector<8x576xf32> -> vector<8x576xf32>
    %24 = arith.addf %19, %23 : vector<8x576xf32>
    %25 = vector.extract_strided_slice %0 {offsets = [1, 0], sizes = [8, 512], strides = [1, 1]} : vector<14x512xf32> to vector<8x512xf32>
    %26 = arith.truncf %25 : vector<8x512xf32> to vector<8x512xbf16>
    %c2560 = arith.constant 2560 : index
    %c0_11 = arith.constant 0 : index
    %27 = vector.load %arg1[%c2560, %c0_11] : memref<3584x576xbf16, #tpu.memory_space<vmem>>, vector<512x576xbf16>
    %cst_12 = arith.constant dense<0.000000e+00> : vector<8x576xf32>
    %28 = tpu.matmul %26, %27, %cst_12 {dimension_numbers = #tpu.dot_dimension_numbers<[1], [0], [0], [1], [0, 0, 1, 1], [], []>} : vector<8x512xbf16>, vector<512x576xbf16>, vector<8x576xf32> -> vector<8x576xf32>
    %29 = arith.addf %24, %28 : vector<8x576xf32>
    %30 = vector.extract_strided_slice %0 {offsets = [0, 0], sizes = [8, 512], strides = [1, 1]} : vector<14x512xf32> to vector<8x512xf32>
    %31 = arith.truncf %30 : vector<8x512xf32> to vector<8x512xbf16>
    %c3072 = arith.constant 3072 : index
    %c0_13 = arith.constant 0 : index
    %32 = vector.load %arg1[%c3072, %c0_13] : memref<3584x576xbf16, #tpu.memory_space<vmem>>, vector<512x576xbf16>
    %cst_14 = arith.constant dense<0.000000e+00> : vector<8x576xf32>
    %33 = tpu.matmul %31, %32, %cst_14 {dimension_numbers = #tpu.dot_dimension_numbers<[1], [0], [0], [1], [0, 0, 1, 1], [], []>} : vector<8x512xbf16>, vector<512x576xbf16>, vector<8x576xf32> -> vector<8x576xf32>
    %34 = arith.addf %29, %33 : vector<8x576xf32>
    %35 = math.tanh %34 : vector<8x576xf32>
    %c0_15 = arith.constant 0 : index
    %c0_16 = arith.constant 0 : index
    %36 = vector.load %arg2[%c0_15, %c0_16] : memref<8x576xf32, #tpu.memory_space<vmem>>, vector<8x576xf32>
    tpu.vector_store %arg2[%c0_15, %c0_16], %35 {strides = array<i32>} : memref<8x576xf32, #tpu.memory_space<vmem>>, vector<8x576xf32>,
    return
  }
}

</mosaic_0001>

<llo_original>
// kernel: conv_transpose_tanh.1
$region0: #{conv_transpose_tanh.1}
  #allocation0 [shape = 'u32[]', space=smem, size = 0x4, offset = 0x4, fixed_abs, tag = 'smem constant byte address 0x4 - core index']
  #allocation1 [shape = 'u32[72,128]{1,0:T(1,128)}', space=vmem, size = 0x9000, scoped, tag = 'internal scratch']
  %s0 = inlined_call_operand.vmem [shape: f32[14,512], index: 0, kind: input, shape index: {}]
  %s1 = inlined_call_operand.vmem [shape: bf16[3584,576], index: 1, kind: input, shape index: {}]
  %s2 = inlined_call_operand.vmem [shape: f32[8,576], index: 2, kind: output, shape index: {}]
  %s3 = sld [smem:[#allocation0]]
  $region18: #{conv_transpose_tanh.1} parent=0
    _
  %s5 = ssub.s32 1, %s3
  %s6 = scalar_select 0, %s5, %s3
  // Predicated region
  $region2: #{conv_transpose_tanh.1} parent=0 // pred_check
    _
  $region3: #{conv_transpose_tanh.1} parent=0 // pred_check_branch
    %8 = sbr.rel (0) target = $region5
  $region4: #{conv_transpose_tanh.1} parent=0 // pred_region
    _
  $region5: #{conv_transpose_tanh.1} parent=0 // pred_fallthru
    _
  // Predicated region
  $region6: #{conv_transpose_tanh.1} parent=0 // pred_check
    _
  $region7: #{conv_transpose_tanh.1} parent=0 // pred_check_branch
    %10 = sbr.rel (0) target = $region9
  $region8: #{conv_transpose_tanh.1} parent=0 // pred_region
    _
  $region9: #{conv_transpose_tanh.1} parent=0 // pred_fallthru
    _
  %v11 = vld [vmem:[%s0] sm:$0xff]
  %v12 = vld [vmem:[%s0 + $0x8] sm:$0xff]
  %v13 = vld [vmem:[%s0 + $0x10] sm:$0xff]
  %v14 = vld [vmem:[%s0 + $0x18] sm:$0xff]
  %v15 = vld [vmem:[%s0 + $0x20] sm:$0x3f]
  %v16 = vld [vmem:[%s0 + $0x28] sm:$0x3f]
  %v17 = vld [vmem:[%s0 + $0x30] sm:$0x3f]
  %v18 = vld [vmem:[%s0 + $0x38] sm:$0x3f]
  %v19 = vpack.c.bf16 %v15, %v11
  %v20 = vpack.c.bf16 %v16, %v12
  %v21 = vpack.c.bf16 %v17, %v13
  %v22 = vpack.c.bf16 %v18, %v14
  %v23 = vld [vmem:[%s1] sm:$0xff]
  %v24 = vld [vmem:[%s1 + $0x8] sm:$0xff]
  %v25 = vld [vmem:[%s1 + $0x10] sm:$0xf]
  %v26 = vld [vmem:[%s1 + $0x14] sm:$0xff]
  %v27 = vld [vmem:[%s1 + $0x1c] sm:$0xff]
  %v28 = vld [vmem:[%s1 + $0x24] sm:$0xf]
  %v29 = vld [vmem:[%s1 + $0x28] sm:$0xff]
  %v30 = vld [vmem:[%s1 + $0x30] sm:$0xff]
  %v31 = vld [vmem:[%s1 + $0x38] sm:$0xf]
  %v32 = vld [vmem:[%s1 + $0x3c] sm:$0xff]
  %v33 = vld [vmem:[%s1 + $0x44] sm:$0xff]
  %v34 = vld [vmem:[%s1 + $0x4c] sm:$0xf]
  %v35 = vld [vmem:[%s1 + $0x50] sm:$0xff]
  %v36 = vld [vmem:[%s1 + $0x58] sm:$0xff]
  %v37 = vld [vmem:[%s1 + $0x60] sm:$0xf]
  %v38 = vld [vmem:[%s1 + $0x64] sm:$0xff]
  %v39 = vld [vmem:[%s1 + $0x6c] sm:$0xff]
  %v40 = vld [vmem:[%s1 + $0x74] sm:$0xf]
  %v41 = vld [vmem:[%s1 + $0x78] sm:$0xff]
  %v42 = vld [vmem:[%s1 + $0x80] sm:$0xff]
  %v43 = vld [vmem:[%s1 + $0x88] sm:$0xf]
  %v44 = vld [vmem:[%s1 + $0x8c] sm:$0xff]
  %v45 = vld [vmem:[%s1 + $0x94] sm:$0xff]
  %v46 = vld [vmem:[%s1 + $0x9c] sm:$0xf]
  %v47 = vld [vmem:[%s1 + $0xa0] sm:$0xff]
  %v48 = vld [vmem:[%s1 + $0xa8] sm:$0xff]
  %v49 = vld [vmem:[%s1 + $0xb0] sm:$0xf]
  %v50 = vld [vmem:[%s1 + $0xb4] sm:$0xff]
  %v51 = vld [vmem:[%s1 + $0xbc] sm:$0xff]
  %v52 = vld [vmem:[%s1 + $0xc4] sm:$0xf]
  %v53 = vld [vmem:[%s1 + $0xc8] sm:$0xff]
  %v54 = vld [vmem:[%s1 + $0xd0] sm:$0xff]
  %v55 = vld [vmem:[%s1 + $0xd8] sm:$0xf]
  %v56 = vld [vmem:[%s1 + $0xdc] sm:$0xff]
  %v57 = vld [vmem:[%s1 + $0xe4] sm:$0xff]
  %v58 = vld [vmem:[%s1 + $0xec] sm:$0xf]
  %v59 = vld [vmem:[%s1 + $0xf0] sm:$0xff]
  %v60 = vld [vmem:[%s1 + $0xf8] sm:$0xff]
  %v61 = vld [vmem:[%s1 + $0x100] sm:$0xf]
  %v62 = vld [vmem:[%s1 + $0x104] sm:$0xff]
  %v63 = vld [vmem:[%s1 + $0x10c] sm:$0xff]
  %v64 = vld [vmem:[%s1 + $0x114] sm:$0xf]
  %v65 = vld [vmem:[%s1 + $0x118] sm:$0xff]
  %v66 = vld [vmem:[%s1 + $0x120] sm:$0xff]
  %v67 = vld [vmem:[%s1 + $0x128] sm:$0xf]
  %v68 = vld [vmem:[%s1 + $0x12c] sm:$0xff]
  %v69 = vld [vmem:[%s1 + $0x134] sm:$0xff]
  %v70 = vld [vmem:[%s1 + $0x13c] sm:$0xf]
  %v71 = vld [vmem:[%s1 + $0x140] sm:$0xff]
  %v72 = vld [vmem:[%s1 + $0x148] sm:$0xff]
  %v73 = vld [vmem:[%s1 + $0x150] sm:$0xf]
  %v74 = vld [vmem:[%s1 + $0x154] sm:$0xff]
  %v75 = vld [vmem:[%s1 + $0x15c] sm:$0xff]
  %v76 = vld [vmem:[%s1 + $0x164] sm:$0xf]
  %v77 = vld [vmem:[%s1 + $0x168] sm:$0xff]
  %v78 = vld [vmem:[%s1 + $0x170] sm:$0xff]
  %v79 = vld [vmem:[%s1 + $0x178] sm:$0xf]
  %v80 = vld [vmem:[%s1 + $0x17c] sm:$0xff]
  %v81 = vld [vmem:[%s1 + $0x184] sm:$0xff]
  %v82 = vld [vmem:[%s1 + $0x18c] sm:$0xf]
  %v83 = vld [vmem:[%s1 + $0x190] sm:$0xff]
  %v84 = vld [vmem:[%s1 + $0x198] sm:$0xff]
  %v85 = vld [vmem:[%s1 + $0x1a0] sm:$0xf]
  %v86 = vld [vmem:[%s1 + $0x1a4] sm:$0xff]
  %v87 = vld [vmem:[%s1 + $0x1ac] sm:$0xff]
  %v88 = vld [vmem:[%s1 + $0x1b4] sm:$0xf]
  %v89 = vld [vmem:[%s1 + $0x1b8] sm:$0xff]
  %v90 = vld [vmem:[%s1 + $0x1c0] sm:$0xff]
  %v91 = vld [vmem:[%s1 + $0x1c8] sm:$0xf]
  %v92 = vld [vmem:[%s1 + $0x1cc] sm:$0xff]
  %v93 = vld [vmem:[%s1 + $0x1d4] sm:$0xff]
  %v94 = vld [vmem:[%s1 + $0x1dc] sm:$0xf]
  %v95 = vld [vmem:[%s1 + $0x1e0] sm:$0xff]
  %v96 = vld [vmem:[%s1 + $0x1e8] sm:$0xff]
  %v97 = vld [vmem:[%s1 + $0x1f0] sm:$0xf]
  %v98 = vld [vmem:[%s1 + $0x1f4] sm:$0xff]
  %v99 = vld [vmem:[%s1 + $0x1fc] sm:$0xff]
  %v100 = vld [vmem:[%s1 + $0x204] sm:$0xf]
  %v101 = vld [vmem:[%s1 + $0x208] sm:$0xff]
  %v102 = vld [vmem:[%s1 + $0x210] sm:$0xff]
  %v103 = vld [vmem:[%s1 + $0x218] sm:$0xf]
  %v104 = vld [vmem:[%s1 + $0x21c] sm:$0xff]
  %v105 = vld [vmem:[%s1 + $0x224] sm:$0xff]
  %v106 = vld [vmem:[%s1 + $0x22c] sm:$0xf]
  %v107 = vld [vmem:[%s1 + $0x230] sm:$0xff]
  %v108 = vld [vmem:[%s1 + $0x238] sm:$0xff]
  %v109 = vld [vmem:[%s1 + $0x240] sm:$0xf]
  %v110 = vld [vmem:[%s1 + $0x244] sm:$0xff]
  %v111 = vld [vmem:[%s1 + $0x24c] sm:$0xff]
  %v112 = vld [vmem:[%s1 + $0x254] sm:$0xf]
  %v113 = vld [vmem:[%s1 + $0x258] sm:$0xff]
  %v114 = vld [vmem:[%s1 + $0x260] sm:$0xff]
  %v115 = vld [vmem:[%s1 + $0x268] sm:$0xf]
  %v116 = vld [vmem:[%s1 + $0x26c] sm:$0xff]
  %v117 = vld [vmem:[%s1 + $0x274] sm:$0xff]
  %v118 = vld [vmem:[%s1 + $0x27c] sm:$0xf]
  %v119 = vld [vmem:[%s1 + $0x280] sm:$0xff]
  %v120 = vld [vmem:[%s1 + $0x288] sm:$0xff]
  %v121 = vld [vmem:[%s1 + $0x290] sm:$0xf]
  %v122 = vld [vmem:[%s1 + $0x294] sm:$0xff]
  %v123 = vld [vmem:[%s1 + $0x29c] sm:$0xff]
  %v124 = vld [vmem:[%s1 + $0x2a4] sm:$0xf]
  %v125 = vld [vmem:[%s1 + $0x2a8] sm:$0xff]
  %v126 = vld [vmem:[%s1 + $0x2b0] sm:$0xff]
  %v127 = vld [vmem:[%s1 + $0x2b8] sm:$0xf]
  %v128 = vld [vmem:[%s1 + $0x2bc] sm:$0xff]
  %v129 = vld [vmem:[%s1 + $0x2c4] sm:$0xff]
  %v130 = vld [vmem:[%s1 + $0x2cc] sm:$0xf]
  %v131 = vld [vmem:[%s1 + $0x2d0] sm:$0xff]
  %v132 = vld [vmem:[%s1 + $0x2d8] sm:$0xff]
  %v133 = vld [vmem:[%s1 + $0x2e0] sm:$0xf]
  %v134 = vld [vmem:[%s1 + $0x2e4] sm:$0xff]
  %v135 = vld [vmem:[%s1 + $0x2ec] sm:$0xff]
  %v136 = vld [vmem:[%s1 + $0x2f4] sm:$0xf]
  %v137 = vld [vmem:[%s1 + $0x2f8] sm:$0xff]
  %v138 = vld [vmem:[%s1 + $0x300] sm:$0xff]
  %v139 = vld [vmem:[%s1 + $0x308] sm:$0xf]
  %v140 = vld [vmem:[%s1 + $0x30c] sm:$0xff]
  %v141 = vld [vmem:[%s1 + $0x314] sm:$0xff]
  %v142 = vld [vmem:[%s1 + $0x31c] sm:$0xf]
  %v143 = vld [vmem:[%s1 + $0x320] sm:$0xff]
  %v144 = vld [vmem:[%s1 + $0x328] sm:$0xff]
  %v145 = vld [vmem:[%s1 + $0x330] sm:$0xf]
  %v146 = vld [vmem:[%s1 + $0x334] sm:$0xff]
  %v147 = vld [vmem:[%s1 + $0x33c] sm:$0xff]
  %v148 = vld [vmem:[%s1 + $0x344] sm:$0xf]
  %v149 = vld [vmem:[%s1 + $0x348] sm:$0xff]
  %v150 = vld [vmem:[%s1 + $0x350] sm:$0xff]
  %v151 = vld [vmem:[%s1 + $0x358] sm:$0xf]
  %v152 = vld [vmem:[%s1 + $0x35c] sm:$0xff]
  %v153 = vld [vmem:[%s1 + $0x364] sm:$0xff]
  %v154 = vld [vmem:[%s1 + $0x36c] sm:$0xf]
  %v155 = vld [vmem:[%s1 + $0x370] sm:$0xff]
  %v156 = vld [vmem:[%s1 + $0x378] sm:$0xff]
  %v157 = vld [vmem:[%s1 + $0x380] sm:$0xf]
  %v158 = vld [vmem:[%s1 + $0x384] sm:$0xff]
  %v159 = vld [vmem:[%s1 + $0x38c] sm:$0xff]
  %v160 = vld [vmem:[%s1 + $0x394] sm:$0xf]
  %v161 = vld [vmem:[%s1 + $0x398] sm:$0xff]
  %v162 = vld [vmem:[%s1 + $0x3a0] sm:$0xff]
  %v163 = vld [vmem:[%s1 + $0x3a8] sm:$0xf]
  %v164 = vld [vmem:[%s1 + $0x3ac] sm:$0xff]
  %v165 = vld [vmem:[%s1 + $0x3b4] sm:$0xff]
  %v166 = vld [vmem:[%s1 + $0x3bc] sm:$0xf]
  %v167 = vld [vmem:[%s1 + $0x3c0] sm:$0xff]
  %v168 = vld [vmem:[%s1 + $0x3c8] sm:$0xff]
  %v169 = vld [vmem:[%s1 + $0x3d0] sm:$0xf]
  %v170 = vld [vmem:[%s1 + $0x3d4] sm:$0xff]
  %v171 = vld [vmem:[%s1 + $0x3dc] sm:$0xff]
  %v172 = vld [vmem:[%s1 + $0x3e4] sm:$0xf]
  %v173 = vld [vmem:[%s1 + $0x3e8] sm:$0xff]
  %v174 = vld [vmem:[%s1 + $0x3f0] sm:$0xff]
  %v175 = vld [vmem:[%s1 + $0x3f8] sm:$0xf]
  %v176 = vld [vmem:[%s1 + $0x3fc] sm:$0xff]
  %v177 = vld [vmem:[%s1 + $0x404] sm:$0xff]
  %v178 = vld [vmem:[%s1 + $0x40c] sm:$0xf]
  %v179 = vld [vmem:[%s1 + $0x410] sm:$0xff]
  %v180 = vld [vmem:[%s1 + $0x418] sm:$0xff]
  %v181 = vld [vmem:[%s1 + $0x420] sm:$0xf]
  %v182 = vld [vmem:[%s1 + $0x424] sm:$0xff]
  %v183 = vld [vmem:[%s1 + $0x42c] sm:$0xff]
  %v184 = vld [vmem:[%s1 + $0x434] sm:$0xf]
  %v185 = vld [vmem:[%s1 + $0x438] sm:$0xff]
  %v186 = vld [vmem:[%s1 + $0x440] sm:$0xff]
  %v187 = vld [vmem:[%s1 + $0x448] sm:$0xf]
  %v188 = vld [vmem:[%s1 + $0x44c] sm:$0xff]
  %v189 = vld [vmem:[%s1 + $0x454] sm:$0xff]
  %v190 = vld [vmem:[%s1 + $0x45c] sm:$0xf]
  %v191 = vld [vmem:[%s1 + $0x460] sm:$0xff]
  %v192 = vld [vmem:[%s1 + $0x468] sm:$0xff]
  %v193 = vld [vmem:[%s1 + $0x470] sm:$0xf]
  %v194 = vld [vmem:[%s1 + $0x474] sm:$0xff]
  %v195 = vld [vmem:[%s1 + $0x47c] sm:$0xff]
  %v196 = vld [vmem:[%s1 + $0x484] sm:$0xf]
  %v197 = vld [vmem:[%s1 + $0x488] sm:$0xff]
  %v198 = vld [vmem:[%s1 + $0x490] sm:$0xff]
  %v199 = vld [vmem:[%s1 + $0x498] sm:$0xf]
  %v200 = vld [vmem:[%s1 + $0x49c] sm:$0xff]
  %v201 = vld [vmem:[%s1 + $0x4a4] sm:$0xff]
  %v202 = vld [vmem:[%s1 + $0x4ac] sm:$0xf]
  %v203 = vld [vmem:[%s1 + $0x4b0] sm:$0xff]
  %v204 = vld [vmem:[%s1 + $0x4b8] sm:$0xff]
  %v205 = vld [vmem:[%s1 + $0x4c0] sm:$0xf]
  %v206 = vld [vmem:[%s1 + $0x4c4] sm:$0xff]
  %v207 = vld [vmem:[%s1 + $0x4cc] sm:$0xff]
  %v208 = vld [vmem:[%s1 + $0x4d4] sm:$0xf]
  %v209 = vld [vmem:[%s1 + $0x4d8] sm:$0xff]
  %v210 = vld [vmem:[%s1 + $0x4e0] sm:$0xff]
  %v211 = vld [vmem:[%s1 + $0x4e8] sm:$0xf]
  %v212 = vld [vmem:[%s1 + $0x4ec] sm:$0xff]
  %v213 = vld [vmem:[%s1 + $0x4f4] sm:$0xff]
  %v214 = vld [vmem:[%s1 + $0x4fc] sm:$0xf]
  %v215 = vld [vmem:[%s1 + $0x500] sm:$0xff]
  %v216 = vld [vmem:[%s1 + $0x508] sm:$0xff]
  %v217 = vld [vmem:[%s1 + $0x510] sm:$0xf]
  %v218 = vld [vmem:[%s1 + $0x514] sm:$0xff]
  %v219 = vld [vmem:[%s1 + $0x51c] sm:$0xff]
  %v220 = vld [vmem:[%s1 + $0x524] sm:$0xf]
  %v221 = vld [vmem:[%s1 + $0x528] sm:$0xff]
  %v222 = vld [vmem:[%s1 + $0x530] sm:$0xff]
  %v223 = vld [vmem:[%s1 + $0x538] sm:$0xf]
  %v224 = vld [vmem:[%s1 + $0x53c] sm:$0xff]
  %v225 = vld [vmem:[%s1 + $0x544] sm:$0xff]
  %v226 = vld [vmem:[%s1 + $0x54c] sm:$0xf]
  %v227 = vld [vmem:[%s1 + $0x550] sm:$0xff]
  %v228 = vld [vmem:[%s1 + $0x558] sm:$0xff]
  %v229 = vld [vmem:[%s1 + $0x560] sm:$0xf]
  %v230 = vld [vmem:[%s1 + $0x564] sm:$0xff]
  %v231 = vld [vmem:[%s1 + $0x56c] sm:$0xff]
  %v232 = vld [vmem:[%s1 + $0x574] sm:$0xf]
  %v233 = vld [vmem:[%s1 + $0x578] sm:$0xff]
  %v234 = vld [vmem:[%s1 + $0x580] sm:$0xff]
  %v235 = vld [vmem:[%s1 + $0x588] sm:$0xf]
  %v236 = vld [vmem:[%s1 + $0x58c] sm:$0xff]
  %v237 = vld [vmem:[%s1 + $0x594] sm:$0xff]
  %v238 = vld [vmem:[%s1 + $0x59c] sm:$0xf]
  %v239 = vld [vmem:[%s1 + $0x5a0] sm:$0xff]
  %v240 = vld [vmem:[%s1 + $0x5a8] sm:$0xff]
  %v241 = vld [vmem:[%s1 + $0x5b0] sm:$0xf]
  %v242 = vld [vmem:[%s1 + $0x5b4] sm:$0xff]
  %v243 = vld [vmem:[%s1 + $0x5bc] sm:$0xff]
  %v244 = vld [vmem:[%s1 + $0x5c4] sm:$0xf]
  %v245 = vld [vmem:[%s1 + $0x5c8] sm:$0xff]
  %v246 = vld [vmem:[%s1 + $0x5d0] sm:$0xff]
  %v247 = vld [vmem:[%s1 + $0x5d8] sm:$0xf]
  %v248 = vld [vmem:[%s1 + $0x5dc] sm:$0xff]
  %v249 = vld [vmem:[%s1 + $0x5e4] sm:$0xff]
  %v250 = vld [vmem:[%s1 + $0x5ec] sm:$0xf]
  %v251 = vld [vmem:[%s1 + $0x5f0] sm:$0xff]
  %v252 = vld [vmem:[%s1 + $0x5f8] sm:$0xff]
  %v253 = vld [vmem:[%s1 + $0x600] sm:$0xf]
  %v254 = vld [vmem:[%s1 + $0x604] sm:$0xff]
  %v255 = vld [vmem:[%s1 + $0x60c] sm:$0xff]
  %v256 = vld [vmem:[%s1 + $0x614] sm:$0xf]
  %v257 = vld [vmem:[%s1 + $0x618] sm:$0xff]
  %v258 = vld [vmem:[%s1 + $0x620] sm:$0xff]
  %v259 = vld [vmem:[%s1 + $0x628] sm:$0xf]
  %v260 = vld [vmem:[%s1 + $0x62c] sm:$0xff]
  %v261 = vld [vmem:[%s1 + $0x634] sm:$0xff]
  %v262 = vld [vmem:[%s1 + $0x63c] sm:$0xf]
  %v263 = vld [vmem:[%s1 + $0x640] sm:$0xff]
  %v264 = vld [vmem:[%s1 + $0x648] sm:$0xff]
  %v265 = vld [vmem:[%s1 + $0x650] sm:$0xf]
  %v266 = vld [vmem:[%s1 + $0x654] sm:$0xff]
  %v267 = vld [vmem:[%s1 + $0x65c] sm:$0xff]
  %v268 = vld [vmem:[%s1 + $0x664] sm:$0xf]
  %v269 = vld [vmem:[%s1 + $0x668] sm:$0xff]
  %v270 = vld [vmem:[%s1 + $0x670] sm:$0xff]
  %v271 = vld [vmem:[%s1 + $0x678] sm:$0xf]
  %v272 = vld [vmem:[%s1 + $0x67c] sm:$0xff]
  %v273 = vld [vmem:[%s1 + $0x684] sm:$0xff]
  %v274 = vld [vmem:[%s1 + $0x68c] sm:$0xf]
  %v275 = vld [vmem:[%s1 + $0x690] sm:$0xff]
  %v276 = vld [vmem:[%s1 + $0x698] sm:$0xff]
  %v277 = vld [vmem:[%s1 + $0x6a0] sm:$0xf]
  %v278 = vld [vmem:[%s1 + $0x6a4] sm:$0xff]
  %v279 = vld [vmem:[%s1 + $0x6ac] sm:$0xff]
  %v280 = vld [vmem:[%s1 + $0x6b4] sm:$0xf]
  %v281 = vld [vmem:[%s1 + $0x6b8] sm:$0xff]
  %v282 = vld [vmem:[%s1 + $0x6c0] sm:$0xff]
  %v283 = vld [vmem:[%s1 + $0x6c8] sm:$0xf]
  %v284 = vld [vmem:[%s1 + $0x6cc] sm:$0xff]
  %v285 = vld [vmem:[%s1 + $0x6d4] sm:$0xff]
  %v286 = vld [vmem:[%s1 + $0x6dc] sm:$0xf]
  %v287 = vld [vmem:[%s1 + $0x6e0] sm:$0xff]
  %v288 = vld [vmem:[%s1 + $0x6e8] sm:$0xff]
  %v289 = vld [vmem:[%s1 + $0x6f0] sm:$0xf]
  %v290 = vld [vmem:[%s1 + $0x6f4] sm:$0xff]
  %v291 = vld [vmem:[%s1 + $0x6fc] sm:$0xff]
  %v292 = vld [vmem:[%s1 + $0x704] sm:$0xf]
  %v293 = vld [vmem:[%s1 + $0x708] sm:$0xff]
  %v294 = vld [vmem:[%s1 + $0x710] sm:$0xff]
  %v295 = vld [vmem:[%s1 + $0x718] sm:$0xf]
  %v296 = vld [vmem:[%s1 + $0x71c] sm:$0xff]
  %v297 = vld [vmem:[%s1 + $0x724] sm:$0xff]
  %v298 = vld [vmem:[%s1 + $0x72c] sm:$0xf]
  %v299 = vld [vmem:[%s1 + $0x730] sm:$0xff]
  %v300 = vld [vmem:[%s1 + $0x738] sm:$0xff]
  %v301 = vld [vmem:[%s1 + $0x740] sm:$0xf]
  %v302 = vld [vmem:[%s1 + $0x744] sm:$0xff]
  %v303 = vld [vmem:[%s1 + $0x74c] sm:$0xff]
  %v304 = vld [vmem:[%s1 + $0x754] sm:$0xf]
  %v305 = vld [vmem:[%s1 + $0x758] sm:$0xff]
  %v306 = vld [vmem:[%s1 + $0x760] sm:$0xff]
  %v307 = vld [vmem:[%s1 + $0x768] sm:$0xf]
  %v308 = vld [vmem:[%s1 + $0x76c] sm:$0xff]
  %v309 = vld [vmem:[%s1 + $0x774] sm:$0xff]
  %v310 = vld [vmem:[%s1 + $0x77c] sm:$0xf]
  %v311 = vld [vmem:[%s1 + $0x780] sm:$0xff]
  %v312 = vld [vmem:[%s1 + $0x788] sm:$0xff]
  %v313 = vld [vmem:[%s1 + $0x790] sm:$0xf]
  %v314 = vld [vmem:[%s1 + $0x794] sm:$0xff]
  %v315 = vld [vmem:[%s1 + $0x79c] sm:$0xff]
  %v316 = vld [vmem:[%s1 + $0x7a4] sm:$0xf]
  %v317 = vld [vmem:[%s1 + $0x7a8] sm:$0xff]
  %v318 = vld [vmem:[%s1 + $0x7b0] sm:$0xff]
  %v319 = vld [vmem:[%s1 + $0x7b8] sm:$0xf]
  %v320 = vld [vmem:[%s1 + $0x7bc] sm:$0xff]
  %v321 = vld [vmem:[%s1 + $0x7c4] sm:$0xff]
  %v322 = vld [vmem:[%s1 + $0x7cc] sm:$0xf]
  %v323 = vld [vmem:[%s1 + $0x7d0] sm:$0xff]
  %v324 = vld [vmem:[%s1 + $0x7d8] sm:$0xff]
  %v325 = vld [vmem:[%s1 + $0x7e0] sm:$0xf]
  %v326 = vld [vmem:[%s1 + $0x7e4] sm:$0xff]
  %v327 = vld [vmem:[%s1 + $0x7ec] sm:$0xff]
  %v328 = vld [vmem:[%s1 + $0x7f4] sm:$0xf]
  %v329 = vld [vmem:[%s1 + $0x7f8] sm:$0xff]
  %v330 = vld [vmem:[%s1 + $0x800] sm:$0xff]
  %v331 = vld [vmem:[%s1 + $0x808] sm:$0xf]
  %v332 = vld [vmem:[%s1 + $0x80c] sm:$0xff]
  %v333 = vld [vmem:[%s1 + $0x814] sm:$0xff]
  %v334 = vld [vmem:[%s1 + $0x81c] sm:$0xf]
  %v335 = vld [vmem:[%s1 + $0x820] sm:$0xff]
  %v336 = vld [vmem:[%s1 + $0x828] sm:$0xff]
  %v337 = vld [vmem:[%s1 + $0x830] sm:$0xf]
  %v338 = vld [vmem:[%s1 + $0x834] sm:$0xff]
  %v339 = vld [vmem:[%s1 + $0x83c] sm:$0xff]
  %v340 = vld [vmem:[%s1 + $0x844] sm:$0xf]
  %v341 = vld [vmem:[%s1 + $0x848] sm:$0xff]
  %v342 = vld [vmem:[%s1 + $0x850] sm:$0xff]
  %v343 = vld [vmem:[%s1 + $0x858] sm:$0xf]
  %v344 = vld [vmem:[%s1 + $0x85c] sm:$0xff]
  %v345 = vld [vmem:[%s1 + $0x864] sm:$0xff]
  %v346 = vld [vmem:[%s1 + $0x86c] sm:$0xf]
  %v347 = vld [vmem:[%s1 + $0x870] sm:$0xff]
  %v348 = vld [vmem:[%s1 + $0x878] sm:$0xff]
  %v349 = vld [vmem:[%s1 + $0x880] sm:$0xf]
  %v350 = vld [vmem:[%s1 + $0x884] sm:$0xff]
  %v351 = vld [vmem:[%s1 + $0x88c] sm:$0xff]
  %v352 = vld [vmem:[%s1 + $0x894] sm:$0xf]
  %v353 = vld [vmem:[%s1 + $0x898] sm:$0xff]
  %v354 = vld [vmem:[%s1 + $0x8a0] sm:$0xff]
  %v355 = vld [vmem:[%s1 + $0x8a8] sm:$0xf]
  %v356 = vld [vmem:[%s1 + $0x8ac] sm:$0xff]
  %v357 = vld [vmem:[%s1 + $0x8b4] sm:$0xff]
  %v358 = vld [vmem:[%s1 + $0x8bc] sm:$0xf]
  %v359 = vld [vmem:[%s1 + $0x8c0] sm:$0xff]
  %v360 = vld [vmem:[%s1 + $0x8c8] sm:$0xff]
  %v361 = vld [vmem:[%s1 + $0x8d0] sm:$0xf]
  %v362 = vld [vmem:[%s1 + $0x8d4] sm:$0xff]
  %v363 = vld [vmem:[%s1 + $0x8dc] sm:$0xff]
  %v364 = vld [vmem:[%s1 + $0x8e4] sm:$0xf]
  %v365 = vld [vmem:[%s1 + $0x8e8] sm:$0xff]
  %v366 = vld [vmem:[%s1 + $0x8f0] sm:$0xff]
  %v367 = vld [vmem:[%s1 + $0x8f8] sm:$0xf]
  %v368 = vld [vmem:[%s1 + $0x8fc] sm:$0xff]
  %v369 = vld [vmem:[%s1 + $0x904] sm:$0xff]
  %v370 = vld [vmem:[%s1 + $0x90c] sm:$0xf]
  %v371 = vld [vmem:[%s1 + $0x910] sm:$0xff]
  %v372 = vld [vmem:[%s1 + $0x918] sm:$0xff]
  %v373 = vld [vmem:[%s1 + $0x920] sm:$0xf]
  %v374 = vld [vmem:[%s1 + $0x924] sm:$0xff]
  %v375 = vld [vmem:[%s1 + $0x92c] sm:$0xff]
  %v376 = vld [vmem:[%s1 + $0x934] sm:$0xf]
  %v377 = vld [vmem:[%s1 + $0x938] sm:$0xff]
  %v378 = vld [vmem:[%s1 + $0x940] sm:$0xff]
  %v379 = vld [vmem:[%s1 + $0x948] sm:$0xf]
  %v380 = vld [vmem:[%s1 + $0x94c] sm:$0xff]
  %v381 = vld [vmem:[%s1 + $0x954] sm:$0xff]
  %v382 = vld [vmem:[%s1 + $0x95c] sm:$0xf]
  %v383 = vld [vmem:[%s1 + $0x960] sm:$0xff]
  %v384 = vld [vmem:[%s1 + $0x968] sm:$0xff]
  %v385 = vld [vmem:[%s1 + $0x970] sm:$0xf]
  %v386 = vld [vmem:[%s1 + $0x974] sm:$0xff]
  %v387 = vld [vmem:[%s1 + $0x97c] sm:$0xff]
  %v388 = vld [vmem:[%s1 + $0x984] sm:$0xf]
  %v389 = vld [vmem:[%s1 + $0x988] sm:$0xff]
  %v390 = vld [vmem:[%s1 + $0x990] sm:$0xff]
  %v391 = vld [vmem:[%s1 + $0x998] sm:$0xf]
  %v392 = vld [vmem:[%s1 + $0x99c] sm:$0xff]
  %v393 = vld [vmem:[%s1 + $0x9a4] sm:$0xff]
  %v394 = vld [vmem:[%s1 + $0x9ac] sm:$0xf]
  %v395 = vld [vmem:[%s1 + $0x9b0] sm:$0xff]
  %v396 = vld [vmem:[%s1 + $0x9b8] sm:$0xff]
  %v397 = vld [vmem:[%s1 + $0x9c0] sm:$0xf]
  %v398 = vld [vmem:[%s1 + $0x9c4] sm:$0xff]
  %v399 = vld [vmem:[%s1 + $0x9cc] sm:$0xff]
  %v400 = vld [vmem:[%s1 + $0x9d4] sm:$0xf]
  %v401 = vld [vmem:[%s1 + $0x9d8] sm:$0xff]
  %v402 = vld [vmem:[%s1 + $0x9e0] sm:$0xff]
  %v403 = vld [vmem:[%s1 + $0x9e8] sm:$0xf]
  %v404 = vld [vmem:[%s1 + $0x9ec] sm:$0xff]
  %v405 = vld [vmem:[%s1 + $0x9f4] sm:$0xff]
  %v406 = vld [vmem:[%s1 + $0x9fc] sm:$0xf]
  %v408 = vshrl.u32 %v19, 16
  %v410 = vrot.slane %v408, 2
  %v411 = vshll.u32 %v19, 16
  %v413 = vrot.slane %v411, 3
  %v414 = vor.u32 %v410, %v413
  %v416 = vshrl.u32 %v20, 16
  %v418 = vrot.slane %v416, 2
  %v419 = vshll.u32 %v20, 16
  %v421 = vrot.slane %v419, 3
  %v422 = vor.u32 %v418, %v421
  %v424 = vshrl.u32 %v21, 16
  %v426 = vrot.slane %v424, 2
  %v427 = vshll.u32 %v21, 16
  %v429 = vrot.slane %v427, 3
  %v430 = vor.u32 %v426, %v429
  %v432 = vshrl.u32 %v22, 16
  %v434 = vrot.slane %v432, 2
  %v435 = vshll.u32 %v22, 16
  %v437 = vrot.slane %v435, 3
  %v438 = vor.u32 %v434, %v437
  %v635 = vunpack.c.l.b16 %v215
  %v636 = vunpack.c.h.b16 %v215
  %v637 = vunpack.c.l.b16 %v216
  %v638 = vunpack.c.h.b16 %v216
  %v639 = vunpack.c.l.b16 %v217
  %v640 = vunpack.c.l.b16 %v218
  %v641 = vunpack.c.h.b16 %v218
  %v642 = vunpack.c.l.b16 %v219
  %v643 = vunpack.c.h.b16 %v219
  %v644 = vunpack.c.l.b16 %v220
  %v645 = vunpack.c.l.b16 %v221
  %v646 = vunpack.c.h.b16 %v221
  %v647 = vunpack.c.l.b16 %v222
  %v648 = vunpack.c.h.b16 %v222
  %v649 = vunpack.c.l.b16 %v223
  %v650 = vunpack.c.l.b16 %v224
  %v651 = vunpack.c.h.b16 %v224
  %v652 = vunpack.c.l.b16 %v225
  %v653 = vunpack.c.h.b16 %v225
  %v654 = vunpack.c.l.b16 %v226
  %v655 = vunpack.c.l.b16 %v227
  %v656 = vunpack.c.h.b16 %v227
  %v657 = vunpack.c.l.b16 %v228
  %v658 = vunpack.c.h.b16 %v228
  %v659 = vunpack.c.l.b16 %v229
  %v660 = vunpack.c.l.b16 %v230
  %v661 = vunpack.c.h.b16 %v230
  %v662 = vunpack.c.l.b16 %v231
  %v663 = vunpack.c.h.b16 %v231
  %v664 = vunpack.c.l.b16 %v232
  %v665 = vunpack.c.l.b16 %v233
  %v666 = vunpack.c.h.b16 %v233
  %v667 = vunpack.c.l.b16 %v234
  %v668 = vunpack.c.h.b16 %v234
  %v669 = vunpack.c.l.b16 %v235
  %v670 = vunpack.c.l.b16 %v236
  %v671 = vunpack.c.h.b16 %v236
  %v672 = vunpack.c.l.b16 %v237
  %v673 = vunpack.c.h.b16 %v237
  %v674 = vunpack.c.l.b16 %v238
  %v675 = vunpack.c.l.b16 %v239
  %v676 = vunpack.c.h.b16 %v239
  %v677 = vunpack.c.l.b16 %v240
  %v678 = vunpack.c.h.b16 %v240
  %v679 = vunpack.c.l.b16 %v241
  %v680 = vunpack.c.l.b16 %v242
  %v681 = vunpack.c.h.b16 %v242
  %v682 = vunpack.c.l.b16 %v243
  %v683 = vunpack.c.h.b16 %v243
  %v684 = vunpack.c.l.b16 %v244
  %v685 = vunpack.c.l.b16 %v245
  %v686 = vunpack.c.h.b16 %v245
  %v687 = vunpack.c.l.b16 %v246
  %v688 = vunpack.c.h.b16 %v246
  %v689 = vunpack.c.l.b16 %v247
  %v690 = vunpack.c.l.b16 %v248
  %v691 = vunpack.c.h.b16 %v248
  %v692 = vunpack.c.l.b16 %v249
  %v693 = vunpack.c.h.b16 %v249
  %v694 = vunpack.c.l.b16 %v250
  %v695 = vunpack.c.l.b16 %v251
  %v696 = vunpack.c.h.b16 %v251
  %v697 = vunpack.c.l.b16 %v252
  %v698 = vunpack.c.h.b16 %v252
  %v699 = vunpack.c.l.b16 %v253
  %v700 = vunpack.c.l.b16 %v254
  %v701 = vunpack.c.h.b16 %v254
  %v702 = vunpack.c.l.b16 %v255
  %v703 = vunpack.c.h.b16 %v255
  %v704 = vunpack.c.l.b16 %v256
  %v705 = vunpack.c.l.b16 %v257
  %v706 = vunpack.c.h.b16 %v257
  %v707 = vunpack.c.l.b16 %v258
  %v708 = vunpack.c.h.b16 %v258
  %v709 = vunpack.c.l.b16 %v259
  %v710 = vunpack.c.l.b16 %v260
  %v711 = vunpack.c.h.b16 %v260
  %v712 = vunpack.c.l.b16 %v261
  %v713 = vunpack.c.h.b16 %v261
  %v714 = vunpack.c.l.b16 %v262
  %v715 = vunpack.c.l.b16 %v263
  %v716 = vunpack.c.h.b16 %v263
  %v717 = vunpack.c.l.b16 %v264
  %v718 = vunpack.c.h.b16 %v264
  %v719 = vunpack.c.l.b16 %v265
  %v720 = vunpack.c.l.b16 %v266
  %v721 = vunpack.c.h.b16 %v266
  %v722 = vunpack.c.l.b16 %v267
  %v723 = vunpack.c.h.b16 %v267
  %v724 = vunpack.c.l.b16 %v268
  %v725 = vunpack.c.l.b16 %v269
  %v726 = vunpack.c.h.b16 %v269
  %v727 = vunpack.c.l.b16 %v270
  %v728 = vunpack.c.h.b16 %v270
  %v729 = vunpack.c.l.b16 %v271
  %v730 = vunpack.c.l.b16 %v272
  %v731 = vunpack.c.h.b16 %v272
  %v732 = vunpack.c.l.b16 %v273
  %v733 = vunpack.c.h.b16 %v273
  %v734 = vunpack.c.l.b16 %v274
  %v735 = vunpack.c.l.b16 %v275
  %v736 = vunpack.c.h.b16 %v275
  %v737 = vunpack.c.l.b16 %v276
  %v738 = vunpack.c.h.b16 %v276
  %v739 = vunpack.c.l.b16 %v277
  %v740 = vunpack.c.l.b16 %v278
  %v741 = vunpack.c.h.b16 %v278
  %v742 = vunpack.c.l.b16 %v279
  %v743 = vunpack.c.h.b16 %v279
  %v744 = vunpack.c.l.b16 %v280
  %v745 = vunpack.c.l.b16 %v281
  %v746 = vunpack.c.h.b16 %v281
  %v747 = vunpack.c.l.b16 %v282
  %v748 = vunpack.c.h.b16 %v282
  %v749 = vunpack.c.l.b16 %v283
  %v750 = vunpack.c.l.b16 %v284
  %v751 = vunpack.c.h.b16 %v284
  %v752 = vunpack.c.l.b16 %v285
  %v753 = vunpack.c.h.b16 %v285
  %v754 = vunpack.c.l.b16 %v286
  %v755 = vunpack.c.l.b16 %v287
  %v756 = vunpack.c.h.b16 %v287
  %v757 = vunpack.c.l.b16 %v288
  %v758 = vunpack.c.h.b16 %v288
  %v759 = vunpack.c.l.b16 %v289
  %v760 = vunpack.c.l.b16 %v290
  %v761 = vunpack.c.h.b16 %v290
  %v762 = vunpack.c.l.b16 %v291
  %v763 = vunpack.c.h.b16 %v291
  %v764 = vunpack.c.l.b16 %v292
  %v765 = vunpack.c.l.b16 %v293
  %v766 = vunpack.c.h.b16 %v293
  %v767 = vunpack.c.l.b16 %v294
  %v768 = vunpack.c.h.b16 %v294
  %v769 = vunpack.c.l.b16 %v295
  %v770 = vunpack.c.l.b16 %v296
  %v771 = vunpack.c.h.b16 %v296
  %v772 = vunpack.c.l.b16 %v297
  %v773 = vunpack.c.h.b16 %v297
  %v774 = vunpack.c.l.b16 %v298
  %v775 = vunpack.c.l.b16 %v299
  %v776 = vunpack.c.h.b16 %v299
  %v777 = vunpack.c.l.b16 %v300
  %v778 = vunpack.c.h.b16 %v300
  %v779 = vunpack.c.l.b16 %v301
  %v780 = vunpack.c.l.b16 %v302
  %v781 = vunpack.c.h.b16 %v302
  %v782 = vunpack.c.l.b16 %v303
  %v783 = vunpack.c.h.b16 %v303
  %v784 = vunpack.c.l.b16 %v304
  %v785 = vunpack.c.l.b16 %v305
  %v786 = vunpack.c.h.b16 %v305
  %v787 = vunpack.c.l.b16 %v306
  %v788 = vunpack.c.h.b16 %v306
  %v789 = vunpack.c.l.b16 %v307
  %v790 = vunpack.c.l.b16 %v308
  %v791 = vunpack.c.h.b16 %v308
  %v792 = vunpack.c.l.b16 %v309
  %v793 = vunpack.c.h.b16 %v309
  %v794 = vunpack.c.l.b16 %v310
  %v795 = vunpack.c.l.b16 %v311
  %v796 = vunpack.c.h.b16 %v311
  %v797 = vunpack.c.l.b16 %v312
  %v798 = vunpack.c.h.b16 %v312
  %v799 = vunpack.c.l.b16 %v313
  %v800 = vunpack.c.l.b16 %v314
  %v801 = vunpack.c.h.b16 %v314
  %v802 = vunpack.c.l.b16 %v315
  %v803 = vunpack.c.h.b16 %v315
  %v804 = vunpack.c.l.b16 %v316
  %v805 = vunpack.c.l.b16 %v317
  %v806 = vunpack.c.h.b16 %v317
  %v807 = vunpack.c.l.b16 %v318
  %v808 = vunpack.c.h.b16 %v318
  %v809 = vunpack.c.l.b16 %v319
  %v810 = vunpack.c.l.b16 %v320
  %v811 = vunpack.c.h.b16 %v320
  %v812 = vunpack.c.l.b16 %v321
  %v813 = vunpack.c.h.b16 %v321
  %v814 = vunpack.c.l.b16 %v322
  %v815 = vunpack.c.l.b16 %v323
  %v816 = vunpack.c.h.b16 %v323
  %v817 = vunpack.c.l.b16 %v324
  %v818 = vunpack.c.h.b16 %v324
  %v819 = vunpack.c.l.b16 %v325
  %v820 = vunpack.c.l.b16 %v326
  %v821 = vunpack.c.h.b16 %v326
  %v822 = vunpack.c.l.b16 %v327
  %v823 = vunpack.c.h.b16 %v327
  %v824 = vunpack.c.l.b16 %v328
  %v825 = vunpack.c.l.b16 %v329
  %v826 = vunpack.c.h.b16 %v329
  %v827 = vunpack.c.l.b16 %v330
  %v828 = vunpack.c.h.b16 %v330
  %v829 = vunpack.c.l.b16 %v331
  %v830 = vunpack.c.l.b16 %v332
  %v831 = vunpack.c.h.b16 %v332
  %v832 = vunpack.c.l.b16 %v333
  %v833 = vunpack.c.h.b16 %v333
  %v834 = vunpack.c.l.b16 %v334
  %v835 = vunpack.c.l.b16 %v335
  %v836 = vunpack.c.h.b16 %v335
  %v837 = vunpack.c.l.b16 %v336
  %v838 = vunpack.c.h.b16 %v336
  %v839 = vunpack.c.l.b16 %v337
  %v840 = vunpack.c.l.b16 %v338
  %v841 = vunpack.c.h.b16 %v338
  %v842 = vunpack.c.l.b16 %v339
  %v843 = vunpack.c.h.b16 %v339
  %v844 = vunpack.c.l.b16 %v340
  %v845 = vunpack.c.l.b16 %v341
  %v846 = vunpack.c.h.b16 %v341
  %v847 = vunpack.c.l.b16 %v342
  %v848 = vunpack.c.h.b16 %v342
  %v849 = vunpack.c.l.b16 %v343
  %v850 = vunpack.c.l.b16 %v344
  %v851 = vunpack.c.h.b16 %v344
  %v852 = vunpack.c.l.b16 %v345
  %v853 = vunpack.c.h.b16 %v345
  %v854 = vunpack.c.l.b16 %v346
  %v855 = vunpack.c.l.b16 %v347
  %v856 = vunpack.c.h.b16 %v347
  %v857 = vunpack.c.l.b16 %v348
  %v858 = vunpack.c.h.b16 %v348
  %v859 = vunpack.c.l.b16 %v349
  %v860 = vunpack.c.l.b16 %v350
  %v861 = vunpack.c.h.b16 %v350
  %v862 = vunpack.c.l.b16 %v351
  %v863 = vunpack.c.h.b16 %v351
  %v864 = vunpack.c.l.b16 %v352
  %v865 = vunpack.c.l.b16 %v353
  %v866 = vunpack.c.h.b16 %v353
  %v867 = vunpack.c.l.b16 %v354
  %v868 = vunpack.c.h.b16 %v354
  %v869 = vunpack.c.l.b16 %v355
  %v870 = vunpack.c.l.b16 %v356
  %v871 = vunpack.c.h.b16 %v356
  %v872 = vunpack.c.l.b16 %v357
  %v873 = vunpack.c.h.b16 %v357
  %v874 = vunpack.c.l.b16 %v358
  %v875 = vunpack.c.l.b16 %v359
  %v876 = vunpack.c.h.b16 %v359
  %v877 = vunpack.c.l.b16 %v360
  %v878 = vunpack.c.h.b16 %v360
  %v879 = vunpack.c.l.b16 %v361
  %v880 = vunpack.c.l.b16 %v362
  %v881 = vunpack.c.h.b16 %v362
  %v882 = vunpack.c.l.b16 %v363
  %v883 = vunpack.c.h.b16 %v363
  %v884 = vunpack.c.l.b16 %v364
  %v885 = vunpack.c.l.b16 %v365
  %v886 = vunpack.c.h.b16 %v365
  %v887 = vunpack.c.l.b16 %v366
  %v888 = vunpack.c.h.b16 %v366
  %v889 = vunpack.c.l.b16 %v367
  %v890 = vunpack.c.l.b16 %v368
  %v891 = vunpack.c.h.b16 %v368
  %v892 = vunpack.c.l.b16 %v369
  %v893 = vunpack.c.h.b16 %v369
  %v894 = vunpack.c.l.b16 %v370
  %v895 = vunpack.c.l.b16 %v371
  %v896 = vunpack.c.h.b16 %v371
  %v897 = vunpack.c.l.b16 %v372
  %v898 = vunpack.c.h.b16 %v372
  %v899 = vunpack.c.l.b16 %v373
  %v900 = vunpack.c.l.b16 %v374
  %v901 = vunpack.c.h.b16 %v374
  %v902 = vunpack.c.l.b16 %v375
  %v903 = vunpack.c.h.b16 %v375
  %v904 = vunpack.c.l.b16 %v376
  %v905 = vunpack.c.l.b16 %v377
  %v906 = vunpack.c.h.b16 %v377
  %v907 = vunpack.c.l.b16 %v378
  %v908 = vunpack.c.h.b16 %v378
  %v909 = vunpack.c.l.b16 %v379
  %v910 = vunpack.c.l.b16 %v380
  %v911 = vunpack.c.h.b16 %v380
  %v912 = vunpack.c.l.b16 %v381
  %v913 = vunpack.c.h.b16 %v381
  %v914 = vunpack.c.l.b16 %v382
  %v915 = vunpack.c.l.b16 %v383
  %v916 = vunpack.c.h.b16 %v383
  %v917 = vunpack.c.l.b16 %v384
  %v918 = vunpack.c.h.b16 %v384
  %v919 = vunpack.c.l.b16 %v385
  %v920 = vunpack.c.l.b16 %v386
  %v921 = vunpack.c.h.b16 %v386
  %v922 = vunpack.c.l.b16 %v387
  %v923 = vunpack.c.h.b16 %v387
  %v924 = vunpack.c.l.b16 %v388
  %v925 = vunpack.c.l.b16 %v389
  %v926 = vunpack.c.h.b16 %v389
  %v927 = vunpack.c.l.b16 %v390
  %v928 = vunpack.c.h.b16 %v390
  %v929 = vunpack.c.l.b16 %v391
  %v930 = vunpack.c.l.b16 %v392
  %v931 = vunpack.c.h.b16 %v392
  %v932 = vunpack.c.l.b16 %v393
  %v933 = vunpack.c.h.b16 %v393
  %v934 = vunpack.c.l.b16 %v394
  %v935 = vunpack.c.l.b16 %v395
  %v936 = vunpack.c.h.b16 %v395
  %v937 = vunpack.c.l.b16 %v396
  %v938 = vunpack.c.h.b16 %v396
  %v939 = vunpack.c.l.b16 %v397
  %v940 = vunpack.c.l.b16 %v398
  %v941 = vunpack.c.h.b16 %v398
  %v942 = vunpack.c.l.b16 %v399
  %v943 = vunpack.c.h.b16 %v399
  %v944 = vunpack.c.l.b16 %v400
  %v945 = vunpack.c.l.b16 %v401
  %v946 = vunpack.c.h.b16 %v401
  %v947 = vunpack.c.l.b16 %v402
  %v948 = vunpack.c.h.b16 %v402
  %v949 = vunpack.c.l.b16 %v403
  %v950 = vunpack.c.l.b16 %v404
  %v951 = vunpack.c.h.b16 %v404
  %v952 = vunpack.c.l.b16 %v405
  %v953 = vunpack.c.h.b16 %v405
  %v954 = vunpack.c.l.b16 %v406
  %v955 = vpack.c.b16 %v640, %v635
  %v956 = vpack.c.b16 %v641, %v636
  %v957 = vpack.c.b16 %v642, %v637
  %v958 = vpack.c.b16 %v643, %v638
  %v959 = vpack.c.b16 %v644, %v639
  %v960 = vpack.c.b16 %v650, %v645
  %v961 = vpack.c.b16 %v651, %v646
  %v962 = vpack.c.b16 %v652, %v647
  %v963 = vpack.c.b16 %v653, %v648
  %v964 = vpack.c.b16 %v654, %v649
  %v965 = vpack.c.b16 %v660, %v655
  %v966 = vpack.c.b16 %v661, %v656
  %v967 = vpack.c.b16 %v662, %v657
  %v968 = vpack.c.b16 %v663, %v658
  %v969 = vpack.c.b16 %v664, %v659
  %v970 = vpack.c.b16 %v670, %v665
  %v971 = vpack.c.b16 %v671, %v666
  %v972 = vpack.c.b16 %v672, %v667
  %v973 = vpack.c.b16 %v673, %v668
  %v974 = vpack.c.b16 %v674, %v669
  %v975 = vpack.c.b16 %v680, %v675
  %v976 = vpack.c.b16 %v681, %v676
  %v977 = vpack.c.b16 %v682, %v677
  %v978 = vpack.c.b16 %v683, %v678
  %v979 = vpack.c.b16 %v684, %v679
  %v980 = vpack.c.b16 %v690, %v685
  %v981 = vpack.c.b16 %v691, %v686
  %v982 = vpack.c.b16 %v692, %v687
  %v983 = vpack.c.b16 %v693, %v688
  %v984 = vpack.c.b16 %v694, %v689
  %v985 = vpack.c.b16 %v700, %v695
  %v986 = vpack.c.b16 %v701, %v696
  %v987 = vpack.c.b16 %v702, %v697
  %v988 = vpack.c.b16 %v703, %v698
  %v989 = vpack.c.b16 %v704, %v699
  %v990 = vpack.c.b16 %v710, %v705
  %v991 = vpack.c.b16 %v711, %v706
  %v992 = vpack.c.b16 %v712, %v707
  %v993 = vpack.c.b16 %v713, %v708
  %v994 = vpack.c.b16 %v714, %v709
  %v995 = vpack.c.b16 %v720, %v715
  %v996 = vpack.c.b16 %v721, %v716
  %v997 = vpack.c.b16 %v722, %v717
  %v998 = vpack.c.b16 %v723, %v718
  %v999 = vpack.c.b16 %v724, %v719
  %v1000 = vpack.c.b16 %v730, %v725
  %v1001 = vpack.c.b16 %v731, %v726
  %v1002 = vpack.c.b16 %v732, %v727
  %v1003 = vpack.c.b16 %v733, %v728
  %v1004 = vpack.c.b16 %v734, %v729
  %v1005 = vpack.c.b16 %v740, %v735
  %v1006 = vpack.c.b16 %v741, %v736
  %v1007 = vpack.c.b16 %v742, %v737
  %v1008 = vpack.c.b16 %v743, %v738
  %v1009 = vpack.c.b16 %v744, %v739
  %v1010 = vpack.c.b16 %v750, %v745
  %v1011 = vpack.c.b16 %v751, %v746
  %v1012 = vpack.c.b16 %v752, %v747
  %v1013 = vpack.c.b16 %v753, %v748
  %v1014 = vpack.c.b16 %v754, %v749
  %v1015 = vpack.c.b16 %v760, %v755
  %v1016 = vpack.c.b16 %v761, %v756
  %v1017 = vpack.c.b16 %v762, %v757
  %v1018 = vpack.c.b16 %v763, %v758
  %v1019 = vpack.c.b16 %v764, %v759
  %v1020 = vpack.c.b16 %v770, %v765
  %v1021 = vpack.c.b16 %v771, %v766
  %v1022 = vpack.c.b16 %v772, %v767
  %v1023 = vpack.c.b16 %v773, %v768
  %v1024 = vpack.c.b16 %v774, %v769
  %v1025 = vpack.c.b16 %v780, %v775
  %v1026 = vpack.c.b16 %v781, %v776
  %v1027 = vpack.c.b16 %v782, %v777
  %v1028 = vpack.c.b16 %v783, %v778
  %v1029 = vpack.c.b16 %v784, %v779
  %v1030 = vpack.c.b16 %v790, %v785
  %v1031 = vpack.c.b16 %v791, %v786
  %v1032 = vpack.c.b16 %v792, %v787
  %v1033 = vpack.c.b16 %v793, %v788
  %v1034 = vpack.c.b16 %v794, %v789
  %v1035 = vpack.c.b16 %v800, %v795
  %v1036 = vpack.c.b16 %v801, %v796
  %v1037 = vpack.c.b16 %v802, %v797
  %v1038 = vpack.c.b16 %v803, %v798
  %v1039 = vpack.c.b16 %v804, %v799
  %v1040 = vpack.c.b16 %v810, %v805
  %v1041 = vpack.c.b16 %v811, %v806
  %v1042 = vpack.c.b16 %v812, %v807
  %v1043 = vpack.c.b16 %v813, %v808
  %v1044 = vpack.c.b16 %v814, %v809
  %v1045 = vpack.c.b16 %v820, %v815
  %v1046 = vpack.c.b16 %v821, %v816
  %v1047 = vpack.c.b16 %v822, %v817
  %v1048 = vpack.c.b16 %v823, %v818
  %v1049 = vpack.c.b16 %v824, %v819
  %v1050 = vpack.c.b16 %v830, %v825
  %v1051 = vpack.c.b16 %v831, %v826
  %v1052 = vpack.c.b16 %v832, %v827
  %v1053 = vpack.c.b16 %v833, %v828
  %v1054 = vpack.c.b16 %v834, %v829
  %v1055 = vpack.c.b16 %v840, %v835
  %v1056 = vpack.c.b16 %v841, %v836
  %v1057 = vpack.c.b16 %v842, %v837
  %v1058 = vpack.c.b16 %v843, %v838
  %v1059 = vpack.c.b16 %v844, %v839
  %v1060 = vpack.c.b16 %v850, %v845
  %v1061 = vpack.c.b16 %v851, %v846
  %v1062 = vpack.c.b16 %v852, %v847
  %v1063 = vpack.c.b16 %v853, %v848
  %v1064 = vpack.c.b16 %v854, %v849
  %v1065 = vpack.c.b16 %v860, %v855
  %v1066 = vpack.c.b16 %v861, %v856
  %v1067 = vpack.c.b16 %v862, %v857
  %v1068 = vpack.c.b16 %v863, %v858
  %v1069 = vpack.c.b16 %v864, %v859
  %v1070 = vpack.c.b16 %v870, %v865
  %v1071 = vpack.c.b16 %v871, %v866
  %v1072 = vpack.c.b16 %v872, %v867
  %v1073 = vpack.c.b16 %v873, %v868
  %v1074 = vpack.c.b16 %v874, %v869
  %v1075 = vpack.c.b16 %v880, %v875
  %v1076 = vpack.c.b16 %v881, %v876
  %v1077 = vpack.c.b16 %v882, %v877
  %v1078 = vpack.c.b16 %v883, %v878
  %v1079 = vpack.c.b16 %v884, %v879
  %v1080 = vpack.c.b16 %v890, %v885
  %v1081 = vpack.c.b16 %v891, %v886
  %v1082 = vpack.c.b16 %v892, %v887
  %v1083 = vpack.c.b16 %v893, %v888
  %v1084 = vpack.c.b16 %v894, %v889
  %v1085 = vpack.c.b16 %v900, %v895
  %v1086 = vpack.c.b16 %v901, %v896
  %v1087 = vpack.c.b16 %v902, %v897
  %v1088 = vpack.c.b16 %v903, %v898
  %v1089 = vpack.c.b16 %v904, %v899
  %v1090 = vpack.c.b16 %v910, %v905
  %v1091 = vpack.c.b16 %v911, %v906
  %v1092 = vpack.c.b16 %v912, %v907
  %v1093 = vpack.c.b16 %v913, %v908
  %v1094 = vpack.c.b16 %v914, %v909
  %v1095 = vpack.c.b16 %v920, %v915
  %v1096 = vpack.c.b16 %v921, %v916
  %v1097 = vpack.c.b16 %v922, %v917
  %v1098 = vpack.c.b16 %v923, %v918
  %v1099 = vpack.c.b16 %v924, %v919
  %v1100 = vpack.c.b16 %v930, %v925
  %v1101 = vpack.c.b16 %v931, %v926
  %v1102 = vpack.c.b16 %v932, %v927
  %v1103 = vpack.c.b16 %v933, %v928
  %v1104 = vpack.c.b16 %v934, %v929
  %v1105 = vpack.c.b16 %v940, %v935
  %v1106 = vpack.c.b16 %v941, %v936
  %v1107 = vpack.c.b16 %v942, %v937
  %v1108 = vpack.c.b16 %v943, %v938
  %v1109 = vpack.c.b16 %v944, %v939
  %v1110 = vpack.c.b16 %v950, %v945
  %v1111 = vpack.c.b16 %v951, %v946
  %v1112 = vpack.c.b16 %v952, %v947
  %v1113 = vpack.c.b16 %v953, %v948
  %v1114 = vpack.c.b16 %v954, %v949
  %1275 = vmatpush.bf16.msra.mxu0 %v990
  %1276 = vmatpush.bf16.msra.mxu0 %v985
  %1277 = vmatpush.bf16.msra.mxu0 %v980
  %1278 = vmatpush.bf16.msra.mxu0 %v975
  %1279 = vmatpush.bf16.msra.mxu0 %v970
  %1280 = vmatpush.bf16.msra.mxu0 %v965
  %1281 = vmatpush.bf16.msra.mxu0 %v960
  %1282 = vmatpush.bf16.msra.mxu0 %v955
  %1283 = vmatmul.bf16.gmra.mxu0 %v414
  %v1284 = vpop.f32.mrf.mxu0
  %v1285 = vadd.f32 0.0, %v1284
  %v1286 = vpop.f32.mrf.mxu0
  %1287 = vdwg.mxu0
  %1288 = vmatpush.bf16.msra.mxu0 %v1030
  %1289 = vmatpush.bf16.msra.mxu0 %v1025
  %1290 = vmatpush.bf16.msra.mxu0 %v1020
  %1291 = vmatpush.bf16.msra.mxu0 %v1015
  %1292 = vmatpush.bf16.msra.mxu0 %v1010
  %1293 = vmatpush.bf16.msra.mxu0 %v1005
  %1294 = vmatpush.bf16.msra.mxu0 %v1000
  %1295 = vmatpush.bf16.msra.mxu0 %v995
  %1296 = vmatmul.bf16.gmra.mxu0 %v422
  %v1297 = vpop.f32.mrf.mxu0
  %v1298 = vadd.f32 %v1285, %v1297
  %v1299 = vpop.f32.mrf.mxu0
  %1300 = vdwg.mxu0
  %1301 = vmatpush.bf16.msra.mxu0 %v1070
  %1302 = vmatpush.bf16.msra.mxu0 %v1065
  %1303 = vmatpush.bf16.msra.mxu0 %v1060
  %1304 = vmatpush.bf16.msra.mxu0 %v1055
  %1305 = vmatpush.bf16.msra.mxu0 %v1050
  %1306 = vmatpush.bf16.msra.mxu0 %v1045
  %1307 = vmatpush.bf16.msra.mxu0 %v1040
  %1308 = vmatpush.bf16.msra.mxu0 %v1035
  %1309 = vmatmul.bf16.gmra.mxu0 %v430
  %v1310 = vpop.f32.mrf.mxu0
  %v1311 = vadd.f32 %v1298, %v1310
  %v1312 = vpop.f32.mrf.mxu0
  %1313 = vdwg.mxu0
  %1314 = vmatpush.bf16.msra.mxu0 %v1110
  %1315 = vmatpush.bf16.msra.mxu0 %v1105
  %1316 = vmatpush.bf16.msra.mxu0 %v1100
  %1317 = vmatpush.bf16.msra.mxu0 %v1095
  %1318 = vmatpush.bf16.msra.mxu0 %v1090
  %1319 = vmatpush.bf16.msra.mxu0 %v1085
  %1320 = vmatpush.bf16.msra.mxu0 %v1080
  %1321 = vmatpush.bf16.msra.mxu0 %v1075
  %1322 = vmatmul.bf16.gmra.mxu0 %v438
  %v1323 = vpop.f32.mrf.mxu0
  %v1324 = vadd.f32 %v1311, %v1323
  %v1325 = vpop.f32.mrf.mxu0
  %1326 = vdwg.mxu0
  %1327 = vmatpush.bf16.msra.mxu0 %v991
  %1328 = vmatpush.bf16.msra.mxu0 %v986
  %1329 = vmatpush.bf16.msra.mxu0 %v981
  %1330 = vmatpush.bf16.msra.mxu0 %v976
  %1331 = vmatpush.bf16.msra.mxu0 %v971
  %1332 = vmatpush.bf16.msra.mxu0 %v966
  %1333 = vmatpush.bf16.msra.mxu0 %v961
  %1334 = vmatpush.bf16.msra.mxu0 %v956
  %1335 = vmatmul.bf16.gmra.mxu0 %v414
  %v1336 = vpop.f32.mrf.mxu0
  %v1337 = vadd.f32 0.0, %v1336
  %v1338 = vpop.f32.mrf.mxu0
  %1339 = vdwg.mxu0
  %1340 = vmatpush.bf16.msra.mxu0 %v1031
  %1341 = vmatpush.bf16.msra.mxu0 %v1026
  %1342 = vmatpush.bf16.msra.mxu0 %v1021
  %1343 = vmatpush.bf16.msra.mxu0 %v1016
  %1344 = vmatpush.bf16.msra.mxu0 %v1011
  %1345 = vmatpush.bf16.msra.mxu0 %v1006
  %1346 = vmatpush.bf16.msra.mxu0 %v1001
  %1347 = vmatpush.bf16.msra.mxu0 %v996
  %1348 = vmatmul.bf16.gmra.mxu0 %v422
  %v1349 = vpop.f32.mrf.mxu0
  %v1350 = vadd.f32 %v1337, %v1349
  %v1351 = vpop.f32.mrf.mxu0
  %1352 = vdwg.mxu0
  %1353 = vmatpush.bf16.msra.mxu0 %v1071
  %1354 = vmatpush.bf16.msra.mxu0 %v1066
  %1355 = vmatpush.bf16.msra.mxu0 %v1061
  %1356 = vmatpush.bf16.msra.mxu0 %v1056
  %1357 = vmatpush.bf16.msra.mxu0 %v1051
  %1358 = vmatpush.bf16.msra.mxu0 %v1046
  %1359 = vmatpush.bf16.msra.mxu0 %v1041
  %1360 = vmatpush.bf16.msra.mxu0 %v1036
  %1361 = vmatmul.bf16.gmra.mxu0 %v430
  %v1362 = vpop.f32.mrf.mxu0
  %v1363 = vadd.f32 %v1350, %v1362
  %v1364 = vpop.f32.mrf.mxu0
  %1365 = vdwg.mxu0
  %1366 = vmatpush.bf16.msra.mxu0 %v1111
  %1367 = vmatpush.bf16.msra.mxu0 %v1106
  %1368 = vmatpush.bf16.msra.mxu0 %v1101
  %1369 = vmatpush.bf16.msra.mxu0 %v1096
  %1370 = vmatpush.bf16.msra.mxu0 %v1091
  %1371 = vmatpush.bf16.msra.mxu0 %v1086
  %1372 = vmatpush.bf16.msra.mxu0 %v1081
  %1373 = vmatpush.bf16.msra.mxu0 %v1076
  %1374 = vmatmul.bf16.gmra.mxu0 %v438
  %v1375 = vpop.f32.mrf.mxu0
  %v1376 = vadd.f32 %v1363, %v1375
  %v1377 = vpop.f32.mrf.mxu0
  %1378 = vdwg.mxu0
  %1379 = vmatpush.bf16.msra.mxu0 %v992
  %1380 = vmatpush.bf16.msra.mxu0 %v987
  %1381 = vmatpush.bf16.msra.mxu0 %v982
  %1382 = vmatpush.bf16.msra.mxu0 %v977
  %1383 = vmatpush.bf16.msra.mxu0 %v972
  %1384 = vmatpush.bf16.msra.mxu0 %v967
  %1385 = vmatpush.bf16.msra.mxu0 %v962
  %1386 = vmatpush.bf16.msra.mxu0 %v957
  %1387 = vmatmul.bf16.gmra.mxu0 %v414
  %v1388 = vpop.f32.mrf.mxu0
  %v1389 = vadd.f32 0.0, %v1388
  %v1390 = vpop.f32.mrf.mxu0
  %1391 = vdwg.mxu0
  %1392 = vmatpush.bf16.msra.mxu0 %v1032
  %1393 = vmatpush.bf16.msra.mxu0 %v1027
  %1394 = vmatpush.bf16.msra.mxu0 %v1022
  %1395 = vmatpush.bf16.msra.mxu0 %v1017
  %1396 = vmatpush.bf16.msra.mxu0 %v1012
  %1397 = vmatpush.bf16.msra.mxu0 %v1007
  %1398 = vmatpush.bf16.msra.mxu0 %v1002
  %1399 = vmatpush.bf16.msra.mxu0 %v997
  %1400 = vmatmul.bf16.gmra.mxu0 %v422
  %v1401 = vpop.f32.mrf.mxu0
  %v1402 = vadd.f32 %v1389, %v1401
  %v1403 = vpop.f32.mrf.mxu0
  %1404 = vdwg.mxu0
  %1405 = vmatpush.bf16.msra.mxu0 %v1072
  %1406 = vmatpush.bf16.msra.mxu0 %v1067
  %1407 = vmatpush.bf16.msra.mxu0 %v1062
  %1408 = vmatpush.bf16.msra.mxu0 %v1057
  %1409 = vmatpush.bf16.msra.mxu0 %v1052
  %1410 = vmatpush.bf16.msra.mxu0 %v1047
  %1411 = vmatpush.bf16.msra.mxu0 %v1042
  %1412 = vmatpush.bf16.msra.mxu0 %v1037
  %1413 = vmatmul.bf16.gmra.mxu0 %v430
  %v1414 = vpop.f32.mrf.mxu0
  %v1415 = vadd.f32 %v1402, %v1414
  %v1416 = vpop.f32.mrf.mxu0
  %1417 = vdwg.mxu0
  %1418 = vmatpush.bf16.msra.mxu0 %v1112
  %1419 = vmatpush.bf16.msra.mxu0 %v1107
  %1420 = vmatpush.bf16.msra.mxu0 %v1102
  %1421 = vmatpush.bf16.msra.mxu0 %v1097
  %1422 = vmatpush.bf16.msra.mxu0 %v1092
  %1423 = vmatpush.bf16.msra.mxu0 %v1087
  %1424 = vmatpush.bf16.msra.mxu0 %v1082
  %1425 = vmatpush.bf16.msra.mxu0 %v1077
  %1426 = vmatmul.bf16.gmra.mxu0 %v438
  %v1427 = vpop.f32.mrf.mxu0
  %v1428 = vadd.f32 %v1415, %v1427
  %v1429 = vpop.f32.mrf.mxu0
  %1430 = vdwg.mxu0
  %1431 = vmatpush.bf16.msra.mxu0 %v993
  %1432 = vmatpush.bf16.msra.mxu0 %v988
  %1433 = vmatpush.bf16.msra.mxu0 %v983
  %1434 = vmatpush.bf16.msra.mxu0 %v978
  %1435 = vmatpush.bf16.msra.mxu0 %v973
  %1436 = vmatpush.bf16.msra.mxu0 %v968
  %1437 = vmatpush.bf16.msra.mxu0 %v963
  %1438 = vmatpush.bf16.msra.mxu0 %v958
  %1439 = vmatmul.bf16.gmra.mxu0 %v414
  %v1440 = vpop.f32.mrf.mxu0
  %v1441 = vadd.f32 0.0, %v1440
  %v1442 = vpop.f32.mrf.mxu0
  %1443 = vdwg.mxu0
  %1444 = vmatpush.bf16.msra.mxu0 %v1033
  %1445 = vmatpush.bf16.msra.mxu0 %v1028
  %1446 = vmatpush.bf16.msra.mxu0 %v1023
  %1447 = vmatpush.bf16.msra.mxu0 %v1018
  %1448 = vmatpush.bf16.msra.mxu0 %v1013
  %1449 = vmatpush.bf16.msra.mxu0 %v1008
  %1450 = vmatpush.bf16.msra.mxu0 %v1003
  %1451 = vmatpush.bf16.msra.mxu0 %v998
  %1452 = vmatmul.bf16.gmra.mxu0 %v422
  %v1453 = vpop.f32.mrf.mxu0
  %v1454 = vadd.f32 %v1441, %v1453
  %v1455 = vpop.f32.mrf.mxu0
  %1456 = vdwg.mxu0
  %1457 = vmatpush.bf16.msra.mxu0 %v1073
  %1458 = vmatpush.bf16.msra.mxu0 %v1068
  %1459 = vmatpush.bf16.msra.mxu0 %v1063
  %1460 = vmatpush.bf16.msra.mxu0 %v1058
  %1461 = vmatpush.bf16.msra.mxu0 %v1053
  %1462 = vmatpush.bf16.msra.mxu0 %v1048
  %1463 = vmatpush.bf16.msra.mxu0 %v1043
  %1464 = vmatpush.bf16.msra.mxu0 %v1038
  %1465 = vmatmul.bf16.gmra.mxu0 %v430
  %v1466 = vpop.f32.mrf.mxu0
  %v1467 = vadd.f32 %v1454, %v1466
  %v1468 = vpop.f32.mrf.mxu0
  %1469 = vdwg.mxu0
  %1470 = vmatpush.bf16.msra.mxu0 %v1113
  %1471 = vmatpush.bf16.msra.mxu0 %v1108
  %1472 = vmatpush.bf16.msra.mxu0 %v1103
  %1473 = vmatpush.bf16.msra.mxu0 %v1098
  %1474 = vmatpush.bf16.msra.mxu0 %v1093
  %1475 = vmatpush.bf16.msra.mxu0 %v1088
  %1476 = vmatpush.bf16.msra.mxu0 %v1083
  %1477 = vmatpush.bf16.msra.mxu0 %v1078
  %1478 = vmatmul.bf16.gmra.mxu0 %v438
  %v1479 = vpop.f32.mrf.mxu0
  %v1480 = vadd.f32 %v1467, %v1479
  %v1481 = vpop.f32.mrf.mxu0
  %1482 = vdwg.mxu0
  %1483 = vmatpush.bf16.msra.mxu0 %v994
  %1484 = vmatpush.bf16.msra.mxu0 %v989
  %1485 = vmatpush.bf16.msra.mxu0 %v984
  %1486 = vmatpush.bf16.msra.mxu0 %v979
  %1487 = vmatpush.bf16.msra.mxu0 %v974
  %1488 = vmatpush.bf16.msra.mxu0 %v969
  %1489 = vmatpush.bf16.msra.mxu0 %v964
  %1490 = vmatpush.bf16.msra.mxu0 %v959
  %1491 = vmatmul.bf16.gmra.mxu0 %v414
  %v1492 = vpop.f32.mrf.mxu0
  %v1493 = vadd.f32 0.0, %v1492
  %v1494 = vpop.f32.mrf.mxu0
  %1495 = vdwg.mxu0
  %1496 = vmatpush.bf16.msra.mxu0 %v1034
  %1497 = vmatpush.bf16.msra.mxu0 %v1029
  %1498 = vmatpush.bf16.msra.mxu0 %v1024
  %1499 = vmatpush.bf16.msra.mxu0 %v1019
  %1500 = vmatpush.bf16.msra.mxu0 %v1014
  %1501 = vmatpush.bf16.msra.mxu0 %v1009
  %1502 = vmatpush.bf16.msra.mxu0 %v1004
  %1503 = vmatpush.bf16.msra.mxu0 %v999
  %1504 = vmatmul.bf16.gmra.mxu0 %v422
  %v1505 = vpop.f32.mrf.mxu0
  %v1506 = vadd.f32 %v1493, %v1505
  %v1507 = vpop.f32.mrf.mxu0
  %1508 = vdwg.mxu0
  %1509 = vmatpush.bf16.msra.mxu0 %v1074
  %1510 = vmatpush.bf16.msra.mxu0 %v1069
  %1511 = vmatpush.bf16.msra.mxu0 %v1064
  %1512 = vmatpush.bf16.msra.mxu0 %v1059
  %1513 = vmatpush.bf16.msra.mxu0 %v1054
  %1514 = vmatpush.bf16.msra.mxu0 %v1049
  %1515 = vmatpush.bf16.msra.mxu0 %v1044
  %1516 = vmatpush.bf16.msra.mxu0 %v1039
  %1517 = vmatmul.bf16.gmra.mxu0 %v430
  %v1518 = vpop.f32.mrf.mxu0
  %v1519 = vadd.f32 %v1506, %v1518
  %v1520 = vpop.f32.mrf.mxu0
  %1521 = vdwg.mxu0
  %1522 = vmatpush.bf16.msra.mxu0 %v1114
  %1523 = vmatpush.bf16.msra.mxu0 %v1109
  %1524 = vmatpush.bf16.msra.mxu0 %v1104
  %1525 = vmatpush.bf16.msra.mxu0 %v1099
  %1526 = vmatpush.bf16.msra.mxu0 %v1094
  %1527 = vmatpush.bf16.msra.mxu0 %v1089
  %1528 = vmatpush.bf16.msra.mxu0 %v1084
  %1529 = vmatpush.bf16.msra.mxu0 %v1079
  %1530 = vmatmul.bf16.gmra.mxu0 %v438
  %v1531 = vpop.f32.mrf.mxu0
  %v1532 = vadd.f32 %v1519, %v1531
  %v1533 = vpop.f32.mrf.mxu0
  %1534 = vdwg.mxu0
  %v1539 = vrot.slane %v19, 3
  %v1540 = vrot.slane %v20, 3
  %v1541 = vrot.slane %v21, 3
  %v1542 = vrot.slane %v22, 3
  %v1739 = vunpack.c.l.b16 %v23
  %v1740 = vunpack.c.h.b16 %v23
  %v1741 = vunpack.c.l.b16 %v24
  %v1742 = vunpack.c.h.b16 %v24
  %v1743 = vunpack.c.l.b16 %v25
  %v1744 = vunpack.c.l.b16 %v26
  %v1745 = vunpack.c.h.b16 %v26
  %v1746 = vunpack.c.l.b16 %v27
  %v1747 = vunpack.c.h.b16 %v27
  %v1748 = vunpack.c.l.b16 %v28
  %v1749 = vunpack.c.l.b16 %v29
  %v1750 = vunpack.c.h.b16 %v29
  %v1751 = vunpack.c.l.b16 %v30
  %v1752 = vunpack.c.h.b16 %v30
  %v1753 = vunpack.c.l.b16 %v31
  %v1754 = vunpack.c.l.b16 %v32
  %v1755 = vunpack.c.h.b16 %v32
  %v1756 = vunpack.c.l.b16 %v33
  %v1757 = vunpack.c.h.b16 %v33
  %v1758 = vunpack.c.l.b16 %v34
  %v1759 = vunpack.c.l.b16 %v35
  %v1760 = vunpack.c.h.b16 %v35
  %v1761 = vunpack.c.l.b16 %v36
  %v1762 = vunpack.c.h.b16 %v36
  %v1763 = vunpack.c.l.b16 %v37
  %v1764 = vunpack.c.l.b16 %v38
  %v1765 = vunpack.c.h.b16 %v38
  %v1766 = vunpack.c.l.b16 %v39
  %v1767 = vunpack.c.h.b16 %v39
  %v1768 = vunpack.c.l.b16 %v40
  %v1769 = vunpack.c.l.b16 %v41
  %v1770 = vunpack.c.h.b16 %v41
  %v1771 = vunpack.c.l.b16 %v42
  %v1772 = vunpack.c.h.b16 %v42
  %v1773 = vunpack.c.l.b16 %v43
  %v1774 = vunpack.c.l.b16 %v44
  %v1775 = vunpack.c.h.b16 %v44
  %v1776 = vunpack.c.l.b16 %v45
  %v1777 = vunpack.c.h.b16 %v45
  %v1778 = vunpack.c.l.b16 %v46
  %v1779 = vunpack.c.l.b16 %v47
  %v1780 = vunpack.c.h.b16 %v47
  %v1781 = vunpack.c.l.b16 %v48
  %v1782 = vunpack.c.h.b16 %v48
  %v1783 = vunpack.c.l.b16 %v49
  %v1784 = vunpack.c.l.b16 %v50
  %v1785 = vunpack.c.h.b16 %v50
  %v1786 = vunpack.c.l.b16 %v51
  %v1787 = vunpack.c.h.b16 %v51
  %v1788 = vunpack.c.l.b16 %v52
  %v1789 = vunpack.c.l.b16 %v53
  %v1790 = vunpack.c.h.b16 %v53
  %v1791 = vunpack.c.l.b16 %v54
  %v1792 = vunpack.c.h.b16 %v54
  %v1793 = vunpack.c.l.b16 %v55
  %v1794 = vunpack.c.l.b16 %v56
  %v1795 = vunpack.c.h.b16 %v56
  %v1796 = vunpack.c.l.b16 %v57
  %v1797 = vunpack.c.h.b16 %v57
  %v1798 = vunpack.c.l.b16 %v58
  %v1799 = vunpack.c.l.b16 %v59
  %v1800 = vunpack.c.h.b16 %v59
  %v1801 = vunpack.c.l.b16 %v60
  %v1802 = vunpack.c.h.b16 %v60
  %v1803 = vunpack.c.l.b16 %v61
  %v1804 = vunpack.c.l.b16 %v62
  %v1805 = vunpack.c.h.b16 %v62
  %v1806 = vunpack.c.l.b16 %v63
  %v1807 = vunpack.c.h.b16 %v63
  %v1808 = vunpack.c.l.b16 %v64
  %v1809 = vunpack.c.l.b16 %v65
  %v1810 = vunpack.c.h.b16 %v65
  %v1811 = vunpack.c.l.b16 %v66
  %v1812 = vunpack.c.h.b16 %v66
  %v1813 = vunpack.c.l.b16 %v67
  %v1814 = vunpack.c.l.b16 %v68
  %v1815 = vunpack.c.h.b16 %v68
  %v1816 = vunpack.c.l.b16 %v69
  %v1817 = vunpack.c.h.b16 %v69
  %v1818 = vunpack.c.l.b16 %v70
  %v1819 = vunpack.c.l.b16 %v71
  %v1820 = vunpack.c.h.b16 %v71
  %v1821 = vunpack.c.l.b16 %v72
  %v1822 = vunpack.c.h.b16 %v72
  %v1823 = vunpack.c.l.b16 %v73
  %v1824 = vunpack.c.l.b16 %v74
  %v1825 = vunpack.c.h.b16 %v74
  %v1826 = vunpack.c.l.b16 %v75
  %v1827 = vunpack.c.h.b16 %v75
  %v1828 = vunpack.c.l.b16 %v76
  %v1829 = vunpack.c.l.b16 %v77
  %v1830 = vunpack.c.h.b16 %v77
  %v1831 = vunpack.c.l.b16 %v78
  %v1832 = vunpack.c.h.b16 %v78
  %v1833 = vunpack.c.l.b16 %v79
  %v1834 = vunpack.c.l.b16 %v80
  %v1835 = vunpack.c.h.b16 %v80
  %v1836 = vunpack.c.l.b16 %v81
  %v1837 = vunpack.c.h.b16 %v81
  %v1838 = vunpack.c.l.b16 %v82
  %v1839 = vunpack.c.l.b16 %v83
  %v1840 = vunpack.c.h.b16 %v83
  %v1841 = vunpack.c.l.b16 %v84
  %v1842 = vunpack.c.h.b16 %v84
  %v1843 = vunpack.c.l.b16 %v85
  %v1844 = vunpack.c.l.b16 %v86
  %v1845 = vunpack.c.h.b16 %v86
  %v1846 = vunpack.c.l.b16 %v87
  %v1847 = vunpack.c.h.b16 %v87
  %v1848 = vunpack.c.l.b16 %v88
  %v1849 = vunpack.c.l.b16 %v89
  %v1850 = vunpack.c.h.b16 %v89
  %v1851 = vunpack.c.l.b16 %v90
  %v1852 = vunpack.c.h.b16 %v90
  %v1853 = vunpack.c.l.b16 %v91
  %v1854 = vunpack.c.l.b16 %v92
  %v1855 = vunpack.c.h.b16 %v92
  %v1856 = vunpack.c.l.b16 %v93
  %v1857 = vunpack.c.h.b16 %v93
  %v1858 = vunpack.c.l.b16 %v94
  %v1859 = vunpack.c.l.b16 %v95
  %v1860 = vunpack.c.h.b16 %v95
  %v1861 = vunpack.c.l.b16 %v96
  %v1862 = vunpack.c.h.b16 %v96
  %v1863 = vunpack.c.l.b16 %v97
  %v1864 = vunpack.c.l.b16 %v98
  %v1865 = vunpack.c.h.b16 %v98
  %v1866 = vunpack.c.l.b16 %v99
  %v1867 = vunpack.c.h.b16 %v99
  %v1868 = vunpack.c.l.b16 %v100
  %v1869 = vunpack.c.l.b16 %v101
  %v1870 = vunpack.c.h.b16 %v101
  %v1871 = vunpack.c.l.b16 %v102
  %v1872 = vunpack.c.h.b16 %v102
  %v1873 = vunpack.c.l.b16 %v103
  %v1874 = vunpack.c.l.b16 %v104
  %v1875 = vunpack.c.h.b16 %v104
  %v1876 = vunpack.c.l.b16 %v105
  %v1877 = vunpack.c.h.b16 %v105
  %v1878 = vunpack.c.l.b16 %v106
  %v1879 = vunpack.c.l.b16 %v107
  %v1880 = vunpack.c.h.b16 %v107
  %v1881 = vunpack.c.l.b16 %v108
  %v1882 = vunpack.c.h.b16 %v108
  %v1883 = vunpack.c.l.b16 %v109
  %v1884 = vunpack.c.l.b16 %v110
  %v1885 = vunpack.c.h.b16 %v110
  %v1886 = vunpack.c.l.b16 %v111
  %v1887 = vunpack.c.h.b16 %v111
  %v1888 = vunpack.c.l.b16 %v112
  %v1889 = vunpack.c.l.b16 %v113
  %v1890 = vunpack.c.h.b16 %v113
  %v1891 = vunpack.c.l.b16 %v114
  %v1892 = vunpack.c.h.b16 %v114
  %v1893 = vunpack.c.l.b16 %v115
  %v1894 = vunpack.c.l.b16 %v116
  %v1895 = vunpack.c.h.b16 %v116
  %v1896 = vunpack.c.l.b16 %v117
  %v1897 = vunpack.c.h.b16 %v117
  %v1898 = vunpack.c.l.b16 %v118
  %v1899 = vunpack.c.l.b16 %v119
  %v1900 = vunpack.c.h.b16 %v119
  %v1901 = vunpack.c.l.b16 %v120
  %v1902 = vunpack.c.h.b16 %v120
  %v1903 = vunpack.c.l.b16 %v121
  %v1904 = vunpack.c.l.b16 %v122
  %v1905 = vunpack.c.h.b16 %v122
  %v1906 = vunpack.c.l.b16 %v123
  %v1907 = vunpack.c.h.b16 %v123
  %v1908 = vunpack.c.l.b16 %v124
  %v1909 = vunpack.c.l.b16 %v125
  %v1910 = vunpack.c.h.b16 %v125
  %v1911 = vunpack.c.l.b16 %v126
  %v1912 = vunpack.c.h.b16 %v126
  %v1913 = vunpack.c.l.b16 %v127
  %v1914 = vunpack.c.l.b16 %v128
  %v1915 = vunpack.c.h.b16 %v128
  %v1916 = vunpack.c.l.b16 %v129
  %v1917 = vunpack.c.h.b16 %v129
  %v1918 = vunpack.c.l.b16 %v130
  %v1919 = vunpack.c.l.b16 %v131
  %v1920 = vunpack.c.h.b16 %v131
  %v1921 = vunpack.c.l.b16 %v132
  %v1922 = vunpack.c.h.b16 %v132
  %v1923 = vunpack.c.l.b16 %v133
  %v1924 = vunpack.c.l.b16 %v134
  %v1925 = vunpack.c.h.b16 %v134
  %v1926 = vunpack.c.l.b16 %v135
  %v1927 = vunpack.c.h.b16 %v135
  %v1928 = vunpack.c.l.b16 %v136
  %v1929 = vunpack.c.l.b16 %v137
  %v1930 = vunpack.c.h.b16 %v137
  %v1931 = vunpack.c.l.b16 %v138
  %v1932 = vunpack.c.h.b16 %v138
  %v1933 = vunpack.c.l.b16 %v139
  %v1934 = vunpack.c.l.b16 %v140
  %v1935 = vunpack.c.h.b16 %v140
  %v1936 = vunpack.c.l.b16 %v141
  %v1937 = vunpack.c.h.b16 %v141
  %v1938 = vunpack.c.l.b16 %v142
  %v1939 = vunpack.c.l.b16 %v143
  %v1940 = vunpack.c.h.b16 %v143
  %v1941 = vunpack.c.l.b16 %v144
  %v1942 = vunpack.c.h.b16 %v144
  %v1943 = vunpack.c.l.b16 %v145
  %v1944 = vunpack.c.l.b16 %v146
  %v1945 = vunpack.c.h.b16 %v146
  %v1946 = vunpack.c.l.b16 %v147
  %v1947 = vunpack.c.h.b16 %v147
  %v1948 = vunpack.c.l.b16 %v148
  %v1949 = vunpack.c.l.b16 %v149
  %v1950 = vunpack.c.h.b16 %v149
  %v1951 = vunpack.c.l.b16 %v150
  %v1952 = vunpack.c.h.b16 %v150
  %v1953 = vunpack.c.l.b16 %v151
  %v1954 = vunpack.c.l.b16 %v152
  %v1955 = vunpack.c.h.b16 %v152
  %v1956 = vunpack.c.l.b16 %v153
  %v1957 = vunpack.c.h.b16 %v153
  %v1958 = vunpack.c.l.b16 %v154
  %v1959 = vunpack.c.l.b16 %v155
  %v1960 = vunpack.c.h.b16 %v155
  %v1961 = vunpack.c.l.b16 %v156
  %v1962 = vunpack.c.h.b16 %v156
  %v1963 = vunpack.c.l.b16 %v157
  %v1964 = vunpack.c.l.b16 %v158
  %v1965 = vunpack.c.h.b16 %v158
  %v1966 = vunpack.c.l.b16 %v159
  %v1967 = vunpack.c.h.b16 %v159
  %v1968 = vunpack.c.l.b16 %v160
  %v1969 = vunpack.c.l.b16 %v161
  %v1970 = vunpack.c.h.b16 %v161
  %v1971 = vunpack.c.l.b16 %v162
  %v1972 = vunpack.c.h.b16 %v162
  %v1973 = vunpack.c.l.b16 %v163
  %v1974 = vunpack.c.l.b16 %v164
  %v1975 = vunpack.c.h.b16 %v164
  %v1976 = vunpack.c.l.b16 %v165
  %v1977 = vunpack.c.h.b16 %v165
  %v1978 = vunpack.c.l.b16 %v166
  %v1979 = vunpack.c.l.b16 %v167
  %v1980 = vunpack.c.h.b16 %v167
  %v1981 = vunpack.c.l.b16 %v168
  %v1982 = vunpack.c.h.b16 %v168
  %v1983 = vunpack.c.l.b16 %v169
  %v1984 = vunpack.c.l.b16 %v170
  %v1985 = vunpack.c.h.b16 %v170
  %v1986 = vunpack.c.l.b16 %v171
  %v1987 = vunpack.c.h.b16 %v171
  %v1988 = vunpack.c.l.b16 %v172
  %v1989 = vunpack.c.l.b16 %v173
  %v1990 = vunpack.c.h.b16 %v173
  %v1991 = vunpack.c.l.b16 %v174
  %v1992 = vunpack.c.h.b16 %v174
  %v1993 = vunpack.c.l.b16 %v175
  %v1994 = vunpack.c.l.b16 %v176
  %v1995 = vunpack.c.h.b16 %v176
  %v1996 = vunpack.c.l.b16 %v177
  %v1997 = vunpack.c.h.b16 %v177
  %v1998 = vunpack.c.l.b16 %v178
  %v1999 = vunpack.c.l.b16 %v179
  %v2000 = vunpack.c.h.b16 %v179
  %v2001 = vunpack.c.l.b16 %v180
  %v2002 = vunpack.c.h.b16 %v180
  %v2003 = vunpack.c.l.b16 %v181
  %v2004 = vunpack.c.l.b16 %v182
  %v2005 = vunpack.c.h.b16 %v182
  %v2006 = vunpack.c.l.b16 %v183
  %v2007 = vunpack.c.h.b16 %v183
  %v2008 = vunpack.c.l.b16 %v184
  %v2009 = vunpack.c.l.b16 %v185
  %v2010 = vunpack.c.h.b16 %v185
  %v2011 = vunpack.c.l.b16 %v186
  %v2012 = vunpack.c.h.b16 %v186
  %v2013 = vunpack.c.l.b16 %v187
  %v2014 = vunpack.c.l.b16 %v188
  %v2015 = vunpack.c.h.b16 %v188
  %v2016 = vunpack.c.l.b16 %v189
  %v2017 = vunpack.c.h.b16 %v189
  %v2018 = vunpack.c.l.b16 %v190
  %v2019 = vunpack.c.l.b16 %v191
  %v2020 = vunpack.c.h.b16 %v191
  %v2021 = vunpack.c.l.b16 %v192
  %v2022 = vunpack.c.h.b16 %v192
  %v2023 = vunpack.c.l.b16 %v193
  %v2024 = vunpack.c.l.b16 %v194
  %v2025 = vunpack.c.h.b16 %v194
  %v2026 = vunpack.c.l.b16 %v195
  %v2027 = vunpack.c.h.b16 %v195
  %v2028 = vunpack.c.l.b16 %v196
  %v2029 = vunpack.c.l.b16 %v197
  %v2030 = vunpack.c.h.b16 %v197
  %v2031 = vunpack.c.l.b16 %v198
  %v2032 = vunpack.c.h.b16 %v198
  %v2033 = vunpack.c.l.b16 %v199
  %v2034 = vunpack.c.l.b16 %v200
  %v2035 = vunpack.c.h.b16 %v200
  %v2036 = vunpack.c.l.b16 %v201
  %v2037 = vunpack.c.h.b16 %v201
  %v2038 = vunpack.c.l.b16 %v202
  %v2039 = vunpack.c.l.b16 %v203
  %v2040 = vunpack.c.h.b16 %v203
  %v2041 = vunpack.c.l.b16 %v204
  %v2042 = vunpack.c.h.b16 %v204
  %v2043 = vunpack.c.l.b16 %v205
  %v2044 = vunpack.c.l.b16 %v206
  %v2045 = vunpack.c.h.b16 %v206
  %v2046 = vunpack.c.l.b16 %v207
  %v2047 = vunpack.c.h.b16 %v207
  %v2048 = vunpack.c.l.b16 %v208
  %v2049 = vunpack.c.l.b16 %v209
  %v2050 = vunpack.c.h.b16 %v209
  %v2051 = vunpack.c.l.b16 %v210
  %v2052 = vunpack.c.h.b16 %v210
  %v2053 = vunpack.c.l.b16 %v211
  %v2054 = vunpack.c.l.b16 %v212
  %v2055 = vunpack.c.h.b16 %v212
  %v2056 = vunpack.c.l.b16 %v213
  %v2057 = vunpack.c.h.b16 %v213
  %v2058 = vunpack.c.l.b16 %v214
  %v2059 = vpack.c.b16 %v1744, %v1739
  %v2060 = vpack.c.b16 %v1745, %v1740
  %v2061 = vpack.c.b16 %v1746, %v1741
  %v2062 = vpack.c.b16 %v1747, %v1742
  %v2063 = vpack.c.b16 %v1748, %v1743
  %v2064 = vpack.c.b16 %v1754, %v1749
  %v2065 = vpack.c.b16 %v1755, %v1750
  %v2066 = vpack.c.b16 %v1756, %v1751
  %v2067 = vpack.c.b16 %v1757, %v1752
  %v2068 = vpack.c.b16 %v1758, %v1753
  %v2069 = vpack.c.b16 %v1764, %v1759
  %v2070 = vpack.c.b16 %v1765, %v1760
  %v2071 = vpack.c.b16 %v1766, %v1761
  %v2072 = vpack.c.b16 %v1767, %v1762
  %v2073 = vpack.c.b16 %v1768, %v1763
  %v2074 = vpack.c.b16 %v1774, %v1769
  %v2075 = vpack.c.b16 %v1775, %v1770
  %v2076 = vpack.c.b16 %v1776, %v1771
  %v2077 = vpack.c.b16 %v1777, %v1772
  %v2078 = vpack.c.b16 %v1778, %v1773
  %v2079 = vpack.c.b16 %v1784, %v1779
  %v2080 = vpack.c.b16 %v1785, %v1780
  %v2081 = vpack.c.b16 %v1786, %v1781
  %v2082 = vpack.c.b16 %v1787, %v1782
  %v2083 = vpack.c.b16 %v1788, %v1783
  %v2084 = vpack.c.b16 %v1794, %v1789
  %v2085 = vpack.c.b16 %v1795, %v1790
  %v2086 = vpack.c.b16 %v1796, %v1791
  %v2087 = vpack.c.b16 %v1797, %v1792
  %v2088 = vpack.c.b16 %v1798, %v1793
  %v2089 = vpack.c.b16 %v1804, %v1799
  %v2090 = vpack.c.b16 %v1805, %v1800
  %v2091 = vpack.c.b16 %v1806, %v1801
  %v2092 = vpack.c.b16 %v1807, %v1802
  %v2093 = vpack.c.b16 %v1808, %v1803
  %v2094 = vpack.c.b16 %v1814, %v1809
  %v2095 = vpack.c.b16 %v1815, %v1810
  %v2096 = vpack.c.b16 %v1816, %v1811
  %v2097 = vpack.c.b16 %v1817, %v1812
  %v2098 = vpack.c.b16 %v1818, %v1813
  %v2099 = vpack.c.b16 %v1824, %v1819
  %v2100 = vpack.c.b16 %v1825, %v1820
  %v2101 = vpack.c.b16 %v1826, %v1821
  %v2102 = vpack.c.b16 %v1827, %v1822
  %v2103 = vpack.c.b16 %v1828, %v1823
  %v2104 = vpack.c.b16 %v1834, %v1829
  %v2105 = vpack.c.b16 %v1835, %v1830
  %v2106 = vpack.c.b16 %v1836, %v1831
  %v2107 = vpack.c.b16 %v1837, %v1832
  %v2108 = vpack.c.b16 %v1838, %v1833
  %v2109 = vpack.c.b16 %v1844, %v1839
  %v2110 = vpack.c.b16 %v1845, %v1840
  %v2111 = vpack.c.b16 %v1846, %v1841
  %v2112 = vpack.c.b16 %v1847, %v1842
  %v2113 = vpack.c.b16 %v1848, %v1843
  %v2114 = vpack.c.b16 %v1854, %v1849
  %v2115 = vpack.c.b16 %v1855, %v1850
  %v2116 = vpack.c.b16 %v1856, %v1851
  %v2117 = vpack.c.b16 %v1857, %v1852
  %v2118 = vpack.c.b16 %v1858, %v1853
  %v2119 = vpack.c.b16 %v1864, %v1859
  %v2120 = vpack.c.b16 %v1865, %v1860
  %v2121 = vpack.c.b16 %v1866, %v1861
  %v2122 = vpack.c.b16 %v1867, %v1862
  %v2123 = vpack.c.b16 %v1868, %v1863
  %v2124 = vpack.c.b16 %v1874, %v1869
  %v2125 = vpack.c.b16 %v1875, %v1870
  %v2126 = vpack.c.b16 %v1876, %v1871
  %v2127 = vpack.c.b16 %v1877, %v1872
  %v2128 = vpack.c.b16 %v1878, %v1873
  %v2129 = vpack.c.b16 %v1884, %v1879
  %v2130 = vpack.c.b16 %v1885, %v1880
  %v2131 = vpack.c.b16 %v1886, %v1881
  %v2132 = vpack.c.b16 %v1887, %v1882
  %v2133 = vpack.c.b16 %v1888, %v1883
  %v2134 = vpack.c.b16 %v1894, %v1889
  %v2135 = vpack.c.b16 %v1895, %v1890
  %v2136 = vpack.c.b16 %v1896, %v1891
  %v2137 = vpack.c.b16 %v1897, %v1892
  %v2138 = vpack.c.b16 %v1898, %v1893
  %v2139 = vpack.c.b16 %v1904, %v1899
  %v2140 = vpack.c.b16 %v1905, %v1900
  %v2141 = vpack.c.b16 %v1906, %v1901
  %v2142 = vpack.c.b16 %v1907, %v1902
  %v2143 = vpack.c.b16 %v1908, %v1903
  %v2144 = vpack.c.b16 %v1914, %v1909
  %v2145 = vpack.c.b16 %v1915, %v1910
  %v2146 = vpack.c.b16 %v1916, %v1911
  %v2147 = vpack.c.b16 %v1917, %v1912
  %v2148 = vpack.c.b16 %v1918, %v1913
  %v2149 = vpack.c.b16 %v1924, %v1919
  %v2150 = vpack.c.b16 %v1925, %v1920
  %v2151 = vpack.c.b16 %v1926, %v1921
  %v2152 = vpack.c.b16 %v1927, %v1922
  %v2153 = vpack.c.b16 %v1928, %v1923
  %v2154 = vpack.c.b16 %v1934, %v1929
  %v2155 = vpack.c.b16 %v1935, %v1930
  %v2156 = vpack.c.b16 %v1936, %v1931
  %v2157 = vpack.c.b16 %v1937, %v1932
  %v2158 = vpack.c.b16 %v1938, %v1933
  %v2159 = vpack.c.b16 %v1944, %v1939
  %v2160 = vpack.c.b16 %v1945, %v1940
  %v2161 = vpack.c.b16 %v1946, %v1941
  %v2162 = vpack.c.b16 %v1947, %v1942
  %v2163 = vpack.c.b16 %v1948, %v1943
  %v2164 = vpack.c.b16 %v1954, %v1949
  %v2165 = vpack.c.b16 %v1955, %v1950
  %v2166 = vpack.c.b16 %v1956, %v1951
  %v2167 = vpack.c.b16 %v1957, %v1952
  %v2168 = vpack.c.b16 %v1958, %v1953
  %v2169 = vpack.c.b16 %v1964, %v1959
  %v2170 = vpack.c.b16 %v1965, %v1960
  %v2171 = vpack.c.b16 %v1966, %v1961
  %v2172 = vpack.c.b16 %v1967, %v1962
  %v2173 = vpack.c.b16 %v1968, %v1963
  %v2174 = vpack.c.b16 %v1974, %v1969
  %v2175 = vpack.c.b16 %v1975, %v1970
  %v2176 = vpack.c.b16 %v1976, %v1971
  %v2177 = vpack.c.b16 %v1977, %v1972
  %v2178 = vpack.c.b16 %v1978, %v1973
  %v2179 = vpack.c.b16 %v1984, %v1979
  %v2180 = vpack.c.b16 %v1985, %v1980
  %v2181 = vpack.c.b16 %v1986, %v1981
  %v2182 = vpack.c.b16 %v1987, %v1982
  %v2183 = vpack.c.b16 %v1988, %v1983
  %v2184 = vpack.c.b16 %v1994, %v1989
  %v2185 = vpack.c.b16 %v1995, %v1990
  %v2186 = vpack.c.b16 %v1996, %v1991
  %v2187 = vpack.c.b16 %v1997, %v1992
  %v2188 = vpack.c.b16 %v1998, %v1993
  %v2189 = vpack.c.b16 %v2004, %v1999
  %v2190 = vpack.c.b16 %v2005, %v2000
  %v2191 = vpack.c.b16 %v2006, %v2001
  %v2192 = vpack.c.b16 %v2007, %v2002
  %v2193 = vpack.c.b16 %v2008, %v2003
  %v2194 = vpack.c.b16 %v2014, %v2009
  %v2195 = vpack.c.b16 %v2015, %v2010
  %v2196 = vpack.c.b16 %v2016, %v2011
  %v2197 = vpack.c.b16 %v2017, %v2012
  %v2198 = vpack.c.b16 %v2018, %v2013
  %v2199 = vpack.c.b16 %v2024, %v2019
  %v2200 = vpack.c.b16 %v2025, %v2020
  %v2201 = vpack.c.b16 %v2026, %v2021
  %v2202 = vpack.c.b16 %v2027, %v2022
  %v2203 = vpack.c.b16 %v2028, %v2023
  %v2204 = vpack.c.b16 %v2034, %v2029
  %v2205 = vpack.c.b16 %v2035, %v2030
  %v2206 = vpack.c.b16 %v2036, %v2031
  %v2207 = vpack.c.b16 %v2037, %v2032
  %v2208 = vpack.c.b16 %v2038, %v2033
  %v2209 = vpack.c.b16 %v2044, %v2039
  %v2210 = vpack.c.b16 %v2045, %v2040
  %v2211 = vpack.c.b16 %v2046, %v2041
  %v2212 = vpack.c.b16 %v2047, %v2042
  %v2213 = vpack.c.b16 %v2048, %v2043
  %v2214 = vpack.c.b16 %v2054, %v2049
  %v2215 = vpack.c.b16 %v2055, %v2050
  %v2216 = vpack.c.b16 %v2056, %v2051
  %v2217 = vpack.c.b16 %v2057, %v2052
  %v2218 = vpack.c.b16 %v2058, %v2053
  %2379 = vmatpush.bf16.msra.mxu0 %v2094
  %2380 = vmatpush.bf16.msra.mxu0 %v2089
  %2381 = vmatpush.bf16.msra.mxu0 %v2084
  %2382 = vmatpush.bf16.msra.mxu0 %v2079
  %2383 = vmatpush.bf16.msra.mxu0 %v2074
  %2384 = vmatpush.bf16.msra.mxu0 %v2069
  %2385 = vmatpush.bf16.msra.mxu0 %v2064
  %2386 = vmatpush.bf16.msra.mxu0 %v2059
  %2387 = vmatmul.bf16.gmra.mxu0 %v1539
  %v2388 = vpop.f32.mrf.mxu0
  %v2389 = vadd.f32 %v1324, %v2388
  %v2390 = vpop.f32.mrf.mxu0
  %2391 = vdwg.mxu0
  %2392 = vmatpush.bf16.msra.mxu0 %v2134
  %2393 = vmatpush.bf16.msra.mxu0 %v2129
  %2394 = vmatpush.bf16.msra.mxu0 %v2124
  %2395 = vmatpush.bf16.msra.mxu0 %v2119
  %2396 = vmatpush.bf16.msra.mxu0 %v2114
  %2397 = vmatpush.bf16.msra.mxu0 %v2109
  %2398 = vmatpush.bf16.msra.mxu0 %v2104
  %2399 = vmatpush.bf16.msra.mxu0 %v2099
  %2400 = vmatmul.bf16.gmra.mxu0 %v1540
  %v2401 = vpop.f32.mrf.mxu0
  %v2402 = vadd.f32 %v2389, %v2401
  %v2403 = vpop.f32.mrf.mxu0
  %2404 = vdwg.mxu0
  %2405 = vmatpush.bf16.msra.mxu0 %v2174
  %2406 = vmatpush.bf16.msra.mxu0 %v2169
  %2407 = vmatpush.bf16.msra.mxu0 %v2164
  %2408 = vmatpush.bf16.msra.mxu0 %v2159
  %2409 = vmatpush.bf16.msra.mxu0 %v2154
  %2410 = vmatpush.bf16.msra.mxu0 %v2149
  %2411 = vmatpush.bf16.msra.mxu0 %v2144
  %2412 = vmatpush.bf16.msra.mxu0 %v2139
  %2413 = vmatmul.bf16.gmra.mxu0 %v1541
  %v2414 = vpop.f32.mrf.mxu0
  %v2415 = vadd.f32 %v2402, %v2414
  %v2416 = vpop.f32.mrf.mxu0
  %2417 = vdwg.mxu0
  %2418 = vmatpush.bf16.msra.mxu0 %v2214
  %2419 = vmatpush.bf16.msra.mxu0 %v2209
  %2420 = vmatpush.bf16.msra.mxu0 %v2204
  %2421 = vmatpush.bf16.msra.mxu0 %v2199
  %2422 = vmatpush.bf16.msra.mxu0 %v2194
  %2423 = vmatpush.bf16.msra.mxu0 %v2189
  %2424 = vmatpush.bf16.msra.mxu0 %v2184
  %2425 = vmatpush.bf16.msra.mxu0 %v2179
  %2426 = vmatmul.bf16.gmra.mxu0 %v1542
  %v2427 = vpop.f32.mrf.mxu0
  %v2428 = vadd.f32 %v2415, %v2427
  %v2429 = vpop.f32.mrf.mxu0
  %2430 = vdwg.mxu0
  %2431 = vmatpush.bf16.msra.mxu0 %v2095
  %2432 = vmatpush.bf16.msra.mxu0 %v2090
  %2433 = vmatpush.bf16.msra.mxu0 %v2085
  %2434 = vmatpush.bf16.msra.mxu0 %v2080
  %2435 = vmatpush.bf16.msra.mxu0 %v2075
  %2436 = vmatpush.bf16.msra.mxu0 %v2070
  %2437 = vmatpush.bf16.msra.mxu0 %v2065
  %2438 = vmatpush.bf16.msra.mxu0 %v2060
  %2439 = vmatmul.bf16.gmra.mxu0 %v1539
  %v2440 = vpop.f32.mrf.mxu0
  %v2441 = vadd.f32 %v1376, %v2440
  %v2442 = vpop.f32.mrf.mxu0
  %2443 = vdwg.mxu0
  %2444 = vmatpush.bf16.msra.mxu0 %v2135
  %2445 = vmatpush.bf16.msra.mxu0 %v2130
  %2446 = vmatpush.bf16.msra.mxu0 %v2125
  %2447 = vmatpush.bf16.msra.mxu0 %v2120
  %2448 = vmatpush.bf16.msra.mxu0 %v2115
  %2449 = vmatpush.bf16.msra.mxu0 %v2110
  %2450 = vmatpush.bf16.msra.mxu0 %v2105
  %2451 = vmatpush.bf16.msra.mxu0 %v2100
  %2452 = vmatmul.bf16.gmra.mxu0 %v1540
  %v2453 = vpop.f32.mrf.mxu0
  %v2454 = vadd.f32 %v2441, %v2453
  %v2455 = vpop.f32.mrf.mxu0
  %2456 = vdwg.mxu0
  %2457 = vmatpush.bf16.msra.mxu0 %v2175
  %2458 = vmatpush.bf16.msra.mxu0 %v2170
  %2459 = vmatpush.bf16.msra.mxu0 %v2165
  %2460 = vmatpush.bf16.msra.mxu0 %v2160
  %2461 = vmatpush.bf16.msra.mxu0 %v2155
  %2462 = vmatpush.bf16.msra.mxu0 %v2150
  %2463 = vmatpush.bf16.msra.mxu0 %v2145
  %2464 = vmatpush.bf16.msra.mxu0 %v2140
  %2465 = vmatmul.bf16.gmra.mxu0 %v1541
  %v2466 = vpop.f32.mrf.mxu0
  %v2467 = vadd.f32 %v2454, %v2466
  %v2468 = vpop.f32.mrf.mxu0
  %2469 = vdwg.mxu0
  %2470 = vmatpush.bf16.msra.mxu0 %v2215
  %2471 = vmatpush.bf16.msra.mxu0 %v2210
  %2472 = vmatpush.bf16.msra.mxu0 %v2205
  %2473 = vmatpush.bf16.msra.mxu0 %v2200
  %2474 = vmatpush.bf16.msra.mxu0 %v2195
  %2475 = vmatpush.bf16.msra.mxu0 %v2190
  %2476 = vmatpush.bf16.msra.mxu0 %v2185
  %2477 = vmatpush.bf16.msra.mxu0 %v2180
  %2478 = vmatmul.bf16.gmra.mxu0 %v1542
  %v2479 = vpop.f32.mrf.mxu0
  %v2480 = vadd.f32 %v2467, %v2479
  %v2481 = vpop.f32.mrf.mxu0
  %2482 = vdwg.mxu0
  %2483 = vmatpush.bf16.msra.mxu0 %v2096
  %2484 = vmatpush.bf16.msra.mxu0 %v2091
  %2485 = vmatpush.bf16.msra.mxu0 %v2086
  %2486 = vmatpush.bf16.msra.mxu0 %v2081
  %2487 = vmatpush.bf16.msra.mxu0 %v2076
  %2488 = vmatpush.bf16.msra.mxu0 %v2071
  %2489 = vmatpush.bf16.msra.mxu0 %v2066
  %2490 = vmatpush.bf16.msra.mxu0 %v2061
  %2491 = vmatmul.bf16.gmra.mxu0 %v1539
  %v2492 = vpop.f32.mrf.mxu0
  %v2493 = vadd.f32 %v1428, %v2492
  %v2494 = vpop.f32.mrf.mxu0
  %2495 = vdwg.mxu0
  %2496 = vmatpush.bf16.msra.mxu0 %v2136
  %2497 = vmatpush.bf16.msra.mxu0 %v2131
  %2498 = vmatpush.bf16.msra.mxu0 %v2126
  %2499 = vmatpush.bf16.msra.mxu0 %v2121
  %2500 = vmatpush.bf16.msra.mxu0 %v2116
  %2501 = vmatpush.bf16.msra.mxu0 %v2111
  %2502 = vmatpush.bf16.msra.mxu0 %v2106
  %2503 = vmatpush.bf16.msra.mxu0 %v2101
  %2504 = vmatmul.bf16.gmra.mxu0 %v1540
  %v2505 = vpop.f32.mrf.mxu0
  %v2506 = vadd.f32 %v2493, %v2505
  %v2507 = vpop.f32.mrf.mxu0
  %2508 = vdwg.mxu0
  %2509 = vmatpush.bf16.msra.mxu0 %v2176
  %2510 = vmatpush.bf16.msra.mxu0 %v2171
  %2511 = vmatpush.bf16.msra.mxu0 %v2166
  %2512 = vmatpush.bf16.msra.mxu0 %v2161
  %2513 = vmatpush.bf16.msra.mxu0 %v2156
  %2514 = vmatpush.bf16.msra.mxu0 %v2151
  %2515 = vmatpush.bf16.msra.mxu0 %v2146
  %2516 = vmatpush.bf16.msra.mxu0 %v2141
  %2517 = vmatmul.bf16.gmra.mxu0 %v1541
  %v2518 = vpop.f32.mrf.mxu0
  %v2519 = vadd.f32 %v2506, %v2518
  %v2520 = vpop.f32.mrf.mxu0
  %2521 = vdwg.mxu0
  %2522 = vmatpush.bf16.msra.mxu0 %v2216
  %2523 = vmatpush.bf16.msra.mxu0 %v2211
  %2524 = vmatpush.bf16.msra.mxu0 %v2206
  %2525 = vmatpush.bf16.msra.mxu0 %v2201
  %2526 = vmatpush.bf16.msra.mxu0 %v2196
  %2527 = vmatpush.bf16.msra.mxu0 %v2191
  %2528 = vmatpush.bf16.msra.mxu0 %v2186
  %2529 = vmatpush.bf16.msra.mxu0 %v2181
  %2530 = vmatmul.bf16.gmra.mxu0 %v1542
  %v2531 = vpop.f32.mrf.mxu0
  %v2532 = vadd.f32 %v2519, %v2531
  %v2533 = vpop.f32.mrf.mxu0
  %2534 = vdwg.mxu0
  %2535 = vmatpush.bf16.msra.mxu0 %v2097
  %2536 = vmatpush.bf16.msra.mxu0 %v2092
  %2537 = vmatpush.bf16.msra.mxu0 %v2087
  %2538 = vmatpush.bf16.msra.mxu0 %v2082
  %2539 = vmatpush.bf16.msra.mxu0 %v2077
  %2540 = vmatpush.bf16.msra.mxu0 %v2072
  %2541 = vmatpush.bf16.msra.mxu0 %v2067
  %2542 = vmatpush.bf16.msra.mxu0 %v2062
  %2543 = vmatmul.bf16.gmra.mxu0 %v1539
  %v2544 = vpop.f32.mrf.mxu0
  %v2545 = vadd.f32 %v1480, %v2544
  %v2546 = vpop.f32.mrf.mxu0
  %2547 = vdwg.mxu0
  %2548 = vmatpush.bf16.msra.mxu0 %v2137
  %2549 = vmatpush.bf16.msra.mxu0 %v2132
  %2550 = vmatpush.bf16.msra.mxu0 %v2127
  %2551 = vmatpush.bf16.msra.mxu0 %v2122
  %2552 = vmatpush.bf16.msra.mxu0 %v2117
  %2553 = vmatpush.bf16.msra.mxu0 %v2112
  %2554 = vmatpush.bf16.msra.mxu0 %v2107
  %2555 = vmatpush.bf16.msra.mxu0 %v2102
  %2556 = vmatmul.bf16.gmra.mxu0 %v1540
  %v2557 = vpop.f32.mrf.mxu0
  %v2558 = vadd.f32 %v2545, %v2557
  %v2559 = vpop.f32.mrf.mxu0
  %2560 = vdwg.mxu0
  %2561 = vmatpush.bf16.msra.mxu0 %v2177
  %2562 = vmatpush.bf16.msra.mxu0 %v2172
  %2563 = vmatpush.bf16.msra.mxu0 %v2167
  %2564 = vmatpush.bf16.msra.mxu0 %v2162
  %2565 = vmatpush.bf16.msra.mxu0 %v2157
  %2566 = vmatpush.bf16.msra.mxu0 %v2152
  %2567 = vmatpush.bf16.msra.mxu0 %v2147
  %2568 = vmatpush.bf16.msra.mxu0 %v2142
  %2569 = vmatmul.bf16.gmra.mxu0 %v1541
  %v2570 = vpop.f32.mrf.mxu0
  %v2571 = vadd.f32 %v2558, %v2570
  %v2572 = vpop.f32.mrf.mxu0
  %2573 = vdwg.mxu0
  %2574 = vmatpush.bf16.msra.mxu0 %v2217
  %2575 = vmatpush.bf16.msra.mxu0 %v2212
  %2576 = vmatpush.bf16.msra.mxu0 %v2207
  %2577 = vmatpush.bf16.msra.mxu0 %v2202
  %2578 = vmatpush.bf16.msra.mxu0 %v2197
  %2579 = vmatpush.bf16.msra.mxu0 %v2192
  %2580 = vmatpush.bf16.msra.mxu0 %v2187
  %2581 = vmatpush.bf16.msra.mxu0 %v2182
  %2582 = vmatmul.bf16.gmra.mxu0 %v1542
  %v2583 = vpop.f32.mrf.mxu0
  %v2584 = vadd.f32 %v2571, %v2583
  %v2585 = vpop.f32.mrf.mxu0
  %2586 = vdwg.mxu0
  %2587 = vmatpush.bf16.msra.mxu0 %v2098
  %2588 = vmatpush.bf16.msra.mxu0 %v2093
  %2589 = vmatpush.bf16.msra.mxu0 %v2088
  %2590 = vmatpush.bf16.msra.mxu0 %v2083
  %2591 = vmatpush.bf16.msra.mxu0 %v2078
  %2592 = vmatpush.bf16.msra.mxu0 %v2073
  %2593 = vmatpush.bf16.msra.mxu0 %v2068
  %2594 = vmatpush.bf16.msra.mxu0 %v2063
  %2595 = vmatmul.bf16.gmra.mxu0 %v1539
  %v2596 = vpop.f32.mrf.mxu0
  %v2597 = vadd.f32 %v1532, %v2596
  %v2598 = vpop.f32.mrf.mxu0
  %2599 = vdwg.mxu0
  %2600 = vmatpush.bf16.msra.mxu0 %v2138
  %2601 = vmatpush.bf16.msra.mxu0 %v2133
  %2602 = vmatpush.bf16.msra.mxu0 %v2128
  %2603 = vmatpush.bf16.msra.mxu0 %v2123
  %2604 = vmatpush.bf16.msra.mxu0 %v2118
  %2605 = vmatpush.bf16.msra.mxu0 %v2113
  %2606 = vmatpush.bf16.msra.mxu0 %v2108
  %2607 = vmatpush.bf16.msra.mxu0 %v2103
  %2608 = vmatmul.bf16.gmra.mxu0 %v1540
  %v2609 = vpop.f32.mrf.mxu0
  %v2610 = vadd.f32 %v2597, %v2609
  %v2611 = vpop.f32.mrf.mxu0
  %2612 = vdwg.mxu0
  %2613 = vmatpush.bf16.msra.mxu0 %v2178
  %2614 = vmatpush.bf16.msra.mxu0 %v2173
  %2615 = vmatpush.bf16.msra.mxu0 %v2168
  %2616 = vmatpush.bf16.msra.mxu0 %v2163
  %2617 = vmatpush.bf16.msra.mxu0 %v2158
  %2618 = vmatpush.bf16.msra.mxu0 %v2153
  %2619 = vmatpush.bf16.msra.mxu0 %v2148
  %2620 = vmatpush.bf16.msra.mxu0 %v2143
  %2621 = vmatmul.bf16.gmra.mxu0 %v1541
  %v2622 = vpop.f32.mrf.mxu0
  %v2623 = vadd.f32 %v2610, %v2622
  %v2624 = vpop.f32.mrf.mxu0
  %2625 = vdwg.mxu0
  %2626 = vmatpush.bf16.msra.mxu0 %v2218
  %2627 = vmatpush.bf16.msra.mxu0 %v2213
  %2628 = vmatpush.bf16.msra.mxu0 %v2208
  %2629 = vmatpush.bf16.msra.mxu0 %v2203
  %2630 = vmatpush.bf16.msra.mxu0 %v2198
  %2631 = vmatpush.bf16.msra.mxu0 %v2193
  %2632 = vmatpush.bf16.msra.mxu0 %v2188
  %2633 = vmatpush.bf16.msra.mxu0 %v2183
  %2634 = vmatmul.bf16.gmra.mxu0 %v1542
  %v2635 = vpop.f32.mrf.mxu0
  %v2636 = vadd.f32 %v2623, %v2635
  %v2637 = vpop.f32.mrf.mxu0
  %2638 = vdwg.mxu0
  %v2639 = vld [vmem:[%s1 + $0xa00] sm:$0xff]
  %v2640 = vld [vmem:[%s1 + $0xa08] sm:$0xff]
  %v2641 = vld [vmem:[%s1 + $0xa10] sm:$0xf]
  %v2642 = vld [vmem:[%s1 + $0xa14] sm:$0xff]
  %v2643 = vld [vmem:[%s1 + $0xa1c] sm:$0xff]
  %v2644 = vld [vmem:[%s1 + $0xa24] sm:$0xf]
  %v2645 = vld [vmem:[%s1 + $0xa28] sm:$0xff]
  %v2646 = vld [vmem:[%s1 + $0xa30] sm:$0xff]
  %v2647 = vld [vmem:[%s1 + $0xa38] sm:$0xf]
  %v2648 = vld [vmem:[%s1 + $0xa3c] sm:$0xff]
  %v2649 = vld [vmem:[%s1 + $0xa44] sm:$0xff]
  %v2650 = vld [vmem:[%s1 + $0xa4c] sm:$0xf]
  %v2651 = vld [vmem:[%s1 + $0xa50] sm:$0xff]
  %v2652 = vld [vmem:[%s1 + $0xa58] sm:$0xff]
  %v2653 = vld [vmem:[%s1 + $0xa60] sm:$0xf]
  %v2654 = vld [vmem:[%s1 + $0xa64] sm:$0xff]
  %v2655 = vld [vmem:[%s1 + $0xa6c] sm:$0xff]
  %v2656 = vld [vmem:[%s1 + $0xa74] sm:$0xf]
  %v2657 = vld [vmem:[%s1 + $0xa78] sm:$0xff]
  %v2658 = vld [vmem:[%s1 + $0xa80] sm:$0xff]
  %v2659 = vld [vmem:[%s1 + $0xa88] sm:$0xf]
  %v2660 = vld [vmem:[%s1 + $0xa8c] sm:$0xff]
  %v2661 = vld [vmem:[%s1 + $0xa94] sm:$0xff]
  %v2662 = vld [vmem:[%s1 + $0xa9c] sm:$0xf]
  %v2663 = vld [vmem:[%s1 + $0xaa0] sm:$0xff]
  %v2664 = vld [vmem:[%s1 + $0xaa8] sm:$0xff]
  %v2665 = vld [vmem:[%s1 + $0xab0] sm:$0xf]
  %v2666 = vld [vmem:[%s1 + $0xab4] sm:$0xff]
  %v2667 = vld [vmem:[%s1 + $0xabc] sm:$0xff]
  %v2668 = vld [vmem:[%s1 + $0xac4] sm:$0xf]
  %v2669 = vld [vmem:[%s1 + $0xac8] sm:$0xff]
  %v2670 = vld [vmem:[%s1 + $0xad0] sm:$0xff]
  %v2671 = vld [vmem:[%s1 + $0xad8] sm:$0xf]
  %v2672 = vld [vmem:[%s1 + $0xadc] sm:$0xff]
  %v2673 = vld [vmem:[%s1 + $0xae4] sm:$0xff]
  %v2674 = vld [vmem:[%s1 + $0xaec] sm:$0xf]
  %v2675 = vld [vmem:[%s1 + $0xaf0] sm:$0xff]
  %v2676 = vld [vmem:[%s1 + $0xaf8] sm:$0xff]
  %v2677 = vld [vmem:[%s1 + $0xb00] sm:$0xf]
  %v2678 = vld [vmem:[%s1 + $0xb04] sm:$0xff]
  %v2679 = vld [vmem:[%s1 + $0xb0c] sm:$0xff]
  %v2680 = vld [vmem:[%s1 + $0xb14] sm:$0xf]
  %v2681 = vld [vmem:[%s1 + $0xb18] sm:$0xff]
  %v2682 = vld [vmem:[%s1 + $0xb20] sm:$0xff]
  %v2683 = vld [vmem:[%s1 + $0xb28] sm:$0xf]
  %v2684 = vld [vmem:[%s1 + $0xb2c] sm:$0xff]
  %v2685 = vld [vmem:[%s1 + $0xb34] sm:$0xff]
  %v2686 = vld [vmem:[%s1 + $0xb3c] sm:$0xf]
  %v2687 = vld [vmem:[%s1 + $0xb40] sm:$0xff]
  %v2688 = vld [vmem:[%s1 + $0xb48] sm:$0xff]
  %v2689 = vld [vmem:[%s1 + $0xb50] sm:$0xf]
  %v2690 = vld [vmem:[%s1 + $0xb54] sm:$0xff]
  %v2691 = vld [vmem:[%s1 + $0xb5c] sm:$0xff]
  %v2692 = vld [vmem:[%s1 + $0xb64] sm:$0xf]
  %v2693 = vld [vmem:[%s1 + $0xb68] sm:$0xff]
  %v2694 = vld [vmem:[%s1 + $0xb70] sm:$0xff]
  %v2695 = vld [vmem:[%s1 + $0xb78] sm:$0xf]
  %v2696 = vld [vmem:[%s1 + $0xb7c] sm:$0xff]
  %v2697 = vld [vmem:[%s1 + $0xb84] sm:$0xff]
  %v2698 = vld [vmem:[%s1 + $0xb8c] sm:$0xf]
  %v2699 = vld [vmem:[%s1 + $0xb90] sm:$0xff]
  %v2700 = vld [vmem:[%s1 + $0xb98] sm:$0xff]
  %v2701 = vld [vmem:[%s1 + $0xba0] sm:$0xf]
  %v2702 = vld [vmem:[%s1 + $0xba4] sm:$0xff]
  %v2703 = vld [vmem:[%s1 + $0xbac] sm:$0xff]
  %v2704 = vld [vmem:[%s1 + $0xbb4] sm:$0xf]
  %v2705 = vld [vmem:[%s1 + $0xbb8] sm:$0xff]
  %v2706 = vld [vmem:[%s1 + $0xbc0] sm:$0xff]
  %v2707 = vld [vmem:[%s1 + $0xbc8] sm:$0xf]
  %v2708 = vld [vmem:[%s1 + $0xbcc] sm:$0xff]
  %v2709 = vld [vmem:[%s1 + $0xbd4] sm:$0xff]
  %v2710 = vld [vmem:[%s1 + $0xbdc] sm:$0xf]
  %v2711 = vld [vmem:[%s1 + $0xbe0] sm:$0xff]
  %v2712 = vld [vmem:[%s1 + $0xbe8] sm:$0xff]
  %v2713 = vld [vmem:[%s1 + $0xbf0] sm:$0xf]
  %v2714 = vld [vmem:[%s1 + $0xbf4] sm:$0xff]
  %v2715 = vld [vmem:[%s1 + $0xbfc] sm:$0xff]
  %v2716 = vld [vmem:[%s1 + $0xc04] sm:$0xf]
  %v2717 = vld [vmem:[%s1 + $0xc08] sm:$0xff]
  %v2718 = vld [vmem:[%s1 + $0xc10] sm:$0xff]
  %v2719 = vld [vmem:[%s1 + $0xc18] sm:$0xf]
  %v2720 = vld [vmem:[%s1 + $0xc1c] sm:$0xff]
  %v2721 = vld [vmem:[%s1 + $0xc24] sm:$0xff]
  %v2722 = vld [vmem:[%s1 + $0xc2c] sm:$0xf]
  %v2723 = vld [vmem:[%s1 + $0xc30] sm:$0xff]
  %v2724 = vld [vmem:[%s1 + $0xc38] sm:$0xff]
  %v2725 = vld [vmem:[%s1 + $0xc40] sm:$0xf]
  %v2726 = vld [vmem:[%s1 + $0xc44] sm:$0xff]
  %v2727 = vld [vmem:[%s1 + $0xc4c] sm:$0xff]
  %v2728 = vld [vmem:[%s1 + $0xc54] sm:$0xf]
  %v2729 = vld [vmem:[%s1 + $0xc58] sm:$0xff]
  %v2730 = vld [vmem:[%s1 + $0xc60] sm:$0xff]
  %v2731 = vld [vmem:[%s1 + $0xc68] sm:$0xf]
  %v2732 = vld [vmem:[%s1 + $0xc6c] sm:$0xff]
  %v2733 = vld [vmem:[%s1 + $0xc74] sm:$0xff]
  %v2734 = vld [vmem:[%s1 + $0xc7c] sm:$0xf]
  %v2735 = vld [vmem:[%s1 + $0xc80] sm:$0xff]
  %v2736 = vld [vmem:[%s1 + $0xc88] sm:$0xff]
  %v2737 = vld [vmem:[%s1 + $0xc90] sm:$0xf]
  %v2738 = vld [vmem:[%s1 + $0xc94] sm:$0xff]
  %v2739 = vld [vmem:[%s1 + $0xc9c] sm:$0xff]
  %v2740 = vld [vmem:[%s1 + $0xca4] sm:$0xf]
  %v2741 = vld [vmem:[%s1 + $0xca8] sm:$0xff]
  %v2742 = vld [vmem:[%s1 + $0xcb0] sm:$0xff]
  %v2743 = vld [vmem:[%s1 + $0xcb8] sm:$0xf]
  %v2744 = vld [vmem:[%s1 + $0xcbc] sm:$0xff]
  %v2745 = vld [vmem:[%s1 + $0xcc4] sm:$0xff]
  %v2746 = vld [vmem:[%s1 + $0xccc] sm:$0xf]
  %v2747 = vld [vmem:[%s1 + $0xcd0] sm:$0xff]
  %v2748 = vld [vmem:[%s1 + $0xcd8] sm:$0xff]
  %v2749 = vld [vmem:[%s1 + $0xce0] sm:$0xf]
  %v2750 = vld [vmem:[%s1 + $0xce4] sm:$0xff]
  %v2751 = vld [vmem:[%s1 + $0xcec] sm:$0xff]
  %v2752 = vld [vmem:[%s1 + $0xcf4] sm:$0xf]
  %v2753 = vld [vmem:[%s1 + $0xcf8] sm:$0xff]
  %v2754 = vld [vmem:[%s1 + $0xd00] sm:$0xff]
  %v2755 = vld [vmem:[%s1 + $0xd08] sm:$0xf]
  %v2756 = vld [vmem:[%s1 + $0xd0c] sm:$0xff]
  %v2757 = vld [vmem:[%s1 + $0xd14] sm:$0xff]
  %v2758 = vld [vmem:[%s1 + $0xd1c] sm:$0xf]
  %v2759 = vld [vmem:[%s1 + $0xd20] sm:$0xff]
  %v2760 = vld [vmem:[%s1 + $0xd28] sm:$0xff]
  %v2761 = vld [vmem:[%s1 + $0xd30] sm:$0xf]
  %v2762 = vld [vmem:[%s1 + $0xd34] sm:$0xff]
  %v2763 = vld [vmem:[%s1 + $0xd3c] sm:$0xff]
  %v2764 = vld [vmem:[%s1 + $0xd44] sm:$0xf]
  %v2765 = vld [vmem:[%s1 + $0xd48] sm:$0xff]
  %v2766 = vld [vmem:[%s1 + $0xd50] sm:$0xff]
  %v2767 = vld [vmem:[%s1 + $0xd58] sm:$0xf]
  %v2768 = vld [vmem:[%s1 + $0xd5c] sm:$0xff]
  %v2769 = vld [vmem:[%s1 + $0xd64] sm:$0xff]
  %v2770 = vld [vmem:[%s1 + $0xd6c] sm:$0xf]
  %v2771 = vld [vmem:[%s1 + $0xd70] sm:$0xff]
  %v2772 = vld [vmem:[%s1 + $0xd78] sm:$0xff]
  %v2773 = vld [vmem:[%s1 + $0xd80] sm:$0xf]
  %v2774 = vld [vmem:[%s1 + $0xd84] sm:$0xff]
  %v2775 = vld [vmem:[%s1 + $0xd8c] sm:$0xff]
  %v2776 = vld [vmem:[%s1 + $0xd94] sm:$0xf]
  %v2777 = vld [vmem:[%s1 + $0xd98] sm:$0xff]
  %v2778 = vld [vmem:[%s1 + $0xda0] sm:$0xff]
  %v2779 = vld [vmem:[%s1 + $0xda8] sm:$0xf]
  %v2780 = vld [vmem:[%s1 + $0xdac] sm:$0xff]
  %v2781 = vld [vmem:[%s1 + $0xdb4] sm:$0xff]
  %v2782 = vld [vmem:[%s1 + $0xdbc] sm:$0xf]
  %v2783 = vld [vmem:[%s1 + $0xdc0] sm:$0xff]
  %v2784 = vld [vmem:[%s1 + $0xdc8] sm:$0xff]
  %v2785 = vld [vmem:[%s1 + $0xdd0] sm:$0xf]
  %v2786 = vld [vmem:[%s1 + $0xdd4] sm:$0xff]
  %v2787 = vld [vmem:[%s1 + $0xddc] sm:$0xff]
  %v2788 = vld [vmem:[%s1 + $0xde4] sm:$0xf]
  %v2789 = vld [vmem:[%s1 + $0xde8] sm:$0xff]
  %v2790 = vld [vmem:[%s1 + $0xdf0] sm:$0xff]
  %v2791 = vld [vmem:[%s1 + $0xdf8] sm:$0xf]
  %v2792 = vld [vmem:[%s1 + $0xdfc] sm:$0xff]
  %v2793 = vld [vmem:[%s1 + $0xe04] sm:$0xff]
  %v2794 = vld [vmem:[%s1 + $0xe0c] sm:$0xf]
  %v2795 = vld [vmem:[%s1 + $0xe10] sm:$0xff]
  %v2796 = vld [vmem:[%s1 + $0xe18] sm:$0xff]
  %v2797 = vld [vmem:[%s1 + $0xe20] sm:$0xf]
  %v2798 = vld [vmem:[%s1 + $0xe24] sm:$0xff]
  %v2799 = vld [vmem:[%s1 + $0xe2c] sm:$0xff]
  %v2800 = vld [vmem:[%s1 + $0xe34] sm:$0xf]
  %v2801 = vld [vmem:[%s1 + $0xe38] sm:$0xff]
  %v2802 = vld [vmem:[%s1 + $0xe40] sm:$0xff]
  %v2803 = vld [vmem:[%s1 + $0xe48] sm:$0xf]
  %v2804 = vld [vmem:[%s1 + $0xe4c] sm:$0xff]
  %v2805 = vld [vmem:[%s1 + $0xe54] sm:$0xff]
  %v2806 = vld [vmem:[%s1 + $0xe5c] sm:$0xf]
  %v2807 = vld [vmem:[%s1 + $0xe60] sm:$0xff]
  %v2808 = vld [vmem:[%s1 + $0xe68] sm:$0xff]
  %v2809 = vld [vmem:[%s1 + $0xe70] sm:$0xf]
  %v2810 = vld [vmem:[%s1 + $0xe74] sm:$0xff]
  %v2811 = vld [vmem:[%s1 + $0xe7c] sm:$0xff]
  %v2812 = vld [vmem:[%s1 + $0xe84] sm:$0xf]
  %v2813 = vld [vmem:[%s1 + $0xe88] sm:$0xff]
  %v2814 = vld [vmem:[%s1 + $0xe90] sm:$0xff]
  %v2815 = vld [vmem:[%s1 + $0xe98] sm:$0xf]
  %v2816 = vld [vmem:[%s1 + $0xe9c] sm:$0xff]
  %v2817 = vld [vmem:[%s1 + $0xea4] sm:$0xff]
  %v2818 = vld [vmem:[%s1 + $0xeac] sm:$0xf]
  %v2819 = vld [vmem:[%s1 + $0xeb0] sm:$0xff]
  %v2820 = vld [vmem:[%s1 + $0xeb8] sm:$0xff]
  %v2821 = vld [vmem:[%s1 + $0xec0] sm:$0xf]
  %v2822 = vld [vmem:[%s1 + $0xec4] sm:$0xff]
  %v2823 = vld [vmem:[%s1 + $0xecc] sm:$0xff]
  %v2824 = vld [vmem:[%s1 + $0xed4] sm:$0xf]
  %v2825 = vld [vmem:[%s1 + $0xed8] sm:$0xff]
  %v2826 = vld [vmem:[%s1 + $0xee0] sm:$0xff]
  %v2827 = vld [vmem:[%s1 + $0xee8] sm:$0xf]
  %v2828 = vld [vmem:[%s1 + $0xeec] sm:$0xff]
  %v2829 = vld [vmem:[%s1 + $0xef4] sm:$0xff]
  %v2830 = vld [vmem:[%s1 + $0xefc] sm:$0xf]
  %v2831 = vrot.slane %v19, 2
  %v2832 = vrot.slane %v20, 2
  %v2833 = vrot.slane %v21, 2
  %v2834 = vrot.slane %v22, 2
  %v3031 = vunpack.c.l.b16 %v2639
  %v3032 = vunpack.c.h.b16 %v2639
  %v3033 = vunpack.c.l.b16 %v2640
  %v3034 = vunpack.c.h.b16 %v2640
  %v3035 = vunpack.c.l.b16 %v2641
  %v3036 = vunpack.c.l.b16 %v2642
  %v3037 = vunpack.c.h.b16 %v2642
  %v3038 = vunpack.c.l.b16 %v2643
  %v3039 = vunpack.c.h.b16 %v2643
  %v3040 = vunpack.c.l.b16 %v2644
  %v3041 = vunpack.c.l.b16 %v2645
  %v3042 = vunpack.c.h.b16 %v2645
  %v3043 = vunpack.c.l.b16 %v2646
  %v3044 = vunpack.c.h.b16 %v2646
  %v3045 = vunpack.c.l.b16 %v2647
  %v3046 = vunpack.c.l.b16 %v2648
  %v3047 = vunpack.c.h.b16 %v2648
  %v3048 = vunpack.c.l.b16 %v2649
  %v3049 = vunpack.c.h.b16 %v2649
  %v3050 = vunpack.c.l.b16 %v2650
  %v3051 = vunpack.c.l.b16 %v2651
  %v3052 = vunpack.c.h.b16 %v2651
  %v3053 = vunpack.c.l.b16 %v2652
  %v3054 = vunpack.c.h.b16 %v2652
  %v3055 = vunpack.c.l.b16 %v2653
  %v3056 = vunpack.c.l.b16 %v2654
  %v3057 = vunpack.c.h.b16 %v2654
  %v3058 = vunpack.c.l.b16 %v2655
  %v3059 = vunpack.c.h.b16 %v2655
  %v3060 = vunpack.c.l.b16 %v2656
  %v3061 = vunpack.c.l.b16 %v2657
  %v3062 = vunpack.c.h.b16 %v2657
  %v3063 = vunpack.c.l.b16 %v2658
  %v3064 = vunpack.c.h.b16 %v2658
  %v3065 = vunpack.c.l.b16 %v2659
  %v3066 = vunpack.c.l.b16 %v2660
  %v3067 = vunpack.c.h.b16 %v2660
  %v3068 = vunpack.c.l.b16 %v2661
  %v3069 = vunpack.c.h.b16 %v2661
  %v3070 = vunpack.c.l.b16 %v2662
  %v3071 = vunpack.c.l.b16 %v2663
  %v3072 = vunpack.c.h.b16 %v2663
  %v3073 = vunpack.c.l.b16 %v2664
  %v3074 = vunpack.c.h.b16 %v2664
  %v3075 = vunpack.c.l.b16 %v2665
  %v3076 = vunpack.c.l.b16 %v2666
  %v3077 = vunpack.c.h.b16 %v2666
  %v3078 = vunpack.c.l.b16 %v2667
  %v3079 = vunpack.c.h.b16 %v2667
  %v3080 = vunpack.c.l.b16 %v2668
  %v3081 = vunpack.c.l.b16 %v2669
  %v3082 = vunpack.c.h.b16 %v2669
  %v3083 = vunpack.c.l.b16 %v2670
  %v3084 = vunpack.c.h.b16 %v2670
  %v3085 = vunpack.c.l.b16 %v2671
  %v3086 = vunpack.c.l.b16 %v2672
  %v3087 = vunpack.c.h.b16 %v2672
  %v3088 = vunpack.c.l.b16 %v2673
  %v3089 = vunpack.c.h.b16 %v2673
  %v3090 = vunpack.c.l.b16 %v2674
  %v3091 = vunpack.c.l.b16 %v2675
  %v3092 = vunpack.c.h.b16 %v2675
  %v3093 = vunpack.c.l.b16 %v2676
  %v3094 = vunpack.c.h.b16 %v2676
  %v3095 = vunpack.c.l.b16 %v2677
  %v3096 = vunpack.c.l.b16 %v2678
  %v3097 = vunpack.c.h.b16 %v2678
  %v3098 = vunpack.c.l.b16 %v2679
  %v3099 = vunpack.c.h.b16 %v2679
  %v3100 = vunpack.c.l.b16 %v2680
  %v3101 = vunpack.c.l.b16 %v2681
  %v3102 = vunpack.c.h.b16 %v2681
  %v3103 = vunpack.c.l.b16 %v2682
  %v3104 = vunpack.c.h.b16 %v2682
  %v3105 = vunpack.c.l.b16 %v2683
  %v3106 = vunpack.c.l.b16 %v2684
  %v3107 = vunpack.c.h.b16 %v2684
  %v3108 = vunpack.c.l.b16 %v2685
  %v3109 = vunpack.c.h.b16 %v2685
  %v3110 = vunpack.c.l.b16 %v2686
  %v3111 = vunpack.c.l.b16 %v2687
  %v3112 = vunpack.c.h.b16 %v2687
  %v3113 = vunpack.c.l.b16 %v2688
  %v3114 = vunpack.c.h.b16 %v2688
  %v3115 = vunpack.c.l.b16 %v2689
  %v3116 = vunpack.c.l.b16 %v2690
  %v3117 = vunpack.c.h.b16 %v2690
  %v3118 = vunpack.c.l.b16 %v2691
  %v3119 = vunpack.c.h.b16 %v2691
  %v3120 = vunpack.c.l.b16 %v2692
  %v3121 = vunpack.c.l.b16 %v2693
  %v3122 = vunpack.c.h.b16 %v2693
  %v3123 = vunpack.c.l.b16 %v2694
  %v3124 = vunpack.c.h.b16 %v2694
  %v3125 = vunpack.c.l.b16 %v2695
  %v3126 = vunpack.c.l.b16 %v2696
  %v3127 = vunpack.c.h.b16 %v2696
  %v3128 = vunpack.c.l.b16 %v2697
  %v3129 = vunpack.c.h.b16 %v2697
  %v3130 = vunpack.c.l.b16 %v2698
  %v3131 = vunpack.c.l.b16 %v2699
  %v3132 = vunpack.c.h.b16 %v2699
  %v3133 = vunpack.c.l.b16 %v2700
  %v3134 = vunpack.c.h.b16 %v2700
  %v3135 = vunpack.c.l.b16 %v2701
  %v3136 = vunpack.c.l.b16 %v2702
  %v3137 = vunpack.c.h.b16 %v2702
  %v3138 = vunpack.c.l.b16 %v2703
  %v3139 = vunpack.c.h.b16 %v2703
  %v3140 = vunpack.c.l.b16 %v2704
  %v3141 = vunpack.c.l.b16 %v2705
  %v3142 = vunpack.c.h.b16 %v2705
  %v3143 = vunpack.c.l.b16 %v2706
  %v3144 = vunpack.c.h.b16 %v2706
  %v3145 = vunpack.c.l.b16 %v2707
  %v3146 = vunpack.c.l.b16 %v2708
  %v3147 = vunpack.c.h.b16 %v2708
  %v3148 = vunpack.c.l.b16 %v2709
  %v3149 = vunpack.c.h.b16 %v2709
  %v3150 = vunpack.c.l.b16 %v2710
  %v3151 = vunpack.c.l.b16 %v2711
  %v3152 = vunpack.c.h.b16 %v2711
  %v3153 = vunpack.c.l.b16 %v2712
  %v3154 = vunpack.c.h.b16 %v2712
  %v3155 = vunpack.c.l.b16 %v2713
  %v3156 = vunpack.c.l.b16 %v2714
  %v3157 = vunpack.c.h.b16 %v2714
  %v3158 = vunpack.c.l.b16 %v2715
  %v3159 = vunpack.c.h.b16 %v2715
  %v3160 = vunpack.c.l.b16 %v2716
  %v3161 = vunpack.c.l.b16 %v2717
  %v3162 = vunpack.c.h.b16 %v2717
  %v3163 = vunpack.c.l.b16 %v2718
  %v3164 = vunpack.c.h.b16 %v2718
  %v3165 = vunpack.c.l.b16 %v2719
  %v3166 = vunpack.c.l.b16 %v2720
  %v3167 = vunpack.c.h.b16 %v2720
  %v3168 = vunpack.c.l.b16 %v2721
  %v3169 = vunpack.c.h.b16 %v2721
  %v3170 = vunpack.c.l.b16 %v2722
  %v3171 = vunpack.c.l.b16 %v2723
  %v3172 = vunpack.c.h.b16 %v2723
  %v3173 = vunpack.c.l.b16 %v2724
  %v3174 = vunpack.c.h.b16 %v2724
  %v3175 = vunpack.c.l.b16 %v2725
  %v3176 = vunpack.c.l.b16 %v2726
  %v3177 = vunpack.c.h.b16 %v2726
  %v3178 = vunpack.c.l.b16 %v2727
  %v3179 = vunpack.c.h.b16 %v2727
  %v3180 = vunpack.c.l.b16 %v2728
  %v3181 = vunpack.c.l.b16 %v2729
  %v3182 = vunpack.c.h.b16 %v2729
  %v3183 = vunpack.c.l.b16 %v2730
  %v3184 = vunpack.c.h.b16 %v2730
  %v3185 = vunpack.c.l.b16 %v2731
  %v3186 = vunpack.c.l.b16 %v2732
  %v3187 = vunpack.c.h.b16 %v2732
  %v3188 = vunpack.c.l.b16 %v2733
  %v3189 = vunpack.c.h.b16 %v2733
  %v3190 = vunpack.c.l.b16 %v2734
  %v3191 = vunpack.c.l.b16 %v2735
  %v3192 = vunpack.c.h.b16 %v2735
  %v3193 = vunpack.c.l.b16 %v2736
  %v3194 = vunpack.c.h.b16 %v2736
  %v3195 = vunpack.c.l.b16 %v2737
  %v3196 = vunpack.c.l.b16 %v2738
  %v3197 = vunpack.c.h.b16 %v2738
  %v3198 = vunpack.c.l.b16 %v2739
  %v3199 = vunpack.c.h.b16 %v2739
  %v3200 = vunpack.c.l.b16 %v2740
  %v3201 = vunpack.c.l.b16 %v2741
  %v3202 = vunpack.c.h.b16 %v2741
  %v3203 = vunpack.c.l.b16 %v2742
  %v3204 = vunpack.c.h.b16 %v2742
  %v3205 = vunpack.c.l.b16 %v2743
  %v3206 = vunpack.c.l.b16 %v2744
  %v3207 = vunpack.c.h.b16 %v2744
  %v3208 = vunpack.c.l.b16 %v2745
  %v3209 = vunpack.c.h.b16 %v2745
  %v3210 = vunpack.c.l.b16 %v2746
  %v3211 = vunpack.c.l.b16 %v2747
  %v3212 = vunpack.c.h.b16 %v2747
  %v3213 = vunpack.c.l.b16 %v2748
  %v3214 = vunpack.c.h.b16 %v2748
  %v3215 = vunpack.c.l.b16 %v2749
  %v3216 = vunpack.c.l.b16 %v2750
  %v3217 = vunpack.c.h.b16 %v2750
  %v3218 = vunpack.c.l.b16 %v2751
  %v3219 = vunpack.c.h.b16 %v2751
  %v3220 = vunpack.c.l.b16 %v2752
  %v3221 = vunpack.c.l.b16 %v2753
  %v3222 = vunpack.c.h.b16 %v2753
  %v3223 = vunpack.c.l.b16 %v2754
  %v3224 = vunpack.c.h.b16 %v2754
  %v3225 = vunpack.c.l.b16 %v2755
  %v3226 = vunpack.c.l.b16 %v2756
  %v3227 = vunpack.c.h.b16 %v2756
  %v3228 = vunpack.c.l.b16 %v2757
  %v3229 = vunpack.c.h.b16 %v2757
  %v3230 = vunpack.c.l.b16 %v2758
  %v3231 = vunpack.c.l.b16 %v2759
  %v3232 = vunpack.c.h.b16 %v2759
  %v3233 = vunpack.c.l.b16 %v2760
  %v3234 = vunpack.c.h.b16 %v2760
  %v3235 = vunpack.c.l.b16 %v2761
  %v3236 = vunpack.c.l.b16 %v2762
  %v3237 = vunpack.c.h.b16 %v2762
  %v3238 = vunpack.c.l.b16 %v2763
  %v3239 = vunpack.c.h.b16 %v2763
  %v3240 = vunpack.c.l.b16 %v2764
  %v3241 = vunpack.c.l.b16 %v2765
  %v3242 = vunpack.c.h.b16 %v2765
  %v3243 = vunpack.c.l.b16 %v2766
  %v3244 = vunpack.c.h.b16 %v2766
  %v3245 = vunpack.c.l.b16 %v2767
  %v3246 = vunpack.c.l.b16 %v2768
  %v3247 = vunpack.c.h.b16 %v2768
  %v3248 = vunpack.c.l.b16 %v2769
  %v3249 = vunpack.c.h.b16 %v2769
  %v3250 = vunpack.c.l.b16 %v2770
  %v3251 = vunpack.c.l.b16 %v2771
  %v3252 = vunpack.c.h.b16 %v2771
  %v3253 = vunpack.c.l.b16 %v2772
  %v3254 = vunpack.c.h.b16 %v2772
  %v3255 = vunpack.c.l.b16 %v2773
  %v3256 = vunpack.c.l.b16 %v2774
  %v3257 = vunpack.c.h.b16 %v2774
  %v3258 = vunpack.c.l.b16 %v2775
  %v3259 = vunpack.c.h.b16 %v2775
  %v3260 = vunpack.c.l.b16 %v2776
  %v3261 = vunpack.c.l.b16 %v2777
  %v3262 = vunpack.c.h.b16 %v2777
  %v3263 = vunpack.c.l.b16 %v2778
  %v3264 = vunpack.c.h.b16 %v2778
  %v3265 = vunpack.c.l.b16 %v2779
  %v3266 = vunpack.c.l.b16 %v2780
  %v3267 = vunpack.c.h.b16 %v2780
  %v3268 = vunpack.c.l.b16 %v2781
  %v3269 = vunpack.c.h.b16 %v2781
  %v3270 = vunpack.c.l.b16 %v2782
  %v3271 = vunpack.c.l.b16 %v2783
  %v3272 = vunpack.c.h.b16 %v2783
  %v3273 = vunpack.c.l.b16 %v2784
  %v3274 = vunpack.c.h.b16 %v2784
  %v3275 = vunpack.c.l.b16 %v2785
  %v3276 = vunpack.c.l.b16 %v2786
  %v3277 = vunpack.c.h.b16 %v2786
  %v3278 = vunpack.c.l.b16 %v2787
  %v3279 = vunpack.c.h.b16 %v2787
  %v3280 = vunpack.c.l.b16 %v2788
  %v3281 = vunpack.c.l.b16 %v2789
  %v3282 = vunpack.c.h.b16 %v2789
  %v3283 = vunpack.c.l.b16 %v2790
  %v3284 = vunpack.c.h.b16 %v2790
  %v3285 = vunpack.c.l.b16 %v2791
  %v3286 = vunpack.c.l.b16 %v2792
  %v3287 = vunpack.c.h.b16 %v2792
  %v3288 = vunpack.c.l.b16 %v2793
  %v3289 = vunpack.c.h.b16 %v2793
  %v3290 = vunpack.c.l.b16 %v2794
  %v3291 = vunpack.c.l.b16 %v2795
  %v3292 = vunpack.c.h.b16 %v2795
  %v3293 = vunpack.c.l.b16 %v2796
  %v3294 = vunpack.c.h.b16 %v2796
  %v3295 = vunpack.c.l.b16 %v2797
  %v3296 = vunpack.c.l.b16 %v2798
  %v3297 = vunpack.c.h.b16 %v2798
  %v3298 = vunpack.c.l.b16 %v2799
  %v3299 = vunpack.c.h.b16 %v2799
  %v3300 = vunpack.c.l.b16 %v2800
  %v3301 = vunpack.c.l.b16 %v2801
  %v3302 = vunpack.c.h.b16 %v2801
  %v3303 = vunpack.c.l.b16 %v2802
  %v3304 = vunpack.c.h.b16 %v2802
  %v3305 = vunpack.c.l.b16 %v2803
  %v3306 = vunpack.c.l.b16 %v2804
  %v3307 = vunpack.c.h.b16 %v2804
  %v3308 = vunpack.c.l.b16 %v2805
  %v3309 = vunpack.c.h.b16 %v2805
  %v3310 = vunpack.c.l.b16 %v2806
  %v3311 = vunpack.c.l.b16 %v2807
  %v3312 = vunpack.c.h.b16 %v2807
  %v3313 = vunpack.c.l.b16 %v2808
  %v3314 = vunpack.c.h.b16 %v2808
  %v3315 = vunpack.c.l.b16 %v2809
  %v3316 = vunpack.c.l.b16 %v2810
  %v3317 = vunpack.c.h.b16 %v2810
  %v3318 = vunpack.c.l.b16 %v2811
  %v3319 = vunpack.c.h.b16 %v2811
  %v3320 = vunpack.c.l.b16 %v2812
  %v3321 = vunpack.c.l.b16 %v2813
  %v3322 = vunpack.c.h.b16 %v2813
  %v3323 = vunpack.c.l.b16 %v2814
  %v3324 = vunpack.c.h.b16 %v2814
  %v3325 = vunpack.c.l.b16 %v2815
  %v3326 = vunpack.c.l.b16 %v2816
  %v3327 = vunpack.c.h.b16 %v2816
  %v3328 = vunpack.c.l.b16 %v2817
  %v3329 = vunpack.c.h.b16 %v2817
  %v3330 = vunpack.c.l.b16 %v2818
  %v3331 = vunpack.c.l.b16 %v2819
  %v3332 = vunpack.c.h.b16 %v2819
  %v3333 = vunpack.c.l.b16 %v2820
  %v3334 = vunpack.c.h.b16 %v2820
  %v3335 = vunpack.c.l.b16 %v2821
  %v3336 = vunpack.c.l.b16 %v2822
  %v3337 = vunpack.c.h.b16 %v2822
  %v3338 = vunpack.c.l.b16 %v2823
  %v3339 = vunpack.c.h.b16 %v2823
  %v3340 = vunpack.c.l.b16 %v2824
  %v3341 = vunpack.c.l.b16 %v2825
  %v3342 = vunpack.c.h.b16 %v2825
  %v3343 = vunpack.c.l.b16 %v2826
  %v3344 = vunpack.c.h.b16 %v2826
  %v3345 = vunpack.c.l.b16 %v2827
  %v3346 = vunpack.c.l.b16 %v2828
  %v3347 = vunpack.c.h.b16 %v2828
  %v3348 = vunpack.c.l.b16 %v2829
  %v3349 = vunpack.c.h.b16 %v2829
  %v3350 = vunpack.c.l.b16 %v2830
  %v3351 = vpack.c.b16 %v3036, %v3031
  %v3352 = vpack.c.b16 %v3037, %v3032
  %v3353 = vpack.c.b16 %v3038, %v3033
  %v3354 = vpack.c.b16 %v3039, %v3034
  %v3355 = vpack.c.b16 %v3040, %v3035
  %v3356 = vpack.c.b16 %v3046, %v3041
  %v3357 = vpack.c.b16 %v3047, %v3042
  %v3358 = vpack.c.b16 %v3048, %v3043
  %v3359 = vpack.c.b16 %v3049, %v3044
  %v3360 = vpack.c.b16 %v3050, %v3045
  %v3361 = vpack.c.b16 %v3056, %v3051
  %v3362 = vpack.c.b16 %v3057, %v3052
  %v3363 = vpack.c.b16 %v3058, %v3053
  %v3364 = vpack.c.b16 %v3059, %v3054
  %v3365 = vpack.c.b16 %v3060, %v3055
  %v3366 = vpack.c.b16 %v3066, %v3061
  %v3367 = vpack.c.b16 %v3067, %v3062
  %v3368 = vpack.c.b16 %v3068, %v3063
  %v3369 = vpack.c.b16 %v3069, %v3064
  %v3370 = vpack.c.b16 %v3070, %v3065
  %v3371 = vpack.c.b16 %v3076, %v3071
  %v3372 = vpack.c.b16 %v3077, %v3072
  %v3373 = vpack.c.b16 %v3078, %v3073
  %v3374 = vpack.c.b16 %v3079, %v3074
  %v3375 = vpack.c.b16 %v3080, %v3075
  %v3376 = vpack.c.b16 %v3086, %v3081
  %v3377 = vpack.c.b16 %v3087, %v3082
  %v3378 = vpack.c.b16 %v3088, %v3083
  %v3379 = vpack.c.b16 %v3089, %v3084
  %v3380 = vpack.c.b16 %v3090, %v3085
  %v3381 = vpack.c.b16 %v3096, %v3091
  %v3382 = vpack.c.b16 %v3097, %v3092
  %v3383 = vpack.c.b16 %v3098, %v3093
  %v3384 = vpack.c.b16 %v3099, %v3094
  %v3385 = vpack.c.b16 %v3100, %v3095
  %v3386 = vpack.c.b16 %v3106, %v3101
  %v3387 = vpack.c.b16 %v3107, %v3102
  %v3388 = vpack.c.b16 %v3108, %v3103
  %v3389 = vpack.c.b16 %v3109, %v3104
  %v3390 = vpack.c.b16 %v3110, %v3105
  %v3391 = vpack.c.b16 %v3116, %v3111
  %v3392 = vpack.c.b16 %v3117, %v3112
  %v3393 = vpack.c.b16 %v3118, %v3113
  %v3394 = vpack.c.b16 %v3119, %v3114
  %v3395 = vpack.c.b16 %v3120, %v3115
  %v3396 = vpack.c.b16 %v3126, %v3121
  %v3397 = vpack.c.b16 %v3127, %v3122
  %v3398 = vpack.c.b16 %v3128, %v3123
  %v3399 = vpack.c.b16 %v3129, %v3124
  %v3400 = vpack.c.b16 %v3130, %v3125
  %v3401 = vpack.c.b16 %v3136, %v3131
  %v3402 = vpack.c.b16 %v3137, %v3132
  %v3403 = vpack.c.b16 %v3138, %v3133
  %v3404 = vpack.c.b16 %v3139, %v3134
  %v3405 = vpack.c.b16 %v3140, %v3135
  %v3406 = vpack.c.b16 %v3146, %v3141
  %v3407 = vpack.c.b16 %v3147, %v3142
  %v3408 = vpack.c.b16 %v3148, %v3143
  %v3409 = vpack.c.b16 %v3149, %v3144
  %v3410 = vpack.c.b16 %v3150, %v3145
  %v3411 = vpack.c.b16 %v3156, %v3151
  %v3412 = vpack.c.b16 %v3157, %v3152
  %v3413 = vpack.c.b16 %v3158, %v3153
  %v3414 = vpack.c.b16 %v3159, %v3154
  %v3415 = vpack.c.b16 %v3160, %v3155
  %v3416 = vpack.c.b16 %v3166, %v3161
  %v3417 = vpack.c.b16 %v3167, %v3162
  %v3418 = vpack.c.b16 %v3168, %v3163
  %v3419 = vpack.c.b16 %v3169, %v3164
  %v3420 = vpack.c.b16 %v3170, %v3165
  %v3421 = vpack.c.b16 %v3176, %v3171
  %v3422 = vpack.c.b16 %v3177, %v3172
  %v3423 = vpack.c.b16 %v3178, %v3173
  %v3424 = vpack.c.b16 %v3179, %v3174
  %v3425 = vpack.c.b16 %v3180, %v3175
  %v3426 = vpack.c.b16 %v3186, %v3181
  %v3427 = vpack.c.b16 %v3187, %v3182
  %v3428 = vpack.c.b16 %v3188, %v3183
  %v3429 = vpack.c.b16 %v3189, %v3184
  %v3430 = vpack.c.b16 %v3190, %v3185
  %v3431 = vpack.c.b16 %v3196, %v3191
  %v3432 = vpack.c.b16 %v3197, %v3192
  %v3433 = vpack.c.b16 %v3198, %v3193
  %v3434 = vpack.c.b16 %v3199, %v3194
  %v3435 = vpack.c.b16 %v3200, %v3195
  %v3436 = vpack.c.b16 %v3206, %v3201
  %v3437 = vpack.c.b16 %v3207, %v3202
  %v3438 = vpack.c.b16 %v3208, %v3203
  %v3439 = vpack.c.b16 %v3209, %v3204
  %v3440 = vpack.c.b16 %v3210, %v3205
  %v3441 = vpack.c.b16 %v3216, %v3211
  %v3442 = vpack.c.b16 %v3217, %v3212
  %v3443 = vpack.c.b16 %v3218, %v3213
  %v3444 = vpack.c.b16 %v3219, %v3214
  %v3445 = vpack.c.b16 %v3220, %v3215
  %v3446 = vpack.c.b16 %v3226, %v3221
  %v3447 = vpack.c.b16 %v3227, %v3222
  %v3448 = vpack.c.b16 %v3228, %v3223
  %v3449 = vpack.c.b16 %v3229, %v3224
  %v3450 = vpack.c.b16 %v3230, %v3225
  %v3451 = vpack.c.b16 %v3236, %v3231
  %v3452 = vpack.c.b16 %v3237, %v3232
  %v3453 = vpack.c.b16 %v3238, %v3233
  %v3454 = vpack.c.b16 %v3239, %v3234
  %v3455 = vpack.c.b16 %v3240, %v3235
  %v3456 = vpack.c.b16 %v3246, %v3241
  %v3457 = vpack.c.b16 %v3247, %v3242
  %v3458 = vpack.c.b16 %v3248, %v3243
  %v3459 = vpack.c.b16 %v3249, %v3244
  %v3460 = vpack.c.b16 %v3250, %v3245
  %v3461 = vpack.c.b16 %v3256, %v3251
  %v3462 = vpack.c.b16 %v3257, %v3252
  %v3463 = vpack.c.b16 %v3258, %v3253
  %v3464 = vpack.c.b16 %v3259, %v3254
  %v3465 = vpack.c.b16 %v3260, %v3255
  %v3466 = vpack.c.b16 %v3266, %v3261
  %v3467 = vpack.c.b16 %v3267, %v3262
  %v3468 = vpack.c.b16 %v3268, %v3263
  %v3469 = vpack.c.b16 %v3269, %v3264
  %v3470 = vpack.c.b16 %v3270, %v3265
  %v3471 = vpack.c.b16 %v3276, %v3271
  %v3472 = vpack.c.b16 %v3277, %v3272
  %v3473 = vpack.c.b16 %v3278, %v3273
  %v3474 = vpack.c.b16 %v3279, %v3274
  %v3475 = vpack.c.b16 %v3280, %v3275
  %v3476 = vpack.c.b16 %v3286, %v3281
  %v3477 = vpack.c.b16 %v3287, %v3282
  %v3478 = vpack.c.b16 %v3288, %v3283
  %v3479 = vpack.c.b16 %v3289, %v3284
  %v3480 = vpack.c.b16 %v3290, %v3285
  %v3481 = vpack.c.b16 %v3296, %v3291
  %v3482 = vpack.c.b16 %v3297, %v3292
  %v3483 = vpack.c.b16 %v3298, %v3293
  %v3484 = vpack.c.b16 %v3299, %v3294
  %v3485 = vpack.c.b16 %v3300, %v3295
  %v3486 = vpack.c.b16 %v3306, %v3301
  %v3487 = vpack.c.b16 %v3307, %v3302
  %v3488 = vpack.c.b16 %v3308, %v3303
  %v3489 = vpack.c.b16 %v3309, %v3304
  %v3490 = vpack.c.b16 %v3310, %v3305
  %v3491 = vpack.c.b16 %v3316, %v3311
  %v3492 = vpack.c.b16 %v3317, %v3312
  %v3493 = vpack.c.b16 %v3318, %v3313
  %v3494 = vpack.c.b16 %v3319, %v3314
  %v3495 = vpack.c.b16 %v3320, %v3315
  %v3496 = vpack.c.b16 %v3326, %v3321
  %v3497 = vpack.c.b16 %v3327, %v3322
  %v3498 = vpack.c.b16 %v3328, %v3323
  %v3499 = vpack.c.b16 %v3329, %v3324
  %v3500 = vpack.c.b16 %v3330, %v3325
  %v3501 = vpack.c.b16 %v3336, %v3331
  %v3502 = vpack.c.b16 %v3337, %v3332
  %v3503 = vpack.c.b16 %v3338, %v3333
  %v3504 = vpack.c.b16 %v3339, %v3334
  %v3505 = vpack.c.b16 %v3340, %v3335
  %v3506 = vpack.c.b16 %v3346, %v3341
  %v3507 = vpack.c.b16 %v3347, %v3342
  %v3508 = vpack.c.b16 %v3348, %v3343
  %v3509 = vpack.c.b16 %v3349, %v3344
  %v3510 = vpack.c.b16 %v3350, %v3345
  %3671 = vmatpush.bf16.msra.mxu0 %v3386
  %3672 = vmatpush.bf16.msra.mxu0 %v3381
  %3673 = vmatpush.bf16.msra.mxu0 %v3376
  %3674 = vmatpush.bf16.msra.mxu0 %v3371
  %3675 = vmatpush.bf16.msra.mxu0 %v3366
  %3676 = vmatpush.bf16.msra.mxu0 %v3361
  %3677 = vmatpush.bf16.msra.mxu0 %v3356
  %3678 = vmatpush.bf16.msra.mxu0 %v3351
  %3679 = vmatmul.bf16.gmra.mxu0 %v2831
  %v3680 = vpop.f32.mrf.mxu0
  %v3681 = vadd.f32 0.0, %v3680
  %v3682 = vpop.f32.mrf.mxu0
  %3683 = vdwg.mxu0
  %3684 = vmatpush.bf16.msra.mxu0 %v3426
  %3685 = vmatpush.bf16.msra.mxu0 %v3421
  %3686 = vmatpush.bf16.msra.mxu0 %v3416
  %3687 = vmatpush.bf16.msra.mxu0 %v3411
  %3688 = vmatpush.bf16.msra.mxu0 %v3406
  %3689 = vmatpush.bf16.msra.mxu0 %v3401
  %3690 = vmatpush.bf16.msra.mxu0 %v3396
  %3691 = vmatpush.bf16.msra.mxu0 %v3391
  %3692 = vmatmul.bf16.gmra.mxu0 %v2832
  %v3693 = vpop.f32.mrf.mxu0
  %v3694 = vadd.f32 %v3681, %v3693
  %v3695 = vpop.f32.mrf.mxu0
  %3696 = vdwg.mxu0
  %3697 = vmatpush.bf16.msra.mxu0 %v3466
  %3698 = vmatpush.bf16.msra.mxu0 %v3461
  %3699 = vmatpush.bf16.msra.mxu0 %v3456
  %3700 = vmatpush.bf16.msra.mxu0 %v3451
  %3701 = vmatpush.bf16.msra.mxu0 %v3446
  %3702 = vmatpush.bf16.msra.mxu0 %v3441
  %3703 = vmatpush.bf16.msra.mxu0 %v3436
  %3704 = vmatpush.bf16.msra.mxu0 %v3431
  %3705 = vmatmul.bf16.gmra.mxu0 %v2833
  %v3706 = vpop.f32.mrf.mxu0
  %v3707 = vadd.f32 %v3694, %v3706
  %v3708 = vpop.f32.mrf.mxu0
  %3709 = vdwg.mxu0
  %3710 = vmatpush.bf16.msra.mxu0 %v3506
  %3711 = vmatpush.bf16.msra.mxu0 %v3501
  %3712 = vmatpush.bf16.msra.mxu0 %v3496
  %3713 = vmatpush.bf16.msra.mxu0 %v3491
  %3714 = vmatpush.bf16.msra.mxu0 %v3486
  %3715 = vmatpush.bf16.msra.mxu0 %v3481
  %3716 = vmatpush.bf16.msra.mxu0 %v3476
  %3717 = vmatpush.bf16.msra.mxu0 %v3471
  %3718 = vmatmul.bf16.gmra.mxu0 %v2834
  %v3719 = vpop.f32.mrf.mxu0
  %v3720 = vadd.f32 %v3707, %v3719
  %v3721 = vpop.f32.mrf.mxu0
  %3722 = vdwg.mxu0
  %3723 = vmatpush.bf16.msra.mxu0 %v3387
  %3724 = vmatpush.bf16.msra.mxu0 %v3382
  %3725 = vmatpush.bf16.msra.mxu0 %v3377
  %3726 = vmatpush.bf16.msra.mxu0 %v3372
  %3727 = vmatpush.bf16.msra.mxu0 %v3367
  %3728 = vmatpush.bf16.msra.mxu0 %v3362
  %3729 = vmatpush.bf16.msra.mxu0 %v3357
  %3730 = vmatpush.bf16.msra.mxu0 %v3352
  %3731 = vmatmul.bf16.gmra.mxu0 %v2831
  %v3732 = vpop.f32.mrf.mxu0
  %v3733 = vadd.f32 0.0, %v3732
  %v3734 = vpop.f32.mrf.mxu0
  %3735 = vdwg.mxu0
  %3736 = vmatpush.bf16.msra.mxu0 %v3427
  %3737 = vmatpush.bf16.msra.mxu0 %v3422
  %3738 = vmatpush.bf16.msra.mxu0 %v3417
  %3739 = vmatpush.bf16.msra.mxu0 %v3412
  %3740 = vmatpush.bf16.msra.mxu0 %v3407
  %3741 = vmatpush.bf16.msra.mxu0 %v3402
  %3742 = vmatpush.bf16.msra.mxu0 %v3397
  %3743 = vmatpush.bf16.msra.mxu0 %v3392
  %3744 = vmatmul.bf16.gmra.mxu0 %v2832
  %v3745 = vpop.f32.mrf.mxu0
  %v3746 = vadd.f32 %v3733, %v3745
  %v3747 = vpop.f32.mrf.mxu0
  %3748 = vdwg.mxu0
  %3749 = vmatpush.bf16.msra.mxu0 %v3467
  %3750 = vmatpush.bf16.msra.mxu0 %v3462
  %3751 = vmatpush.bf16.msra.mxu0 %v3457
  %3752 = vmatpush.bf16.msra.mxu0 %v3452
  %3753 = vmatpush.bf16.msra.mxu0 %v3447
  %3754 = vmatpush.bf16.msra.mxu0 %v3442
  %3755 = vmatpush.bf16.msra.mxu0 %v3437
  %3756 = vmatpush.bf16.msra.mxu0 %v3432
  %3757 = vmatmul.bf16.gmra.mxu0 %v2833
  %v3758 = vpop.f32.mrf.mxu0
  %v3759 = vadd.f32 %v3746, %v3758
  %v3760 = vpop.f32.mrf.mxu0
  %3761 = vdwg.mxu0
  %3762 = vmatpush.bf16.msra.mxu0 %v3507
  %3763 = vmatpush.bf16.msra.mxu0 %v3502
  %3764 = vmatpush.bf16.msra.mxu0 %v3497
  %3765 = vmatpush.bf16.msra.mxu0 %v3492
  %3766 = vmatpush.bf16.msra.mxu0 %v3487
  %3767 = vmatpush.bf16.msra.mxu0 %v3482
  %3768 = vmatpush.bf16.msra.mxu0 %v3477
  %3769 = vmatpush.bf16.msra.mxu0 %v3472
  %3770 = vmatmul.bf16.gmra.mxu0 %v2834
  %v3771 = vpop.f32.mrf.mxu0
  %v3772 = vadd.f32 %v3759, %v3771
  %v3773 = vpop.f32.mrf.mxu0
  %3774 = vdwg.mxu0
  %3775 = vmatpush.bf16.msra.mxu0 %v3388
  %3776 = vmatpush.bf16.msra.mxu0 %v3383
  %3777 = vmatpush.bf16.msra.mxu0 %v3378
  %3778 = vmatpush.bf16.msra.mxu0 %v3373
  %3779 = vmatpush.bf16.msra.mxu0 %v3368
  %3780 = vmatpush.bf16.msra.mxu0 %v3363
  %3781 = vmatpush.bf16.msra.mxu0 %v3358
  %3782 = vmatpush.bf16.msra.mxu0 %v3353
  %3783 = vmatmul.bf16.gmra.mxu0 %v2831
  %v3784 = vpop.f32.mrf.mxu0
  %v3785 = vadd.f32 0.0, %v3784
  %v3786 = vpop.f32.mrf.mxu0
  %3787 = vdwg.mxu0
  %3788 = vmatpush.bf16.msra.mxu0 %v3428
  %3789 = vmatpush.bf16.msra.mxu0 %v3423
  %3790 = vmatpush.bf16.msra.mxu0 %v3418
  %3791 = vmatpush.bf16.msra.mxu0 %v3413
  %3792 = vmatpush.bf16.msra.mxu0 %v3408
  %3793 = vmatpush.bf16.msra.mxu0 %v3403
  %3794 = vmatpush.bf16.msra.mxu0 %v3398
  %3795 = vmatpush.bf16.msra.mxu0 %v3393
  %3796 = vmatmul.bf16.gmra.mxu0 %v2832
  %v3797 = vpop.f32.mrf.mxu0
  %v3798 = vadd.f32 %v3785, %v3797
  %v3799 = vpop.f32.mrf.mxu0
  %3800 = vdwg.mxu0
  %3801 = vmatpush.bf16.msra.mxu0 %v3468
  %3802 = vmatpush.bf16.msra.mxu0 %v3463
  %3803 = vmatpush.bf16.msra.mxu0 %v3458
  %3804 = vmatpush.bf16.msra.mxu0 %v3453
  %3805 = vmatpush.bf16.msra.mxu0 %v3448
  %3806 = vmatpush.bf16.msra.mxu0 %v3443
  %3807 = vmatpush.bf16.msra.mxu0 %v3438
  %3808 = vmatpush.bf16.msra.mxu0 %v3433
  %3809 = vmatmul.bf16.gmra.mxu0 %v2833
  %v3810 = vpop.f32.mrf.mxu0
  %v3811 = vadd.f32 %v3798, %v3810
  %v3812 = vpop.f32.mrf.mxu0
  %3813 = vdwg.mxu0
  %3814 = vmatpush.bf16.msra.mxu0 %v3508
  %3815 = vmatpush.bf16.msra.mxu0 %v3503
  %3816 = vmatpush.bf16.msra.mxu0 %v3498
  %3817 = vmatpush.bf16.msra.mxu0 %v3493
  %3818 = vmatpush.bf16.msra.mxu0 %v3488
  %3819 = vmatpush.bf16.msra.mxu0 %v3483
  %3820 = vmatpush.bf16.msra.mxu0 %v3478
  %3821 = vmatpush.bf16.msra.mxu0 %v3473
  %3822 = vmatmul.bf16.gmra.mxu0 %v2834
  %v3823 = vpop.f32.mrf.mxu0
  %v3824 = vadd.f32 %v3811, %v3823
  %v3825 = vpop.f32.mrf.mxu0
  %3826 = vdwg.mxu0
  %3827 = vmatpush.bf16.msra.mxu0 %v3389
  %3828 = vmatpush.bf16.msra.mxu0 %v3384
  %3829 = vmatpush.bf16.msra.mxu0 %v3379
  %3830 = vmatpush.bf16.msra.mxu0 %v3374
  %3831 = vmatpush.bf16.msra.mxu0 %v3369
  %3832 = vmatpush.bf16.msra.mxu0 %v3364
  %3833 = vmatpush.bf16.msra.mxu0 %v3359
  %3834 = vmatpush.bf16.msra.mxu0 %v3354
  %3835 = vmatmul.bf16.gmra.mxu0 %v2831
  %v3836 = vpop.f32.mrf.mxu0
  %v3837 = vadd.f32 0.0, %v3836
  %v3838 = vpop.f32.mrf.mxu0
  %3839 = vdwg.mxu0
  %3840 = vmatpush.bf16.msra.mxu0 %v3429
  %3841 = vmatpush.bf16.msra.mxu0 %v3424
  %3842 = vmatpush.bf16.msra.mxu0 %v3419
  %3843 = vmatpush.bf16.msra.mxu0 %v3414
  %3844 = vmatpush.bf16.msra.mxu0 %v3409
  %3845 = vmatpush.bf16.msra.mxu0 %v3404
  %3846 = vmatpush.bf16.msra.mxu0 %v3399
  %3847 = vmatpush.bf16.msra.mxu0 %v3394
  %3848 = vmatmul.bf16.gmra.mxu0 %v2832
  %v3849 = vpop.f32.mrf.mxu0
  %v3850 = vadd.f32 %v3837, %v3849
  %v3851 = vpop.f32.mrf.mxu0
  %3852 = vdwg.mxu0
  %3853 = vmatpush.bf16.msra.mxu0 %v3469
  %3854 = vmatpush.bf16.msra.mxu0 %v3464
  %3855 = vmatpush.bf16.msra.mxu0 %v3459
  %3856 = vmatpush.bf16.msra.mxu0 %v3454
  %3857 = vmatpush.bf16.msra.mxu0 %v3449
  %3858 = vmatpush.bf16.msra.mxu0 %v3444
  %3859 = vmatpush.bf16.msra.mxu0 %v3439
  %3860 = vmatpush.bf16.msra.mxu0 %v3434
  %3861 = vmatmul.bf16.gmra.mxu0 %v2833
  %v3862 = vpop.f32.mrf.mxu0
  %v3863 = vadd.f32 %v3850, %v3862
  %v3864 = vpop.f32.mrf.mxu0
  %3865 = vdwg.mxu0
  %3866 = vmatpush.bf16.msra.mxu0 %v3509
  %3867 = vmatpush.bf16.msra.mxu0 %v3504
  %3868 = vmatpush.bf16.msra.mxu0 %v3499
  %3869 = vmatpush.bf16.msra.mxu0 %v3494
  %3870 = vmatpush.bf16.msra.mxu0 %v3489
  %3871 = vmatpush.bf16.msra.mxu0 %v3484
  %3872 = vmatpush.bf16.msra.mxu0 %v3479
  %3873 = vmatpush.bf16.msra.mxu0 %v3474
  %3874 = vmatmul.bf16.gmra.mxu0 %v2834
  %v3875 = vpop.f32.mrf.mxu0
  %v3876 = vadd.f32 %v3863, %v3875
  %v3877 = vpop.f32.mrf.mxu0
  %3878 = vdwg.mxu0
  %3879 = vmatpush.bf16.msra.mxu0 %v3390
  %3880 = vmatpush.bf16.msra.mxu0 %v3385
  %3881 = vmatpush.bf16.msra.mxu0 %v3380
  %3882 = vmatpush.bf16.msra.mxu0 %v3375
  %3883 = vmatpush.bf16.msra.mxu0 %v3370
  %3884 = vmatpush.bf16.msra.mxu0 %v3365
  %3885 = vmatpush.bf16.msra.mxu0 %v3360
  %3886 = vmatpush.bf16.msra.mxu0 %v3355
  %3887 = vmatmul.bf16.gmra.mxu0 %v2831
  %v3888 = vpop.f32.mrf.mxu0
  %v3889 = vadd.f32 0.0, %v3888
  %v3890 = vpop.f32.mrf.mxu0
  %3891 = vdwg.mxu0
  %3892 = vmatpush.bf16.msra.mxu0 %v3430
  %3893 = vmatpush.bf16.msra.mxu0 %v3425
  %3894 = vmatpush.bf16.msra.mxu0 %v3420
  %3895 = vmatpush.bf16.msra.mxu0 %v3415
  %3896 = vmatpush.bf16.msra.mxu0 %v3410
  %3897 = vmatpush.bf16.msra.mxu0 %v3405
  %3898 = vmatpush.bf16.msra.mxu0 %v3400
  %3899 = vmatpush.bf16.msra.mxu0 %v3395
  %3900 = vmatmul.bf16.gmra.mxu0 %v2832
  %v3901 = vpop.f32.mrf.mxu0
  %v3902 = vadd.f32 %v3889, %v3901
  %v3903 = vpop.f32.mrf.mxu0
  %3904 = vdwg.mxu0
  %3905 = vmatpush.bf16.msra.mxu0 %v3470
  %3906 = vmatpush.bf16.msra.mxu0 %v3465
  %3907 = vmatpush.bf16.msra.mxu0 %v3460
  %3908 = vmatpush.bf16.msra.mxu0 %v3455
  %3909 = vmatpush.bf16.msra.mxu0 %v3450
  %3910 = vmatpush.bf16.msra.mxu0 %v3445
  %3911 = vmatpush.bf16.msra.mxu0 %v3440
  %3912 = vmatpush.bf16.msra.mxu0 %v3435
  %3913 = vmatmul.bf16.gmra.mxu0 %v2833
  %v3914 = vpop.f32.mrf.mxu0
  %v3915 = vadd.f32 %v3902, %v3914
  %v3916 = vpop.f32.mrf.mxu0
  %3917 = vdwg.mxu0
  %3918 = vmatpush.bf16.msra.mxu0 %v3510
  %3919 = vmatpush.bf16.msra.mxu0 %v3505
  %3920 = vmatpush.bf16.msra.mxu0 %v3500
  %3921 = vmatpush.bf16.msra.mxu0 %v3495
  %3922 = vmatpush.bf16.msra.mxu0 %v3490
  %3923 = vmatpush.bf16.msra.mxu0 %v3485
  %3924 = vmatpush.bf16.msra.mxu0 %v3480
  %3925 = vmatpush.bf16.msra.mxu0 %v3475
  %3926 = vmatmul.bf16.gmra.mxu0 %v2834
  %v3927 = vpop.f32.mrf.mxu0
  %v3928 = vadd.f32 %v3915, %v3927
  %v3929 = vpop.f32.mrf.mxu0
  %3930 = vdwg.mxu0
  %v3931 = vadd.f32 %v2428, %v3720
  %v3932 = vadd.f32 %v2480, %v3772
  %v3933 = vadd.f32 %v2532, %v3824
  %v3934 = vadd.f32 %v2584, %v3876
  %v3935 = vadd.f32 %v2636, %v3928
  %v3936 = vld [vmem:[%s1 + $0xf00] sm:$0xff]
  %v3937 = vld [vmem:[%s1 + $0xf08] sm:$0xff]
  %v3938 = vld [vmem:[%s1 + $0xf10] sm:$0xf]
  %v3939 = vld [vmem:[%s1 + $0xf14] sm:$0xff]
  %v3940 = vld [vmem:[%s1 + $0xf1c] sm:$0xff]
  %v3941 = vld [vmem:[%s1 + $0xf24] sm:$0xf]
  %v3942 = vld [vmem:[%s1 + $0xf28] sm:$0xff]
  %v3943 = vld [vmem:[%s1 + $0xf30] sm:$0xff]
  %v3944 = vld [vmem:[%s1 + $0xf38] sm:$0xf]
  %v3945 = vld [vmem:[%s1 + $0xf3c] sm:$0xff]
  %v3946 = vld [vmem:[%s1 + $0xf44] sm:$0xff]
  %v3947 = vld [vmem:[%s1 + $0xf4c] sm:$0xf]
  %v3948 = vld [vmem:[%s1 + $0xf50] sm:$0xff]
  %v3949 = vld [vmem:[%s1 + $0xf58] sm:$0xff]
  %v3950 = vld [vmem:[%s1 + $0xf60] sm:$0xf]
  %v3951 = vld [vmem:[%s1 + $0xf64] sm:$0xff]
  %v3952 = vld [vmem:[%s1 + $0xf6c] sm:$0xff]
  %v3953 = vld [vmem:[%s1 + $0xf74] sm:$0xf]
  %v3954 = vld [vmem:[%s1 + $0xf78] sm:$0xff]
  %v3955 = vld [vmem:[%s1 + $0xf80] sm:$0xff]
  %v3956 = vld [vmem:[%s1 + $0xf88] sm:$0xf]
  %v3957 = vld [vmem:[%s1 + $0xf8c] sm:$0xff]
  %v3958 = vld [vmem:[%s1 + $0xf94] sm:$0xff]
  %v3959 = vld [vmem:[%s1 + $0xf9c] sm:$0xf]
  %v3960 = vld [vmem:[%s1 + $0xfa0] sm:$0xff]
  %v3961 = vld [vmem:[%s1 + $0xfa8] sm:$0xff]
  %v3962 = vld [vmem:[%s1 + $0xfb0] sm:$0xf]
  %v3963 = vld [vmem:[%s1 + $0xfb4] sm:$0xff]
  %v3964 = vld [vmem:[%s1 + $0xfbc] sm:$0xff]
  %v3965 = vld [vmem:[%s1 + $0xfc4] sm:$0xf]
  %v3966 = vld [vmem:[%s1 + $0xfc8] sm:$0xff]
  %v3967 = vld [vmem:[%s1 + $0xfd0] sm:$0xff]
  %v3968 = vld [vmem:[%s1 + $0xfd8] sm:$0xf]
  %v3969 = vld [vmem:[%s1 + $0xfdc] sm:$0xff]
  %v3970 = vld [vmem:[%s1 + $0xfe4] sm:$0xff]
  %v3971 = vld [vmem:[%s1 + $0xfec] sm:$0xf]
  %v3972 = vld [vmem:[%s1 + $0xff0] sm:$0xff]
  %v3973 = vld [vmem:[%s1 + $0xff8] sm:$0xff]
  %v3974 = vld [vmem:[%s1 + $0x1000] sm:$0xf]
  %v3975 = vld [vmem:[%s1 + $0x1004] sm:$0xff]
  %v3976 = vld [vmem:[%s1 + $0x100c] sm:$0xff]
  %v3977 = vld [vmem:[%s1 + $0x1014] sm:$0xf]
  %v3978 = vld [vmem:[%s1 + $0x1018] sm:$0xff]
  %v3979 = vld [vmem:[%s1 + $0x1020] sm:$0xff]
  %v3980 = vld [vmem:[%s1 + $0x1028] sm:$0xf]
  %v3981 = vld [vmem:[%s1 + $0x102c] sm:$0xff]
  %v3982 = vld [vmem:[%s1 + $0x1034] sm:$0xff]
  %v3983 = vld [vmem:[%s1 + $0x103c] sm:$0xf]
  %v3984 = vld [vmem:[%s1 + $0x1040] sm:$0xff]
  %v3985 = vld [vmem:[%s1 + $0x1048] sm:$0xff]
  %v3986 = vld [vmem:[%s1 + $0x1050] sm:$0xf]
  %v3987 = vld [vmem:[%s1 + $0x1054] sm:$0xff]
  %v3988 = vld [vmem:[%s1 + $0x105c] sm:$0xff]
  %v3989 = vld [vmem:[%s1 + $0x1064] sm:$0xf]
  %v3990 = vld [vmem:[%s1 + $0x1068] sm:$0xff]
  %v3991 = vld [vmem:[%s1 + $0x1070] sm:$0xff]
  %v3992 = vld [vmem:[%s1 + $0x1078] sm:$0xf]
  %v3993 = vld [vmem:[%s1 + $0x107c] sm:$0xff]
  %v3994 = vld [vmem:[%s1 + $0x1084] sm:$0xff]
  %v3995 = vld [vmem:[%s1 + $0x108c] sm:$0xf]
  %v3996 = vld [vmem:[%s1 + $0x1090] sm:$0xff]
  %v3997 = vld [vmem:[%s1 + $0x1098] sm:$0xff]
  %v3998 = vld [vmem:[%s1 + $0x10a0] sm:$0xf]
  %v3999 = vld [vmem:[%s1 + $0x10a4] sm:$0xff]
  %v4000 = vld [vmem:[%s1 + $0x10ac] sm:$0xff]
  %v4001 = vld [vmem:[%s1 + $0x10b4] sm:$0xf]
  %v4002 = vld [vmem:[%s1 + $0x10b8] sm:$0xff]
  %v4003 = vld [vmem:[%s1 + $0x10c0] sm:$0xff]
  %v4004 = vld [vmem:[%s1 + $0x10c8] sm:$0xf]
  %v4005 = vld [vmem:[%s1 + $0x10cc] sm:$0xff]
  %v4006 = vld [vmem:[%s1 + $0x10d4] sm:$0xff]
  %v4007 = vld [vmem:[%s1 + $0x10dc] sm:$0xf]
  %v4008 = vld [vmem:[%s1 + $0x10e0] sm:$0xff]
  %v4009 = vld [vmem:[%s1 + $0x10e8] sm:$0xff]
  %v4010 = vld [vmem:[%s1 + $0x10f0] sm:$0xf]
  %v4011 = vld [vmem:[%s1 + $0x10f4] sm:$0xff]
  %v4012 = vld [vmem:[%s1 + $0x10fc] sm:$0xff]
  %v4013 = vld [vmem:[%s1 + $0x1104] sm:$0xf]
  %v4014 = vld [vmem:[%s1 + $0x1108] sm:$0xff]
  %v4015 = vld [vmem:[%s1 + $0x1110] sm:$0xff]
  %v4016 = vld [vmem:[%s1 + $0x1118] sm:$0xf]
  %v4017 = vld [vmem:[%s1 + $0x111c] sm:$0xff]
  %v4018 = vld [vmem:[%s1 + $0x1124] sm:$0xff]
  %v4019 = vld [vmem:[%s1 + $0x112c] sm:$0xf]
  %v4020 = vld [vmem:[%s1 + $0x1130] sm:$0xff]
  %v4021 = vld [vmem:[%s1 + $0x1138] sm:$0xff]
  %v4022 = vld [vmem:[%s1 + $0x1140] sm:$0xf]
  %v4023 = vld [vmem:[%s1 + $0x1144] sm:$0xff]
  %v4024 = vld [vmem:[%s1 + $0x114c] sm:$0xff]
  %v4025 = vld [vmem:[%s1 + $0x1154] sm:$0xf]
  %v4026 = vld [vmem:[%s1 + $0x1158] sm:$0xff]
  %v4027 = vld [vmem:[%s1 + $0x1160] sm:$0xff]
  %v4028 = vld [vmem:[%s1 + $0x1168] sm:$0xf]
  %v4029 = vld [vmem:[%s1 + $0x116c] sm:$0xff]
  %v4030 = vld [vmem:[%s1 + $0x1174] sm:$0xff]
  %v4031 = vld [vmem:[%s1 + $0x117c] sm:$0xf]
  %v4032 = vld [vmem:[%s1 + $0x1180] sm:$0xff]
  %v4033 = vld [vmem:[%s1 + $0x1188] sm:$0xff]
  %v4034 = vld [vmem:[%s1 + $0x1190] sm:$0xf]
  %v4035 = vld [vmem:[%s1 + $0x1194] sm:$0xff]
  %v4036 = vld [vmem:[%s1 + $0x119c] sm:$0xff]
  %v4037 = vld [vmem:[%s1 + $0x11a4] sm:$0xf]
  %v4038 = vld [vmem:[%s1 + $0x11a8] sm:$0xff]
  %v4039 = vld [vmem:[%s1 + $0x11b0] sm:$0xff]
  %v4040 = vld [vmem:[%s1 + $0x11b8] sm:$0xf]
  %v4041 = vld [vmem:[%s1 + $0x11bc] sm:$0xff]
  %v4042 = vld [vmem:[%s1 + $0x11c4] sm:$0xff]
  %v4043 = vld [vmem:[%s1 + $0x11cc] sm:$0xf]
  %v4044 = vld [vmem:[%s1 + $0x11d0] sm:$0xff]
  %v4045 = vld [vmem:[%s1 + $0x11d8] sm:$0xff]
  %v4046 = vld [vmem:[%s1 + $0x11e0] sm:$0xf]
  %v4047 = vld [vmem:[%s1 + $0x11e4] sm:$0xff]
  %v4048 = vld [vmem:[%s1 + $0x11ec] sm:$0xff]
  %v4049 = vld [vmem:[%s1 + $0x11f4] sm:$0xf]
  %v4050 = vld [vmem:[%s1 + $0x11f8] sm:$0xff]
  %v4051 = vld [vmem:[%s1 + $0x1200] sm:$0xff]
  %v4052 = vld [vmem:[%s1 + $0x1208] sm:$0xf]
  %v4053 = vld [vmem:[%s1 + $0x120c] sm:$0xff]
  %v4054 = vld [vmem:[%s1 + $0x1214] sm:$0xff]
  %v4055 = vld [vmem:[%s1 + $0x121c] sm:$0xf]
  %v4056 = vld [vmem:[%s1 + $0x1220] sm:$0xff]
  %v4057 = vld [vmem:[%s1 + $0x1228] sm:$0xff]
  %v4058 = vld [vmem:[%s1 + $0x1230] sm:$0xf]
  %v4059 = vld [vmem:[%s1 + $0x1234] sm:$0xff]
  %v4060 = vld [vmem:[%s1 + $0x123c] sm:$0xff]
  %v4061 = vld [vmem:[%s1 + $0x1244] sm:$0xf]
  %v4062 = vld [vmem:[%s1 + $0x1248] sm:$0xff]
  %v4063 = vld [vmem:[%s1 + $0x1250] sm:$0xff]
  %v4064 = vld [vmem:[%s1 + $0x1258] sm:$0xf]
  %v4065 = vld [vmem:[%s1 + $0x125c] sm:$0xff]
  %v4066 = vld [vmem:[%s1 + $0x1264] sm:$0xff]
  %v4067 = vld [vmem:[%s1 + $0x126c] sm:$0xf]
  %v4068 = vld [vmem:[%s1 + $0x1270] sm:$0xff]
  %v4069 = vld [vmem:[%s1 + $0x1278] sm:$0xff]
  %v4070 = vld [vmem:[%s1 + $0x1280] sm:$0xf]
  %v4071 = vld [vmem:[%s1 + $0x1284] sm:$0xff]
  %v4072 = vld [vmem:[%s1 + $0x128c] sm:$0xff]
  %v4073 = vld [vmem:[%s1 + $0x1294] sm:$0xf]
  %v4074 = vld [vmem:[%s1 + $0x1298] sm:$0xff]
  %v4075 = vld [vmem:[%s1 + $0x12a0] sm:$0xff]
  %v4076 = vld [vmem:[%s1 + $0x12a8] sm:$0xf]
  %v4077 = vld [vmem:[%s1 + $0x12ac] sm:$0xff]
  %v4078 = vld [vmem:[%s1 + $0x12b4] sm:$0xff]
  %v4079 = vld [vmem:[%s1 + $0x12bc] sm:$0xf]
  %v4080 = vld [vmem:[%s1 + $0x12c0] sm:$0xff]
  %v4081 = vld [vmem:[%s1 + $0x12c8] sm:$0xff]
  %v4082 = vld [vmem:[%s1 + $0x12d0] sm:$0xf]
  %v4083 = vld [vmem:[%s1 + $0x12d4] sm:$0xff]
  %v4084 = vld [vmem:[%s1 + $0x12dc] sm:$0xff]
  %v4085 = vld [vmem:[%s1 + $0x12e4] sm:$0xf]
  %v4086 = vld [vmem:[%s1 + $0x12e8] sm:$0xff]
  %v4087 = vld [vmem:[%s1 + $0x12f0] sm:$0xff]
  %v4088 = vld [vmem:[%s1 + $0x12f8] sm:$0xf]
  %v4089 = vld [vmem:[%s1 + $0x12fc] sm:$0xff]
  %v4090 = vld [vmem:[%s1 + $0x1304] sm:$0xff]
  %v4091 = vld [vmem:[%s1 + $0x130c] sm:$0xf]
  %v4092 = vld [vmem:[%s1 + $0x1310] sm:$0xff]
  %v4093 = vld [vmem:[%s1 + $0x1318] sm:$0xff]
  %v4094 = vld [vmem:[%s1 + $0x1320] sm:$0xf]
  %v4095 = vld [vmem:[%s1 + $0x1324] sm:$0xff]
  %v4096 = vld [vmem:[%s1 + $0x132c] sm:$0xff]
  %v4097 = vld [vmem:[%s1 + $0x1334] sm:$0xf]
  %v4098 = vld [vmem:[%s1 + $0x1338] sm:$0xff]
  %v4099 = vld [vmem:[%s1 + $0x1340] sm:$0xff]
  %v4100 = vld [vmem:[%s1 + $0x1348] sm:$0xf]
  %v4101 = vld [vmem:[%s1 + $0x134c] sm:$0xff]
  %v4102 = vld [vmem:[%s1 + $0x1354] sm:$0xff]
  %v4103 = vld [vmem:[%s1 + $0x135c] sm:$0xf]
  %v4104 = vld [vmem:[%s1 + $0x1360] sm:$0xff]
  %v4105 = vld [vmem:[%s1 + $0x1368] sm:$0xff]
  %v4106 = vld [vmem:[%s1 + $0x1370] sm:$0xf]
  %v4107 = vld [vmem:[%s1 + $0x1374] sm:$0xff]
  %v4108 = vld [vmem:[%s1 + $0x137c] sm:$0xff]
  %v4109 = vld [vmem:[%s1 + $0x1384] sm:$0xf]
  %v4110 = vld [vmem:[%s1 + $0x1388] sm:$0xff]
  %v4111 = vld [vmem:[%s1 + $0x1390] sm:$0xff]
  %v4112 = vld [vmem:[%s1 + $0x1398] sm:$0xf]
  %v4113 = vld [vmem:[%s1 + $0x139c] sm:$0xff]
  %v4114 = vld [vmem:[%s1 + $0x13a4] sm:$0xff]
  %v4115 = vld [vmem:[%s1 + $0x13ac] sm:$0xf]
  %v4116 = vld [vmem:[%s1 + $0x13b0] sm:$0xff]
  %v4117 = vld [vmem:[%s1 + $0x13b8] sm:$0xff]
  %v4118 = vld [vmem:[%s1 + $0x13c0] sm:$0xf]
  %v4119 = vld [vmem:[%s1 + $0x13c4] sm:$0xff]
  %v4120 = vld [vmem:[%s1 + $0x13cc] sm:$0xff]
  %v4121 = vld [vmem:[%s1 + $0x13d4] sm:$0xf]
  %v4122 = vld [vmem:[%s1 + $0x13d8] sm:$0xff]
  %v4123 = vld [vmem:[%s1 + $0x13e0] sm:$0xff]
  %v4124 = vld [vmem:[%s1 + $0x13e8] sm:$0xf]
  %v4125 = vld [vmem:[%s1 + $0x13ec] sm:$0xff]
  %v4126 = vld [vmem:[%s1 + $0x13f4] sm:$0xff]
  %v4127 = vld [vmem:[%s1 + $0x13fc] sm:$0xf]
  %v4128 = vrot.slane %v408, 1
  %v4129 = vrot.slane %v411, 2
  %v4130 = vor.u32 %v4128, %v4129
  %v4131 = vrot.slane %v416, 1
  %v4132 = vrot.slane %v419, 2
  %v4133 = vor.u32 %v4131, %v4132
  %v4134 = vrot.slane %v424, 1
  %v4135 = vrot.slane %v427, 2
  %v4136 = vor.u32 %v4134, %v4135
  %v4137 = vrot.slane %v432, 1
  %v4138 = vrot.slane %v435, 2
  %v4139 = vor.u32 %v4137, %v4138
  %v4336 = vunpack.c.l.b16 %v3936
  %v4337 = vunpack.c.h.b16 %v3936
  %v4338 = vunpack.c.l.b16 %v3937
  %v4339 = vunpack.c.h.b16 %v3937
  %v4340 = vunpack.c.l.b16 %v3938
  %v4341 = vunpack.c.l.b16 %v3939
  %v4342 = vunpack.c.h.b16 %v3939
  %v4343 = vunpack.c.l.b16 %v3940
  %v4344 = vunpack.c.h.b16 %v3940
  %v4345 = vunpack.c.l.b16 %v3941
  %v4346 = vunpack.c.l.b16 %v3942
  %v4347 = vunpack.c.h.b16 %v3942
  %v4348 = vunpack.c.l.b16 %v3943
  %v4349 = vunpack.c.h.b16 %v3943
  %v4350 = vunpack.c.l.b16 %v3944
  %v4351 = vunpack.c.l.b16 %v3945
  %v4352 = vunpack.c.h.b16 %v3945
  %v4353 = vunpack.c.l.b16 %v3946
  %v4354 = vunpack.c.h.b16 %v3946
  %v4355 = vunpack.c.l.b16 %v3947
  %v4356 = vunpack.c.l.b16 %v3948
  %v4357 = vunpack.c.h.b16 %v3948
  %v4358 = vunpack.c.l.b16 %v3949
  %v4359 = vunpack.c.h.b16 %v3949
  %v4360 = vunpack.c.l.b16 %v3950
  %v4361 = vunpack.c.l.b16 %v3951
  %v4362 = vunpack.c.h.b16 %v3951
  %v4363 = vunpack.c.l.b16 %v3952
  %v4364 = vunpack.c.h.b16 %v3952
  %v4365 = vunpack.c.l.b16 %v3953
  %v4366 = vunpack.c.l.b16 %v3954
  %v4367 = vunpack.c.h.b16 %v3954
  %v4368 = vunpack.c.l.b16 %v3955
  %v4369 = vunpack.c.h.b16 %v3955
  %v4370 = vunpack.c.l.b16 %v3956
  %v4371 = vunpack.c.l.b16 %v3957
  %v4372 = vunpack.c.h.b16 %v3957
  %v4373 = vunpack.c.l.b16 %v3958
  %v4374 = vunpack.c.h.b16 %v3958
  %v4375 = vunpack.c.l.b16 %v3959
  %v4376 = vunpack.c.l.b16 %v3960
  %v4377 = vunpack.c.h.b16 %v3960
  %v4378 = vunpack.c.l.b16 %v3961
  %v4379 = vunpack.c.h.b16 %v3961
  %v4380 = vunpack.c.l.b16 %v3962
  %v4381 = vunpack.c.l.b16 %v3963
  %v4382 = vunpack.c.h.b16 %v3963
  %v4383 = vunpack.c.l.b16 %v3964
  %v4384 = vunpack.c.h.b16 %v3964
  %v4385 = vunpack.c.l.b16 %v3965
  %v4386 = vunpack.c.l.b16 %v3966
  %v4387 = vunpack.c.h.b16 %v3966
  %v4388 = vunpack.c.l.b16 %v3967
  %v4389 = vunpack.c.h.b16 %v3967
  %v4390 = vunpack.c.l.b16 %v3968
  %v4391 = vunpack.c.l.b16 %v3969
  %v4392 = vunpack.c.h.b16 %v3969
  %v4393 = vunpack.c.l.b16 %v3970
  %v4394 = vunpack.c.h.b16 %v3970
  %v4395 = vunpack.c.l.b16 %v3971
  %v4396 = vunpack.c.l.b16 %v3972
  %v4397 = vunpack.c.h.b16 %v3972
  %v4398 = vunpack.c.l.b16 %v3973
  %v4399 = vunpack.c.h.b16 %v3973
  %v4400 = vunpack.c.l.b16 %v3974
  %v4401 = vunpack.c.l.b16 %v3975
  %v4402 = vunpack.c.h.b16 %v3975
  %v4403 = vunpack.c.l.b16 %v3976
  %v4404 = vunpack.c.h.b16 %v3976
  %v4405 = vunpack.c.l.b16 %v3977
  %v4406 = vunpack.c.l.b16 %v3978
  %v4407 = vunpack.c.h.b16 %v3978
  %v4408 = vunpack.c.l.b16 %v3979
  %v4409 = vunpack.c.h.b16 %v3979
  %v4410 = vunpack.c.l.b16 %v3980
  %v4411 = vunpack.c.l.b16 %v3981
  %v4412 = vunpack.c.h.b16 %v3981
  %v4413 = vunpack.c.l.b16 %v3982
  %v4414 = vunpack.c.h.b16 %v3982
  %v4415 = vunpack.c.l.b16 %v3983
  %v4416 = vunpack.c.l.b16 %v3984
  %v4417 = vunpack.c.h.b16 %v3984
  %v4418 = vunpack.c.l.b16 %v3985
  %v4419 = vunpack.c.h.b16 %v3985
  %v4420 = vunpack.c.l.b16 %v3986
  %v4421 = vunpack.c.l.b16 %v3987
  %v4422 = vunpack.c.h.b16 %v3987
  %v4423 = vunpack.c.l.b16 %v3988
  %v4424 = vunpack.c.h.b16 %v3988
  %v4425 = vunpack.c.l.b16 %v3989
  %v4426 = vunpack.c.l.b16 %v3990
  %v4427 = vunpack.c.h.b16 %v3990
  %v4428 = vunpack.c.l.b16 %v3991
  %v4429 = vunpack.c.h.b16 %v3991
  %v4430 = vunpack.c.l.b16 %v3992
  %v4431 = vunpack.c.l.b16 %v3993
  %v4432 = vunpack.c.h.b16 %v3993
  %v4433 = vunpack.c.l.b16 %v3994
  %v4434 = vunpack.c.h.b16 %v3994
  %v4435 = vunpack.c.l.b16 %v3995
  %v4436 = vunpack.c.l.b16 %v3996
  %v4437 = vunpack.c.h.b16 %v3996
  %v4438 = vunpack.c.l.b16 %v3997
  %v4439 = vunpack.c.h.b16 %v3997
  %v4440 = vunpack.c.l.b16 %v3998
  %v4441 = vunpack.c.l.b16 %v3999
  %v4442 = vunpack.c.h.b16 %v3999
  %v4443 = vunpack.c.l.b16 %v4000
  %v4444 = vunpack.c.h.b16 %v4000
  %v4445 = vunpack.c.l.b16 %v4001
  %v4446 = vunpack.c.l.b16 %v4002
  %v4447 = vunpack.c.h.b16 %v4002
  %v4448 = vunpack.c.l.b16 %v4003
  %v4449 = vunpack.c.h.b16 %v4003
  %v4450 = vunpack.c.l.b16 %v4004
  %v4451 = vunpack.c.l.b16 %v4005
  %v4452 = vunpack.c.h.b16 %v4005
  %v4453 = vunpack.c.l.b16 %v4006
  %v4454 = vunpack.c.h.b16 %v4006
  %v4455 = vunpack.c.l.b16 %v4007
  %v4456 = vunpack.c.l.b16 %v4008
  %v4457 = vunpack.c.h.b16 %v4008
  %v4458 = vunpack.c.l.b16 %v4009
  %v4459 = vunpack.c.h.b16 %v4009
  %v4460 = vunpack.c.l.b16 %v4010
  %v4461 = vunpack.c.l.b16 %v4011
  %v4462 = vunpack.c.h.b16 %v4011
  %v4463 = vunpack.c.l.b16 %v4012
  %v4464 = vunpack.c.h.b16 %v4012
  %v4465 = vunpack.c.l.b16 %v4013
  %v4466 = vunpack.c.l.b16 %v4014
  %v4467 = vunpack.c.h.b16 %v4014
  %v4468 = vunpack.c.l.b16 %v4015
  %v4469 = vunpack.c.h.b16 %v4015
  %v4470 = vunpack.c.l.b16 %v4016
  %v4471 = vunpack.c.l.b16 %v4017
  %v4472 = vunpack.c.h.b16 %v4017
  %v4473 = vunpack.c.l.b16 %v4018
  %v4474 = vunpack.c.h.b16 %v4018
  %v4475 = vunpack.c.l.b16 %v4019
  %v4476 = vunpack.c.l.b16 %v4020
  %v4477 = vunpack.c.h.b16 %v4020
  %v4478 = vunpack.c.l.b16 %v4021
  %v4479 = vunpack.c.h.b16 %v4021
  %v4480 = vunpack.c.l.b16 %v4022
  %v4481 = vunpack.c.l.b16 %v4023
  %v4482 = vunpack.c.h.b16 %v4023
  %v4483 = vunpack.c.l.b16 %v4024
  %v4484 = vunpack.c.h.b16 %v4024
  %v4485 = vunpack.c.l.b16 %v4025
  %v4486 = vunpack.c.l.b16 %v4026
  %v4487 = vunpack.c.h.b16 %v4026
  %v4488 = vunpack.c.l.b16 %v4027
  %v4489 = vunpack.c.h.b16 %v4027
  %v4490 = vunpack.c.l.b16 %v4028
  %v4491 = vunpack.c.l.b16 %v4029
  %v4492 = vunpack.c.h.b16 %v4029
  %v4493 = vunpack.c.l.b16 %v4030
  %v4494 = vunpack.c.h.b16 %v4030
  %v4495 = vunpack.c.l.b16 %v4031
  %v4496 = vunpack.c.l.b16 %v4032
  %v4497 = vunpack.c.h.b16 %v4032
  %v4498 = vunpack.c.l.b16 %v4033
  %v4499 = vunpack.c.h.b16 %v4033
  %v4500 = vunpack.c.l.b16 %v4034
  %v4501 = vunpack.c.l.b16 %v4035
  %v4502 = vunpack.c.h.b16 %v4035
  %v4503 = vunpack.c.l.b16 %v4036
  %v4504 = vunpack.c.h.b16 %v4036
  %v4505 = vunpack.c.l.b16 %v4037
  %v4506 = vunpack.c.l.b16 %v4038
  %v4507 = vunpack.c.h.b16 %v4038
  %v4508 = vunpack.c.l.b16 %v4039
  %v4509 = vunpack.c.h.b16 %v4039
  %v4510 = vunpack.c.l.b16 %v4040
  %v4511 = vunpack.c.l.b16 %v4041
  %v4512 = vunpack.c.h.b16 %v4041
  %v4513 = vunpack.c.l.b16 %v4042
  %v4514 = vunpack.c.h.b16 %v4042
  %v4515 = vunpack.c.l.b16 %v4043
  %v4516 = vunpack.c.l.b16 %v4044
  %v4517 = vunpack.c.h.b16 %v4044
  %v4518 = vunpack.c.l.b16 %v4045
  %v4519 = vunpack.c.h.b16 %v4045
  %v4520 = vunpack.c.l.b16 %v4046
  %v4521 = vunpack.c.l.b16 %v4047
  %v4522 = vunpack.c.h.b16 %v4047
  %v4523 = vunpack.c.l.b16 %v4048
  %v4524 = vunpack.c.h.b16 %v4048
  %v4525 = vunpack.c.l.b16 %v4049
  %v4526 = vunpack.c.l.b16 %v4050
  %v4527 = vunpack.c.h.b16 %v4050
  %v4528 = vunpack.c.l.b16 %v4051
  %v4529 = vunpack.c.h.b16 %v4051
  %v4530 = vunpack.c.l.b16 %v4052
  %v4531 = vunpack.c.l.b16 %v4053
  %v4532 = vunpack.c.h.b16 %v4053
  %v4533 = vunpack.c.l.b16 %v4054
  %v4534 = vunpack.c.h.b16 %v4054
  %v4535 = vunpack.c.l.b16 %v4055
  %v4536 = vunpack.c.l.b16 %v4056
  %v4537 = vunpack.c.h.b16 %v4056
  %v4538 = vunpack.c.l.b16 %v4057
  %v4539 = vunpack.c.h.b16 %v4057
  %v4540 = vunpack.c.l.b16 %v4058
  %v4541 = vunpack.c.l.b16 %v4059
  %v4542 = vunpack.c.h.b16 %v4059
  %v4543 = vunpack.c.l.b16 %v4060
  %v4544 = vunpack.c.h.b16 %v4060
  %v4545 = vunpack.c.l.b16 %v4061
  %v4546 = vunpack.c.l.b16 %v4062
  %v4547 = vunpack.c.h.b16 %v4062
  %v4548 = vunpack.c.l.b16 %v4063
  %v4549 = vunpack.c.h.b16 %v4063
  %v4550 = vunpack.c.l.b16 %v4064
  %v4551 = vunpack.c.l.b16 %v4065
  %v4552 = vunpack.c.h.b16 %v4065
  %v4553 = vunpack.c.l.b16 %v4066
  %v4554 = vunpack.c.h.b16 %v4066
  %v4555 = vunpack.c.l.b16 %v4067
  %v4556 = vunpack.c.l.b16 %v4068
  %v4557 = vunpack.c.h.b16 %v4068
  %v4558 = vunpack.c.l.b16 %v4069
  %v4559 = vunpack.c.h.b16 %v4069
  %v4560 = vunpack.c.l.b16 %v4070
  %v4561 = vunpack.c.l.b16 %v4071
  %v4562 = vunpack.c.h.b16 %v4071
  %v4563 = vunpack.c.l.b16 %v4072
  %v4564 = vunpack.c.h.b16 %v4072
  %v4565 = vunpack.c.l.b16 %v4073
  %v4566 = vunpack.c.l.b16 %v4074
  %v4567 = vunpack.c.h.b16 %v4074
  %v4568 = vunpack.c.l.b16 %v4075
  %v4569 = vunpack.c.h.b16 %v4075
  %v4570 = vunpack.c.l.b16 %v4076
  %v4571 = vunpack.c.l.b16 %v4077
  %v4572 = vunpack.c.h.b16 %v4077
  %v4573 = vunpack.c.l.b16 %v4078
  %v4574 = vunpack.c.h.b16 %v4078
  %v4575 = vunpack.c.l.b16 %v4079
  %v4576 = vunpack.c.l.b16 %v4080
  %v4577 = vunpack.c.h.b16 %v4080
  %v4578 = vunpack.c.l.b16 %v4081
  %v4579 = vunpack.c.h.b16 %v4081
  %v4580 = vunpack.c.l.b16 %v4082
  %v4581 = vunpack.c.l.b16 %v4083
  %v4582 = vunpack.c.h.b16 %v4083
  %v4583 = vunpack.c.l.b16 %v4084
  %v4584 = vunpack.c.h.b16 %v4084
  %v4585 = vunpack.c.l.b16 %v4085
  %v4586 = vunpack.c.l.b16 %v4086
  %v4587 = vunpack.c.h.b16 %v4086
  %v4588 = vunpack.c.l.b16 %v4087
  %v4589 = vunpack.c.h.b16 %v4087
  %v4590 = vunpack.c.l.b16 %v4088
  %v4591 = vunpack.c.l.b16 %v4089
  %v4592 = vunpack.c.h.b16 %v4089
  %v4593 = vunpack.c.l.b16 %v4090
  %v4594 = vunpack.c.h.b16 %v4090
  %v4595 = vunpack.c.l.b16 %v4091
  %v4596 = vunpack.c.l.b16 %v4092
  %v4597 = vunpack.c.h.b16 %v4092
  %v4598 = vunpack.c.l.b16 %v4093
  %v4599 = vunpack.c.h.b16 %v4093
  %v4600 = vunpack.c.l.b16 %v4094
  %v4601 = vunpack.c.l.b16 %v4095
  %v4602 = vunpack.c.h.b16 %v4095
  %v4603 = vunpack.c.l.b16 %v4096
  %v4604 = vunpack.c.h.b16 %v4096
  %v4605 = vunpack.c.l.b16 %v4097
  %v4606 = vunpack.c.l.b16 %v4098
  %v4607 = vunpack.c.h.b16 %v4098
  %v4608 = vunpack.c.l.b16 %v4099
  %v4609 = vunpack.c.h.b16 %v4099
  %v4610 = vunpack.c.l.b16 %v4100
  %v4611 = vunpack.c.l.b16 %v4101
  %v4612 = vunpack.c.h.b16 %v4101
  %v4613 = vunpack.c.l.b16 %v4102
  %v4614 = vunpack.c.h.b16 %v4102
  %v4615 = vunpack.c.l.b16 %v4103
  %v4616 = vunpack.c.l.b16 %v4104
  %v4617 = vunpack.c.h.b16 %v4104
  %v4618 = vunpack.c.l.b16 %v4105
  %v4619 = vunpack.c.h.b16 %v4105
  %v4620 = vunpack.c.l.b16 %v4106
  %v4621 = vunpack.c.l.b16 %v4107
  %v4622 = vunpack.c.h.b16 %v4107
  %v4623 = vunpack.c.l.b16 %v4108
  %v4624 = vunpack.c.h.b16 %v4108
  %v4625 = vunpack.c.l.b16 %v4109
  %v4626 = vunpack.c.l.b16 %v4110
  %v4627 = vunpack.c.h.b16 %v4110
  %v4628 = vunpack.c.l.b16 %v4111
  %v4629 = vunpack.c.h.b16 %v4111
  %v4630 = vunpack.c.l.b16 %v4112
  %v4631 = vunpack.c.l.b16 %v4113
  %v4632 = vunpack.c.h.b16 %v4113
  %v4633 = vunpack.c.l.b16 %v4114
  %v4634 = vunpack.c.h.b16 %v4114
  %v4635 = vunpack.c.l.b16 %v4115
  %v4636 = vunpack.c.l.b16 %v4116
  %v4637 = vunpack.c.h.b16 %v4116
  %v4638 = vunpack.c.l.b16 %v4117
  %v4639 = vunpack.c.h.b16 %v4117
  %v4640 = vunpack.c.l.b16 %v4118
  %v4641 = vunpack.c.l.b16 %v4119
  %v4642 = vunpack.c.h.b16 %v4119
  %v4643 = vunpack.c.l.b16 %v4120
  %v4644 = vunpack.c.h.b16 %v4120
  %v4645 = vunpack.c.l.b16 %v4121
  %v4646 = vunpack.c.l.b16 %v4122
  %v4647 = vunpack.c.h.b16 %v4122
  %v4648 = vunpack.c.l.b16 %v4123
  %v4649 = vunpack.c.h.b16 %v4123
  %v4650 = vunpack.c.l.b16 %v4124
  %v4651 = vunpack.c.l.b16 %v4125
  %v4652 = vunpack.c.h.b16 %v4125
  %v4653 = vunpack.c.l.b16 %v4126
  %v4654 = vunpack.c.h.b16 %v4126
  %v4655 = vunpack.c.l.b16 %v4127
  %v4656 = vpack.c.b16 %v4341, %v4336
  %v4657 = vpack.c.b16 %v4342, %v4337
  %v4658 = vpack.c.b16 %v4343, %v4338
  %v4659 = vpack.c.b16 %v4344, %v4339
  %v4660 = vpack.c.b16 %v4345, %v4340
  %v4661 = vpack.c.b16 %v4351, %v4346
  %v4662 = vpack.c.b16 %v4352, %v4347
  %v4663 = vpack.c.b16 %v4353, %v4348
  %v4664 = vpack.c.b16 %v4354, %v4349
  %v4665 = vpack.c.b16 %v4355, %v4350
  %v4666 = vpack.c.b16 %v4361, %v4356
  %v4667 = vpack.c.b16 %v4362, %v4357
  %v4668 = vpack.c.b16 %v4363, %v4358
  %v4669 = vpack.c.b16 %v4364, %v4359
  %v4670 = vpack.c.b16 %v4365, %v4360
  %v4671 = vpack.c.b16 %v4371, %v4366
  %v4672 = vpack.c.b16 %v4372, %v4367
  %v4673 = vpack.c.b16 %v4373, %v4368
  %v4674 = vpack.c.b16 %v4374, %v4369
  %v4675 = vpack.c.b16 %v4375, %v4370
  %v4676 = vpack.c.b16 %v4381, %v4376
  %v4677 = vpack.c.b16 %v4382, %v4377
  %v4678 = vpack.c.b16 %v4383, %v4378
  %v4679 = vpack.c.b16 %v4384, %v4379
  %v4680 = vpack.c.b16 %v4385, %v4380
  %v4681 = vpack.c.b16 %v4391, %v4386
  %v4682 = vpack.c.b16 %v4392, %v4387
  %v4683 = vpack.c.b16 %v4393, %v4388
  %v4684 = vpack.c.b16 %v4394, %v4389
  %v4685 = vpack.c.b16 %v4395, %v4390
  %v4686 = vpack.c.b16 %v4401, %v4396
  %v4687 = vpack.c.b16 %v4402, %v4397
  %v4688 = vpack.c.b16 %v4403, %v4398
  %v4689 = vpack.c.b16 %v4404, %v4399
  %v4690 = vpack.c.b16 %v4405, %v4400
  %v4691 = vpack.c.b16 %v4411, %v4406
  %v4692 = vpack.c.b16 %v4412, %v4407
  %v4693 = vpack.c.b16 %v4413, %v4408
  %v4694 = vpack.c.b16 %v4414, %v4409
  %v4695 = vpack.c.b16 %v4415, %v4410
  %v4696 = vpack.c.b16 %v4421, %v4416
  %v4697 = vpack.c.b16 %v4422, %v4417
  %v4698 = vpack.c.b16 %v4423, %v4418
  %v4699 = vpack.c.b16 %v4424, %v4419
  %v4700 = vpack.c.b16 %v4425, %v4420
  %v4701 = vpack.c.b16 %v4431, %v4426
  %v4702 = vpack.c.b16 %v4432, %v4427
  %v4703 = vpack.c.b16 %v4433, %v4428
  %v4704 = vpack.c.b16 %v4434, %v4429
  %v4705 = vpack.c.b16 %v4435, %v4430
  %v4706 = vpack.c.b16 %v4441, %v4436
  %v4707 = vpack.c.b16 %v4442, %v4437
  %v4708 = vpack.c.b16 %v4443, %v4438
  %v4709 = vpack.c.b16 %v4444, %v4439
  %v4710 = vpack.c.b16 %v4445, %v4440
  %v4711 = vpack.c.b16 %v4451, %v4446
  %v4712 = vpack.c.b16 %v4452, %v4447
  %v4713 = vpack.c.b16 %v4453, %v4448
  %v4714 = vpack.c.b16 %v4454, %v4449
  %v4715 = vpack.c.b16 %v4455, %v4450
  %v4716 = vpack.c.b16 %v4461, %v4456
  %v4717 = vpack.c.b16 %v4462, %v4457
  %v4718 = vpack.c.b16 %v4463, %v4458
  %v4719 = vpack.c.b16 %v4464, %v4459
  %v4720 = vpack.c.b16 %v4465, %v4460
  %v4721 = vpack.c.b16 %v4471, %v4466
  %v4722 = vpack.c.b16 %v4472, %v4467
  %v4723 = vpack.c.b16 %v4473, %v4468
  %v4724 = vpack.c.b16 %v4474, %v4469
  %v4725 = vpack.c.b16 %v4475, %v4470
  %v4726 = vpack.c.b16 %v4481, %v4476
  %v4727 = vpack.c.b16 %v4482, %v4477
  %v4728 = vpack.c.b16 %v4483, %v4478
  %v4729 = vpack.c.b16 %v4484, %v4479
  %v4730 = vpack.c.b16 %v4485, %v4480
  %v4731 = vpack.c.b16 %v4491, %v4486
  %v4732 = vpack.c.b16 %v4492, %v4487
  %v4733 = vpack.c.b16 %v4493, %v4488
  %v4734 = vpack.c.b16 %v4494, %v4489
  %v4735 = vpack.c.b16 %v4495, %v4490
  %v4736 = vpack.c.b16 %v4501, %v4496
  %v4737 = vpack.c.b16 %v4502, %v4497
  %v4738 = vpack.c.b16 %v4503, %v4498
  %v4739 = vpack.c.b16 %v4504, %v4499
  %v4740 = vpack.c.b16 %v4505, %v4500
  %v4741 = vpack.c.b16 %v4511, %v4506
  %v4742 = vpack.c.b16 %v4512, %v4507
  %v4743 = vpack.c.b16 %v4513, %v4508
  %v4744 = vpack.c.b16 %v4514, %v4509
  %v4745 = vpack.c.b16 %v4515, %v4510
  %v4746 = vpack.c.b16 %v4521, %v4516
  %v4747 = vpack.c.b16 %v4522, %v4517
  %v4748 = vpack.c.b16 %v4523, %v4518
  %v4749 = vpack.c.b16 %v4524, %v4519
  %v4750 = vpack.c.b16 %v4525, %v4520
  %v4751 = vpack.c.b16 %v4531, %v4526
  %v4752 = vpack.c.b16 %v4532, %v4527
  %v4753 = vpack.c.b16 %v4533, %v4528
  %v4754 = vpack.c.b16 %v4534, %v4529
  %v4755 = vpack.c.b16 %v4535, %v4530
  %v4756 = vpack.c.b16 %v4541, %v4536
  %v4757 = vpack.c.b16 %v4542, %v4537
  %v4758 = vpack.c.b16 %v4543, %v4538
  %v4759 = vpack.c.b16 %v4544, %v4539
  %v4760 = vpack.c.b16 %v4545, %v4540
  %v4761 = vpack.c.b16 %v4551, %v4546
  %v4762 = vpack.c.b16 %v4552, %v4547
  %v4763 = vpack.c.b16 %v4553, %v4548
  %v4764 = vpack.c.b16 %v4554, %v4549
  %v4765 = vpack.c.b16 %v4555, %v4550
  %v4766 = vpack.c.b16 %v4561, %v4556
  %v4767 = vpack.c.b16 %v4562, %v4557
  %v4768 = vpack.c.b16 %v4563, %v4558
  %v4769 = vpack.c.b16 %v4564, %v4559
  %v4770 = vpack.c.b16 %v4565, %v4560
  %v4771 = vpack.c.b16 %v4571, %v4566
  %v4772 = vpack.c.b16 %v4572, %v4567
  %v4773 = vpack.c.b16 %v4573, %v4568
  %v4774 = vpack.c.b16 %v4574, %v4569
  %v4775 = vpack.c.b16 %v4575, %v4570
  %v4776 = vpack.c.b16 %v4581, %v4576
  %v4777 = vpack.c.b16 %v4582, %v4577
  %v4778 = vpack.c.b16 %v4583, %v4578
  %v4779 = vpack.c.b16 %v4584, %v4579
  %v4780 = vpack.c.b16 %v4585, %v4580
  %v4781 = vpack.c.b16 %v4591, %v4586
  %v4782 = vpack.c.b16 %v4592, %v4587
  %v4783 = vpack.c.b16 %v4593, %v4588
  %v4784 = vpack.c.b16 %v4594, %v4589
  %v4785 = vpack.c.b16 %v4595, %v4590
  %v4786 = vpack.c.b16 %v4601, %v4596
  %v4787 = vpack.c.b16 %v4602, %v4597
  %v4788 = vpack.c.b16 %v4603, %v4598
  %v4789 = vpack.c.b16 %v4604, %v4599
  %v4790 = vpack.c.b16 %v4605, %v4600
  %v4791 = vpack.c.b16 %v4611, %v4606
  %v4792 = vpack.c.b16 %v4612, %v4607
  %v4793 = vpack.c.b16 %v4613, %v4608
  %v4794 = vpack.c.b16 %v4614, %v4609
  %v4795 = vpack.c.b16 %v4615, %v4610
  %v4796 = vpack.c.b16 %v4621, %v4616
  %v4797 = vpack.c.b16 %v4622, %v4617
  %v4798 = vpack.c.b16 %v4623, %v4618
  %v4799 = vpack.c.b16 %v4624, %v4619
  %v4800 = vpack.c.b16 %v4625, %v4620
  %v4801 = vpack.c.b16 %v4631, %v4626
  %v4802 = vpack.c.b16 %v4632, %v4627
  %v4803 = vpack.c.b16 %v4633, %v4628
  %v4804 = vpack.c.b16 %v4634, %v4629
  %v4805 = vpack.c.b16 %v4635, %v4630
  %v4806 = vpack.c.b16 %v4641, %v4636
  %v4807 = vpack.c.b16 %v4642, %v4637
  %v4808 = vpack.c.b16 %v4643, %v4638
  %v4809 = vpack.c.b16 %v4644, %v4639
  %v4810 = vpack.c.b16 %v4645, %v4640
  %v4811 = vpack.c.b16 %v4651, %v4646
  %v4812 = vpack.c.b16 %v4652, %v4647
  %v4813 = vpack.c.b16 %v4653, %v4648
  %v4814 = vpack.c.b16 %v4654, %v4649
  %v4815 = vpack.c.b16 %v4655, %v4650
  %4976 = vmatpush.bf16.msra.mxu0 %v4691
  %4977 = vmatpush.bf16.msra.mxu0 %v4686
  %4978 = vmatpush.bf16.msra.mxu0 %v4681
  %4979 = vmatpush.bf16.msra.mxu0 %v4676
  %4980 = vmatpush.bf16.msra.mxu0 %v4671
  %4981 = vmatpush.bf16.msra.mxu0 %v4666
  %4982 = vmatpush.bf16.msra.mxu0 %v4661
  %4983 = vmatpush.bf16.msra.mxu0 %v4656
  %4984 = vmatmul.bf16.gmra.mxu0 %v4130
  %v4985 = vpop.f32.mrf.mxu0
  %v4986 = vadd.f32 0.0, %v4985
  %v4987 = vpop.f32.mrf.mxu0
  %4988 = vdwg.mxu0
  %4989 = vmatpush.bf16.msra.mxu0 %v4731
  %4990 = vmatpush.bf16.msra.mxu0 %v4726
  %4991 = vmatpush.bf16.msra.mxu0 %v4721
  %4992 = vmatpush.bf16.msra.mxu0 %v4716
  %4993 = vmatpush.bf16.msra.mxu0 %v4711
  %4994 = vmatpush.bf16.msra.mxu0 %v4706
  %4995 = vmatpush.bf16.msra.mxu0 %v4701
  %4996 = vmatpush.bf16.msra.mxu0 %v4696
  %4997 = vmatmul.bf16.gmra.mxu0 %v4133
  %v4998 = vpop.f32.mrf.mxu0
  %v4999 = vadd.f32 %v4986, %v4998
  %v5000 = vpop.f32.mrf.mxu0
  %5001 = vdwg.mxu0
  %5002 = vmatpush.bf16.msra.mxu0 %v4771
  %5003 = vmatpush.bf16.msra.mxu0 %v4766
  %5004 = vmatpush.bf16.msra.mxu0 %v4761
  %5005 = vmatpush.bf16.msra.mxu0 %v4756
  %5006 = vmatpush.bf16.msra.mxu0 %v4751
  %5007 = vmatpush.bf16.msra.mxu0 %v4746
  %5008 = vmatpush.bf16.msra.mxu0 %v4741
  %5009 = vmatpush.bf16.msra.mxu0 %v4736
  %5010 = vmatmul.bf16.gmra.mxu0 %v4136
  %v5011 = vpop.f32.mrf.mxu0
  %v5012 = vadd.f32 %v4999, %v5011
  %v5013 = vpop.f32.mrf.mxu0
  %5014 = vdwg.mxu0
  %5015 = vmatpush.bf16.msra.mxu0 %v4811
  %5016 = vmatpush.bf16.msra.mxu0 %v4806
  %5017 = vmatpush.bf16.msra.mxu0 %v4801
  %5018 = vmatpush.bf16.msra.mxu0 %v4796
  %5019 = vmatpush.bf16.msra.mxu0 %v4791
  %5020 = vmatpush.bf16.msra.mxu0 %v4786
  %5021 = vmatpush.bf16.msra.mxu0 %v4781
  %5022 = vmatpush.bf16.msra.mxu0 %v4776
  %5023 = vmatmul.bf16.gmra.mxu0 %v4139
  %v5024 = vpop.f32.mrf.mxu0
  %v5025 = vadd.f32 %v5012, %v5024
  %v5026 = vpop.f32.mrf.mxu0
  %5027 = vdwg.mxu0
  %5028 = vmatpush.bf16.msra.mxu0 %v4692
  %5029 = vmatpush.bf16.msra.mxu0 %v4687
  %5030 = vmatpush.bf16.msra.mxu0 %v4682
  %5031 = vmatpush.bf16.msra.mxu0 %v4677
  %5032 = vmatpush.bf16.msra.mxu0 %v4672
  %5033 = vmatpush.bf16.msra.mxu0 %v4667
  %5034 = vmatpush.bf16.msra.mxu0 %v4662
  %5035 = vmatpush.bf16.msra.mxu0 %v4657
  %5036 = vmatmul.bf16.gmra.mxu0 %v4130
  %v5037 = vpop.f32.mrf.mxu0
  %v5038 = vadd.f32 0.0, %v5037
  %v5039 = vpop.f32.mrf.mxu0
  %5040 = vdwg.mxu0
  %5041 = vmatpush.bf16.msra.mxu0 %v4732
  %5042 = vmatpush.bf16.msra.mxu0 %v4727
  %5043 = vmatpush.bf16.msra.mxu0 %v4722
  %5044 = vmatpush.bf16.msra.mxu0 %v4717
  %5045 = vmatpush.bf16.msra.mxu0 %v4712
  %5046 = vmatpush.bf16.msra.mxu0 %v4707
  %5047 = vmatpush.bf16.msra.mxu0 %v4702
  %5048 = vmatpush.bf16.msra.mxu0 %v4697
  %5049 = vmatmul.bf16.gmra.mxu0 %v4133
  %v5050 = vpop.f32.mrf.mxu0
  %v5051 = vadd.f32 %v5038, %v5050
  %v5052 = vpop.f32.mrf.mxu0
  %5053 = vdwg.mxu0
  %5054 = vmatpush.bf16.msra.mxu0 %v4772
  %5055 = vmatpush.bf16.msra.mxu0 %v4767
  %5056 = vmatpush.bf16.msra.mxu0 %v4762
  %5057 = vmatpush.bf16.msra.mxu0 %v4757
  %5058 = vmatpush.bf16.msra.mxu0 %v4752
  %5059 = vmatpush.bf16.msra.mxu0 %v4747
  %5060 = vmatpush.bf16.msra.mxu0 %v4742
  %5061 = vmatpush.bf16.msra.mxu0 %v4737
  %5062 = vmatmul.bf16.gmra.mxu0 %v4136
  %v5063 = vpop.f32.mrf.mxu0
  %v5064 = vadd.f32 %v5051, %v5063
  %v5065 = vpop.f32.mrf.mxu0
  %5066 = vdwg.mxu0
  %5067 = vmatpush.bf16.msra.mxu0 %v4812
  %5068 = vmatpush.bf16.msra.mxu0 %v4807
  %5069 = vmatpush.bf16.msra.mxu0 %v4802
  %5070 = vmatpush.bf16.msra.mxu0 %v4797
  %5071 = vmatpush.bf16.msra.mxu0 %v4792
  %5072 = vmatpush.bf16.msra.mxu0 %v4787
  %5073 = vmatpush.bf16.msra.mxu0 %v4782
  %5074 = vmatpush.bf16.msra.mxu0 %v4777
  %5075 = vmatmul.bf16.gmra.mxu0 %v4139
  %v5076 = vpop.f32.mrf.mxu0
  %v5077 = vadd.f32 %v5064, %v5076
  %v5078 = vpop.f32.mrf.mxu0
  %5079 = vdwg.mxu0
  %5080 = vmatpush.bf16.msra.mxu0 %v4693
  %5081 = vmatpush.bf16.msra.mxu0 %v4688
  %5082 = vmatpush.bf16.msra.mxu0 %v4683
  %5083 = vmatpush.bf16.msra.mxu0 %v4678
  %5084 = vmatpush.bf16.msra.mxu0 %v4673
  %5085 = vmatpush.bf16.msra.mxu0 %v4668
  %5086 = vmatpush.bf16.msra.mxu0 %v4663
  %5087 = vmatpush.bf16.msra.mxu0 %v4658
  %5088 = vmatmul.bf16.gmra.mxu0 %v4130
  %v5089 = vpop.f32.mrf.mxu0
  %v5090 = vadd.f32 0.0, %v5089
  %v5091 = vpop.f32.mrf.mxu0
  %5092 = vdwg.mxu0
  %5093 = vmatpush.bf16.msra.mxu0 %v4733
  %5094 = vmatpush.bf16.msra.mxu0 %v4728
  %5095 = vmatpush.bf16.msra.mxu0 %v4723
  %5096 = vmatpush.bf16.msra.mxu0 %v4718
  %5097 = vmatpush.bf16.msra.mxu0 %v4713
  %5098 = vmatpush.bf16.msra.mxu0 %v4708
  %5099 = vmatpush.bf16.msra.mxu0 %v4703
  %5100 = vmatpush.bf16.msra.mxu0 %v4698
  %5101 = vmatmul.bf16.gmra.mxu0 %v4133
  %v5102 = vpop.f32.mrf.mxu0
  %v5103 = vadd.f32 %v5090, %v5102
  %v5104 = vpop.f32.mrf.mxu0
  %5105 = vdwg.mxu0
  %5106 = vmatpush.bf16.msra.mxu0 %v4773
  %5107 = vmatpush.bf16.msra.mxu0 %v4768
  %5108 = vmatpush.bf16.msra.mxu0 %v4763
  %5109 = vmatpush.bf16.msra.mxu0 %v4758
  %5110 = vmatpush.bf16.msra.mxu0 %v4753
  %5111 = vmatpush.bf16.msra.mxu0 %v4748
  %5112 = vmatpush.bf16.msra.mxu0 %v4743
  %5113 = vmatpush.bf16.msra.mxu0 %v4738
  %5114 = vmatmul.bf16.gmra.mxu0 %v4136
  %v5115 = vpop.f32.mrf.mxu0
  %v5116 = vadd.f32 %v5103, %v5115
  %v5117 = vpop.f32.mrf.mxu0
  %5118 = vdwg.mxu0
  %5119 = vmatpush.bf16.msra.mxu0 %v4813
  %5120 = vmatpush.bf16.msra.mxu0 %v4808
  %5121 = vmatpush.bf16.msra.mxu0 %v4803
  %5122 = vmatpush.bf16.msra.mxu0 %v4798
  %5123 = vmatpush.bf16.msra.mxu0 %v4793
  %5124 = vmatpush.bf16.msra.mxu0 %v4788
  %5125 = vmatpush.bf16.msra.mxu0 %v4783
  %5126 = vmatpush.bf16.msra.mxu0 %v4778
  %5127 = vmatmul.bf16.gmra.mxu0 %v4139
  %v5128 = vpop.f32.mrf.mxu0
  %v5129 = vadd.f32 %v5116, %v5128
  %v5130 = vpop.f32.mrf.mxu0
  %5131 = vdwg.mxu0
  %5132 = vmatpush.bf16.msra.mxu0 %v4694
  %5133 = vmatpush.bf16.msra.mxu0 %v4689
  %5134 = vmatpush.bf16.msra.mxu0 %v4684
  %5135 = vmatpush.bf16.msra.mxu0 %v4679
  %5136 = vmatpush.bf16.msra.mxu0 %v4674
  %5137 = vmatpush.bf16.msra.mxu0 %v4669
  %5138 = vmatpush.bf16.msra.mxu0 %v4664
  %5139 = vmatpush.bf16.msra.mxu0 %v4659
  %5140 = vmatmul.bf16.gmra.mxu0 %v4130
  %v5141 = vpop.f32.mrf.mxu0
  %v5142 = vadd.f32 0.0, %v5141
  %v5143 = vpop.f32.mrf.mxu0
  %5144 = vdwg.mxu0
  %5145 = vmatpush.bf16.msra.mxu0 %v4734
  %5146 = vmatpush.bf16.msra.mxu0 %v4729
  %5147 = vmatpush.bf16.msra.mxu0 %v4724
  %5148 = vmatpush.bf16.msra.mxu0 %v4719
  %5149 = vmatpush.bf16.msra.mxu0 %v4714
  %5150 = vmatpush.bf16.msra.mxu0 %v4709
  %5151 = vmatpush.bf16.msra.mxu0 %v4704
  %5152 = vmatpush.bf16.msra.mxu0 %v4699
  %5153 = vmatmul.bf16.gmra.mxu0 %v4133
  %v5154 = vpop.f32.mrf.mxu0
  %v5155 = vadd.f32 %v5142, %v5154
  %v5156 = vpop.f32.mrf.mxu0
  %5157 = vdwg.mxu0
  %5158 = vmatpush.bf16.msra.mxu0 %v4774
  %5159 = vmatpush.bf16.msra.mxu0 %v4769
  %5160 = vmatpush.bf16.msra.mxu0 %v4764
  %5161 = vmatpush.bf16.msra.mxu0 %v4759
  %5162 = vmatpush.bf16.msra.mxu0 %v4754
  %5163 = vmatpush.bf16.msra.mxu0 %v4749
  %5164 = vmatpush.bf16.msra.mxu0 %v4744
  %5165 = vmatpush.bf16.msra.mxu0 %v4739
  %5166 = vmatmul.bf16.gmra.mxu0 %v4136
  %v5167 = vpop.f32.mrf.mxu0
  %v5168 = vadd.f32 %v5155, %v5167
  %v5169 = vpop.f32.mrf.mxu0
  %5170 = vdwg.mxu0
  %5171 = vmatpush.bf16.msra.mxu0 %v4814
  %5172 = vmatpush.bf16.msra.mxu0 %v4809
  %5173 = vmatpush.bf16.msra.mxu0 %v4804
  %5174 = vmatpush.bf16.msra.mxu0 %v4799
  %5175 = vmatpush.bf16.msra.mxu0 %v4794
  %5176 = vmatpush.bf16.msra.mxu0 %v4789
  %5177 = vmatpush.bf16.msra.mxu0 %v4784
  %5178 = vmatpush.bf16.msra.mxu0 %v4779
  %5179 = vmatmul.bf16.gmra.mxu0 %v4139
  %v5180 = vpop.f32.mrf.mxu0
  %v5181 = vadd.f32 %v5168, %v5180
  %v5182 = vpop.f32.mrf.mxu0
  %5183 = vdwg.mxu0
  %5184 = vmatpush.bf16.msra.mxu0 %v4695
  %5185 = vmatpush.bf16.msra.mxu0 %v4690
  %5186 = vmatpush.bf16.msra.mxu0 %v4685
  %5187 = vmatpush.bf16.msra.mxu0 %v4680
  %5188 = vmatpush.bf16.msra.mxu0 %v4675
  %5189 = vmatpush.bf16.msra.mxu0 %v4670
  %5190 = vmatpush.bf16.msra.mxu0 %v4665
  %5191 = vmatpush.bf16.msra.mxu0 %v4660
  %5192 = vmatmul.bf16.gmra.mxu0 %v4130
  %v5193 = vpop.f32.mrf.mxu0
  %v5194 = vadd.f32 0.0, %v5193
  %v5195 = vpop.f32.mrf.mxu0
  %5196 = vdwg.mxu0
  %5197 = vmatpush.bf16.msra.mxu0 %v4735
  %5198 = vmatpush.bf16.msra.mxu0 %v4730
  %5199 = vmatpush.bf16.msra.mxu0 %v4725
  %5200 = vmatpush.bf16.msra.mxu0 %v4720
  %5201 = vmatpush.bf16.msra.mxu0 %v4715
  %5202 = vmatpush.bf16.msra.mxu0 %v4710
  %5203 = vmatpush.bf16.msra.mxu0 %v4705
  %5204 = vmatpush.bf16.msra.mxu0 %v4700
  %5205 = vmatmul.bf16.gmra.mxu0 %v4133
  %v5206 = vpop.f32.mrf.mxu0
  %v5207 = vadd.f32 %v5194, %v5206
  %v5208 = vpop.f32.mrf.mxu0
  %5209 = vdwg.mxu0
  %5210 = vmatpush.bf16.msra.mxu0 %v4775
  %5211 = vmatpush.bf16.msra.mxu0 %v4770
  %5212 = vmatpush.bf16.msra.mxu0 %v4765
  %5213 = vmatpush.bf16.msra.mxu0 %v4760
  %5214 = vmatpush.bf16.msra.mxu0 %v4755
  %5215 = vmatpush.bf16.msra.mxu0 %v4750
  %5216 = vmatpush.bf16.msra.mxu0 %v4745
  %5217 = vmatpush.bf16.msra.mxu0 %v4740
  %5218 = vmatmul.bf16.gmra.mxu0 %v4136
  %v5219 = vpop.f32.mrf.mxu0
  %v5220 = vadd.f32 %v5207, %v5219
  %v5221 = vpop.f32.mrf.mxu0
  %5222 = vdwg.mxu0
  %5223 = vmatpush.bf16.msra.mxu0 %v4815
  %5224 = vmatpush.bf16.msra.mxu0 %v4810
  %5225 = vmatpush.bf16.msra.mxu0 %v4805
  %5226 = vmatpush.bf16.msra.mxu0 %v4800
  %5227 = vmatpush.bf16.msra.mxu0 %v4795
  %5228 = vmatpush.bf16.msra.mxu0 %v4790
  %5229 = vmatpush.bf16.msra.mxu0 %v4785
  %5230 = vmatpush.bf16.msra.mxu0 %v4780
  %5231 = vmatmul.bf16.gmra.mxu0 %v4139
  %v5232 = vpop.f32.mrf.mxu0
  %v5233 = vadd.f32 %v5220, %v5232
  %v5234 = vpop.f32.mrf.mxu0
  %5235 = vdwg.mxu0
  %v5236 = vadd.f32 %v3931, %v5025
  %v5237 = vadd.f32 %v3932, %v5077
  %v5238 = vadd.f32 %v3933, %v5129
  %v5239 = vadd.f32 %v3934, %v5181
  %v5240 = vadd.f32 %v3935, %v5233
  %v5241 = vld [vmem:[%s1 + $0x1400] sm:$0xff]
  %v5242 = vld [vmem:[%s1 + $0x1408] sm:$0xff]
  %v5243 = vld [vmem:[%s1 + $0x1410] sm:$0xf]
  %v5244 = vld [vmem:[%s1 + $0x1414] sm:$0xff]
  %v5245 = vld [vmem:[%s1 + $0x141c] sm:$0xff]
  %v5246 = vld [vmem:[%s1 + $0x1424] sm:$0xf]
  %v5247 = vld [vmem:[%s1 + $0x1428] sm:$0xff]
  %v5248 = vld [vmem:[%s1 + $0x1430] sm:$0xff]
  %v5249 = vld [vmem:[%s1 + $0x1438] sm:$0xf]
  %v5250 = vld [vmem:[%s1 + $0x143c] sm:$0xff]
  %v5251 = vld [vmem:[%s1 + $0x1444] sm:$0xff]
  %v5252 = vld [vmem:[%s1 + $0x144c] sm:$0xf]
  %v5253 = vld [vmem:[%s1 + $0x1450] sm:$0xff]
  %v5254 = vld [vmem:[%s1 + $0x1458] sm:$0xff]
  %v5255 = vld [vmem:[%s1 + $0x1460] sm:$0xf]
  %v5256 = vld [vmem:[%s1 + $0x1464] sm:$0xff]
  %v5257 = vld [vmem:[%s1 + $0x146c] sm:$0xff]
  %v5258 = vld [vmem:[%s1 + $0x1474] sm:$0xf]
  %v5259 = vld [vmem:[%s1 + $0x1478] sm:$0xff]
  %v5260 = vld [vmem:[%s1 + $0x1480] sm:$0xff]
  %v5261 = vld [vmem:[%s1 + $0x1488] sm:$0xf]
  %v5262 = vld [vmem:[%s1 + $0x148c] sm:$0xff]
  %v5263 = vld [vmem:[%s1 + $0x1494] sm:$0xff]
  %v5264 = vld [vmem:[%s1 + $0x149c] sm:$0xf]
  %v5265 = vld [vmem:[%s1 + $0x14a0] sm:$0xff]
  %v5266 = vld [vmem:[%s1 + $0x14a8] sm:$0xff]
  %v5267 = vld [vmem:[%s1 + $0x14b0] sm:$0xf]
  %v5268 = vld [vmem:[%s1 + $0x14b4] sm:$0xff]
  %v5269 = vld [vmem:[%s1 + $0x14bc] sm:$0xff]
  %v5270 = vld [vmem:[%s1 + $0x14c4] sm:$0xf]
  %v5271 = vld [vmem:[%s1 + $0x14c8] sm:$0xff]
  %v5272 = vld [vmem:[%s1 + $0x14d0] sm:$0xff]
  %v5273 = vld [vmem:[%s1 + $0x14d8] sm:$0xf]
  %v5274 = vld [vmem:[%s1 + $0x14dc] sm:$0xff]
  %v5275 = vld [vmem:[%s1 + $0x14e4] sm:$0xff]
  %v5276 = vld [vmem:[%s1 + $0x14ec] sm:$0xf]
  %v5277 = vld [vmem:[%s1 + $0x14f0] sm:$0xff]
  %v5278 = vld [vmem:[%s1 + $0x14f8] sm:$0xff]
  %v5279 = vld [vmem:[%s1 + $0x1500] sm:$0xf]
  %v5280 = vld [vmem:[%s1 + $0x1504] sm:$0xff]
  %v5281 = vld [vmem:[%s1 + $0x150c] sm:$0xff]
  %v5282 = vld [vmem:[%s1 + $0x1514] sm:$0xf]
  %v5283 = vld [vmem:[%s1 + $0x1518] sm:$0xff]
  %v5284 = vld [vmem:[%s1 + $0x1520] sm:$0xff]
  %v5285 = vld [vmem:[%s1 + $0x1528] sm:$0xf]
  %v5286 = vld [vmem:[%s1 + $0x152c] sm:$0xff]
  %v5287 = vld [vmem:[%s1 + $0x1534] sm:$0xff]
  %v5288 = vld [vmem:[%s1 + $0x153c] sm:$0xf]
  %v5289 = vld [vmem:[%s1 + $0x1540] sm:$0xff]
  %v5290 = vld [vmem:[%s1 + $0x1548] sm:$0xff]
  %v5291 = vld [vmem:[%s1 + $0x1550] sm:$0xf]
  %v5292 = vld [vmem:[%s1 + $0x1554] sm:$0xff]
  %v5293 = vld [vmem:[%s1 + $0x155c] sm:$0xff]
  %v5294 = vld [vmem:[%s1 + $0x1564] sm:$0xf]
  %v5295 = vld [vmem:[%s1 + $0x1568] sm:$0xff]
  %v5296 = vld [vmem:[%s1 + $0x1570] sm:$0xff]
  %v5297 = vld [vmem:[%s1 + $0x1578] sm:$0xf]
  %v5298 = vld [vmem:[%s1 + $0x157c] sm:$0xff]
  %v5299 = vld [vmem:[%s1 + $0x1584] sm:$0xff]
  %v5300 = vld [vmem:[%s1 + $0x158c] sm:$0xf]
  %v5301 = vld [vmem:[%s1 + $0x1590] sm:$0xff]
  %v5302 = vld [vmem:[%s1 + $0x1598] sm:$0xff]
  %v5303 = vld [vmem:[%s1 + $0x15a0] sm:$0xf]
  %v5304 = vld [vmem:[%s1 + $0x15a4] sm:$0xff]
  %v5305 = vld [vmem:[%s1 + $0x15ac] sm:$0xff]
  %v5306 = vld [vmem:[%s1 + $0x15b4] sm:$0xf]
  %v5307 = vld [vmem:[%s1 + $0x15b8] sm:$0xff]
  %v5308 = vld [vmem:[%s1 + $0x15c0] sm:$0xff]
  %v5309 = vld [vmem:[%s1 + $0x15c8] sm:$0xf]
  %v5310 = vld [vmem:[%s1 + $0x15cc] sm:$0xff]
  %v5311 = vld [vmem:[%s1 + $0x15d4] sm:$0xff]
  %v5312 = vld [vmem:[%s1 + $0x15dc] sm:$0xf]
  %v5313 = vld [vmem:[%s1 + $0x15e0] sm:$0xff]
  %v5314 = vld [vmem:[%s1 + $0x15e8] sm:$0xff]
  %v5315 = vld [vmem:[%s1 + $0x15f0] sm:$0xf]
  %v5316 = vld [vmem:[%s1 + $0x15f4] sm:$0xff]
  %v5317 = vld [vmem:[%s1 + $0x15fc] sm:$0xff]
  %v5318 = vld [vmem:[%s1 + $0x1604] sm:$0xf]
  %v5319 = vld [vmem:[%s1 + $0x1608] sm:$0xff]
  %v5320 = vld [vmem:[%s1 + $0x1610] sm:$0xff]
  %v5321 = vld [vmem:[%s1 + $0x1618] sm:$0xf]
  %v5322 = vld [vmem:[%s1 + $0x161c] sm:$0xff]
  %v5323 = vld [vmem:[%s1 + $0x1624] sm:$0xff]
  %v5324 = vld [vmem:[%s1 + $0x162c] sm:$0xf]
  %v5325 = vld [vmem:[%s1 + $0x1630] sm:$0xff]
  %v5326 = vld [vmem:[%s1 + $0x1638] sm:$0xff]
  %v5327 = vld [vmem:[%s1 + $0x1640] sm:$0xf]
  %v5328 = vld [vmem:[%s1 + $0x1644] sm:$0xff]
  %v5329 = vld [vmem:[%s1 + $0x164c] sm:$0xff]
  %v5330 = vld [vmem:[%s1 + $0x1654] sm:$0xf]
  %v5331 = vld [vmem:[%s1 + $0x1658] sm:$0xff]
  %v5332 = vld [vmem:[%s1 + $0x1660] sm:$0xff]
  %v5333 = vld [vmem:[%s1 + $0x1668] sm:$0xf]
  %v5334 = vld [vmem:[%s1 + $0x166c] sm:$0xff]
  %v5335 = vld [vmem:[%s1 + $0x1674] sm:$0xff]
  %v5336 = vld [vmem:[%s1 + $0x167c] sm:$0xf]
  %v5337 = vld [vmem:[%s1 + $0x1680] sm:$0xff]
  %v5338 = vld [vmem:[%s1 + $0x1688] sm:$0xff]
  %v5339 = vld [vmem:[%s1 + $0x1690] sm:$0xf]
  %v5340 = vld [vmem:[%s1 + $0x1694] sm:$0xff]
  %v5341 = vld [vmem:[%s1 + $0x169c] sm:$0xff]
  %v5342 = vld [vmem:[%s1 + $0x16a4] sm:$0xf]
  %v5343 = vld [vmem:[%s1 + $0x16a8] sm:$0xff]
  %v5344 = vld [vmem:[%s1 + $0x16b0] sm:$0xff]
  %v5345 = vld [vmem:[%s1 + $0x16b8] sm:$0xf]
  %v5346 = vld [vmem:[%s1 + $0x16bc] sm:$0xff]
  %v5347 = vld [vmem:[%s1 + $0x16c4] sm:$0xff]
  %v5348 = vld [vmem:[%s1 + $0x16cc] sm:$0xf]
  %v5349 = vld [vmem:[%s1 + $0x16d0] sm:$0xff]
  %v5350 = vld [vmem:[%s1 + $0x16d8] sm:$0xff]
  %v5351 = vld [vmem:[%s1 + $0x16e0] sm:$0xf]
  %v5352 = vld [vmem:[%s1 + $0x16e4] sm:$0xff]
  %v5353 = vld [vmem:[%s1 + $0x16ec] sm:$0xff]
  %v5354 = vld [vmem:[%s1 + $0x16f4] sm:$0xf]
  %v5355 = vld [vmem:[%s1 + $0x16f8] sm:$0xff]
  %v5356 = vld [vmem:[%s1 + $0x1700] sm:$0xff]
  %v5357 = vld [vmem:[%s1 + $0x1708] sm:$0xf]
  %v5358 = vld [vmem:[%s1 + $0x170c] sm:$0xff]
  %v5359 = vld [vmem:[%s1 + $0x1714] sm:$0xff]
  %v5360 = vld [vmem:[%s1 + $0x171c] sm:$0xf]
  %v5361 = vld [vmem:[%s1 + $0x1720] sm:$0xff]
  %v5362 = vld [vmem:[%s1 + $0x1728] sm:$0xff]
  %v5363 = vld [vmem:[%s1 + $0x1730] sm:$0xf]
  %v5364 = vld [vmem:[%s1 + $0x1734] sm:$0xff]
  %v5365 = vld [vmem:[%s1 + $0x173c] sm:$0xff]
  %v5366 = vld [vmem:[%s1 + $0x1744] sm:$0xf]
  %v5367 = vld [vmem:[%s1 + $0x1748] sm:$0xff]
  %v5368 = vld [vmem:[%s1 + $0x1750] sm:$0xff]
  %v5369 = vld [vmem:[%s1 + $0x1758] sm:$0xf]
  %v5370 = vld [vmem:[%s1 + $0x175c] sm:$0xff]
  %v5371 = vld [vmem:[%s1 + $0x1764] sm:$0xff]
  %v5372 = vld [vmem:[%s1 + $0x176c] sm:$0xf]
  %v5373 = vld [vmem:[%s1 + $0x1770] sm:$0xff]
  %v5374 = vld [vmem:[%s1 + $0x1778] sm:$0xff]
  %v5375 = vld [vmem:[%s1 + $0x1780] sm:$0xf]
  %v5376 = vld [vmem:[%s1 + $0x1784] sm:$0xff]
  %v5377 = vld [vmem:[%s1 + $0x178c] sm:$0xff]
  %v5378 = vld [vmem:[%s1 + $0x1794] sm:$0xf]
  %v5379 = vld [vmem:[%s1 + $0x1798] sm:$0xff]
  %v5380 = vld [vmem:[%s1 + $0x17a0] sm:$0xff]
  %v5381 = vld [vmem:[%s1 + $0x17a8] sm:$0xf]
  %v5382 = vld [vmem:[%s1 + $0x17ac] sm:$0xff]
  %v5383 = vld [vmem:[%s1 + $0x17b4] sm:$0xff]
  %v5384 = vld [vmem:[%s1 + $0x17bc] sm:$0xf]
  %v5385 = vld [vmem:[%s1 + $0x17c0] sm:$0xff]
  %v5386 = vld [vmem:[%s1 + $0x17c8] sm:$0xff]
  %v5387 = vld [vmem:[%s1 + $0x17d0] sm:$0xf]
  %v5388 = vld [vmem:[%s1 + $0x17d4] sm:$0xff]
  %v5389 = vld [vmem:[%s1 + $0x17dc] sm:$0xff]
  %v5390 = vld [vmem:[%s1 + $0x17e4] sm:$0xf]
  %v5391 = vld [vmem:[%s1 + $0x17e8] sm:$0xff]
  %v5392 = vld [vmem:[%s1 + $0x17f0] sm:$0xff]
  %v5393 = vld [vmem:[%s1 + $0x17f8] sm:$0xf]
  %v5394 = vld [vmem:[%s1 + $0x17fc] sm:$0xff]
  %v5395 = vld [vmem:[%s1 + $0x1804] sm:$0xff]
  %v5396 = vld [vmem:[%s1 + $0x180c] sm:$0xf]
  %v5397 = vld [vmem:[%s1 + $0x1810] sm:$0xff]
  %v5398 = vld [vmem:[%s1 + $0x1818] sm:$0xff]
  %v5399 = vld [vmem:[%s1 + $0x1820] sm:$0xf]
  %v5400 = vld [vmem:[%s1 + $0x1824] sm:$0xff]
  %v5401 = vld [vmem:[%s1 + $0x182c] sm:$0xff]
  %v5402 = vld [vmem:[%s1 + $0x1834] sm:$0xf]
  %v5403 = vld [vmem:[%s1 + $0x1838] sm:$0xff]
  %v5404 = vld [vmem:[%s1 + $0x1840] sm:$0xff]
  %v5405 = vld [vmem:[%s1 + $0x1848] sm:$0xf]
  %v5406 = vld [vmem:[%s1 + $0x184c] sm:$0xff]
  %v5407 = vld [vmem:[%s1 + $0x1854] sm:$0xff]
  %v5408 = vld [vmem:[%s1 + $0x185c] sm:$0xf]
  %v5409 = vld [vmem:[%s1 + $0x1860] sm:$0xff]
  %v5410 = vld [vmem:[%s1 + $0x1868] sm:$0xff]
  %v5411 = vld [vmem:[%s1 + $0x1870] sm:$0xf]
  %v5412 = vld [vmem:[%s1 + $0x1874] sm:$0xff]
  %v5413 = vld [vmem:[%s1 + $0x187c] sm:$0xff]
  %v5414 = vld [vmem:[%s1 + $0x1884] sm:$0xf]
  %v5415 = vld [vmem:[%s1 + $0x1888] sm:$0xff]
  %v5416 = vld [vmem:[%s1 + $0x1890] sm:$0xff]
  %v5417 = vld [vmem:[%s1 + $0x1898] sm:$0xf]
  %v5418 = vld [vmem:[%s1 + $0x189c] sm:$0xff]
  %v5419 = vld [vmem:[%s1 + $0x18a4] sm:$0xff]
  %v5420 = vld [vmem:[%s1 + $0x18ac] sm:$0xf]
  %v5421 = vld [vmem:[%s1 + $0x18b0] sm:$0xff]
  %v5422 = vld [vmem:[%s1 + $0x18b8] sm:$0xff]
  %v5423 = vld [vmem:[%s1 + $0x18c0] sm:$0xf]
  %v5424 = vld [vmem:[%s1 + $0x18c4] sm:$0xff]
  %v5425 = vld [vmem:[%s1 + $0x18cc] sm:$0xff]
  %v5426 = vld [vmem:[%s1 + $0x18d4] sm:$0xf]
  %v5427 = vld [vmem:[%s1 + $0x18d8] sm:$0xff]
  %v5428 = vld [vmem:[%s1 + $0x18e0] sm:$0xff]
  %v5429 = vld [vmem:[%s1 + $0x18e8] sm:$0xf]
  %v5430 = vld [vmem:[%s1 + $0x18ec] sm:$0xff]
  %v5431 = vld [vmem:[%s1 + $0x18f4] sm:$0xff]
  %v5432 = vld [vmem:[%s1 + $0x18fc] sm:$0xf]
  %v5433 = vrot.slane %v19, 1
  %v5434 = vrot.slane %v20, 1
  %v5435 = vrot.slane %v21, 1
  %v5436 = vrot.slane %v22, 1
  %v5633 = vunpack.c.l.b16 %v5241
  %v5634 = vunpack.c.h.b16 %v5241
  %v5635 = vunpack.c.l.b16 %v5242
  %v5636 = vunpack.c.h.b16 %v5242
  %v5637 = vunpack.c.l.b16 %v5243
  %v5638 = vunpack.c.l.b16 %v5244
  %v5639 = vunpack.c.h.b16 %v5244
  %v5640 = vunpack.c.l.b16 %v5245
  %v5641 = vunpack.c.h.b16 %v5245
  %v5642 = vunpack.c.l.b16 %v5246
  %v5643 = vunpack.c.l.b16 %v5247
  %v5644 = vunpack.c.h.b16 %v5247
  %v5645 = vunpack.c.l.b16 %v5248
  %v5646 = vunpack.c.h.b16 %v5248
  %v5647 = vunpack.c.l.b16 %v5249
  %v5648 = vunpack.c.l.b16 %v5250
  %v5649 = vunpack.c.h.b16 %v5250
  %v5650 = vunpack.c.l.b16 %v5251
  %v5651 = vunpack.c.h.b16 %v5251
  %v5652 = vunpack.c.l.b16 %v5252
  %v5653 = vunpack.c.l.b16 %v5253
  %v5654 = vunpack.c.h.b16 %v5253
  %v5655 = vunpack.c.l.b16 %v5254
  %v5656 = vunpack.c.h.b16 %v5254
  %v5657 = vunpack.c.l.b16 %v5255
  %v5658 = vunpack.c.l.b16 %v5256
  %v5659 = vunpack.c.h.b16 %v5256
  %v5660 = vunpack.c.l.b16 %v5257
  %v5661 = vunpack.c.h.b16 %v5257
  %v5662 = vunpack.c.l.b16 %v5258
  %v5663 = vunpack.c.l.b16 %v5259
  %v5664 = vunpack.c.h.b16 %v5259
  %v5665 = vunpack.c.l.b16 %v5260
  %v5666 = vunpack.c.h.b16 %v5260
  %v5667 = vunpack.c.l.b16 %v5261
  %v5668 = vunpack.c.l.b16 %v5262
  %v5669 = vunpack.c.h.b16 %v5262
  %v5670 = vunpack.c.l.b16 %v5263
  %v5671 = vunpack.c.h.b16 %v5263
  %v5672 = vunpack.c.l.b16 %v5264
  %v5673 = vunpack.c.l.b16 %v5265
  %v5674 = vunpack.c.h.b16 %v5265
  %v5675 = vunpack.c.l.b16 %v5266
  %v5676 = vunpack.c.h.b16 %v5266
  %v5677 = vunpack.c.l.b16 %v5267
  %v5678 = vunpack.c.l.b16 %v5268
  %v5679 = vunpack.c.h.b16 %v5268
  %v5680 = vunpack.c.l.b16 %v5269
  %v5681 = vunpack.c.h.b16 %v5269
  %v5682 = vunpack.c.l.b16 %v5270
  %v5683 = vunpack.c.l.b16 %v5271
  %v5684 = vunpack.c.h.b16 %v5271
  %v5685 = vunpack.c.l.b16 %v5272
  %v5686 = vunpack.c.h.b16 %v5272
  %v5687 = vunpack.c.l.b16 %v5273
  %v5688 = vunpack.c.l.b16 %v5274
  %v5689 = vunpack.c.h.b16 %v5274
  %v5690 = vunpack.c.l.b16 %v5275
  %v5691 = vunpack.c.h.b16 %v5275
  %v5692 = vunpack.c.l.b16 %v5276
  %v5693 = vunpack.c.l.b16 %v5277
  %v5694 = vunpack.c.h.b16 %v5277
  %v5695 = vunpack.c.l.b16 %v5278
  %v5696 = vunpack.c.h.b16 %v5278
  %v5697 = vunpack.c.l.b16 %v5279
  %v5698 = vunpack.c.l.b16 %v5280
  %v5699 = vunpack.c.h.b16 %v5280
  %v5700 = vunpack.c.l.b16 %v5281
  %v5701 = vunpack.c.h.b16 %v5281
  %v5702 = vunpack.c.l.b16 %v5282
  %v5703 = vunpack.c.l.b16 %v5283
  %v5704 = vunpack.c.h.b16 %v5283
  %v5705 = vunpack.c.l.b16 %v5284
  %v5706 = vunpack.c.h.b16 %v5284
  %v5707 = vunpack.c.l.b16 %v5285
  %v5708 = vunpack.c.l.b16 %v5286
  %v5709 = vunpack.c.h.b16 %v5286
  %v5710 = vunpack.c.l.b16 %v5287
  %v5711 = vunpack.c.h.b16 %v5287
  %v5712 = vunpack.c.l.b16 %v5288
  %v5713 = vunpack.c.l.b16 %v5289
  %v5714 = vunpack.c.h.b16 %v5289
  %v5715 = vunpack.c.l.b16 %v5290
  %v5716 = vunpack.c.h.b16 %v5290
  %v5717 = vunpack.c.l.b16 %v5291
  %v5718 = vunpack.c.l.b16 %v5292
  %v5719 = vunpack.c.h.b16 %v5292
  %v5720 = vunpack.c.l.b16 %v5293
  %v5721 = vunpack.c.h.b16 %v5293
  %v5722 = vunpack.c.l.b16 %v5294
  %v5723 = vunpack.c.l.b16 %v5295
  %v5724 = vunpack.c.h.b16 %v5295
  %v5725 = vunpack.c.l.b16 %v5296
  %v5726 = vunpack.c.h.b16 %v5296
  %v5727 = vunpack.c.l.b16 %v5297
  %v5728 = vunpack.c.l.b16 %v5298
  %v5729 = vunpack.c.h.b16 %v5298
  %v5730 = vunpack.c.l.b16 %v5299
  %v5731 = vunpack.c.h.b16 %v5299
  %v5732 = vunpack.c.l.b16 %v5300
  %v5733 = vunpack.c.l.b16 %v5301
  %v5734 = vunpack.c.h.b16 %v5301
  %v5735 = vunpack.c.l.b16 %v5302
  %v5736 = vunpack.c.h.b16 %v5302
  %v5737 = vunpack.c.l.b16 %v5303
  %v5738 = vunpack.c.l.b16 %v5304
  %v5739 = vunpack.c.h.b16 %v5304
  %v5740 = vunpack.c.l.b16 %v5305
  %v5741 = vunpack.c.h.b16 %v5305
  %v5742 = vunpack.c.l.b16 %v5306
  %v5743 = vunpack.c.l.b16 %v5307
  %v5744 = vunpack.c.h.b16 %v5307
  %v5745 = vunpack.c.l.b16 %v5308
  %v5746 = vunpack.c.h.b16 %v5308
  %v5747 = vunpack.c.l.b16 %v5309
  %v5748 = vunpack.c.l.b16 %v5310
  %v5749 = vunpack.c.h.b16 %v5310
  %v5750 = vunpack.c.l.b16 %v5311
  %v5751 = vunpack.c.h.b16 %v5311
  %v5752 = vunpack.c.l.b16 %v5312
  %v5753 = vunpack.c.l.b16 %v5313
  %v5754 = vunpack.c.h.b16 %v5313
  %v5755 = vunpack.c.l.b16 %v5314
  %v5756 = vunpack.c.h.b16 %v5314
  %v5757 = vunpack.c.l.b16 %v5315
  %v5758 = vunpack.c.l.b16 %v5316
  %v5759 = vunpack.c.h.b16 %v5316
  %v5760 = vunpack.c.l.b16 %v5317
  %v5761 = vunpack.c.h.b16 %v5317
  %v5762 = vunpack.c.l.b16 %v5318
  %v5763 = vunpack.c.l.b16 %v5319
  %v5764 = vunpack.c.h.b16 %v5319
  %v5765 = vunpack.c.l.b16 %v5320
  %v5766 = vunpack.c.h.b16 %v5320
  %v5767 = vunpack.c.l.b16 %v5321
  %v5768 = vunpack.c.l.b16 %v5322
  %v5769 = vunpack.c.h.b16 %v5322
  %v5770 = vunpack.c.l.b16 %v5323
  %v5771 = vunpack.c.h.b16 %v5323
  %v5772 = vunpack.c.l.b16 %v5324
  %v5773 = vunpack.c.l.b16 %v5325
  %v5774 = vunpack.c.h.b16 %v5325
  %v5775 = vunpack.c.l.b16 %v5326
  %v5776 = vunpack.c.h.b16 %v5326
  %v5777 = vunpack.c.l.b16 %v5327
  %v5778 = vunpack.c.l.b16 %v5328
  %v5779 = vunpack.c.h.b16 %v5328
  %v5780 = vunpack.c.l.b16 %v5329
  %v5781 = vunpack.c.h.b16 %v5329
  %v5782 = vunpack.c.l.b16 %v5330
  %v5783 = vunpack.c.l.b16 %v5331
  %v5784 = vunpack.c.h.b16 %v5331
  %v5785 = vunpack.c.l.b16 %v5332
  %v5786 = vunpack.c.h.b16 %v5332
  %v5787 = vunpack.c.l.b16 %v5333
  %v5788 = vunpack.c.l.b16 %v5334
  %v5789 = vunpack.c.h.b16 %v5334
  %v5790 = vunpack.c.l.b16 %v5335
  %v5791 = vunpack.c.h.b16 %v5335
  %v5792 = vunpack.c.l.b16 %v5336
  %v5793 = vunpack.c.l.b16 %v5337
  %v5794 = vunpack.c.h.b16 %v5337
  %v5795 = vunpack.c.l.b16 %v5338
  %v5796 = vunpack.c.h.b16 %v5338
  %v5797 = vunpack.c.l.b16 %v5339
  %v5798 = vunpack.c.l.b16 %v5340
  %v5799 = vunpack.c.h.b16 %v5340
  %v5800 = vunpack.c.l.b16 %v5341
  %v5801 = vunpack.c.h.b16 %v5341
  %v5802 = vunpack.c.l.b16 %v5342
  %v5803 = vunpack.c.l.b16 %v5343
  %v5804 = vunpack.c.h.b16 %v5343
  %v5805 = vunpack.c.l.b16 %v5344
  %v5806 = vunpack.c.h.b16 %v5344
  %v5807 = vunpack.c.l.b16 %v5345
  %v5808 = vunpack.c.l.b16 %v5346
  %v5809 = vunpack.c.h.b16 %v5346
  %v5810 = vunpack.c.l.b16 %v5347
  %v5811 = vunpack.c.h.b16 %v5347
  %v5812 = vunpack.c.l.b16 %v5348
  %v5813 = vunpack.c.l.b16 %v5349
  %v5814 = vunpack.c.h.b16 %v5349
  %v5815 = vunpack.c.l.b16 %v5350
  %v5816 = vunpack.c.h.b16 %v5350
  %v5817 = vunpack.c.l.b16 %v5351
  %v5818 = vunpack.c.l.b16 %v5352
  %v5819 = vunpack.c.h.b16 %v5352
  %v5820 = vunpack.c.l.b16 %v5353
  %v5821 = vunpack.c.h.b16 %v5353
  %v5822 = vunpack.c.l.b16 %v5354
  %v5823 = vunpack.c.l.b16 %v5355
  %v5824 = vunpack.c.h.b16 %v5355
  %v5825 = vunpack.c.l.b16 %v5356
  %v5826 = vunpack.c.h.b16 %v5356
  %v5827 = vunpack.c.l.b16 %v5357
  %v5828 = vunpack.c.l.b16 %v5358
  %v5829 = vunpack.c.h.b16 %v5358
  %v5830 = vunpack.c.l.b16 %v5359
  %v5831 = vunpack.c.h.b16 %v5359
  %v5832 = vunpack.c.l.b16 %v5360
  %v5833 = vunpack.c.l.b16 %v5361
  %v5834 = vunpack.c.h.b16 %v5361
  %v5835 = vunpack.c.l.b16 %v5362
  %v5836 = vunpack.c.h.b16 %v5362
  %v5837 = vunpack.c.l.b16 %v5363
  %v5838 = vunpack.c.l.b16 %v5364
  %v5839 = vunpack.c.h.b16 %v5364
  %v5840 = vunpack.c.l.b16 %v5365
  %v5841 = vunpack.c.h.b16 %v5365
  %v5842 = vunpack.c.l.b16 %v5366
  %v5843 = vunpack.c.l.b16 %v5367
  %v5844 = vunpack.c.h.b16 %v5367
  %v5845 = vunpack.c.l.b16 %v5368
  %v5846 = vunpack.c.h.b16 %v5368
  %v5847 = vunpack.c.l.b16 %v5369
  %v5848 = vunpack.c.l.b16 %v5370
  %v5849 = vunpack.c.h.b16 %v5370
  %v5850 = vunpack.c.l.b16 %v5371
  %v5851 = vunpack.c.h.b16 %v5371
  %v5852 = vunpack.c.l.b16 %v5372
  %v5853 = vunpack.c.l.b16 %v5373
  %v5854 = vunpack.c.h.b16 %v5373
  %v5855 = vunpack.c.l.b16 %v5374
  %v5856 = vunpack.c.h.b16 %v5374
  %v5857 = vunpack.c.l.b16 %v5375
  %v5858 = vunpack.c.l.b16 %v5376
  %v5859 = vunpack.c.h.b16 %v5376
  %v5860 = vunpack.c.l.b16 %v5377
  %v5861 = vunpack.c.h.b16 %v5377
  %v5862 = vunpack.c.l.b16 %v5378
  %v5863 = vunpack.c.l.b16 %v5379
  %v5864 = vunpack.c.h.b16 %v5379
  %v5865 = vunpack.c.l.b16 %v5380
  %v5866 = vunpack.c.h.b16 %v5380
  %v5867 = vunpack.c.l.b16 %v5381
  %v5868 = vunpack.c.l.b16 %v5382
  %v5869 = vunpack.c.h.b16 %v5382
  %v5870 = vunpack.c.l.b16 %v5383
  %v5871 = vunpack.c.h.b16 %v5383
  %v5872 = vunpack.c.l.b16 %v5384
  %v5873 = vunpack.c.l.b16 %v5385
  %v5874 = vunpack.c.h.b16 %v5385
  %v5875 = vunpack.c.l.b16 %v5386
  %v5876 = vunpack.c.h.b16 %v5386
  %v5877 = vunpack.c.l.b16 %v5387
  %v5878 = vunpack.c.l.b16 %v5388
  %v5879 = vunpack.c.h.b16 %v5388
  %v5880 = vunpack.c.l.b16 %v5389
  %v5881 = vunpack.c.h.b16 %v5389
  %v5882 = vunpack.c.l.b16 %v5390
  %v5883 = vunpack.c.l.b16 %v5391
  %v5884 = vunpack.c.h.b16 %v5391
  %v5885 = vunpack.c.l.b16 %v5392
  %v5886 = vunpack.c.h.b16 %v5392
  %v5887 = vunpack.c.l.b16 %v5393
  %v5888 = vunpack.c.l.b16 %v5394
  %v5889 = vunpack.c.h.b16 %v5394
  %v5890 = vunpack.c.l.b16 %v5395
  %v5891 = vunpack.c.h.b16 %v5395
  %v5892 = vunpack.c.l.b16 %v5396
  %v5893 = vunpack.c.l.b16 %v5397
  %v5894 = vunpack.c.h.b16 %v5397
  %v5895 = vunpack.c.l.b16 %v5398
  %v5896 = vunpack.c.h.b16 %v5398
  %v5897 = vunpack.c.l.b16 %v5399
  %v5898 = vunpack.c.l.b16 %v5400
  %v5899 = vunpack.c.h.b16 %v5400
  %v5900 = vunpack.c.l.b16 %v5401
  %v5901 = vunpack.c.h.b16 %v5401
  %v5902 = vunpack.c.l.b16 %v5402
  %v5903 = vunpack.c.l.b16 %v5403
  %v5904 = vunpack.c.h.b16 %v5403
  %v5905 = vunpack.c.l.b16 %v5404
  %v5906 = vunpack.c.h.b16 %v5404
  %v5907 = vunpack.c.l.b16 %v5405
  %v5908 = vunpack.c.l.b16 %v5406
  %v5909 = vunpack.c.h.b16 %v5406
  %v5910 = vunpack.c.l.b16 %v5407
  %v5911 = vunpack.c.h.b16 %v5407
  %v5912 = vunpack.c.l.b16 %v5408
  %v5913 = vunpack.c.l.b16 %v5409
  %v5914 = vunpack.c.h.b16 %v5409
  %v5915 = vunpack.c.l.b16 %v5410
  %v5916 = vunpack.c.h.b16 %v5410
  %v5917 = vunpack.c.l.b16 %v5411
  %v5918 = vunpack.c.l.b16 %v5412
  %v5919 = vunpack.c.h.b16 %v5412
  %v5920 = vunpack.c.l.b16 %v5413
  %v5921 = vunpack.c.h.b16 %v5413
  %v5922 = vunpack.c.l.b16 %v5414
  %v5923 = vunpack.c.l.b16 %v5415
  %v5924 = vunpack.c.h.b16 %v5415
  %v5925 = vunpack.c.l.b16 %v5416
  %v5926 = vunpack.c.h.b16 %v5416
  %v5927 = vunpack.c.l.b16 %v5417
  %v5928 = vunpack.c.l.b16 %v5418
  %v5929 = vunpack.c.h.b16 %v5418
  %v5930 = vunpack.c.l.b16 %v5419
  %v5931 = vunpack.c.h.b16 %v5419
  %v5932 = vunpack.c.l.b16 %v5420
  %v5933 = vunpack.c.l.b16 %v5421
  %v5934 = vunpack.c.h.b16 %v5421
  %v5935 = vunpack.c.l.b16 %v5422
  %v5936 = vunpack.c.h.b16 %v5422
  %v5937 = vunpack.c.l.b16 %v5423
  %v5938 = vunpack.c.l.b16 %v5424
  %v5939 = vunpack.c.h.b16 %v5424
  %v5940 = vunpack.c.l.b16 %v5425
  %v5941 = vunpack.c.h.b16 %v5425
  %v5942 = vunpack.c.l.b16 %v5426
  %v5943 = vunpack.c.l.b16 %v5427
  %v5944 = vunpack.c.h.b16 %v5427
  %v5945 = vunpack.c.l.b16 %v5428
  %v5946 = vunpack.c.h.b16 %v5428
  %v5947 = vunpack.c.l.b16 %v5429
  %v5948 = vunpack.c.l.b16 %v5430
  %v5949 = vunpack.c.h.b16 %v5430
  %v5950 = vunpack.c.l.b16 %v5431
  %v5951 = vunpack.c.h.b16 %v5431
  %v5952 = vunpack.c.l.b16 %v5432
  %v5953 = vpack.c.b16 %v5638, %v5633
  %v5954 = vpack.c.b16 %v5639, %v5634
  %v5955 = vpack.c.b16 %v5640, %v5635
  %v5956 = vpack.c.b16 %v5641, %v5636
  %v5957 = vpack.c.b16 %v5642, %v5637
  %v5958 = vpack.c.b16 %v5648, %v5643
  %v5959 = vpack.c.b16 %v5649, %v5644
  %v5960 = vpack.c.b16 %v5650, %v5645
  %v5961 = vpack.c.b16 %v5651, %v5646
  %v5962 = vpack.c.b16 %v5652, %v5647
  %v5963 = vpack.c.b16 %v5658, %v5653
  %v5964 = vpack.c.b16 %v5659, %v5654
  %v5965 = vpack.c.b16 %v5660, %v5655
  %v5966 = vpack.c.b16 %v5661, %v5656
  %v5967 = vpack.c.b16 %v5662, %v5657
  %v5968 = vpack.c.b16 %v5668, %v5663
  %v5969 = vpack.c.b16 %v5669, %v5664
  %v5970 = vpack.c.b16 %v5670, %v5665
  %v5971 = vpack.c.b16 %v5671, %v5666
  %v5972 = vpack.c.b16 %v5672, %v5667
  %v5973 = vpack.c.b16 %v5678, %v5673
  %v5974 = vpack.c.b16 %v5679, %v5674
  %v5975 = vpack.c.b16 %v5680, %v5675
  %v5976 = vpack.c.b16 %v5681, %v5676
  %v5977 = vpack.c.b16 %v5682, %v5677
  %v5978 = vpack.c.b16 %v5688, %v5683
  %v5979 = vpack.c.b16 %v5689, %v5684
  %v5980 = vpack.c.b16 %v5690, %v5685
  %v5981 = vpack.c.b16 %v5691, %v5686
  %v5982 = vpack.c.b16 %v5692, %v5687
  %v5983 = vpack.c.b16 %v5698, %v5693
  %v5984 = vpack.c.b16 %v5699, %v5694
  %v5985 = vpack.c.b16 %v5700, %v5695
  %v5986 = vpack.c.b16 %v5701, %v5696
  %v5987 = vpack.c.b16 %v5702, %v5697
  %v5988 = vpack.c.b16 %v5708, %v5703
  %v5989 = vpack.c.b16 %v5709, %v5704
  %v5990 = vpack.c.b16 %v5710, %v5705
  %v5991 = vpack.c.b16 %v5711, %v5706
  %v5992 = vpack.c.b16 %v5712, %v5707
  %v5993 = vpack.c.b16 %v5718, %v5713
  %v5994 = vpack.c.b16 %v5719, %v5714
  %v5995 = vpack.c.b16 %v5720, %v5715
  %v5996 = vpack.c.b16 %v5721, %v5716
  %v5997 = vpack.c.b16 %v5722, %v5717
  %v5998 = vpack.c.b16 %v5728, %v5723
  %v5999 = vpack.c.b16 %v5729, %v5724
  %v6000 = vpack.c.b16 %v5730, %v5725
  %v6001 = vpack.c.b16 %v5731, %v5726
  %v6002 = vpack.c.b16 %v5732, %v5727
  %v6003 = vpack.c.b16 %v5738, %v5733
  %v6004 = vpack.c.b16 %v5739, %v5734
  %v6005 = vpack.c.b16 %v5740, %v5735
  %v6006 = vpack.c.b16 %v5741, %v5736
  %v6007 = vpack.c.b16 %v5742, %v5737
  %v6008 = vpack.c.b16 %v5748, %v5743
  %v6009 = vpack.c.b16 %v5749, %v5744
  %v6010 = vpack.c.b16 %v5750, %v5745
  %v6011 = vpack.c.b16 %v5751, %v5746
  %v6012 = vpack.c.b16 %v5752, %v5747
  %v6013 = vpack.c.b16 %v5758, %v5753
  %v6014 = vpack.c.b16 %v5759, %v5754
  %v6015 = vpack.c.b16 %v5760, %v5755
  %v6016 = vpack.c.b16 %v5761, %v5756
  %v6017 = vpack.c.b16 %v5762, %v5757
  %v6018 = vpack.c.b16 %v5768, %v5763
  %v6019 = vpack.c.b16 %v5769, %v5764
  %v6020 = vpack.c.b16 %v5770, %v5765
  %v6021 = vpack.c.b16 %v5771, %v5766
  %v6022 = vpack.c.b16 %v5772, %v5767
  %v6023 = vpack.c.b16 %v5778, %v5773
  %v6024 = vpack.c.b16 %v5779, %v5774
  %v6025 = vpack.c.b16 %v5780, %v5775
  %v6026 = vpack.c.b16 %v5781, %v5776
  %v6027 = vpack.c.b16 %v5782, %v5777
  %v6028 = vpack.c.b16 %v5788, %v5783
  %v6029 = vpack.c.b16 %v5789, %v5784
  %v6030 = vpack.c.b16 %v5790, %v5785
  %v6031 = vpack.c.b16 %v5791, %v5786
  %v6032 = vpack.c.b16 %v5792, %v5787
  %v6033 = vpack.c.b16 %v5798, %v5793
  %v6034 = vpack.c.b16 %v5799, %v5794
  %v6035 = vpack.c.b16 %v5800, %v5795
  %v6036 = vpack.c.b16 %v5801, %v5796
  %v6037 = vpack.c.b16 %v5802, %v5797
  %v6038 = vpack.c.b16 %v5808, %v5803
  %v6039 = vpack.c.b16 %v5809, %v5804
  %v6040 = vpack.c.b16 %v5810, %v5805
  %v6041 = vpack.c.b16 %v5811, %v5806
  %v6042 = vpack.c.b16 %v5812, %v5807
  %v6043 = vpack.c.b16 %v5818, %v5813
  %v6044 = vpack.c.b16 %v5819, %v5814
  %v6045 = vpack.c.b16 %v5820, %v5815
  %v6046 = vpack.c.b16 %v5821, %v5816
  %v6047 = vpack.c.b16 %v5822, %v5817
  %v6048 = vpack.c.b16 %v5828, %v5823
  %v6049 = vpack.c.b16 %v5829, %v5824
  %v6050 = vpack.c.b16 %v5830, %v5825
  %v6051 = vpack.c.b16 %v5831, %v5826
  %v6052 = vpack.c.b16 %v5832, %v5827
  %v6053 = vpack.c.b16 %v5838, %v5833
  %v6054 = vpack.c.b16 %v5839, %v5834
  %v6055 = vpack.c.b16 %v5840, %v5835
  %v6056 = vpack.c.b16 %v5841, %v5836
  %v6057 = vpack.c.b16 %v5842, %v5837
  %v6058 = vpack.c.b16 %v5848, %v5843
  %v6059 = vpack.c.b16 %v5849, %v5844
  %v6060 = vpack.c.b16 %v5850, %v5845
  %v6061 = vpack.c.b16 %v5851, %v5846
  %v6062 = vpack.c.b16 %v5852, %v5847
  %v6063 = vpack.c.b16 %v5858, %v5853
  %v6064 = vpack.c.b16 %v5859, %v5854
  %v6065 = vpack.c.b16 %v5860, %v5855
  %v6066 = vpack.c.b16 %v5861, %v5856
  %v6067 = vpack.c.b16 %v5862, %v5857
  %v6068 = vpack.c.b16 %v5868, %v5863
  %v6069 = vpack.c.b16 %v5869, %v5864
  %v6070 = vpack.c.b16 %v5870, %v5865
  %v6071 = vpack.c.b16 %v5871, %v5866
  %v6072 = vpack.c.b16 %v5872, %v5867
  %v6073 = vpack.c.b16 %v5878, %v5873
  %v6074 = vpack.c.b16 %v5879, %v5874
  %v6075 = vpack.c.b16 %v5880, %v5875
  %v6076 = vpack.c.b16 %v5881, %v5876
  %v6077 = vpack.c.b16 %v5882, %v5877
  %v6078 = vpack.c.b16 %v5888, %v5883
  %v6079 = vpack.c.b16 %v5889, %v5884
  %v6080 = vpack.c.b16 %v5890, %v5885
  %v6081 = vpack.c.b16 %v5891, %v5886
  %v6082 = vpack.c.b16 %v5892, %v5887
  %v6083 = vpack.c.b16 %v5898, %v5893
  %v6084 = vpack.c.b16 %v5899, %v5894
  %v6085 = vpack.c.b16 %v5900, %v5895
  %v6086 = vpack.c.b16 %v5901, %v5896
  %v6087 = vpack.c.b16 %v5902, %v5897
  %v6088 = vpack.c.b16 %v5908, %v5903
  %v6089 = vpack.c.b16 %v5909, %v5904
  %v6090 = vpack.c.b16 %v5910, %v5905
  %v6091 = vpack.c.b16 %v5911, %v5906
  %v6092 = vpack.c.b16 %v5912, %v5907
  %v6093 = vpack.c.b16 %v5918, %v5913
  %v6094 = vpack.c.b16 %v5919, %v5914
  %v6095 = vpack.c.b16 %v5920, %v5915
  %v6096 = vpack.c.b16 %v5921, %v5916
  %v6097 = vpack.c.b16 %v5922, %v5917
  %v6098 = vpack.c.b16 %v5928, %v5923
  %v6099 = vpack.c.b16 %v5929, %v5924
  %v6100 = vpack.c.b16 %v5930, %v5925
  %v6101 = vpack.c.b16 %v5931, %v5926
  %v6102 = vpack.c.b16 %v5932, %v5927
  %v6103 = vpack.c.b16 %v5938, %v5933
  %v6104 = vpack.c.b16 %v5939, %v5934
  %v6105 = vpack.c.b16 %v5940, %v5935
  %v6106 = vpack.c.b16 %v5941, %v5936
  %v6107 = vpack.c.b16 %v5942, %v5937
  %v6108 = vpack.c.b16 %v5948, %v5943
  %v6109 = vpack.c.b16 %v5949, %v5944
  %v6110 = vpack.c.b16 %v5950, %v5945
  %v6111 = vpack.c.b16 %v5951, %v5946
  %v6112 = vpack.c.b16 %v5952, %v5947
  %6273 = vmatpush.bf16.msra.mxu0 %v5988
  %6274 = vmatpush.bf16.msra.mxu0 %v5983
  %6275 = vmatpush.bf16.msra.mxu0 %v5978
  %6276 = vmatpush.bf16.msra.mxu0 %v5973
  %6277 = vmatpush.bf16.msra.mxu0 %v5968
  %6278 = vmatpush.bf16.msra.mxu0 %v5963
  %6279 = vmatpush.bf16.msra.mxu0 %v5958
  %6280 = vmatpush.bf16.msra.mxu0 %v5953
  %6281 = vmatmul.bf16.gmra.mxu0 %v5433
  %v6282 = vpop.f32.mrf.mxu0
  %v6283 = vadd.f32 0.0, %v6282
  %v6284 = vpop.f32.mrf.mxu0
  %6285 = vdwg.mxu0
  %6286 = vmatpush.bf16.msra.mxu0 %v6028
  %6287 = vmatpush.bf16.msra.mxu0 %v6023
  %6288 = vmatpush.bf16.msra.mxu0 %v6018
  %6289 = vmatpush.bf16.msra.mxu0 %v6013
  %6290 = vmatpush.bf16.msra.mxu0 %v6008
  %6291 = vmatpush.bf16.msra.mxu0 %v6003
  %6292 = vmatpush.bf16.msra.mxu0 %v5998
  %6293 = vmatpush.bf16.msra.mxu0 %v5993
  %6294 = vmatmul.bf16.gmra.mxu0 %v5434
  %v6295 = vpop.f32.mrf.mxu0
  %v6296 = vadd.f32 %v6283, %v6295
  %v6297 = vpop.f32.mrf.mxu0
  %6298 = vdwg.mxu0
  %6299 = vmatpush.bf16.msra.mxu0 %v6068
  %6300 = vmatpush.bf16.msra.mxu0 %v6063
  %6301 = vmatpush.bf16.msra.mxu0 %v6058
  %6302 = vmatpush.bf16.msra.mxu0 %v6053
  %6303 = vmatpush.bf16.msra.mxu0 %v6048
  %6304 = vmatpush.bf16.msra.mxu0 %v6043
  %6305 = vmatpush.bf16.msra.mxu0 %v6038
  %6306 = vmatpush.bf16.msra.mxu0 %v6033
  %6307 = vmatmul.bf16.gmra.mxu0 %v5435
  %v6308 = vpop.f32.mrf.mxu0
  %v6309 = vadd.f32 %v6296, %v6308
  %v6310 = vpop.f32.mrf.mxu0
  %6311 = vdwg.mxu0
  %6312 = vmatpush.bf16.msra.mxu0 %v6108
  %6313 = vmatpush.bf16.msra.mxu0 %v6103
  %6314 = vmatpush.bf16.msra.mxu0 %v6098
  %6315 = vmatpush.bf16.msra.mxu0 %v6093
  %6316 = vmatpush.bf16.msra.mxu0 %v6088
  %6317 = vmatpush.bf16.msra.mxu0 %v6083
  %6318 = vmatpush.bf16.msra.mxu0 %v6078
  %6319 = vmatpush.bf16.msra.mxu0 %v6073
  %6320 = vmatmul.bf16.gmra.mxu0 %v5436
  %v6321 = vpop.f32.mrf.mxu0
  %v6322 = vadd.f32 %v6309, %v6321
  %v6323 = vpop.f32.mrf.mxu0
  %6324 = vdwg.mxu0
  %6325 = vmatpush.bf16.msra.mxu0 %v5989
  %6326 = vmatpush.bf16.msra.mxu0 %v5984
  %6327 = vmatpush.bf16.msra.mxu0 %v5979
  %6328 = vmatpush.bf16.msra.mxu0 %v5974
  %6329 = vmatpush.bf16.msra.mxu0 %v5969
  %6330 = vmatpush.bf16.msra.mxu0 %v5964
  %6331 = vmatpush.bf16.msra.mxu0 %v5959
  %6332 = vmatpush.bf16.msra.mxu0 %v5954
  %6333 = vmatmul.bf16.gmra.mxu0 %v5433
  %v6334 = vpop.f32.mrf.mxu0
  %v6335 = vadd.f32 0.0, %v6334
  %v6336 = vpop.f32.mrf.mxu0
  %6337 = vdwg.mxu0
  %6338 = vmatpush.bf16.msra.mxu0 %v6029
  %6339 = vmatpush.bf16.msra.mxu0 %v6024
  %6340 = vmatpush.bf16.msra.mxu0 %v6019
  %6341 = vmatpush.bf16.msra.mxu0 %v6014
  %6342 = vmatpush.bf16.msra.mxu0 %v6009
  %6343 = vmatpush.bf16.msra.mxu0 %v6004
  %6344 = vmatpush.bf16.msra.mxu0 %v5999
  %6345 = vmatpush.bf16.msra.mxu0 %v5994
  %6346 = vmatmul.bf16.gmra.mxu0 %v5434
  %v6347 = vpop.f32.mrf.mxu0
  %v6348 = vadd.f32 %v6335, %v6347
  %v6349 = vpop.f32.mrf.mxu0
  %6350 = vdwg.mxu0
  %6351 = vmatpush.bf16.msra.mxu0 %v6069
  %6352 = vmatpush.bf16.msra.mxu0 %v6064
  %6353 = vmatpush.bf16.msra.mxu0 %v6059
  %6354 = vmatpush.bf16.msra.mxu0 %v6054
  %6355 = vmatpush.bf16.msra.mxu0 %v6049
  %6356 = vmatpush.bf16.msra.mxu0 %v6044
  %6357 = vmatpush.bf16.msra.mxu0 %v6039
  %6358 = vmatpush.bf16.msra.mxu0 %v6034
  %6359 = vmatmul.bf16.gmra.mxu0 %v5435
  %v6360 = vpop.f32.mrf.mxu0
  %v6361 = vadd.f32 %v6348, %v6360
  %v6362 = vpop.f32.mrf.mxu0
  %6363 = vdwg.mxu0
  %6364 = vmatpush.bf16.msra.mxu0 %v6109
  %6365 = vmatpush.bf16.msra.mxu0 %v6104
  %6366 = vmatpush.bf16.msra.mxu0 %v6099
  %6367 = vmatpush.bf16.msra.mxu0 %v6094
  %6368 = vmatpush.bf16.msra.mxu0 %v6089
  %6369 = vmatpush.bf16.msra.mxu0 %v6084
  %6370 = vmatpush.bf16.msra.mxu0 %v6079
  %6371 = vmatpush.bf16.msra.mxu0 %v6074
  %6372 = vmatmul.bf16.gmra.mxu0 %v5436
  %v6373 = vpop.f32.mrf.mxu0
  %v6374 = vadd.f32 %v6361, %v6373
  %v6375 = vpop.f32.mrf.mxu0
  %6376 = vdwg.mxu0
  %6377 = vmatpush.bf16.msra.mxu0 %v5990
  %6378 = vmatpush.bf16.msra.mxu0 %v5985
  %6379 = vmatpush.bf16.msra.mxu0 %v5980
  %6380 = vmatpush.bf16.msra.mxu0 %v5975
  %6381 = vmatpush.bf16.msra.mxu0 %v5970
  %6382 = vmatpush.bf16.msra.mxu0 %v5965
  %6383 = vmatpush.bf16.msra.mxu0 %v5960
  %6384 = vmatpush.bf16.msra.mxu0 %v5955
  %6385 = vmatmul.bf16.gmra.mxu0 %v5433
  %v6386 = vpop.f32.mrf.mxu0
  %v6387 = vadd.f32 0.0, %v6386
  %v6388 = vpop.f32.mrf.mxu0
  %6389 = vdwg.mxu0
  %6390 = vmatpush.bf16.msra.mxu0 %v6030
  %6391 = vmatpush.bf16.msra.mxu0 %v6025
  %6392 = vmatpush.bf16.msra.mxu0 %v6020
  %6393 = vmatpush.bf16.msra.mxu0 %v6015
  %6394 = vmatpush.bf16.msra.mxu0 %v6010
  %6395 = vmatpush.bf16.msra.mxu0 %v6005
  %6396 = vmatpush.bf16.msra.mxu0 %v6000
  %6397 = vmatpush.bf16.msra.mxu0 %v5995
  %6398 = vmatmul.bf16.gmra.mxu0 %v5434
  %v6399 = vpop.f32.mrf.mxu0
  %v6400 = vadd.f32 %v6387, %v6399
  %v6401 = vpop.f32.mrf.mxu0
  %6402 = vdwg.mxu0
  %6403 = vmatpush.bf16.msra.mxu0 %v6070
  %6404 = vmatpush.bf16.msra.mxu0 %v6065
  %6405 = vmatpush.bf16.msra.mxu0 %v6060
  %6406 = vmatpush.bf16.msra.mxu0 %v6055
  %6407 = vmatpush.bf16.msra.mxu0 %v6050
  %6408 = vmatpush.bf16.msra.mxu0 %v6045
  %6409 = vmatpush.bf16.msra.mxu0 %v6040
  %6410 = vmatpush.bf16.msra.mxu0 %v6035
  %6411 = vmatmul.bf16.gmra.mxu0 %v5435
  %v6412 = vpop.f32.mrf.mxu0
  %v6413 = vadd.f32 %v6400, %v6412
  %v6414 = vpop.f32.mrf.mxu0
  %6415 = vdwg.mxu0
  %6416 = vmatpush.bf16.msra.mxu0 %v6110
  %6417 = vmatpush.bf16.msra.mxu0 %v6105
  %6418 = vmatpush.bf16.msra.mxu0 %v6100
  %6419 = vmatpush.bf16.msra.mxu0 %v6095
  %6420 = vmatpush.bf16.msra.mxu0 %v6090
  %6421 = vmatpush.bf16.msra.mxu0 %v6085
  %6422 = vmatpush.bf16.msra.mxu0 %v6080
  %6423 = vmatpush.bf16.msra.mxu0 %v6075
  %6424 = vmatmul.bf16.gmra.mxu0 %v5436
  %v6425 = vpop.f32.mrf.mxu0
  %v6426 = vadd.f32 %v6413, %v6425
  %v6427 = vpop.f32.mrf.mxu0
  %6428 = vdwg.mxu0
  %6429 = vmatpush.bf16.msra.mxu0 %v5991
  %6430 = vmatpush.bf16.msra.mxu0 %v5986
  %6431 = vmatpush.bf16.msra.mxu0 %v5981
  %6432 = vmatpush.bf16.msra.mxu0 %v5976
  %6433 = vmatpush.bf16.msra.mxu0 %v5971
  %6434 = vmatpush.bf16.msra.mxu0 %v5966
  %6435 = vmatpush.bf16.msra.mxu0 %v5961
  %6436 = vmatpush.bf16.msra.mxu0 %v5956
  %6437 = vmatmul.bf16.gmra.mxu0 %v5433
  %v6438 = vpop.f32.mrf.mxu0
  %v6439 = vadd.f32 0.0, %v6438
  %v6440 = vpop.f32.mrf.mxu0
  %6441 = vdwg.mxu0
  %6442 = vmatpush.bf16.msra.mxu0 %v6031
  %6443 = vmatpush.bf16.msra.mxu0 %v6026
  %6444 = vmatpush.bf16.msra.mxu0 %v6021
  %6445 = vmatpush.bf16.msra.mxu0 %v6016
  %6446 = vmatpush.bf16.msra.mxu0 %v6011
  %6447 = vmatpush.bf16.msra.mxu0 %v6006
  %6448 = vmatpush.bf16.msra.mxu0 %v6001
  %6449 = vmatpush.bf16.msra.mxu0 %v5996
  %6450 = vmatmul.bf16.gmra.mxu0 %v5434
  %v6451 = vpop.f32.mrf.mxu0
  %v6452 = vadd.f32 %v6439, %v6451
  %v6453 = vpop.f32.mrf.mxu0
  %6454 = vdwg.mxu0
  %6455 = vmatpush.bf16.msra.mxu0 %v6071
  %6456 = vmatpush.bf16.msra.mxu0 %v6066
  %6457 = vmatpush.bf16.msra.mxu0 %v6061
  %6458 = vmatpush.bf16.msra.mxu0 %v6056
  %6459 = vmatpush.bf16.msra.mxu0 %v6051
  %6460 = vmatpush.bf16.msra.mxu0 %v6046
  %6461 = vmatpush.bf16.msra.mxu0 %v6041
  %6462 = vmatpush.bf16.msra.mxu0 %v6036
  %6463 = vmatmul.bf16.gmra.mxu0 %v5435
  %v6464 = vpop.f32.mrf.mxu0
  %v6465 = vadd.f32 %v6452, %v6464
  %v6466 = vpop.f32.mrf.mxu0
  %6467 = vdwg.mxu0
  %6468 = vmatpush.bf16.msra.mxu0 %v6111
  %6469 = vmatpush.bf16.msra.mxu0 %v6106
  %6470 = vmatpush.bf16.msra.mxu0 %v6101
  %6471 = vmatpush.bf16.msra.mxu0 %v6096
  %6472 = vmatpush.bf16.msra.mxu0 %v6091
  %6473 = vmatpush.bf16.msra.mxu0 %v6086
  %6474 = vmatpush.bf16.msra.mxu0 %v6081
  %6475 = vmatpush.bf16.msra.mxu0 %v6076
  %6476 = vmatmul.bf16.gmra.mxu0 %v5436
  %v6477 = vpop.f32.mrf.mxu0
  %v6478 = vadd.f32 %v6465, %v6477
  %v6479 = vpop.f32.mrf.mxu0
  %6480 = vdwg.mxu0
  %6481 = vmatpush.bf16.msra.mxu0 %v5992
  %6482 = vmatpush.bf16.msra.mxu0 %v5987
  %6483 = vmatpush.bf16.msra.mxu0 %v5982
  %6484 = vmatpush.bf16.msra.mxu0 %v5977
  %6485 = vmatpush.bf16.msra.mxu0 %v5972
  %6486 = vmatpush.bf16.msra.mxu0 %v5967
  %6487 = vmatpush.bf16.msra.mxu0 %v5962
  %6488 = vmatpush.bf16.msra.mxu0 %v5957
  %6489 = vmatmul.bf16.gmra.mxu0 %v5433
  %v6490 = vpop.f32.mrf.mxu0
  %v6491 = vadd.f32 0.0, %v6490
  %v6492 = vpop.f32.mrf.mxu0
  %6493 = vdwg.mxu0
  %6494 = vmatpush.bf16.msra.mxu0 %v6032
  %6495 = vmatpush.bf16.msra.mxu0 %v6027
  %6496 = vmatpush.bf16.msra.mxu0 %v6022
  %6497 = vmatpush.bf16.msra.mxu0 %v6017
  %6498 = vmatpush.bf16.msra.mxu0 %v6012
  %6499 = vmatpush.bf16.msra.mxu0 %v6007
  %6500 = vmatpush.bf16.msra.mxu0 %v6002
  %6501 = vmatpush.bf16.msra.mxu0 %v5997
  %6502 = vmatmul.bf16.gmra.mxu0 %v5434
  %v6503 = vpop.f32.mrf.mxu0
  %v6504 = vadd.f32 %v6491, %v6503
  %v6505 = vpop.f32.mrf.mxu0
  %6506 = vdwg.mxu0
  %6507 = vmatpush.bf16.msra.mxu0 %v6072
  %6508 = vmatpush.bf16.msra.mxu0 %v6067
  %6509 = vmatpush.bf16.msra.mxu0 %v6062
  %6510 = vmatpush.bf16.msra.mxu0 %v6057
  %6511 = vmatpush.bf16.msra.mxu0 %v6052
  %6512 = vmatpush.bf16.msra.mxu0 %v6047
  %6513 = vmatpush.bf16.msra.mxu0 %v6042
  %6514 = vmatpush.bf16.msra.mxu0 %v6037
  %6515 = vmatmul.bf16.gmra.mxu0 %v5435
  %v6516 = vpop.f32.mrf.mxu0
  %v6517 = vadd.f32 %v6504, %v6516
  %v6518 = vpop.f32.mrf.mxu0
  %6519 = vdwg.mxu0
  %6520 = vmatpush.bf16.msra.mxu0 %v6112
  %6521 = vmatpush.bf16.msra.mxu0 %v6107
  %6522 = vmatpush.bf16.msra.mxu0 %v6102
  %6523 = vmatpush.bf16.msra.mxu0 %v6097
  %6524 = vmatpush.bf16.msra.mxu0 %v6092
  %6525 = vmatpush.bf16.msra.mxu0 %v6087
  %6526 = vmatpush.bf16.msra.mxu0 %v6082
  %6527 = vmatpush.bf16.msra.mxu0 %v6077
  %6528 = vmatmul.bf16.gmra.mxu0 %v5436
  %v6529 = vpop.f32.mrf.mxu0
  %v6530 = vadd.f32 %v6517, %v6529
  %v6531 = vpop.f32.mrf.mxu0
  %6532 = vdwg.mxu0
  %v6533 = vadd.f32 %v5236, %v6322
  %v6534 = vadd.f32 %v5237, %v6374
  %v6535 = vadd.f32 %v5238, %v6426
  %v6536 = vadd.f32 %v5239, %v6478
  %v6537 = vadd.f32 %v5240, %v6530
  %v6538 = vld [vmem:[%s1 + $0x1900] sm:$0xff]
  %v6539 = vld [vmem:[%s1 + $0x1908] sm:$0xff]
  %v6540 = vld [vmem:[%s1 + $0x1910] sm:$0xf]
  %v6541 = vld [vmem:[%s1 + $0x1914] sm:$0xff]
  %v6542 = vld [vmem:[%s1 + $0x191c] sm:$0xff]
  %v6543 = vld [vmem:[%s1 + $0x1924] sm:$0xf]
  %v6544 = vld [vmem:[%s1 + $0x1928] sm:$0xff]
  %v6545 = vld [vmem:[%s1 + $0x1930] sm:$0xff]
  %v6546 = vld [vmem:[%s1 + $0x1938] sm:$0xf]
  %v6547 = vld [vmem:[%s1 + $0x193c] sm:$0xff]
  %v6548 = vld [vmem:[%s1 + $0x1944] sm:$0xff]
  %v6549 = vld [vmem:[%s1 + $0x194c] sm:$0xf]
  %v6550 = vld [vmem:[%s1 + $0x1950] sm:$0xff]
  %v6551 = vld [vmem:[%s1 + $0x1958] sm:$0xff]
  %v6552 = vld [vmem:[%s1 + $0x1960] sm:$0xf]
  %v6553 = vld [vmem:[%s1 + $0x1964] sm:$0xff]
  %v6554 = vld [vmem:[%s1 + $0x196c] sm:$0xff]
  %v6555 = vld [vmem:[%s1 + $0x1974] sm:$0xf]
  %v6556 = vld [vmem:[%s1 + $0x1978] sm:$0xff]
  %v6557 = vld [vmem:[%s1 + $0x1980] sm:$0xff]
  %v6558 = vld [vmem:[%s1 + $0x1988] sm:$0xf]
  %v6559 = vld [vmem:[%s1 + $0x198c] sm:$0xff]
  %v6560 = vld [vmem:[%s1 + $0x1994] sm:$0xff]
  %v6561 = vld [vmem:[%s1 + $0x199c] sm:$0xf]
  %v6562 = vld [vmem:[%s1 + $0x19a0] sm:$0xff]
  %v6563 = vld [vmem:[%s1 + $0x19a8] sm:$0xff]
  %v6564 = vld [vmem:[%s1 + $0x19b0] sm:$0xf]
  %v6565 = vld [vmem:[%s1 + $0x19b4] sm:$0xff]
  %v6566 = vld [vmem:[%s1 + $0x19bc] sm:$0xff]
  %v6567 = vld [vmem:[%s1 + $0x19c4] sm:$0xf]
  %v6568 = vld [vmem:[%s1 + $0x19c8] sm:$0xff]
  %v6569 = vld [vmem:[%s1 + $0x19d0] sm:$0xff]
  %v6570 = vld [vmem:[%s1 + $0x19d8] sm:$0xf]
  %v6571 = vld [vmem:[%s1 + $0x19dc] sm:$0xff]
  %v6572 = vld [vmem:[%s1 + $0x19e4] sm:$0xff]
  %v6573 = vld [vmem:[%s1 + $0x19ec] sm:$0xf]
  %v6574 = vld [vmem:[%s1 + $0x19f0] sm:$0xff]
  %v6575 = vld [vmem:[%s1 + $0x19f8] sm:$0xff]
  %v6576 = vld [vmem:[%s1 + $0x1a00] sm:$0xf]
  %v6577 = vld [vmem:[%s1 + $0x1a04] sm:$0xff]
  %v6578 = vld [vmem:[%s1 + $0x1a0c] sm:$0xff]
  %v6579 = vld [vmem:[%s1 + $0x1a14] sm:$0xf]
  %v6580 = vld [vmem:[%s1 + $0x1a18] sm:$0xff]
  %v6581 = vld [vmem:[%s1 + $0x1a20] sm:$0xff]
  %v6582 = vld [vmem:[%s1 + $0x1a28] sm:$0xf]
  %v6583 = vld [vmem:[%s1 + $0x1a2c] sm:$0xff]
  %v6584 = vld [vmem:[%s1 + $0x1a34] sm:$0xff]
  %v6585 = vld [vmem:[%s1 + $0x1a3c] sm:$0xf]
  %v6586 = vld [vmem:[%s1 + $0x1a40] sm:$0xff]
  %v6587 = vld [vmem:[%s1 + $0x1a48] sm:$0xff]
  %v6588 = vld [vmem:[%s1 + $0x1a50] sm:$0xf]
  %v6589 = vld [vmem:[%s1 + $0x1a54] sm:$0xff]
  %v6590 = vld [vmem:[%s1 + $0x1a5c] sm:$0xff]
  %v6591 = vld [vmem:[%s1 + $0x1a64] sm:$0xf]
  %v6592 = vld [vmem:[%s1 + $0x1a68] sm:$0xff]
  %v6593 = vld [vmem:[%s1 + $0x1a70] sm:$0xff]
  %v6594 = vld [vmem:[%s1 + $0x1a78] sm:$0xf]
  %v6595 = vld [vmem:[%s1 + $0x1a7c] sm:$0xff]
  %v6596 = vld [vmem:[%s1 + $0x1a84] sm:$0xff]
  %v6597 = vld [vmem:[%s1 + $0x1a8c] sm:$0xf]
  %v6598 = vld [vmem:[%s1 + $0x1a90] sm:$0xff]
  %v6599 = vld [vmem:[%s1 + $0x1a98] sm:$0xff]
  %v6600 = vld [vmem:[%s1 + $0x1aa0] sm:$0xf]
  %v6601 = vld [vmem:[%s1 + $0x1aa4] sm:$0xff]
  %v6602 = vld [vmem:[%s1 + $0x1aac] sm:$0xff]
  %v6603 = vld [vmem:[%s1 + $0x1ab4] sm:$0xf]
  %v6604 = vld [vmem:[%s1 + $0x1ab8] sm:$0xff]
  %v6605 = vld [vmem:[%s1 + $0x1ac0] sm:$0xff]
  %v6606 = vld [vmem:[%s1 + $0x1ac8] sm:$0xf]
  %v6607 = vld [vmem:[%s1 + $0x1acc] sm:$0xff]
  %v6608 = vld [vmem:[%s1 + $0x1ad4] sm:$0xff]
  %v6609 = vld [vmem:[%s1 + $0x1adc] sm:$0xf]
  %v6610 = vld [vmem:[%s1 + $0x1ae0] sm:$0xff]
  %v6611 = vld [vmem:[%s1 + $0x1ae8] sm:$0xff]
  %v6612 = vld [vmem:[%s1 + $0x1af0] sm:$0xf]
  %v6613 = vld [vmem:[%s1 + $0x1af4] sm:$0xff]
  %v6614 = vld [vmem:[%s1 + $0x1afc] sm:$0xff]
  %v6615 = vld [vmem:[%s1 + $0x1b04] sm:$0xf]
  %v6616 = vld [vmem:[%s1 + $0x1b08] sm:$0xff]
  %v6617 = vld [vmem:[%s1 + $0x1b10] sm:$0xff]
  %v6618 = vld [vmem:[%s1 + $0x1b18] sm:$0xf]
  %v6619 = vld [vmem:[%s1 + $0x1b1c] sm:$0xff]
  %v6620 = vld [vmem:[%s1 + $0x1b24] sm:$0xff]
  %v6621 = vld [vmem:[%s1 + $0x1b2c] sm:$0xf]
  %v6622 = vld [vmem:[%s1 + $0x1b30] sm:$0xff]
  %v6623 = vld [vmem:[%s1 + $0x1b38] sm:$0xff]
  %v6624 = vld [vmem:[%s1 + $0x1b40] sm:$0xf]
  %v6625 = vld [vmem:[%s1 + $0x1b44] sm:$0xff]
  %v6626 = vld [vmem:[%s1 + $0x1b4c] sm:$0xff]
  %v6627 = vld [vmem:[%s1 + $0x1b54] sm:$0xf]
  %v6628 = vld [vmem:[%s1 + $0x1b58] sm:$0xff]
  %v6629 = vld [vmem:[%s1 + $0x1b60] sm:$0xff]
  %v6630 = vld [vmem:[%s1 + $0x1b68] sm:$0xf]
  %v6631 = vld [vmem:[%s1 + $0x1b6c] sm:$0xff]
  %v6632 = vld [vmem:[%s1 + $0x1b74] sm:$0xff]
  %v6633 = vld [vmem:[%s1 + $0x1b7c] sm:$0xf]
  %v6634 = vld [vmem:[%s1 + $0x1b80] sm:$0xff]
  %v6635 = vld [vmem:[%s1 + $0x1b88] sm:$0xff]
  %v6636 = vld [vmem:[%s1 + $0x1b90] sm:$0xf]
  %v6637 = vld [vmem:[%s1 + $0x1b94] sm:$0xff]
  %v6638 = vld [vmem:[%s1 + $0x1b9c] sm:$0xff]
  %v6639 = vld [vmem:[%s1 + $0x1ba4] sm:$0xf]
  %v6640 = vld [vmem:[%s1 + $0x1ba8] sm:$0xff]
  %v6641 = vld [vmem:[%s1 + $0x1bb0] sm:$0xff]
  %v6642 = vld [vmem:[%s1 + $0x1bb8] sm:$0xf]
  %v6643 = vld [vmem:[%s1 + $0x1bbc] sm:$0xff]
  %v6644 = vld [vmem:[%s1 + $0x1bc4] sm:$0xff]
  %v6645 = vld [vmem:[%s1 + $0x1bcc] sm:$0xf]
  %v6646 = vld [vmem:[%s1 + $0x1bd0] sm:$0xff]
  %v6647 = vld [vmem:[%s1 + $0x1bd8] sm:$0xff]
  %v6648 = vld [vmem:[%s1 + $0x1be0] sm:$0xf]
  %v6649 = vld [vmem:[%s1 + $0x1be4] sm:$0xff]
  %v6650 = vld [vmem:[%s1 + $0x1bec] sm:$0xff]
  %v6651 = vld [vmem:[%s1 + $0x1bf4] sm:$0xf]
  %v6652 = vld [vmem:[%s1 + $0x1bf8] sm:$0xff]
  %v6653 = vld [vmem:[%s1 + $0x1c00] sm:$0xff]
  %v6654 = vld [vmem:[%s1 + $0x1c08] sm:$0xf]
  %v6655 = vld [vmem:[%s1 + $0x1c0c] sm:$0xff]
  %v6656 = vld [vmem:[%s1 + $0x1c14] sm:$0xff]
  %v6657 = vld [vmem:[%s1 + $0x1c1c] sm:$0xf]
  %v6658 = vld [vmem:[%s1 + $0x1c20] sm:$0xff]
  %v6659 = vld [vmem:[%s1 + $0x1c28] sm:$0xff]
  %v6660 = vld [vmem:[%s1 + $0x1c30] sm:$0xf]
  %v6661 = vld [vmem:[%s1 + $0x1c34] sm:$0xff]
  %v6662 = vld [vmem:[%s1 + $0x1c3c] sm:$0xff]
  %v6663 = vld [vmem:[%s1 + $0x1c44] sm:$0xf]
  %v6664 = vld [vmem:[%s1 + $0x1c48] sm:$0xff]
  %v6665 = vld [vmem:[%s1 + $0x1c50] sm:$0xff]
  %v6666 = vld [vmem:[%s1 + $0x1c58] sm:$0xf]
  %v6667 = vld [vmem:[%s1 + $0x1c5c] sm:$0xff]
  %v6668 = vld [vmem:[%s1 + $0x1c64] sm:$0xff]
  %v6669 = vld [vmem:[%s1 + $0x1c6c] sm:$0xf]
  %v6670 = vld [vmem:[%s1 + $0x1c70] sm:$0xff]
  %v6671 = vld [vmem:[%s1 + $0x1c78] sm:$0xff]
  %v6672 = vld [vmem:[%s1 + $0x1c80] sm:$0xf]
  %v6673 = vld [vmem:[%s1 + $0x1c84] sm:$0xff]
  %v6674 = vld [vmem:[%s1 + $0x1c8c] sm:$0xff]
  %v6675 = vld [vmem:[%s1 + $0x1c94] sm:$0xf]
  %v6676 = vld [vmem:[%s1 + $0x1c98] sm:$0xff]
  %v6677 = vld [vmem:[%s1 + $0x1ca0] sm:$0xff]
  %v6678 = vld [vmem:[%s1 + $0x1ca8] sm:$0xf]
  %v6679 = vld [vmem:[%s1 + $0x1cac] sm:$0xff]
  %v6680 = vld [vmem:[%s1 + $0x1cb4] sm:$0xff]
  %v6681 = vld [vmem:[%s1 + $0x1cbc] sm:$0xf]
  %v6682 = vld [vmem:[%s1 + $0x1cc0] sm:$0xff]
  %v6683 = vld [vmem:[%s1 + $0x1cc8] sm:$0xff]
  %v6684 = vld [vmem:[%s1 + $0x1cd0] sm:$0xf]
  %v6685 = vld [vmem:[%s1 + $0x1cd4] sm:$0xff]
  %v6686 = vld [vmem:[%s1 + $0x1cdc] sm:$0xff]
  %v6687 = vld [vmem:[%s1 + $0x1ce4] sm:$0xf]
  %v6688 = vld [vmem:[%s1 + $0x1ce8] sm:$0xff]
  %v6689 = vld [vmem:[%s1 + $0x1cf0] sm:$0xff]
  %v6690 = vld [vmem:[%s1 + $0x1cf8] sm:$0xf]
  %v6691 = vld [vmem:[%s1 + $0x1cfc] sm:$0xff]
  %v6692 = vld [vmem:[%s1 + $0x1d04] sm:$0xff]
  %v6693 = vld [vmem:[%s1 + $0x1d0c] sm:$0xf]
  %v6694 = vld [vmem:[%s1 + $0x1d10] sm:$0xff]
  %v6695 = vld [vmem:[%s1 + $0x1d18] sm:$0xff]
  %v6696 = vld [vmem:[%s1 + $0x1d20] sm:$0xf]
  %v6697 = vld [vmem:[%s1 + $0x1d24] sm:$0xff]
  %v6698 = vld [vmem:[%s1 + $0x1d2c] sm:$0xff]
  %v6699 = vld [vmem:[%s1 + $0x1d34] sm:$0xf]
  %v6700 = vld [vmem:[%s1 + $0x1d38] sm:$0xff]
  %v6701 = vld [vmem:[%s1 + $0x1d40] sm:$0xff]
  %v6702 = vld [vmem:[%s1 + $0x1d48] sm:$0xf]
  %v6703 = vld [vmem:[%s1 + $0x1d4c] sm:$0xff]
  %v6704 = vld [vmem:[%s1 + $0x1d54] sm:$0xff]
  %v6705 = vld [vmem:[%s1 + $0x1d5c] sm:$0xf]
  %v6706 = vld [vmem:[%s1 + $0x1d60] sm:$0xff]
  %v6707 = vld [vmem:[%s1 + $0x1d68] sm:$0xff]
  %v6708 = vld [vmem:[%s1 + $0x1d70] sm:$0xf]
  %v6709 = vld [vmem:[%s1 + $0x1d74] sm:$0xff]
  %v6710 = vld [vmem:[%s1 + $0x1d7c] sm:$0xff]
  %v6711 = vld [vmem:[%s1 + $0x1d84] sm:$0xf]
  %v6712 = vld [vmem:[%s1 + $0x1d88] sm:$0xff]
  %v6713 = vld [vmem:[%s1 + $0x1d90] sm:$0xff]
  %v6714 = vld [vmem:[%s1 + $0x1d98] sm:$0xf]
  %v6715 = vld [vmem:[%s1 + $0x1d9c] sm:$0xff]
  %v6716 = vld [vmem:[%s1 + $0x1da4] sm:$0xff]
  %v6717 = vld [vmem:[%s1 + $0x1dac] sm:$0xf]
  %v6718 = vld [vmem:[%s1 + $0x1db0] sm:$0xff]
  %v6719 = vld [vmem:[%s1 + $0x1db8] sm:$0xff]
  %v6720 = vld [vmem:[%s1 + $0x1dc0] sm:$0xf]
  %v6721 = vld [vmem:[%s1 + $0x1dc4] sm:$0xff]
  %v6722 = vld [vmem:[%s1 + $0x1dcc] sm:$0xff]
  %v6723 = vld [vmem:[%s1 + $0x1dd4] sm:$0xf]
  %v6724 = vld [vmem:[%s1 + $0x1dd8] sm:$0xff]
  %v6725 = vld [vmem:[%s1 + $0x1de0] sm:$0xff]
  %v6726 = vld [vmem:[%s1 + $0x1de8] sm:$0xf]
  %v6727 = vld [vmem:[%s1 + $0x1dec] sm:$0xff]
  %v6728 = vld [vmem:[%s1 + $0x1df4] sm:$0xff]
  %v6729 = vld [vmem:[%s1 + $0x1dfc] sm:$0xf]
  %v6730 = vrot.slane %v411, 1
  %v6731 = vor.u32 %v408, %v6730
  %v6732 = vrot.slane %v419, 1
  %v6733 = vor.u32 %v416, %v6732
  %v6734 = vrot.slane %v427, 1
  %v6735 = vor.u32 %v424, %v6734
  %v6736 = vrot.slane %v435, 1
  %v6737 = vor.u32 %v432, %v6736
  %v6934 = vunpack.c.l.b16 %v6538
  %v6935 = vunpack.c.h.b16 %v6538
  %v6936 = vunpack.c.l.b16 %v6539
  %v6937 = vunpack.c.h.b16 %v6539
  %v6938 = vunpack.c.l.b16 %v6540
  %v6939 = vunpack.c.l.b16 %v6541
  %v6940 = vunpack.c.h.b16 %v6541
  %v6941 = vunpack.c.l.b16 %v6542
  %v6942 = vunpack.c.h.b16 %v6542
  %v6943 = vunpack.c.l.b16 %v6543
  %v6944 = vunpack.c.l.b16 %v6544
  %v6945 = vunpack.c.h.b16 %v6544
  %v6946 = vunpack.c.l.b16 %v6545
  %v6947 = vunpack.c.h.b16 %v6545
  %v6948 = vunpack.c.l.b16 %v6546
  %v6949 = vunpack.c.l.b16 %v6547
  %v6950 = vunpack.c.h.b16 %v6547
  %v6951 = vunpack.c.l.b16 %v6548
  %v6952 = vunpack.c.h.b16 %v6548
  %v6953 = vunpack.c.l.b16 %v6549
  %v6954 = vunpack.c.l.b16 %v6550
  %v6955 = vunpack.c.h.b16 %v6550
  %v6956 = vunpack.c.l.b16 %v6551
  %v6957 = vunpack.c.h.b16 %v6551
  %v6958 = vunpack.c.l.b16 %v6552
  %v6959 = vunpack.c.l.b16 %v6553
  %v6960 = vunpack.c.h.b16 %v6553
  %v6961 = vunpack.c.l.b16 %v6554
  %v6962 = vunpack.c.h.b16 %v6554
  %v6963 = vunpack.c.l.b16 %v6555
  %v6964 = vunpack.c.l.b16 %v6556
  %v6965 = vunpack.c.h.b16 %v6556
  %v6966 = vunpack.c.l.b16 %v6557
  %v6967 = vunpack.c.h.b16 %v6557
  %v6968 = vunpack.c.l.b16 %v6558
  %v6969 = vunpack.c.l.b16 %v6559
  %v6970 = vunpack.c.h.b16 %v6559
  %v6971 = vunpack.c.l.b16 %v6560
  %v6972 = vunpack.c.h.b16 %v6560
  %v6973 = vunpack.c.l.b16 %v6561
  %v6974 = vunpack.c.l.b16 %v6562
  %v6975 = vunpack.c.h.b16 %v6562
  %v6976 = vunpack.c.l.b16 %v6563
  %v6977 = vunpack.c.h.b16 %v6563
  %v6978 = vunpack.c.l.b16 %v6564
  %v6979 = vunpack.c.l.b16 %v6565
  %v6980 = vunpack.c.h.b16 %v6565
  %v6981 = vunpack.c.l.b16 %v6566
  %v6982 = vunpack.c.h.b16 %v6566
  %v6983 = vunpack.c.l.b16 %v6567
  %v6984 = vunpack.c.l.b16 %v6568
  %v6985 = vunpack.c.h.b16 %v6568
  %v6986 = vunpack.c.l.b16 %v6569
  %v6987 = vunpack.c.h.b16 %v6569
  %v6988 = vunpack.c.l.b16 %v6570
  %v6989 = vunpack.c.l.b16 %v6571
  %v6990 = vunpack.c.h.b16 %v6571
  %v6991 = vunpack.c.l.b16 %v6572
  %v6992 = vunpack.c.h.b16 %v6572
  %v6993 = vunpack.c.l.b16 %v6573
  %v6994 = vunpack.c.l.b16 %v6574
  %v6995 = vunpack.c.h.b16 %v6574
  %v6996 = vunpack.c.l.b16 %v6575
  %v6997 = vunpack.c.h.b16 %v6575
  %v6998 = vunpack.c.l.b16 %v6576
  %v6999 = vunpack.c.l.b16 %v6577
  %v7000 = vunpack.c.h.b16 %v6577
  %v7001 = vunpack.c.l.b16 %v6578
  %v7002 = vunpack.c.h.b16 %v6578
  %v7003 = vunpack.c.l.b16 %v6579
  %v7004 = vunpack.c.l.b16 %v6580
  %v7005 = vunpack.c.h.b16 %v6580
  %v7006 = vunpack.c.l.b16 %v6581
  %v7007 = vunpack.c.h.b16 %v6581
  %v7008 = vunpack.c.l.b16 %v6582
  %v7009 = vunpack.c.l.b16 %v6583
  %v7010 = vunpack.c.h.b16 %v6583
  %v7011 = vunpack.c.l.b16 %v6584
  %v7012 = vunpack.c.h.b16 %v6584
  %v7013 = vunpack.c.l.b16 %v6585
  %v7014 = vunpack.c.l.b16 %v6586
  %v7015 = vunpack.c.h.b16 %v6586
  %v7016 = vunpack.c.l.b16 %v6587
  %v7017 = vunpack.c.h.b16 %v6587
  %v7018 = vunpack.c.l.b16 %v6588
  %v7019 = vunpack.c.l.b16 %v6589
  %v7020 = vunpack.c.h.b16 %v6589
  %v7021 = vunpack.c.l.b16 %v6590
  %v7022 = vunpack.c.h.b16 %v6590
  %v7023 = vunpack.c.l.b16 %v6591
  %v7024 = vunpack.c.l.b16 %v6592
  %v7025 = vunpack.c.h.b16 %v6592
  %v7026 = vunpack.c.l.b16 %v6593
  %v7027 = vunpack.c.h.b16 %v6593
  %v7028 = vunpack.c.l.b16 %v6594
  %v7029 = vunpack.c.l.b16 %v6595
  %v7030 = vunpack.c.h.b16 %v6595
  %v7031 = vunpack.c.l.b16 %v6596
  %v7032 = vunpack.c.h.b16 %v6596
  %v7033 = vunpack.c.l.b16 %v6597
  %v7034 = vunpack.c.l.b16 %v6598
  %v7035 = vunpack.c.h.b16 %v6598
  %v7036 = vunpack.c.l.b16 %v6599
  %v7037 = vunpack.c.h.b16 %v6599
  %v7038 = vunpack.c.l.b16 %v6600
  %v7039 = vunpack.c.l.b16 %v6601
  %v7040 = vunpack.c.h.b16 %v6601
  %v7041 = vunpack.c.l.b16 %v6602
  %v7042 = vunpack.c.h.b16 %v6602
  %v7043 = vunpack.c.l.b16 %v6603
  %v7044 = vunpack.c.l.b16 %v6604
  %v7045 = vunpack.c.h.b16 %v6604
  %v7046 = vunpack.c.l.b16 %v6605
  %v7047 = vunpack.c.h.b16 %v6605
  %v7048 = vunpack.c.l.b16 %v6606
  %v7049 = vunpack.c.l.b16 %v6607
  %v7050 = vunpack.c.h.b16 %v6607
  %v7051 = vunpack.c.l.b16 %v6608
  %v7052 = vunpack.c.h.b16 %v6608
  %v7053 = vunpack.c.l.b16 %v6609
  %v7054 = vunpack.c.l.b16 %v6610
  %v7055 = vunpack.c.h.b16 %v6610
  %v7056 = vunpack.c.l.b16 %v6611
  %v7057 = vunpack.c.h.b16 %v6611
  %v7058 = vunpack.c.l.b16 %v6612
  %v7059 = vunpack.c.l.b16 %v6613
  %v7060 = vunpack.c.h.b16 %v6613
  %v7061 = vunpack.c.l.b16 %v6614
  %v7062 = vunpack.c.h.b16 %v6614
  %v7063 = vunpack.c.l.b16 %v6615
  %v7064 = vunpack.c.l.b16 %v6616
  %v7065 = vunpack.c.h.b16 %v6616
  %v7066 = vunpack.c.l.b16 %v6617
  %v7067 = vunpack.c.h.b16 %v6617
  %v7068 = vunpack.c.l.b16 %v6618
  %v7069 = vunpack.c.l.b16 %v6619
  %v7070 = vunpack.c.h.b16 %v6619
  %v7071 = vunpack.c.l.b16 %v6620
  %v7072 = vunpack.c.h.b16 %v6620
  %v7073 = vunpack.c.l.b16 %v6621
  %v7074 = vunpack.c.l.b16 %v6622
  %v7075 = vunpack.c.h.b16 %v6622
  %v7076 = vunpack.c.l.b16 %v6623
  %v7077 = vunpack.c.h.b16 %v6623
  %v7078 = vunpack.c.l.b16 %v6624
  %v7079 = vunpack.c.l.b16 %v6625
  %v7080 = vunpack.c.h.b16 %v6625
  %v7081 = vunpack.c.l.b16 %v6626
  %v7082 = vunpack.c.h.b16 %v6626
  %v7083 = vunpack.c.l.b16 %v6627
  %v7084 = vunpack.c.l.b16 %v6628
  %v7085 = vunpack.c.h.b16 %v6628
  %v7086 = vunpack.c.l.b16 %v6629
  %v7087 = vunpack.c.h.b16 %v6629
  %v7088 = vunpack.c.l.b16 %v6630
  %v7089 = vunpack.c.l.b16 %v6631
  %v7090 = vunpack.c.h.b16 %v6631
  %v7091 = vunpack.c.l.b16 %v6632
  %v7092 = vunpack.c.h.b16 %v6632
  %v7093 = vunpack.c.l.b16 %v6633
  %v7094 = vunpack.c.l.b16 %v6634
  %v7095 = vunpack.c.h.b16 %v6634
  %v7096 = vunpack.c.l.b16 %v6635
  %v7097 = vunpack.c.h.b16 %v6635
  %v7098 = vunpack.c.l.b16 %v6636
  %v7099 = vunpack.c.l.b16 %v6637
  %v7100 = vunpack.c.h.b16 %v6637
  %v7101 = vunpack.c.l.b16 %v6638
  %v7102 = vunpack.c.h.b16 %v6638
  %v7103 = vunpack.c.l.b16 %v6639
  %v7104 = vunpack.c.l.b16 %v6640
  %v7105 = vunpack.c.h.b16 %v6640
  %v7106 = vunpack.c.l.b16 %v6641
  %v7107 = vunpack.c.h.b16 %v6641
  %v7108 = vunpack.c.l.b16 %v6642
  %v7109 = vunpack.c.l.b16 %v6643
  %v7110 = vunpack.c.h.b16 %v6643
  %v7111 = vunpack.c.l.b16 %v6644
  %v7112 = vunpack.c.h.b16 %v6644
  %v7113 = vunpack.c.l.b16 %v6645
  %v7114 = vunpack.c.l.b16 %v6646
  %v7115 = vunpack.c.h.b16 %v6646
  %v7116 = vunpack.c.l.b16 %v6647
  %v7117 = vunpack.c.h.b16 %v6647
  %v7118 = vunpack.c.l.b16 %v6648
  %v7119 = vunpack.c.l.b16 %v6649
  %v7120 = vunpack.c.h.b16 %v6649
  %v7121 = vunpack.c.l.b16 %v6650
  %v7122 = vunpack.c.h.b16 %v6650
  %v7123 = vunpack.c.l.b16 %v6651
  %v7124 = vunpack.c.l.b16 %v6652
  %v7125 = vunpack.c.h.b16 %v6652
  %v7126 = vunpack.c.l.b16 %v6653
  %v7127 = vunpack.c.h.b16 %v6653
  %v7128 = vunpack.c.l.b16 %v6654
  %v7129 = vunpack.c.l.b16 %v6655
  %v7130 = vunpack.c.h.b16 %v6655
  %v7131 = vunpack.c.l.b16 %v6656
  %v7132 = vunpack.c.h.b16 %v6656
  %v7133 = vunpack.c.l.b16 %v6657
  %v7134 = vunpack.c.l.b16 %v6658
  %v7135 = vunpack.c.h.b16 %v6658
  %v7136 = vunpack.c.l.b16 %v6659
  %v7137 = vunpack.c.h.b16 %v6659
  %v7138 = vunpack.c.l.b16 %v6660
  %v7139 = vunpack.c.l.b16 %v6661
  %v7140 = vunpack.c.h.b16 %v6661
  %v7141 = vunpack.c.l.b16 %v6662
  %v7142 = vunpack.c.h.b16 %v6662
  %v7143 = vunpack.c.l.b16 %v6663
  %v7144 = vunpack.c.l.b16 %v6664
  %v7145 = vunpack.c.h.b16 %v6664
  %v7146 = vunpack.c.l.b16 %v6665
  %v7147 = vunpack.c.h.b16 %v6665
  %v7148 = vunpack.c.l.b16 %v6666
  %v7149 = vunpack.c.l.b16 %v6667
  %v7150 = vunpack.c.h.b16 %v6667
  %v7151 = vunpack.c.l.b16 %v6668
  %v7152 = vunpack.c.h.b16 %v6668
  %v7153 = vunpack.c.l.b16 %v6669
  %v7154 = vunpack.c.l.b16 %v6670
  %v7155 = vunpack.c.h.b16 %v6670
  %v7156 = vunpack.c.l.b16 %v6671
  %v7157 = vunpack.c.h.b16 %v6671
  %v7158 = vunpack.c.l.b16 %v6672
  %v7159 = vunpack.c.l.b16 %v6673
  %v7160 = vunpack.c.h.b16 %v6673
  %v7161 = vunpack.c.l.b16 %v6674
  %v7162 = vunpack.c.h.b16 %v6674
  %v7163 = vunpack.c.l.b16 %v6675
  %v7164 = vunpack.c.l.b16 %v6676
  %v7165 = vunpack.c.h.b16 %v6676
  %v7166 = vunpack.c.l.b16 %v6677
  %v7167 = vunpack.c.h.b16 %v6677
  %v7168 = vunpack.c.l.b16 %v6678
  %v7169 = vunpack.c.l.b16 %v6679
  %v7170 = vunpack.c.h.b16 %v6679
  %v7171 = vunpack.c.l.b16 %v6680
  %v7172 = vunpack.c.h.b16 %v6680
  %v7173 = vunpack.c.l.b16 %v6681
  %v7174 = vunpack.c.l.b16 %v6682
  %v7175 = vunpack.c.h.b16 %v6682
  %v7176 = vunpack.c.l.b16 %v6683
  %v7177 = vunpack.c.h.b16 %v6683
  %v7178 = vunpack.c.l.b16 %v6684
  %v7179 = vunpack.c.l.b16 %v6685
  %v7180 = vunpack.c.h.b16 %v6685
  %v7181 = vunpack.c.l.b16 %v6686
  %v7182 = vunpack.c.h.b16 %v6686
  %v7183 = vunpack.c.l.b16 %v6687
  %v7184 = vunpack.c.l.b16 %v6688
  %v7185 = vunpack.c.h.b16 %v6688
  %v7186 = vunpack.c.l.b16 %v6689
  %v7187 = vunpack.c.h.b16 %v6689
  %v7188 = vunpack.c.l.b16 %v6690
  %v7189 = vunpack.c.l.b16 %v6691
  %v7190 = vunpack.c.h.b16 %v6691
  %v7191 = vunpack.c.l.b16 %v6692
  %v7192 = vunpack.c.h.b16 %v6692
  %v7193 = vunpack.c.l.b16 %v6693
  %v7194 = vunpack.c.l.b16 %v6694
  %v7195 = vunpack.c.h.b16 %v6694
  %v7196 = vunpack.c.l.b16 %v6695
  %v7197 = vunpack.c.h.b16 %v6695
  %v7198 = vunpack.c.l.b16 %v6696
  %v7199 = vunpack.c.l.b16 %v6697
  %v7200 = vunpack.c.h.b16 %v6697
  %v7201 = vunpack.c.l.b16 %v6698
  %v7202 = vunpack.c.h.b16 %v6698
  %v7203 = vunpack.c.l.b16 %v6699
  %v7204 = vunpack.c.l.b16 %v6700
  %v7205 = vunpack.c.h.b16 %v6700
  %v7206 = vunpack.c.l.b16 %v6701
  %v7207 = vunpack.c.h.b16 %v6701
  %v7208 = vunpack.c.l.b16 %v6702
  %v7209 = vunpack.c.l.b16 %v6703
  %v7210 = vunpack.c.h.b16 %v6703
  %v7211 = vunpack.c.l.b16 %v6704
  %v7212 = vunpack.c.h.b16 %v6704
  %v7213 = vunpack.c.l.b16 %v6705
  %v7214 = vunpack.c.l.b16 %v6706
  %v7215 = vunpack.c.h.b16 %v6706
  %v7216 = vunpack.c.l.b16 %v6707
  %v7217 = vunpack.c.h.b16 %v6707
  %v7218 = vunpack.c.l.b16 %v6708
  %v7219 = vunpack.c.l.b16 %v6709
  %v7220 = vunpack.c.h.b16 %v6709
  %v7221 = vunpack.c.l.b16 %v6710
  %v7222 = vunpack.c.h.b16 %v6710
  %v7223 = vunpack.c.l.b16 %v6711
  %v7224 = vunpack.c.l.b16 %v6712
  %v7225 = vunpack.c.h.b16 %v6712
  %v7226 = vunpack.c.l.b16 %v6713
  %v7227 = vunpack.c.h.b16 %v6713
  %v7228 = vunpack.c.l.b16 %v6714
  %v7229 = vunpack.c.l.b16 %v6715
  %v7230 = vunpack.c.h.b16 %v6715
  %v7231 = vunpack.c.l.b16 %v6716
  %v7232 = vunpack.c.h.b16 %v6716
  %v7233 = vunpack.c.l.b16 %v6717
  %v7234 = vunpack.c.l.b16 %v6718
  %v7235 = vunpack.c.h.b16 %v6718
  %v7236 = vunpack.c.l.b16 %v6719
  %v7237 = vunpack.c.h.b16 %v6719
  %v7238 = vunpack.c.l.b16 %v6720
  %v7239 = vunpack.c.l.b16 %v6721
  %v7240 = vunpack.c.h.b16 %v6721
  %v7241 = vunpack.c.l.b16 %v6722
  %v7242 = vunpack.c.h.b16 %v6722
  %v7243 = vunpack.c.l.b16 %v6723
  %v7244 = vunpack.c.l.b16 %v6724
  %v7245 = vunpack.c.h.b16 %v6724
  %v7246 = vunpack.c.l.b16 %v6725
  %v7247 = vunpack.c.h.b16 %v6725
  %v7248 = vunpack.c.l.b16 %v6726
  %v7249 = vunpack.c.l.b16 %v6727
  %v7250 = vunpack.c.h.b16 %v6727
  %v7251 = vunpack.c.l.b16 %v6728
  %v7252 = vunpack.c.h.b16 %v6728
  %v7253 = vunpack.c.l.b16 %v6729
  %v7254 = vpack.c.b16 %v6939, %v6934
  %v7255 = vpack.c.b16 %v6940, %v6935
  %v7256 = vpack.c.b16 %v6941, %v6936
  %v7257 = vpack.c.b16 %v6942, %v6937
  %v7258 = vpack.c.b16 %v6943, %v6938
  %v7259 = vpack.c.b16 %v6949, %v6944
  %v7260 = vpack.c.b16 %v6950, %v6945
  %v7261 = vpack.c.b16 %v6951, %v6946
  %v7262 = vpack.c.b16 %v6952, %v6947
  %v7263 = vpack.c.b16 %v6953, %v6948
  %v7264 = vpack.c.b16 %v6959, %v6954
  %v7265 = vpack.c.b16 %v6960, %v6955
  %v7266 = vpack.c.b16 %v6961, %v6956
  %v7267 = vpack.c.b16 %v6962, %v6957
  %v7268 = vpack.c.b16 %v6963, %v6958
  %v7269 = vpack.c.b16 %v6969, %v6964
  %v7270 = vpack.c.b16 %v6970, %v6965
  %v7271 = vpack.c.b16 %v6971, %v6966
  %v7272 = vpack.c.b16 %v6972, %v6967
  %v7273 = vpack.c.b16 %v6973, %v6968
  %v7274 = vpack.c.b16 %v6979, %v6974
  %v7275 = vpack.c.b16 %v6980, %v6975
  %v7276 = vpack.c.b16 %v6981, %v6976
  %v7277 = vpack.c.b16 %v6982, %v6977
  %v7278 = vpack.c.b16 %v6983, %v6978
  %v7279 = vpack.c.b16 %v6989, %v6984
  %v7280 = vpack.c.b16 %v6990, %v6985
  %v7281 = vpack.c.b16 %v6991, %v6986
  %v7282 = vpack.c.b16 %v6992, %v6987
  %v7283 = vpack.c.b16 %v6993, %v6988
  %v7284 = vpack.c.b16 %v6999, %v6994
  %v7285 = vpack.c.b16 %v7000, %v6995
  %v7286 = vpack.c.b16 %v7001, %v6996
  %v7287 = vpack.c.b16 %v7002, %v6997
  %v7288 = vpack.c.b16 %v7003, %v6998
  %v7289 = vpack.c.b16 %v7009, %v7004
  %v7290 = vpack.c.b16 %v7010, %v7005
  %v7291 = vpack.c.b16 %v7011, %v7006
  %v7292 = vpack.c.b16 %v7012, %v7007
  %v7293 = vpack.c.b16 %v7013, %v7008
  %v7294 = vpack.c.b16 %v7019, %v7014
  %v7295 = vpack.c.b16 %v7020, %v7015
  %v7296 = vpack.c.b16 %v7021, %v7016
  %v7297 = vpack.c.b16 %v7022, %v7017
  %v7298 = vpack.c.b16 %v7023, %v7018
  %v7299 = vpack.c.b16 %v7029, %v7024
  %v7300 = vpack.c.b16 %v7030, %v7025
  %v7301 = vpack.c.b16 %v7031, %v7026
  %v7302 = vpack.c.b16 %v7032, %v7027
  %v7303 = vpack.c.b16 %v7033, %v7028
  %v7304 = vpack.c.b16 %v7039, %v7034
  %v7305 = vpack.c.b16 %v7040, %v7035
  %v7306 = vpack.c.b16 %v7041, %v7036
  %v7307 = vpack.c.b16 %v7042, %v7037
  %v7308 = vpack.c.b16 %v7043, %v7038
  %v7309 = vpack.c.b16 %v7049, %v7044
  %v7310 = vpack.c.b16 %v7050, %v7045
  %v7311 = vpack.c.b16 %v7051, %v7046
  %v7312 = vpack.c.b16 %v7052, %v7047
  %v7313 = vpack.c.b16 %v7053, %v7048
  %v7314 = vpack.c.b16 %v7059, %v7054
  %v7315 = vpack.c.b16 %v7060, %v7055
  %v7316 = vpack.c.b16 %v7061, %v7056
  %v7317 = vpack.c.b16 %v7062, %v7057
  %v7318 = vpack.c.b16 %v7063, %v7058
  %v7319 = vpack.c.b16 %v7069, %v7064
  %v7320 = vpack.c.b16 %v7070, %v7065
  %v7321 = vpack.c.b16 %v7071, %v7066
  %v7322 = vpack.c.b16 %v7072, %v7067
  %v7323 = vpack.c.b16 %v7073, %v7068
  %v7324 = vpack.c.b16 %v7079, %v7074
  %v7325 = vpack.c.b16 %v7080, %v7075
  %v7326 = vpack.c.b16 %v7081, %v7076
  %v7327 = vpack.c.b16 %v7082, %v7077
  %v7328 = vpack.c.b16 %v7083, %v7078
  %v7329 = vpack.c.b16 %v7089, %v7084
  %v7330 = vpack.c.b16 %v7090, %v7085
  %v7331 = vpack.c.b16 %v7091, %v7086
  %v7332 = vpack.c.b16 %v7092, %v7087
  %v7333 = vpack.c.b16 %v7093, %v7088
  %v7334 = vpack.c.b16 %v7099, %v7094
  %v7335 = vpack.c.b16 %v7100, %v7095
  %v7336 = vpack.c.b16 %v7101, %v7096
  %v7337 = vpack.c.b16 %v7102, %v7097
  %v7338 = vpack.c.b16 %v7103, %v7098
  %v7339 = vpack.c.b16 %v7109, %v7104
  %v7340 = vpack.c.b16 %v7110, %v7105
  %v7341 = vpack.c.b16 %v7111, %v7106
  %v7342 = vpack.c.b16 %v7112, %v7107
  %v7343 = vpack.c.b16 %v7113, %v7108
  %v7344 = vpack.c.b16 %v7119, %v7114
  %v7345 = vpack.c.b16 %v7120, %v7115
  %v7346 = vpack.c.b16 %v7121, %v7116
  %v7347 = vpack.c.b16 %v7122, %v7117
  %v7348 = vpack.c.b16 %v7123, %v7118
  %v7349 = vpack.c.b16 %v7129, %v7124
  %v7350 = vpack.c.b16 %v7130, %v7125
  %v7351 = vpack.c.b16 %v7131, %v7126
  %v7352 = vpack.c.b16 %v7132, %v7127
  %v7353 = vpack.c.b16 %v7133, %v7128
  %v7354 = vpack.c.b16 %v7139, %v7134
  %v7355 = vpack.c.b16 %v7140, %v7135
  %v7356 = vpack.c.b16 %v7141, %v7136
  %v7357 = vpack.c.b16 %v7142, %v7137
  %v7358 = vpack.c.b16 %v7143, %v7138
  %v7359 = vpack.c.b16 %v7149, %v7144
  %v7360 = vpack.c.b16 %v7150, %v7145
  %v7361 = vpack.c.b16 %v7151, %v7146
  %v7362 = vpack.c.b16 %v7152, %v7147
  %v7363 = vpack.c.b16 %v7153, %v7148
  %v7364 = vpack.c.b16 %v7159, %v7154
  %v7365 = vpack.c.b16 %v7160, %v7155
  %v7366 = vpack.c.b16 %v7161, %v7156
  %v7367 = vpack.c.b16 %v7162, %v7157
  %v7368 = vpack.c.b16 %v7163, %v7158
  %v7369 = vpack.c.b16 %v7169, %v7164
  %v7370 = vpack.c.b16 %v7170, %v7165
  %v7371 = vpack.c.b16 %v7171, %v7166
  %v7372 = vpack.c.b16 %v7172, %v7167
  %v7373 = vpack.c.b16 %v7173, %v7168
  %v7374 = vpack.c.b16 %v7179, %v7174
  %v7375 = vpack.c.b16 %v7180, %v7175
  %v7376 = vpack.c.b16 %v7181, %v7176
  %v7377 = vpack.c.b16 %v7182, %v7177
  %v7378 = vpack.c.b16 %v7183, %v7178
  %v7379 = vpack.c.b16 %v7189, %v7184
  %v7380 = vpack.c.b16 %v7190, %v7185
  %v7381 = vpack.c.b16 %v7191, %v7186
  %v7382 = vpack.c.b16 %v7192, %v7187
  %v7383 = vpack.c.b16 %v7193, %v7188
  %v7384 = vpack.c.b16 %v7199, %v7194
  %v7385 = vpack.c.b16 %v7200, %v7195
  %v7386 = vpack.c.b16 %v7201, %v7196
  %v7387 = vpack.c.b16 %v7202, %v7197
  %v7388 = vpack.c.b16 %v7203, %v7198
  %v7389 = vpack.c.b16 %v7209, %v7204
  %v7390 = vpack.c.b16 %v7210, %v7205
  %v7391 = vpack.c.b16 %v7211, %v7206
  %v7392 = vpack.c.b16 %v7212, %v7207
  %v7393 = vpack.c.b16 %v7213, %v7208
  %v7394 = vpack.c.b16 %v7219, %v7214
  %v7395 = vpack.c.b16 %v7220, %v7215
  %v7396 = vpack.c.b16 %v7221, %v7216
  %v7397 = vpack.c.b16 %v7222, %v7217
  %v7398 = vpack.c.b16 %v7223, %v7218
  %v7399 = vpack.c.b16 %v7229, %v7224
  %v7400 = vpack.c.b16 %v7230, %v7225
  %v7401 = vpack.c.b16 %v7231, %v7226
  %v7402 = vpack.c.b16 %v7232, %v7227
  %v7403 = vpack.c.b16 %v7233, %v7228
  %v7404 = vpack.c.b16 %v7239, %v7234
  %v7405 = vpack.c.b16 %v7240, %v7235
  %v7406 = vpack.c.b16 %v7241, %v7236
  %v7407 = vpack.c.b16 %v7242, %v7237
  %v7408 = vpack.c.b16 %v7243, %v7238
  %v7409 = vpack.c.b16 %v7249, %v7244
  %v7410 = vpack.c.b16 %v7250, %v7245
  %v7411 = vpack.c.b16 %v7251, %v7246
  %v7412 = vpack.c.b16 %v7252, %v7247
  %v7413 = vpack.c.b16 %v7253, %v7248
  %7574 = vmatpush.bf16.msra.mxu0 %v7289
  %7575 = vmatpush.bf16.msra.mxu0 %v7284
  %7576 = vmatpush.bf16.msra.mxu0 %v7279
  %7577 = vmatpush.bf16.msra.mxu0 %v7274
  %7578 = vmatpush.bf16.msra.mxu0 %v7269
  %7579 = vmatpush.bf16.msra.mxu0 %v7264
  %7580 = vmatpush.bf16.msra.mxu0 %v7259
  %7581 = vmatpush.bf16.msra.mxu0 %v7254
  %7582 = vmatmul.bf16.gmra.mxu0 %v6731
  %v7583 = vpop.f32.mrf.mxu0
  %v7584 = vadd.f32 0.0, %v7583
  %v7585 = vpop.f32.mrf.mxu0
  %7586 = vdwg.mxu0
  %7587 = vmatpush.bf16.msra.mxu0 %v7329
  %7588 = vmatpush.bf16.msra.mxu0 %v7324
  %7589 = vmatpush.bf16.msra.mxu0 %v7319
  %7590 = vmatpush.bf16.msra.mxu0 %v7314
  %7591 = vmatpush.bf16.msra.mxu0 %v7309
  %7592 = vmatpush.bf16.msra.mxu0 %v7304
  %7593 = vmatpush.bf16.msra.mxu0 %v7299
  %7594 = vmatpush.bf16.msra.mxu0 %v7294
  %7595 = vmatmul.bf16.gmra.mxu0 %v6733
  %v7596 = vpop.f32.mrf.mxu0
  %v7597 = vadd.f32 %v7584, %v7596
  %v7598 = vpop.f32.mrf.mxu0
  %7599 = vdwg.mxu0
  %7600 = vmatpush.bf16.msra.mxu0 %v7369
  %7601 = vmatpush.bf16.msra.mxu0 %v7364
  %7602 = vmatpush.bf16.msra.mxu0 %v7359
  %7603 = vmatpush.bf16.msra.mxu0 %v7354
  %7604 = vmatpush.bf16.msra.mxu0 %v7349
  %7605 = vmatpush.bf16.msra.mxu0 %v7344
  %7606 = vmatpush.bf16.msra.mxu0 %v7339
  %7607 = vmatpush.bf16.msra.mxu0 %v7334
  %7608 = vmatmul.bf16.gmra.mxu0 %v6735
  %v7609 = vpop.f32.mrf.mxu0
  %v7610 = vadd.f32 %v7597, %v7609
  %v7611 = vpop.f32.mrf.mxu0
  %7612 = vdwg.mxu0
  %7613 = vmatpush.bf16.msra.mxu0 %v7409
  %7614 = vmatpush.bf16.msra.mxu0 %v7404
  %7615 = vmatpush.bf16.msra.mxu0 %v7399
  %7616 = vmatpush.bf16.msra.mxu0 %v7394
  %7617 = vmatpush.bf16.msra.mxu0 %v7389
  %7618 = vmatpush.bf16.msra.mxu0 %v7384
  %7619 = vmatpush.bf16.msra.mxu0 %v7379
  %7620 = vmatpush.bf16.msra.mxu0 %v7374
  %7621 = vmatmul.bf16.gmra.mxu0 %v6737
  %v7622 = vpop.f32.mrf.mxu0
  %v7623 = vadd.f32 %v7610, %v7622
  %v7624 = vpop.f32.mrf.mxu0
  %7625 = vdwg.mxu0
  %7626 = vmatpush.bf16.msra.mxu0 %v7290
  %7627 = vmatpush.bf16.msra.mxu0 %v7285
  %7628 = vmatpush.bf16.msra.mxu0 %v7280
  %7629 = vmatpush.bf16.msra.mxu0 %v7275
  %7630 = vmatpush.bf16.msra.mxu0 %v7270
  %7631 = vmatpush.bf16.msra.mxu0 %v7265
  %7632 = vmatpush.bf16.msra.mxu0 %v7260
  %7633 = vmatpush.bf16.msra.mxu0 %v7255
  %7634 = vmatmul.bf16.gmra.mxu0 %v6731
  %v7635 = vpop.f32.mrf.mxu0
  %v7636 = vadd.f32 0.0, %v7635
  %v7637 = vpop.f32.mrf.mxu0
  %7638 = vdwg.mxu0
  %7639 = vmatpush.bf16.msra.mxu0 %v7330
  %7640 = vmatpush.bf16.msra.mxu0 %v7325
  %7641 = vmatpush.bf16.msra.mxu0 %v7320
  %7642 = vmatpush.bf16.msra.mxu0 %v7315
  %7643 = vmatpush.bf16.msra.mxu0 %v7310
  %7644 = vmatpush.bf16.msra.mxu0 %v7305
  %7645 = vmatpush.bf16.msra.mxu0 %v7300
  %7646 = vmatpush.bf16.msra.mxu0 %v7295
  %7647 = vmatmul.bf16.gmra.mxu0 %v6733
  %v7648 = vpop.f32.mrf.mxu0
  %v7649 = vadd.f32 %v7636, %v7648
  %v7650 = vpop.f32.mrf.mxu0
  %7651 = vdwg.mxu0
  %7652 = vmatpush.bf16.msra.mxu0 %v7370
  %7653 = vmatpush.bf16.msra.mxu0 %v7365
  %7654 = vmatpush.bf16.msra.mxu0 %v7360
  %7655 = vmatpush.bf16.msra.mxu0 %v7355
  %7656 = vmatpush.bf16.msra.mxu0 %v7350
  %7657 = vmatpush.bf16.msra.mxu0 %v7345
  %7658 = vmatpush.bf16.msra.mxu0 %v7340
  %7659 = vmatpush.bf16.msra.mxu0 %v7335
  %7660 = vmatmul.bf16.gmra.mxu0 %v6735
  %v7661 = vpop.f32.mrf.mxu0
  %v7662 = vadd.f32 %v7649, %v7661
  %v7663 = vpop.f32.mrf.mxu0
  %7664 = vdwg.mxu0
  %7665 = vmatpush.bf16.msra.mxu0 %v7410
  %7666 = vmatpush.bf16.msra.mxu0 %v7405
  %7667 = vmatpush.bf16.msra.mxu0 %v7400
  %7668 = vmatpush.bf16.msra.mxu0 %v7395
  %7669 = vmatpush.bf16.msra.mxu0 %v7390
  %7670 = vmatpush.bf16.msra.mxu0 %v7385
  %7671 = vmatpush.bf16.msra.mxu0 %v7380
  %7672 = vmatpush.bf16.msra.mxu0 %v7375
  %7673 = vmatmul.bf16.gmra.mxu0 %v6737
  %v7674 = vpop.f32.mrf.mxu0
  %v7675 = vadd.f32 %v7662, %v7674
  %v7676 = vpop.f32.mrf.mxu0
  %7677 = vdwg.mxu0
  %7678 = vmatpush.bf16.msra.mxu0 %v7291
  %7679 = vmatpush.bf16.msra.mxu0 %v7286
  %7680 = vmatpush.bf16.msra.mxu0 %v7281
  %7681 = vmatpush.bf16.msra.mxu0 %v7276
  %7682 = vmatpush.bf16.msra.mxu0 %v7271
  %7683 = vmatpush.bf16.msra.mxu0 %v7266
  %7684 = vmatpush.bf16.msra.mxu0 %v7261
  %7685 = vmatpush.bf16.msra.mxu0 %v7256
  %7686 = vmatmul.bf16.gmra.mxu0 %v6731
  %v7687 = vpop.f32.mrf.mxu0
  %v7688 = vadd.f32 0.0, %v7687
  %v7689 = vpop.f32.mrf.mxu0
  %7690 = vdwg.mxu0
  %7691 = vmatpush.bf16.msra.mxu0 %v7331
  %7692 = vmatpush.bf16.msra.mxu0 %v7326
  %7693 = vmatpush.bf16.msra.mxu0 %v7321
  %7694 = vmatpush.bf16.msra.mxu0 %v7316
  %7695 = vmatpush.bf16.msra.mxu0 %v7311
  %7696 = vmatpush.bf16.msra.mxu0 %v7306
  %7697 = vmatpush.bf16.msra.mxu0 %v7301
  %7698 = vmatpush.bf16.msra.mxu0 %v7296
  %7699 = vmatmul.bf16.gmra.mxu0 %v6733
  %v7700 = vpop.f32.mrf.mxu0
  %v7701 = vadd.f32 %v7688, %v7700
  %v7702 = vpop.f32.mrf.mxu0
  %7703 = vdwg.mxu0
  %7704 = vmatpush.bf16.msra.mxu0 %v7371
  %7705 = vmatpush.bf16.msra.mxu0 %v7366
  %7706 = vmatpush.bf16.msra.mxu0 %v7361
  %7707 = vmatpush.bf16.msra.mxu0 %v7356
  %7708 = vmatpush.bf16.msra.mxu0 %v7351
  %7709 = vmatpush.bf16.msra.mxu0 %v7346
  %7710 = vmatpush.bf16.msra.mxu0 %v7341
  %7711 = vmatpush.bf16.msra.mxu0 %v7336
  %7712 = vmatmul.bf16.gmra.mxu0 %v6735
  %v7713 = vpop.f32.mrf.mxu0
  %v7714 = vadd.f32 %v7701, %v7713
  %v7715 = vpop.f32.mrf.mxu0
  %7716 = vdwg.mxu0
  %7717 = vmatpush.bf16.msra.mxu0 %v7411
  %7718 = vmatpush.bf16.msra.mxu0 %v7406
  %7719 = vmatpush.bf16.msra.mxu0 %v7401
  %7720 = vmatpush.bf16.msra.mxu0 %v7396
  %7721 = vmatpush.bf16.msra.mxu0 %v7391
  %7722 = vmatpush.bf16.msra.mxu0 %v7386
  %7723 = vmatpush.bf16.msra.mxu0 %v7381
  %7724 = vmatpush.bf16.msra.mxu0 %v7376
  %7725 = vmatmul.bf16.gmra.mxu0 %v6737
  %v7726 = vpop.f32.mrf.mxu0
  %v7727 = vadd.f32 %v7714, %v7726
  %v7728 = vpop.f32.mrf.mxu0
  %7729 = vdwg.mxu0
  %7730 = vmatpush.bf16.msra.mxu0 %v7292
  %7731 = vmatpush.bf16.msra.mxu0 %v7287
  %7732 = vmatpush.bf16.msra.mxu0 %v7282
  %7733 = vmatpush.bf16.msra.mxu0 %v7277
  %7734 = vmatpush.bf16.msra.mxu0 %v7272
  %7735 = vmatpush.bf16.msra.mxu0 %v7267
  %7736 = vmatpush.bf16.msra.mxu0 %v7262
  %7737 = vmatpush.bf16.msra.mxu0 %v7257
  %7738 = vmatmul.bf16.gmra.mxu0 %v6731
  %v7739 = vpop.f32.mrf.mxu0
  %v7740 = vadd.f32 0.0, %v7739
  %v7741 = vpop.f32.mrf.mxu0
  %7742 = vdwg.mxu0
  %7743 = vmatpush.bf16.msra.mxu0 %v7332
  %7744 = vmatpush.bf16.msra.mxu0 %v7327
  %7745 = vmatpush.bf16.msra.mxu0 %v7322
  %7746 = vmatpush.bf16.msra.mxu0 %v7317
  %7747 = vmatpush.bf16.msra.mxu0 %v7312
  %7748 = vmatpush.bf16.msra.mxu0 %v7307
  %7749 = vmatpush.bf16.msra.mxu0 %v7302
  %7750 = vmatpush.bf16.msra.mxu0 %v7297
  %7751 = vmatmul.bf16.gmra.mxu0 %v6733
  %v7752 = vpop.f32.mrf.mxu0
  %v7753 = vadd.f32 %v7740, %v7752
  %v7754 = vpop.f32.mrf.mxu0
  %7755 = vdwg.mxu0
  %7756 = vmatpush.bf16.msra.mxu0 %v7372
  %7757 = vmatpush.bf16.msra.mxu0 %v7367
  %7758 = vmatpush.bf16.msra.mxu0 %v7362
  %7759 = vmatpush.bf16.msra.mxu0 %v7357
  %7760 = vmatpush.bf16.msra.mxu0 %v7352
  %7761 = vmatpush.bf16.msra.mxu0 %v7347
  %7762 = vmatpush.bf16.msra.mxu0 %v7342
  %7763 = vmatpush.bf16.msra.mxu0 %v7337
  %7764 = vmatmul.bf16.gmra.mxu0 %v6735
  %v7765 = vpop.f32.mrf.mxu0
  %v7766 = vadd.f32 %v7753, %v7765
  %v7767 = vpop.f32.mrf.mxu0
  %7768 = vdwg.mxu0
  %7769 = vmatpush.bf16.msra.mxu0 %v7412
  %7770 = vmatpush.bf16.msra.mxu0 %v7407
  %7771 = vmatpush.bf16.msra.mxu0 %v7402
  %7772 = vmatpush.bf16.msra.mxu0 %v7397
  %7773 = vmatpush.bf16.msra.mxu0 %v7392
  %7774 = vmatpush.bf16.msra.mxu0 %v7387
  %7775 = vmatpush.bf16.msra.mxu0 %v7382
  %7776 = vmatpush.bf16.msra.mxu0 %v7377
  %7777 = vmatmul.bf16.gmra.mxu0 %v6737
  %v7778 = vpop.f32.mrf.mxu0
  %v7779 = vadd.f32 %v7766, %v7778
  %v7780 = vpop.f32.mrf.mxu0
  %7781 = vdwg.mxu0
  %7782 = vmatpush.bf16.msra.mxu0 %v7293
  %7783 = vmatpush.bf16.msra.mxu0 %v7288
  %7784 = vmatpush.bf16.msra.mxu0 %v7283
  %7785 = vmatpush.bf16.msra.mxu0 %v7278
  %7786 = vmatpush.bf16.msra.mxu0 %v7273
  %7787 = vmatpush.bf16.msra.mxu0 %v7268
  %7788 = vmatpush.bf16.msra.mxu0 %v7263
  %7789 = vmatpush.bf16.msra.mxu0 %v7258
  %7790 = vmatmul.bf16.gmra.mxu0 %v6731
  %v7791 = vpop.f32.mrf.mxu0
  %v7792 = vadd.f32 0.0, %v7791
  %v7793 = vpop.f32.mrf.mxu0
  %7794 = vdwg.mxu0
  %7795 = vmatpush.bf16.msra.mxu0 %v7333
  %7796 = vmatpush.bf16.msra.mxu0 %v7328
  %7797 = vmatpush.bf16.msra.mxu0 %v7323
  %7798 = vmatpush.bf16.msra.mxu0 %v7318
  %7799 = vmatpush.bf16.msra.mxu0 %v7313
  %7800 = vmatpush.bf16.msra.mxu0 %v7308
  %7801 = vmatpush.bf16.msra.mxu0 %v7303
  %7802 = vmatpush.bf16.msra.mxu0 %v7298
  %7803 = vmatmul.bf16.gmra.mxu0 %v6733
  %v7804 = vpop.f32.mrf.mxu0
  %v7805 = vadd.f32 %v7792, %v7804
  %v7806 = vpop.f32.mrf.mxu0
  %7807 = vdwg.mxu0
  %7808 = vmatpush.bf16.msra.mxu0 %v7373
  %7809 = vmatpush.bf16.msra.mxu0 %v7368
  %7810 = vmatpush.bf16.msra.mxu0 %v7363
  %7811 = vmatpush.bf16.msra.mxu0 %v7358
  %7812 = vmatpush.bf16.msra.mxu0 %v7353
  %7813 = vmatpush.bf16.msra.mxu0 %v7348
  %7814 = vmatpush.bf16.msra.mxu0 %v7343
  %7815 = vmatpush.bf16.msra.mxu0 %v7338
  %7816 = vmatmul.bf16.gmra.mxu0 %v6735
  %v7817 = vpop.f32.mrf.mxu0
  %v7818 = vadd.f32 %v7805, %v7817
  %v7819 = vpop.f32.mrf.mxu0
  %7820 = vdwg.mxu0
  %7821 = vmatpush.bf16.msra.mxu0 %v7413
  %7822 = vmatpush.bf16.msra.mxu0 %v7408
  %7823 = vmatpush.bf16.msra.mxu0 %v7403
  %7824 = vmatpush.bf16.msra.mxu0 %v7398
  %7825 = vmatpush.bf16.msra.mxu0 %v7393
  %7826 = vmatpush.bf16.msra.mxu0 %v7388
  %7827 = vmatpush.bf16.msra.mxu0 %v7383
  %7828 = vmatpush.bf16.msra.mxu0 %v7378
  %7829 = vmatmul.bf16.gmra.mxu0 %v6737
  %v7830 = vpop.f32.mrf.mxu0
  %v7831 = vadd.f32 %v7818, %v7830
  %v7832 = vpop.f32.mrf.mxu0
  %7833 = vdwg.mxu0
  %v7834 = vadd.f32 %v6533, %v7623
  %v7835 = vadd.f32 %v6534, %v7675
  %v7836 = vadd.f32 %v6535, %v7727
  %v7837 = vadd.f32 %v6536, %v7779
  %v7838 = vadd.f32 %v6537, %v7831
  %v7839 = vpack.c.bf16 %v11, %v11
  %v7840 = vpack.c.bf16 %v12, %v12
  %v7841 = vpack.c.bf16 %v13, %v13
  %v7842 = vpack.c.bf16 %v14, %v14
  %v7843 = vld [vmem:[%s1 + $0x1e00] sm:$0xff]
  %v7844 = vld [vmem:[%s1 + $0x1e08] sm:$0xff]
  %v7845 = vld [vmem:[%s1 + $0x1e10] sm:$0xf]
  %v7846 = vld [vmem:[%s1 + $0x1e14] sm:$0xff]
  %v7847 = vld [vmem:[%s1 + $0x1e1c] sm:$0xff]
  %v7848 = vld [vmem:[%s1 + $0x1e24] sm:$0xf]
  %v7849 = vld [vmem:[%s1 + $0x1e28] sm:$0xff]
  %v7850 = vld [vmem:[%s1 + $0x1e30] sm:$0xff]
  %v7851 = vld [vmem:[%s1 + $0x1e38] sm:$0xf]
  %v7852 = vld [vmem:[%s1 + $0x1e3c] sm:$0xff]
  %v7853 = vld [vmem:[%s1 + $0x1e44] sm:$0xff]
  %v7854 = vld [vmem:[%s1 + $0x1e4c] sm:$0xf]
  %v7855 = vld [vmem:[%s1 + $0x1e50] sm:$0xff]
  %v7856 = vld [vmem:[%s1 + $0x1e58] sm:$0xff]
  %v7857 = vld [vmem:[%s1 + $0x1e60] sm:$0xf]
  %v7858 = vld [vmem:[%s1 + $0x1e64] sm:$0xff]
  %v7859 = vld [vmem:[%s1 + $0x1e6c] sm:$0xff]
  %v7860 = vld [vmem:[%s1 + $0x1e74] sm:$0xf]
  %v7861 = vld [vmem:[%s1 + $0x1e78] sm:$0xff]
  %v7862 = vld [vmem:[%s1 + $0x1e80] sm:$0xff]
  %v7863 = vld [vmem:[%s1 + $0x1e88] sm:$0xf]
  %v7864 = vld [vmem:[%s1 + $0x1e8c] sm:$0xff]
  %v7865 = vld [vmem:[%s1 + $0x1e94] sm:$0xff]
  %v7866 = vld [vmem:[%s1 + $0x1e9c] sm:$0xf]
  %v7867 = vld [vmem:[%s1 + $0x1ea0] sm:$0xff]
  %v7868 = vld [vmem:[%s1 + $0x1ea8] sm:$0xff]
  %v7869 = vld [vmem:[%s1 + $0x1eb0] sm:$0xf]
  %v7870 = vld [vmem:[%s1 + $0x1eb4] sm:$0xff]
  %v7871 = vld [vmem:[%s1 + $0x1ebc] sm:$0xff]
  %v7872 = vld [vmem:[%s1 + $0x1ec4] sm:$0xf]
  %v7873 = vld [vmem:[%s1 + $0x1ec8] sm:$0xff]
  %v7874 = vld [vmem:[%s1 + $0x1ed0] sm:$0xff]
  %v7875 = vld [vmem:[%s1 + $0x1ed8] sm:$0xf]
  %v7876 = vld [vmem:[%s1 + $0x1edc] sm:$0xff]
  %v7877 = vld [vmem:[%s1 + $0x1ee4] sm:$0xff]
  %v7878 = vld [vmem:[%s1 + $0x1eec] sm:$0xf]
  %v7879 = vld [vmem:[%s1 + $0x1ef0] sm:$0xff]
  %v7880 = vld [vmem:[%s1 + $0x1ef8] sm:$0xff]
  %v7881 = vld [vmem:[%s1 + $0x1f00] sm:$0xf]
  %v7882 = vld [vmem:[%s1 + $0x1f04] sm:$0xff]
  %v7883 = vld [vmem:[%s1 + $0x1f0c] sm:$0xff]
  %v7884 = vld [vmem:[%s1 + $0x1f14] sm:$0xf]
  %v7885 = vld [vmem:[%s1 + $0x1f18] sm:$0xff]
  %v7886 = vld [vmem:[%s1 + $0x1f20] sm:$0xff]
  %v7887 = vld [vmem:[%s1 + $0x1f28] sm:$0xf]
  %v7888 = vld [vmem:[%s1 + $0x1f2c] sm:$0xff]
  %v7889 = vld [vmem:[%s1 + $0x1f34] sm:$0xff]
  %v7890 = vld [vmem:[%s1 + $0x1f3c] sm:$0xf]
  %v7891 = vld [vmem:[%s1 + $0x1f40] sm:$0xff]
  %v7892 = vld [vmem:[%s1 + $0x1f48] sm:$0xff]
  %v7893 = vld [vmem:[%s1 + $0x1f50] sm:$0xf]
  %v7894 = vld [vmem:[%s1 + $0x1f54] sm:$0xff]
  %v7895 = vld [vmem:[%s1 + $0x1f5c] sm:$0xff]
  %v7896 = vld [vmem:[%s1 + $0x1f64] sm:$0xf]
  %v7897 = vld [vmem:[%s1 + $0x1f68] sm:$0xff]
  %v7898 = vld [vmem:[%s1 + $0x1f70] sm:$0xff]
  %v7899 = vld [vmem:[%s1 + $0x1f78] sm:$0xf]
  %v7900 = vld [vmem:[%s1 + $0x1f7c] sm:$0xff]
  %v7901 = vld [vmem:[%s1 + $0x1f84] sm:$0xff]
  %v7902 = vld [vmem:[%s1 + $0x1f8c] sm:$0xf]
  %v7903 = vld [vmem:[%s1 + $0x1f90] sm:$0xff]
  %v7904 = vld [vmem:[%s1 + $0x1f98] sm:$0xff]
  %v7905 = vld [vmem:[%s1 + $0x1fa0] sm:$0xf]
  %v7906 = vld [vmem:[%s1 + $0x1fa4] sm:$0xff]
  %v7907 = vld [vmem:[%s1 + $0x1fac] sm:$0xff]
  %v7908 = vld [vmem:[%s1 + $0x1fb4] sm:$0xf]
  %v7909 = vld [vmem:[%s1 + $0x1fb8] sm:$0xff]
  %v7910 = vld [vmem:[%s1 + $0x1fc0] sm:$0xff]
  %v7911 = vld [vmem:[%s1 + $0x1fc8] sm:$0xf]
  %v7912 = vld [vmem:[%s1 + $0x1fcc] sm:$0xff]
  %v7913 = vld [vmem:[%s1 + $0x1fd4] sm:$0xff]
  %v7914 = vld [vmem:[%s1 + $0x1fdc] sm:$0xf]
  %v7915 = vld [vmem:[%s1 + $0x1fe0] sm:$0xff]
  %v7916 = vld [vmem:[%s1 + $0x1fe8] sm:$0xff]
  %v7917 = vld [vmem:[%s1 + $0x1ff0] sm:$0xf]
  %v7918 = vld [vmem:[%s1 + $0x1ff4] sm:$0xff]
  %v7919 = vld [vmem:[%s1 + $0x1ffc] sm:$0xff]
  %v7920 = vld [vmem:[%s1 + $0x2004] sm:$0xf]
  %v7921 = vld [vmem:[%s1 + $0x2008] sm:$0xff]
  %v7922 = vld [vmem:[%s1 + $0x2010] sm:$0xff]
  %v7923 = vld [vmem:[%s1 + $0x2018] sm:$0xf]
  %v7924 = vld [vmem:[%s1 + $0x201c] sm:$0xff]
  %v7925 = vld [vmem:[%s1 + $0x2024] sm:$0xff]
  %v7926 = vld [vmem:[%s1 + $0x202c] sm:$0xf]
  %v7927 = vld [vmem:[%s1 + $0x2030] sm:$0xff]
  %v7928 = vld [vmem:[%s1 + $0x2038] sm:$0xff]
  %v7929 = vld [vmem:[%s1 + $0x2040] sm:$0xf]
  %v7930 = vld [vmem:[%s1 + $0x2044] sm:$0xff]
  %v7931 = vld [vmem:[%s1 + $0x204c] sm:$0xff]
  %v7932 = vld [vmem:[%s1 + $0x2054] sm:$0xf]
  %v7933 = vld [vmem:[%s1 + $0x2058] sm:$0xff]
  %v7934 = vld [vmem:[%s1 + $0x2060] sm:$0xff]
  %v7935 = vld [vmem:[%s1 + $0x2068] sm:$0xf]
  %v7936 = vld [vmem:[%s1 + $0x206c] sm:$0xff]
  %v7937 = vld [vmem:[%s1 + $0x2074] sm:$0xff]
  %v7938 = vld [vmem:[%s1 + $0x207c] sm:$0xf]
  %v7939 = vld [vmem:[%s1 + $0x2080] sm:$0xff]
  %v7940 = vld [vmem:[%s1 + $0x2088] sm:$0xff]
  %v7941 = vld [vmem:[%s1 + $0x2090] sm:$0xf]
  %v7942 = vld [vmem:[%s1 + $0x2094] sm:$0xff]
  %v7943 = vld [vmem:[%s1 + $0x209c] sm:$0xff]
  %v7944 = vld [vmem:[%s1 + $0x20a4] sm:$0xf]
  %v7945 = vld [vmem:[%s1 + $0x20a8] sm:$0xff]
  %v7946 = vld [vmem:[%s1 + $0x20b0] sm:$0xff]
  %v7947 = vld [vmem:[%s1 + $0x20b8] sm:$0xf]
  %v7948 = vld [vmem:[%s1 + $0x20bc] sm:$0xff]
  %v7949 = vld [vmem:[%s1 + $0x20c4] sm:$0xff]
  %v7950 = vld [vmem:[%s1 + $0x20cc] sm:$0xf]
  %v7951 = vld [vmem:[%s1 + $0x20d0] sm:$0xff]
  %v7952 = vld [vmem:[%s1 + $0x20d8] sm:$0xff]
  %v7953 = vld [vmem:[%s1 + $0x20e0] sm:$0xf]
  %v7954 = vld [vmem:[%s1 + $0x20e4] sm:$0xff]
  %v7955 = vld [vmem:[%s1 + $0x20ec] sm:$0xff]
  %v7956 = vld [vmem:[%s1 + $0x20f4] sm:$0xf]
  %v7957 = vld [vmem:[%s1 + $0x20f8] sm:$0xff]
  %v7958 = vld [vmem:[%s1 + $0x2100] sm:$0xff]
  %v7959 = vld [vmem:[%s1 + $0x2108] sm:$0xf]
  %v7960 = vld [vmem:[%s1 + $0x210c] sm:$0xff]
  %v7961 = vld [vmem:[%s1 + $0x2114] sm:$0xff]
  %v7962 = vld [vmem:[%s1 + $0x211c] sm:$0xf]
  %v7963 = vld [vmem:[%s1 + $0x2120] sm:$0xff]
  %v7964 = vld [vmem:[%s1 + $0x2128] sm:$0xff]
  %v7965 = vld [vmem:[%s1 + $0x2130] sm:$0xf]
  %v7966 = vld [vmem:[%s1 + $0x2134] sm:$0xff]
  %v7967 = vld [vmem:[%s1 + $0x213c] sm:$0xff]
  %v7968 = vld [vmem:[%s1 + $0x2144] sm:$0xf]
  %v7969 = vld [vmem:[%s1 + $0x2148] sm:$0xff]
  %v7970 = vld [vmem:[%s1 + $0x2150] sm:$0xff]
  %v7971 = vld [vmem:[%s1 + $0x2158] sm:$0xf]
  %v7972 = vld [vmem:[%s1 + $0x215c] sm:$0xff]
  %v7973 = vld [vmem:[%s1 + $0x2164] sm:$0xff]
  %v7974 = vld [vmem:[%s1 + $0x216c] sm:$0xf]
  %v7975 = vld [vmem:[%s1 + $0x2170] sm:$0xff]
  %v7976 = vld [vmem:[%s1 + $0x2178] sm:$0xff]
  %v7977 = vld [vmem:[%s1 + $0x2180] sm:$0xf]
  %v7978 = vld [vmem:[%s1 + $0x2184] sm:$0xff]
  %v7979 = vld [vmem:[%s1 + $0x218c] sm:$0xff]
  %v7980 = vld [vmem:[%s1 + $0x2194] sm:$0xf]
  %v7981 = vld [vmem:[%s1 + $0x2198] sm:$0xff]
  %v7982 = vld [vmem:[%s1 + $0x21a0] sm:$0xff]
  %v7983 = vld [vmem:[%s1 + $0x21a8] sm:$0xf]
  %v7984 = vld [vmem:[%s1 + $0x21ac] sm:$0xff]
  %v7985 = vld [vmem:[%s1 + $0x21b4] sm:$0xff]
  %v7986 = vld [vmem:[%s1 + $0x21bc] sm:$0xf]
  %v7987 = vld [vmem:[%s1 + $0x21c0] sm:$0xff]
  %v7988 = vld [vmem:[%s1 + $0x21c8] sm:$0xff]
  %v7989 = vld [vmem:[%s1 + $0x21d0] sm:$0xf]
  %v7990 = vld [vmem:[%s1 + $0x21d4] sm:$0xff]
  %v7991 = vld [vmem:[%s1 + $0x21dc] sm:$0xff]
  %v7992 = vld [vmem:[%s1 + $0x21e4] sm:$0xf]
  %v7993 = vld [vmem:[%s1 + $0x21e8] sm:$0xff]
  %v7994 = vld [vmem:[%s1 + $0x21f0] sm:$0xff]
  %v7995 = vld [vmem:[%s1 + $0x21f8] sm:$0xf]
  %v7996 = vld [vmem:[%s1 + $0x21fc] sm:$0xff]
  %v7997 = vld [vmem:[%s1 + $0x2204] sm:$0xff]
  %v7998 = vld [vmem:[%s1 + $0x220c] sm:$0xf]
  %v7999 = vld [vmem:[%s1 + $0x2210] sm:$0xff]
  %v8000 = vld [vmem:[%s1 + $0x2218] sm:$0xff]
  %v8001 = vld [vmem:[%s1 + $0x2220] sm:$0xf]
  %v8002 = vld [vmem:[%s1 + $0x2224] sm:$0xff]
  %v8003 = vld [vmem:[%s1 + $0x222c] sm:$0xff]
  %v8004 = vld [vmem:[%s1 + $0x2234] sm:$0xf]
  %v8005 = vld [vmem:[%s1 + $0x2238] sm:$0xff]
  %v8006 = vld [vmem:[%s1 + $0x2240] sm:$0xff]
  %v8007 = vld [vmem:[%s1 + $0x2248] sm:$0xf]
  %v8008 = vld [vmem:[%s1 + $0x224c] sm:$0xff]
  %v8009 = vld [vmem:[%s1 + $0x2254] sm:$0xff]
  %v8010 = vld [vmem:[%s1 + $0x225c] sm:$0xf]
  %v8011 = vld [vmem:[%s1 + $0x2260] sm:$0xff]
  %v8012 = vld [vmem:[%s1 + $0x2268] sm:$0xff]
  %v8013 = vld [vmem:[%s1 + $0x2270] sm:$0xf]
  %v8014 = vld [vmem:[%s1 + $0x2274] sm:$0xff]
  %v8015 = vld [vmem:[%s1 + $0x227c] sm:$0xff]
  %v8016 = vld [vmem:[%s1 + $0x2284] sm:$0xf]
  %v8017 = vld [vmem:[%s1 + $0x2288] sm:$0xff]
  %v8018 = vld [vmem:[%s1 + $0x2290] sm:$0xff]
  %v8019 = vld [vmem:[%s1 + $0x2298] sm:$0xf]
  %v8020 = vld [vmem:[%s1 + $0x229c] sm:$0xff]
  %v8021 = vld [vmem:[%s1 + $0x22a4] sm:$0xff]
  %v8022 = vld [vmem:[%s1 + $0x22ac] sm:$0xf]
  %v8023 = vld [vmem:[%s1 + $0x22b0] sm:$0xff]
  %v8024 = vld [vmem:[%s1 + $0x22b8] sm:$0xff]
  %v8025 = vld [vmem:[%s1 + $0x22c0] sm:$0xf]
  %v8026 = vld [vmem:[%s1 + $0x22c4] sm:$0xff]
  %v8027 = vld [vmem:[%s1 + $0x22cc] sm:$0xff]
  %v8028 = vld [vmem:[%s1 + $0x22d4] sm:$0xf]
  %v8029 = vld [vmem:[%s1 + $0x22d8] sm:$0xff]
  %v8030 = vld [vmem:[%s1 + $0x22e0] sm:$0xff]
  %v8031 = vld [vmem:[%s1 + $0x22e8] sm:$0xf]
  %v8032 = vld [vmem:[%s1 + $0x22ec] sm:$0xff]
  %v8033 = vld [vmem:[%s1 + $0x22f4] sm:$0xff]
  %v8034 = vld [vmem:[%s1 + $0x22fc] sm:$0xf]
  %v8227 = vunpack.c.l.b16 %v7843
  %v8228 = vunpack.c.h.b16 %v7843
  %v8229 = vunpack.c.l.b16 %v7844
  %v8230 = vunpack.c.h.b16 %v7844
  %v8231 = vunpack.c.l.b16 %v7845
  %v8232 = vunpack.c.l.b16 %v7846
  %v8233 = vunpack.c.h.b16 %v7846
  %v8234 = vunpack.c.l.b16 %v7847
  %v8235 = vunpack.c.h.b16 %v7847
  %v8236 = vunpack.c.l.b16 %v7848
  %v8237 = vunpack.c.l.b16 %v7849
  %v8238 = vunpack.c.h.b16 %v7849
  %v8239 = vunpack.c.l.b16 %v7850
  %v8240 = vunpack.c.h.b16 %v7850
  %v8241 = vunpack.c.l.b16 %v7851
  %v8242 = vunpack.c.l.b16 %v7852
  %v8243 = vunpack.c.h.b16 %v7852
  %v8244 = vunpack.c.l.b16 %v7853
  %v8245 = vunpack.c.h.b16 %v7853
  %v8246 = vunpack.c.l.b16 %v7854
  %v8247 = vunpack.c.l.b16 %v7855
  %v8248 = vunpack.c.h.b16 %v7855
  %v8249 = vunpack.c.l.b16 %v7856
  %v8250 = vunpack.c.h.b16 %v7856
  %v8251 = vunpack.c.l.b16 %v7857
  %v8252 = vunpack.c.l.b16 %v7858
  %v8253 = vunpack.c.h.b16 %v7858
  %v8254 = vunpack.c.l.b16 %v7859
  %v8255 = vunpack.c.h.b16 %v7859
  %v8256 = vunpack.c.l.b16 %v7860
  %v8257 = vunpack.c.l.b16 %v7861
  %v8258 = vunpack.c.h.b16 %v7861
  %v8259 = vunpack.c.l.b16 %v7862
  %v8260 = vunpack.c.h.b16 %v7862
  %v8261 = vunpack.c.l.b16 %v7863
  %v8262 = vunpack.c.l.b16 %v7864
  %v8263 = vunpack.c.h.b16 %v7864
  %v8264 = vunpack.c.l.b16 %v7865
  %v8265 = vunpack.c.h.b16 %v7865
  %v8266 = vunpack.c.l.b16 %v7866
  %v8267 = vunpack.c.l.b16 %v7867
  %v8268 = vunpack.c.h.b16 %v7867
  %v8269 = vunpack.c.l.b16 %v7868
  %v8270 = vunpack.c.h.b16 %v7868
  %v8271 = vunpack.c.l.b16 %v7869
  %v8272 = vunpack.c.l.b16 %v7870
  %v8273 = vunpack.c.h.b16 %v7870
  %v8274 = vunpack.c.l.b16 %v7871
  %v8275 = vunpack.c.h.b16 %v7871
  %v8276 = vunpack.c.l.b16 %v7872
  %v8277 = vunpack.c.l.b16 %v7873
  %v8278 = vunpack.c.h.b16 %v7873
  %v8279 = vunpack.c.l.b16 %v7874
  %v8280 = vunpack.c.h.b16 %v7874
  %v8281 = vunpack.c.l.b16 %v7875
  %v8282 = vunpack.c.l.b16 %v7876
  %v8283 = vunpack.c.h.b16 %v7876
  %v8284 = vunpack.c.l.b16 %v7877
  %v8285 = vunpack.c.h.b16 %v7877
  %v8286 = vunpack.c.l.b16 %v7878
  %v8287 = vunpack.c.l.b16 %v7879
  %v8288 = vunpack.c.h.b16 %v7879
  %v8289 = vunpack.c.l.b16 %v7880
  %v8290 = vunpack.c.h.b16 %v7880
  %v8291 = vunpack.c.l.b16 %v7881
  %v8292 = vunpack.c.l.b16 %v7882
  %v8293 = vunpack.c.h.b16 %v7882
  %v8294 = vunpack.c.l.b16 %v7883
  %v8295 = vunpack.c.h.b16 %v7883
  %v8296 = vunpack.c.l.b16 %v7884
  %v8297 = vunpack.c.l.b16 %v7885
  %v8298 = vunpack.c.h.b16 %v7885
  %v8299 = vunpack.c.l.b16 %v7886
  %v8300 = vunpack.c.h.b16 %v7886
  %v8301 = vunpack.c.l.b16 %v7887
  %v8302 = vunpack.c.l.b16 %v7888
  %v8303 = vunpack.c.h.b16 %v7888
  %v8304 = vunpack.c.l.b16 %v7889
  %v8305 = vunpack.c.h.b16 %v7889
  %v8306 = vunpack.c.l.b16 %v7890
  %v8307 = vunpack.c.l.b16 %v7891
  %v8308 = vunpack.c.h.b16 %v7891
  %v8309 = vunpack.c.l.b16 %v7892
  %v8310 = vunpack.c.h.b16 %v7892
  %v8311 = vunpack.c.l.b16 %v7893
  %v8312 = vunpack.c.l.b16 %v7894
  %v8313 = vunpack.c.h.b16 %v7894
  %v8314 = vunpack.c.l.b16 %v7895
  %v8315 = vunpack.c.h.b16 %v7895
  %v8316 = vunpack.c.l.b16 %v7896
  %v8317 = vunpack.c.l.b16 %v7897
  %v8318 = vunpack.c.h.b16 %v7897
  %v8319 = vunpack.c.l.b16 %v7898
  %v8320 = vunpack.c.h.b16 %v7898
  %v8321 = vunpack.c.l.b16 %v7899
  %v8322 = vunpack.c.l.b16 %v7900
  %v8323 = vunpack.c.h.b16 %v7900
  %v8324 = vunpack.c.l.b16 %v7901
  %v8325 = vunpack.c.h.b16 %v7901
  %v8326 = vunpack.c.l.b16 %v7902
  %v8327 = vunpack.c.l.b16 %v7903
  %v8328 = vunpack.c.h.b16 %v7903
  %v8329 = vunpack.c.l.b16 %v7904
  %v8330 = vunpack.c.h.b16 %v7904
  %v8331 = vunpack.c.l.b16 %v7905
  %v8332 = vunpack.c.l.b16 %v7906
  %v8333 = vunpack.c.h.b16 %v7906
  %v8334 = vunpack.c.l.b16 %v7907
  %v8335 = vunpack.c.h.b16 %v7907
  %v8336 = vunpack.c.l.b16 %v7908
  %v8337 = vunpack.c.l.b16 %v7909
  %v8338 = vunpack.c.h.b16 %v7909
  %v8339 = vunpack.c.l.b16 %v7910
  %v8340 = vunpack.c.h.b16 %v7910
  %v8341 = vunpack.c.l.b16 %v7911
  %v8342 = vunpack.c.l.b16 %v7912
  %v8343 = vunpack.c.h.b16 %v7912
  %v8344 = vunpack.c.l.b16 %v7913
  %v8345 = vunpack.c.h.b16 %v7913
  %v8346 = vunpack.c.l.b16 %v7914
  %v8347 = vunpack.c.l.b16 %v7915
  %v8348 = vunpack.c.h.b16 %v7915
  %v8349 = vunpack.c.l.b16 %v7916
  %v8350 = vunpack.c.h.b16 %v7916
  %v8351 = vunpack.c.l.b16 %v7917
  %v8352 = vunpack.c.l.b16 %v7918
  %v8353 = vunpack.c.h.b16 %v7918
  %v8354 = vunpack.c.l.b16 %v7919
  %v8355 = vunpack.c.h.b16 %v7919
  %v8356 = vunpack.c.l.b16 %v7920
  %v8357 = vunpack.c.l.b16 %v7921
  %v8358 = vunpack.c.h.b16 %v7921
  %v8359 = vunpack.c.l.b16 %v7922
  %v8360 = vunpack.c.h.b16 %v7922
  %v8361 = vunpack.c.l.b16 %v7923
  %v8362 = vunpack.c.l.b16 %v7924
  %v8363 = vunpack.c.h.b16 %v7924
  %v8364 = vunpack.c.l.b16 %v7925
  %v8365 = vunpack.c.h.b16 %v7925
  %v8366 = vunpack.c.l.b16 %v7926
  %v8367 = vunpack.c.l.b16 %v7927
  %v8368 = vunpack.c.h.b16 %v7927
  %v8369 = vunpack.c.l.b16 %v7928
  %v8370 = vunpack.c.h.b16 %v7928
  %v8371 = vunpack.c.l.b16 %v7929
  %v8372 = vunpack.c.l.b16 %v7930
  %v8373 = vunpack.c.h.b16 %v7930
  %v8374 = vunpack.c.l.b16 %v7931
  %v8375 = vunpack.c.h.b16 %v7931
  %v8376 = vunpack.c.l.b16 %v7932
  %v8377 = vunpack.c.l.b16 %v7933
  %v8378 = vunpack.c.h.b16 %v7933
  %v8379 = vunpack.c.l.b16 %v7934
  %v8380 = vunpack.c.h.b16 %v7934
  %v8381 = vunpack.c.l.b16 %v7935
  %v8382 = vunpack.c.l.b16 %v7936
  %v8383 = vunpack.c.h.b16 %v7936
  %v8384 = vunpack.c.l.b16 %v7937
  %v8385 = vunpack.c.h.b16 %v7937
  %v8386 = vunpack.c.l.b16 %v7938
  %v8387 = vunpack.c.l.b16 %v7939
  %v8388 = vunpack.c.h.b16 %v7939
  %v8389 = vunpack.c.l.b16 %v7940
  %v8390 = vunpack.c.h.b16 %v7940
  %v8391 = vunpack.c.l.b16 %v7941
  %v8392 = vunpack.c.l.b16 %v7942
  %v8393 = vunpack.c.h.b16 %v7942
  %v8394 = vunpack.c.l.b16 %v7943
  %v8395 = vunpack.c.h.b16 %v7943
  %v8396 = vunpack.c.l.b16 %v7944
  %v8397 = vunpack.c.l.b16 %v7945
  %v8398 = vunpack.c.h.b16 %v7945
  %v8399 = vunpack.c.l.b16 %v7946
  %v8400 = vunpack.c.h.b16 %v7946
  %v8401 = vunpack.c.l.b16 %v7947
  %v8402 = vunpack.c.l.b16 %v7948
  %v8403 = vunpack.c.h.b16 %v7948
  %v8404 = vunpack.c.l.b16 %v7949
  %v8405 = vunpack.c.h.b16 %v7949
  %v8406 = vunpack.c.l.b16 %v7950
  %v8407 = vunpack.c.l.b16 %v7951
  %v8408 = vunpack.c.h.b16 %v7951
  %v8409 = vunpack.c.l.b16 %v7952
  %v8410 = vunpack.c.h.b16 %v7952
  %v8411 = vunpack.c.l.b16 %v7953
  %v8412 = vunpack.c.l.b16 %v7954
  %v8413 = vunpack.c.h.b16 %v7954
  %v8414 = vunpack.c.l.b16 %v7955
  %v8415 = vunpack.c.h.b16 %v7955
  %v8416 = vunpack.c.l.b16 %v7956
  %v8417 = vunpack.c.l.b16 %v7957
  %v8418 = vunpack.c.h.b16 %v7957
  %v8419 = vunpack.c.l.b16 %v7958
  %v8420 = vunpack.c.h.b16 %v7958
  %v8421 = vunpack.c.l.b16 %v7959
  %v8422 = vunpack.c.l.b16 %v7960
  %v8423 = vunpack.c.h.b16 %v7960
  %v8424 = vunpack.c.l.b16 %v7961
  %v8425 = vunpack.c.h.b16 %v7961
  %v8426 = vunpack.c.l.b16 %v7962
  %v8427 = vunpack.c.l.b16 %v7963
  %v8428 = vunpack.c.h.b16 %v7963
  %v8429 = vunpack.c.l.b16 %v7964
  %v8430 = vunpack.c.h.b16 %v7964
  %v8431 = vunpack.c.l.b16 %v7965
  %v8432 = vunpack.c.l.b16 %v7966
  %v8433 = vunpack.c.h.b16 %v7966
  %v8434 = vunpack.c.l.b16 %v7967
  %v8435 = vunpack.c.h.b16 %v7967
  %v8436 = vunpack.c.l.b16 %v7968
  %v8437 = vunpack.c.l.b16 %v7969
  %v8438 = vunpack.c.h.b16 %v7969
  %v8439 = vunpack.c.l.b16 %v7970
  %v8440 = vunpack.c.h.b16 %v7970
  %v8441 = vunpack.c.l.b16 %v7971
  %v8442 = vunpack.c.l.b16 %v7972
  %v8443 = vunpack.c.h.b16 %v7972
  %v8444 = vunpack.c.l.b16 %v7973
  %v8445 = vunpack.c.h.b16 %v7973
  %v8446 = vunpack.c.l.b16 %v7974
  %v8447 = vunpack.c.l.b16 %v7975
  %v8448 = vunpack.c.h.b16 %v7975
  %v8449 = vunpack.c.l.b16 %v7976
  %v8450 = vunpack.c.h.b16 %v7976
  %v8451 = vunpack.c.l.b16 %v7977
  %v8452 = vunpack.c.l.b16 %v7978
  %v8453 = vunpack.c.h.b16 %v7978
  %v8454 = vunpack.c.l.b16 %v7979
  %v8455 = vunpack.c.h.b16 %v7979
  %v8456 = vunpack.c.l.b16 %v7980
  %v8457 = vunpack.c.l.b16 %v7981
  %v8458 = vunpack.c.h.b16 %v7981
  %v8459 = vunpack.c.l.b16 %v7982
  %v8460 = vunpack.c.h.b16 %v7982
  %v8461 = vunpack.c.l.b16 %v7983
  %v8462 = vunpack.c.l.b16 %v7984
  %v8463 = vunpack.c.h.b16 %v7984
  %v8464 = vunpack.c.l.b16 %v7985
  %v8465 = vunpack.c.h.b16 %v7985
  %v8466 = vunpack.c.l.b16 %v7986
  %v8467 = vunpack.c.l.b16 %v7987
  %v8468 = vunpack.c.h.b16 %v7987
  %v8469 = vunpack.c.l.b16 %v7988
  %v8470 = vunpack.c.h.b16 %v7988
  %v8471 = vunpack.c.l.b16 %v7989
  %v8472 = vunpack.c.l.b16 %v7990
  %v8473 = vunpack.c.h.b16 %v7990
  %v8474 = vunpack.c.l.b16 %v7991
  %v8475 = vunpack.c.h.b16 %v7991
  %v8476 = vunpack.c.l.b16 %v7992
  %v8477 = vunpack.c.l.b16 %v7993
  %v8478 = vunpack.c.h.b16 %v7993
  %v8479 = vunpack.c.l.b16 %v7994
  %v8480 = vunpack.c.h.b16 %v7994
  %v8481 = vunpack.c.l.b16 %v7995
  %v8482 = vunpack.c.l.b16 %v7996
  %v8483 = vunpack.c.h.b16 %v7996
  %v8484 = vunpack.c.l.b16 %v7997
  %v8485 = vunpack.c.h.b16 %v7997
  %v8486 = vunpack.c.l.b16 %v7998
  %v8487 = vunpack.c.l.b16 %v7999
  %v8488 = vunpack.c.h.b16 %v7999
  %v8489 = vunpack.c.l.b16 %v8000
  %v8490 = vunpack.c.h.b16 %v8000
  %v8491 = vunpack.c.l.b16 %v8001
  %v8492 = vunpack.c.l.b16 %v8002
  %v8493 = vunpack.c.h.b16 %v8002
  %v8494 = vunpack.c.l.b16 %v8003
  %v8495 = vunpack.c.h.b16 %v8003
  %v8496 = vunpack.c.l.b16 %v8004
  %v8497 = vunpack.c.l.b16 %v8005
  %v8498 = vunpack.c.h.b16 %v8005
  %v8499 = vunpack.c.l.b16 %v8006
  %v8500 = vunpack.c.h.b16 %v8006
  %v8501 = vunpack.c.l.b16 %v8007
  %v8502 = vunpack.c.l.b16 %v8008
  %v8503 = vunpack.c.h.b16 %v8008
  %v8504 = vunpack.c.l.b16 %v8009
  %v8505 = vunpack.c.h.b16 %v8009
  %v8506 = vunpack.c.l.b16 %v8010
  %v8507 = vunpack.c.l.b16 %v8011
  %v8508 = vunpack.c.h.b16 %v8011
  %v8509 = vunpack.c.l.b16 %v8012
  %v8510 = vunpack.c.h.b16 %v8012
  %v8511 = vunpack.c.l.b16 %v8013
  %v8512 = vunpack.c.l.b16 %v8014
  %v8513 = vunpack.c.h.b16 %v8014
  %v8514 = vunpack.c.l.b16 %v8015
  %v8515 = vunpack.c.h.b16 %v8015
  %v8516 = vunpack.c.l.b16 %v8016
  %v8517 = vunpack.c.l.b16 %v8017
  %v8518 = vunpack.c.h.b16 %v8017
  %v8519 = vunpack.c.l.b16 %v8018
  %v8520 = vunpack.c.h.b16 %v8018
  %v8521 = vunpack.c.l.b16 %v8019
  %v8522 = vunpack.c.l.b16 %v8020
  %v8523 = vunpack.c.h.b16 %v8020
  %v8524 = vunpack.c.l.b16 %v8021
  %v8525 = vunpack.c.h.b16 %v8021
  %v8526 = vunpack.c.l.b16 %v8022
  %v8527 = vunpack.c.l.b16 %v8023
  %v8528 = vunpack.c.h.b16 %v8023
  %v8529 = vunpack.c.l.b16 %v8024
  %v8530 = vunpack.c.h.b16 %v8024
  %v8531 = vunpack.c.l.b16 %v8025
  %v8532 = vunpack.c.l.b16 %v8026
  %v8533 = vunpack.c.h.b16 %v8026
  %v8534 = vunpack.c.l.b16 %v8027
  %v8535 = vunpack.c.h.b16 %v8027
  %v8536 = vunpack.c.l.b16 %v8028
  %v8537 = vunpack.c.l.b16 %v8029
  %v8538 = vunpack.c.h.b16 %v8029
  %v8539 = vunpack.c.l.b16 %v8030
  %v8540 = vunpack.c.h.b16 %v8030
  %v8541 = vunpack.c.l.b16 %v8031
  %v8542 = vunpack.c.l.b16 %v8032
  %v8543 = vunpack.c.h.b16 %v8032
  %v8544 = vunpack.c.l.b16 %v8033
  %v8545 = vunpack.c.h.b16 %v8033
  %v8546 = vunpack.c.l.b16 %v8034
  %v8547 = vpack.c.b16 %v8232, %v8227
  %v8548 = vpack.c.b16 %v8233, %v8228
  %v8549 = vpack.c.b16 %v8234, %v8229
  %v8550 = vpack.c.b16 %v8235, %v8230
  %v8551 = vpack.c.b16 %v8236, %v8231
  %v8552 = vpack.c.b16 %v8242, %v8237
  %v8553 = vpack.c.b16 %v8243, %v8238
  %v8554 = vpack.c.b16 %v8244, %v8239
  %v8555 = vpack.c.b16 %v8245, %v8240
  %v8556 = vpack.c.b16 %v8246, %v8241
  %v8557 = vpack.c.b16 %v8252, %v8247
  %v8558 = vpack.c.b16 %v8253, %v8248
  %v8559 = vpack.c.b16 %v8254, %v8249
  %v8560 = vpack.c.b16 %v8255, %v8250
  %v8561 = vpack.c.b16 %v8256, %v8251
  %v8562 = vpack.c.b16 %v8262, %v8257
  %v8563 = vpack.c.b16 %v8263, %v8258
  %v8564 = vpack.c.b16 %v8264, %v8259
  %v8565 = vpack.c.b16 %v8265, %v8260
  %v8566 = vpack.c.b16 %v8266, %v8261
  %v8567 = vpack.c.b16 %v8272, %v8267
  %v8568 = vpack.c.b16 %v8273, %v8268
  %v8569 = vpack.c.b16 %v8274, %v8269
  %v8570 = vpack.c.b16 %v8275, %v8270
  %v8571 = vpack.c.b16 %v8276, %v8271
  %v8572 = vpack.c.b16 %v8282, %v8277
  %v8573 = vpack.c.b16 %v8283, %v8278
  %v8574 = vpack.c.b16 %v8284, %v8279
  %v8575 = vpack.c.b16 %v8285, %v8280
  %v8576 = vpack.c.b16 %v8286, %v8281
  %v8577 = vpack.c.b16 %v8292, %v8287
  %v8578 = vpack.c.b16 %v8293, %v8288
  %v8579 = vpack.c.b16 %v8294, %v8289
  %v8580 = vpack.c.b16 %v8295, %v8290
  %v8581 = vpack.c.b16 %v8296, %v8291
  %v8582 = vpack.c.b16 %v8302, %v8297
  %v8583 = vpack.c.b16 %v8303, %v8298
  %v8584 = vpack.c.b16 %v8304, %v8299
  %v8585 = vpack.c.b16 %v8305, %v8300
  %v8586 = vpack.c.b16 %v8306, %v8301
  %v8587 = vpack.c.b16 %v8312, %v8307
  %v8588 = vpack.c.b16 %v8313, %v8308
  %v8589 = vpack.c.b16 %v8314, %v8309
  %v8590 = vpack.c.b16 %v8315, %v8310
  %v8591 = vpack.c.b16 %v8316, %v8311
  %v8592 = vpack.c.b16 %v8322, %v8317
  %v8593 = vpack.c.b16 %v8323, %v8318
  %v8594 = vpack.c.b16 %v8324, %v8319
  %v8595 = vpack.c.b16 %v8325, %v8320
  %v8596 = vpack.c.b16 %v8326, %v8321
  %v8597 = vpack.c.b16 %v8332, %v8327
  %v8598 = vpack.c.b16 %v8333, %v8328
  %v8599 = vpack.c.b16 %v8334, %v8329
  %v8600 = vpack.c.b16 %v8335, %v8330
  %v8601 = vpack.c.b16 %v8336, %v8331
  %v8602 = vpack.c.b16 %v8342, %v8337
  %v8603 = vpack.c.b16 %v8343, %v8338
  %v8604 = vpack.c.b16 %v8344, %v8339
  %v8605 = vpack.c.b16 %v8345, %v8340
  %v8606 = vpack.c.b16 %v8346, %v8341
  %v8607 = vpack.c.b16 %v8352, %v8347
  %v8608 = vpack.c.b16 %v8353, %v8348
  %v8609 = vpack.c.b16 %v8354, %v8349
  %v8610 = vpack.c.b16 %v8355, %v8350
  %v8611 = vpack.c.b16 %v8356, %v8351
  %v8612 = vpack.c.b16 %v8362, %v8357
  %v8613 = vpack.c.b16 %v8363, %v8358
  %v8614 = vpack.c.b16 %v8364, %v8359
  %v8615 = vpack.c.b16 %v8365, %v8360
  %v8616 = vpack.c.b16 %v8366, %v8361
  %v8617 = vpack.c.b16 %v8372, %v8367
  %v8618 = vpack.c.b16 %v8373, %v8368
  %v8619 = vpack.c.b16 %v8374, %v8369
  %v8620 = vpack.c.b16 %v8375, %v8370
  %v8621 = vpack.c.b16 %v8376, %v8371
  %v8622 = vpack.c.b16 %v8382, %v8377
  %v8623 = vpack.c.b16 %v8383, %v8378
  %v8624 = vpack.c.b16 %v8384, %v8379
  %v8625 = vpack.c.b16 %v8385, %v8380
  %v8626 = vpack.c.b16 %v8386, %v8381
  %v8627 = vpack.c.b16 %v8392, %v8387
  %v8628 = vpack.c.b16 %v8393, %v8388
  %v8629 = vpack.c.b16 %v8394, %v8389
  %v8630 = vpack.c.b16 %v8395, %v8390
  %v8631 = vpack.c.b16 %v8396, %v8391
  %v8632 = vpack.c.b16 %v8402, %v8397
  %v8633 = vpack.c.b16 %v8403, %v8398
  %v8634 = vpack.c.b16 %v8404, %v8399
  %v8635 = vpack.c.b16 %v8405, %v8400
  %v8636 = vpack.c.b16 %v8406, %v8401
  %v8637 = vpack.c.b16 %v8412, %v8407
  %v8638 = vpack.c.b16 %v8413, %v8408
  %v8639 = vpack.c.b16 %v8414, %v8409
  %v8640 = vpack.c.b16 %v8415, %v8410
  %v8641 = vpack.c.b16 %v8416, %v8411
  %v8642 = vpack.c.b16 %v8422, %v8417
  %v8643 = vpack.c.b16 %v8423, %v8418
  %v8644 = vpack.c.b16 %v8424, %v8419
  %v8645 = vpack.c.b16 %v8425, %v8420
  %v8646 = vpack.c.b16 %v8426, %v8421
  %v8647 = vpack.c.b16 %v8432, %v8427
  %v8648 = vpack.c.b16 %v8433, %v8428
  %v8649 = vpack.c.b16 %v8434, %v8429
  %v8650 = vpack.c.b16 %v8435, %v8430
  %v8651 = vpack.c.b16 %v8436, %v8431
  %v8652 = vpack.c.b16 %v8442, %v8437
  %v8653 = vpack.c.b16 %v8443, %v8438
  %v8654 = vpack.c.b16 %v8444, %v8439
  %v8655 = vpack.c.b16 %v8445, %v8440
  %v8656 = vpack.c.b16 %v8446, %v8441
  %v8657 = vpack.c.b16 %v8452, %v8447
  %v8658 = vpack.c.b16 %v8453, %v8448
  %v8659 = vpack.c.b16 %v8454, %v8449
  %v8660 = vpack.c.b16 %v8455, %v8450
  %v8661 = vpack.c.b16 %v8456, %v8451
  %v8662 = vpack.c.b16 %v8462, %v8457
  %v8663 = vpack.c.b16 %v8463, %v8458
  %v8664 = vpack.c.b16 %v8464, %v8459
  %v8665 = vpack.c.b16 %v8465, %v8460
  %v8666 = vpack.c.b16 %v8466, %v8461
  %v8667 = vpack.c.b16 %v8472, %v8467
  %v8668 = vpack.c.b16 %v8473, %v8468
  %v8669 = vpack.c.b16 %v8474, %v8469
  %v8670 = vpack.c.b16 %v8475, %v8470
  %v8671 = vpack.c.b16 %v8476, %v8471
  %v8672 = vpack.c.b16 %v8482, %v8477
  %v8673 = vpack.c.b16 %v8483, %v8478
  %v8674 = vpack.c.b16 %v8484, %v8479
  %v8675 = vpack.c.b16 %v8485, %v8480
  %v8676 = vpack.c.b16 %v8486, %v8481
  %v8677 = vpack.c.b16 %v8492, %v8487
  %v8678 = vpack.c.b16 %v8493, %v8488
  %v8679 = vpack.c.b16 %v8494, %v8489
  %v8680 = vpack.c.b16 %v8495, %v8490
  %v8681 = vpack.c.b16 %v8496, %v8491
  %v8682 = vpack.c.b16 %v8502, %v8497
  %v8683 = vpack.c.b16 %v8503, %v8498
  %v8684 = vpack.c.b16 %v8504, %v8499
  %v8685 = vpack.c.b16 %v8505, %v8500
  %v8686 = vpack.c.b16 %v8506, %v8501
  %v8687 = vpack.c.b16 %v8512, %v8507
  %v8688 = vpack.c.b16 %v8513, %v8508
  %v8689 = vpack.c.b16 %v8514, %v8509
  %v8690 = vpack.c.b16 %v8515, %v8510
  %v8691 = vpack.c.b16 %v8516, %v8511
  %v8692 = vpack.c.b16 %v8522, %v8517
  %v8693 = vpack.c.b16 %v8523, %v8518
  %v8694 = vpack.c.b16 %v8524, %v8519
  %v8695 = vpack.c.b16 %v8525, %v8520
  %v8696 = vpack.c.b16 %v8526, %v8521
  %v8697 = vpack.c.b16 %v8532, %v8527
  %v8698 = vpack.c.b16 %v8533, %v8528
  %v8699 = vpack.c.b16 %v8534, %v8529
  %v8700 = vpack.c.b16 %v8535, %v8530
  %v8701 = vpack.c.b16 %v8536, %v8531
  %v8702 = vpack.c.b16 %v8542, %v8537
  %v8703 = vpack.c.b16 %v8543, %v8538
  %v8704 = vpack.c.b16 %v8544, %v8539
  %v8705 = vpack.c.b16 %v8545, %v8540
  %v8706 = vpack.c.b16 %v8546, %v8541
  %8867 = vmatpush.bf16.msra.mxu0 %v8582
  %8868 = vmatpush.bf16.msra.mxu0 %v8577
  %8869 = vmatpush.bf16.msra.mxu0 %v8572
  %8870 = vmatpush.bf16.msra.mxu0 %v8567
  %8871 = vmatpush.bf16.msra.mxu0 %v8562
  %8872 = vmatpush.bf16.msra.mxu0 %v8557
  %8873 = vmatpush.bf16.msra.mxu0 %v8552
  %8874 = vmatpush.bf16.msra.mxu0 %v8547
  %8875 = vmatmul.bf16.gmra.mxu0 %v7839
  %v8876 = vpop.f32.mrf.mxu0
  %v8877 = vadd.f32 0.0, %v8876
  %v8878 = vpop.f32.mrf.mxu0
  %8879 = vdwg.mxu0
  %8880 = vmatpush.bf16.msra.mxu0 %v8622
  %8881 = vmatpush.bf16.msra.mxu0 %v8617
  %8882 = vmatpush.bf16.msra.mxu0 %v8612
  %8883 = vmatpush.bf16.msra.mxu0 %v8607
  %8884 = vmatpush.bf16.msra.mxu0 %v8602
  %8885 = vmatpush.bf16.msra.mxu0 %v8597
  %8886 = vmatpush.bf16.msra.mxu0 %v8592
  %8887 = vmatpush.bf16.msra.mxu0 %v8587
  %8888 = vmatmul.bf16.gmra.mxu0 %v7840
  %v8889 = vpop.f32.mrf.mxu0
  %v8890 = vadd.f32 %v8877, %v8889
  %v8891 = vpop.f32.mrf.mxu0
  %8892 = vdwg.mxu0
  %8893 = vmatpush.bf16.msra.mxu0 %v8662
  %8894 = vmatpush.bf16.msra.mxu0 %v8657
  %8895 = vmatpush.bf16.msra.mxu0 %v8652
  %8896 = vmatpush.bf16.msra.mxu0 %v8647
  %8897 = vmatpush.bf16.msra.mxu0 %v8642
  %8898 = vmatpush.bf16.msra.mxu0 %v8637
  %8899 = vmatpush.bf16.msra.mxu0 %v8632
  %8900 = vmatpush.bf16.msra.mxu0 %v8627
  %8901 = vmatmul.bf16.gmra.mxu0 %v7841
  %v8902 = vpop.f32.mrf.mxu0
  %v8903 = vadd.f32 %v8890, %v8902
  %v8904 = vpop.f32.mrf.mxu0
  %8905 = vdwg.mxu0
  %8906 = vmatpush.bf16.msra.mxu0 %v8702
  %8907 = vmatpush.bf16.msra.mxu0 %v8697
  %8908 = vmatpush.bf16.msra.mxu0 %v8692
  %8909 = vmatpush.bf16.msra.mxu0 %v8687
  %8910 = vmatpush.bf16.msra.mxu0 %v8682
  %8911 = vmatpush.bf16.msra.mxu0 %v8677
  %8912 = vmatpush.bf16.msra.mxu0 %v8672
  %8913 = vmatpush.bf16.msra.mxu0 %v8667
  %8914 = vmatmul.bf16.gmra.mxu0 %v7842
  %v8915 = vpop.f32.mrf.mxu0
  %v8916 = vadd.f32 %v8903, %v8915
  %v8917 = vpop.f32.mrf.mxu0
  %8918 = vdwg.mxu0
  %8919 = vmatpush.bf16.msra.mxu0 %v8583
  %8920 = vmatpush.bf16.msra.mxu0 %v8578
  %8921 = vmatpush.bf16.msra.mxu0 %v8573
  %8922 = vmatpush.bf16.msra.mxu0 %v8568
  %8923 = vmatpush.bf16.msra.mxu0 %v8563
  %8924 = vmatpush.bf16.msra.mxu0 %v8558
  %8925 = vmatpush.bf16.msra.mxu0 %v8553
  %8926 = vmatpush.bf16.msra.mxu0 %v8548
  %8927 = vmatmul.bf16.gmra.mxu0 %v7839
  %v8928 = vpop.f32.mrf.mxu0
  %v8929 = vadd.f32 0.0, %v8928
  %v8930 = vpop.f32.mrf.mxu0
  %8931 = vdwg.mxu0
  %8932 = vmatpush.bf16.msra.mxu0 %v8623
  %8933 = vmatpush.bf16.msra.mxu0 %v8618
  %8934 = vmatpush.bf16.msra.mxu0 %v8613
  %8935 = vmatpush.bf16.msra.mxu0 %v8608
  %8936 = vmatpush.bf16.msra.mxu0 %v8603
  %8937 = vmatpush.bf16.msra.mxu0 %v8598
  %8938 = vmatpush.bf16.msra.mxu0 %v8593
  %8939 = vmatpush.bf16.msra.mxu0 %v8588
  %8940 = vmatmul.bf16.gmra.mxu0 %v7840
  %v8941 = vpop.f32.mrf.mxu0
  %v8942 = vadd.f32 %v8929, %v8941
  %v8943 = vpop.f32.mrf.mxu0
  %8944 = vdwg.mxu0
  %8945 = vmatpush.bf16.msra.mxu0 %v8663
  %8946 = vmatpush.bf16.msra.mxu0 %v8658
  %8947 = vmatpush.bf16.msra.mxu0 %v8653
  %8948 = vmatpush.bf16.msra.mxu0 %v8648
  %8949 = vmatpush.bf16.msra.mxu0 %v8643
  %8950 = vmatpush.bf16.msra.mxu0 %v8638
  %8951 = vmatpush.bf16.msra.mxu0 %v8633
  %8952 = vmatpush.bf16.msra.mxu0 %v8628
  %8953 = vmatmul.bf16.gmra.mxu0 %v7841
  %v8954 = vpop.f32.mrf.mxu0
  %v8955 = vadd.f32 %v8942, %v8954
  %v8956 = vpop.f32.mrf.mxu0
  %8957 = vdwg.mxu0
  %8958 = vmatpush.bf16.msra.mxu0 %v8703
  %8959 = vmatpush.bf16.msra.mxu0 %v8698
  %8960 = vmatpush.bf16.msra.mxu0 %v8693
  %8961 = vmatpush.bf16.msra.mxu0 %v8688
  %8962 = vmatpush.bf16.msra.mxu0 %v8683
  %8963 = vmatpush.bf16.msra.mxu0 %v8678
  %8964 = vmatpush.bf16.msra.mxu0 %v8673
  %8965 = vmatpush.bf16.msra.mxu0 %v8668
  %8966 = vmatmul.bf16.gmra.mxu0 %v7842
  %v8967 = vpop.f32.mrf.mxu0
  %v8968 = vadd.f32 %v8955, %v8967
  %v8969 = vpop.f32.mrf.mxu0
  %8970 = vdwg.mxu0
  %8971 = vmatpush.bf16.msra.mxu0 %v8584
  %8972 = vmatpush.bf16.msra.mxu0 %v8579
  %8973 = vmatpush.bf16.msra.mxu0 %v8574
  %8974 = vmatpush.bf16.msra.mxu0 %v8569
  %8975 = vmatpush.bf16.msra.mxu0 %v8564
  %8976 = vmatpush.bf16.msra.mxu0 %v8559
  %8977 = vmatpush.bf16.msra.mxu0 %v8554
  %8978 = vmatpush.bf16.msra.mxu0 %v8549
  %8979 = vmatmul.bf16.gmra.mxu0 %v7839
  %v8980 = vpop.f32.mrf.mxu0
  %v8981 = vadd.f32 0.0, %v8980
  %v8982 = vpop.f32.mrf.mxu0
  %8983 = vdwg.mxu0
  %8984 = vmatpush.bf16.msra.mxu0 %v8624
  %8985 = vmatpush.bf16.msra.mxu0 %v8619
  %8986 = vmatpush.bf16.msra.mxu0 %v8614
  %8987 = vmatpush.bf16.msra.mxu0 %v8609
  %8988 = vmatpush.bf16.msra.mxu0 %v8604
  %8989 = vmatpush.bf16.msra.mxu0 %v8599
  %8990 = vmatpush.bf16.msra.mxu0 %v8594
  %8991 = vmatpush.bf16.msra.mxu0 %v8589
  %8992 = vmatmul.bf16.gmra.mxu0 %v7840
  %v8993 = vpop.f32.mrf.mxu0
  %v8994 = vadd.f32 %v8981, %v8993
  %v8995 = vpop.f32.mrf.mxu0
  %8996 = vdwg.mxu0
  %8997 = vmatpush.bf16.msra.mxu0 %v8664
  %8998 = vmatpush.bf16.msra.mxu0 %v8659
  %8999 = vmatpush.bf16.msra.mxu0 %v8654
  %9000 = vmatpush.bf16.msra.mxu0 %v8649
  %9001 = vmatpush.bf16.msra.mxu0 %v8644
  %9002 = vmatpush.bf16.msra.mxu0 %v8639
  %9003 = vmatpush.bf16.msra.mxu0 %v8634
  %9004 = vmatpush.bf16.msra.mxu0 %v8629
  %9005 = vmatmul.bf16.gmra.mxu0 %v7841
  %v9006 = vpop.f32.mrf.mxu0
  %v9007 = vadd.f32 %v8994, %v9006
  %v9008 = vpop.f32.mrf.mxu0
  %9009 = vdwg.mxu0
  %9010 = vmatpush.bf16.msra.mxu0 %v8704
  %9011 = vmatpush.bf16.msra.mxu0 %v8699
  %9012 = vmatpush.bf16.msra.mxu0 %v8694
  %9013 = vmatpush.bf16.msra.mxu0 %v8689
  %9014 = vmatpush.bf16.msra.mxu0 %v8684
  %9015 = vmatpush.bf16.msra.mxu0 %v8679
  %9016 = vmatpush.bf16.msra.mxu0 %v8674
  %9017 = vmatpush.bf16.msra.mxu0 %v8669
  %9018 = vmatmul.bf16.gmra.mxu0 %v7842
  %v9019 = vpop.f32.mrf.mxu0
  %v9020 = vadd.f32 %v9007, %v9019
  %v9021 = vpop.f32.mrf.mxu0
  %9022 = vdwg.mxu0
  %9023 = vmatpush.bf16.msra.mxu0 %v8585
  %9024 = vmatpush.bf16.msra.mxu0 %v8580
  %9025 = vmatpush.bf16.msra.mxu0 %v8575
  %9026 = vmatpush.bf16.msra.mxu0 %v8570
  %9027 = vmatpush.bf16.msra.mxu0 %v8565
  %9028 = vmatpush.bf16.msra.mxu0 %v8560
  %9029 = vmatpush.bf16.msra.mxu0 %v8555
  %9030 = vmatpush.bf16.msra.mxu0 %v8550
  %9031 = vmatmul.bf16.gmra.mxu0 %v7839
  %v9032 = vpop.f32.mrf.mxu0
  %v9033 = vadd.f32 0.0, %v9032
  %v9034 = vpop.f32.mrf.mxu0
  %9035 = vdwg.mxu0
  %9036 = vmatpush.bf16.msra.mxu0 %v8625
  %9037 = vmatpush.bf16.msra.mxu0 %v8620
  %9038 = vmatpush.bf16.msra.mxu0 %v8615
  %9039 = vmatpush.bf16.msra.mxu0 %v8610
  %9040 = vmatpush.bf16.msra.mxu0 %v8605
  %9041 = vmatpush.bf16.msra.mxu0 %v8600
  %9042 = vmatpush.bf16.msra.mxu0 %v8595
  %9043 = vmatpush.bf16.msra.mxu0 %v8590
  %9044 = vmatmul.bf16.gmra.mxu0 %v7840
  %v9045 = vpop.f32.mrf.mxu0
  %v9046 = vadd.f32 %v9033, %v9045
  %v9047 = vpop.f32.mrf.mxu0
  %9048 = vdwg.mxu0
  %9049 = vmatpush.bf16.msra.mxu0 %v8665
  %9050 = vmatpush.bf16.msra.mxu0 %v8660
  %9051 = vmatpush.bf16.msra.mxu0 %v8655
  %9052 = vmatpush.bf16.msra.mxu0 %v8650
  %9053 = vmatpush.bf16.msra.mxu0 %v8645
  %9054 = vmatpush.bf16.msra.mxu0 %v8640
  %9055 = vmatpush.bf16.msra.mxu0 %v8635
  %9056 = vmatpush.bf16.msra.mxu0 %v8630
  %9057 = vmatmul.bf16.gmra.mxu0 %v7841
  %v9058 = vpop.f32.mrf.mxu0
  %v9059 = vadd.f32 %v9046, %v9058
  %v9060 = vpop.f32.mrf.mxu0
  %9061 = vdwg.mxu0
  %9062 = vmatpush.bf16.msra.mxu0 %v8705
  %9063 = vmatpush.bf16.msra.mxu0 %v8700
  %9064 = vmatpush.bf16.msra.mxu0 %v8695
  %9065 = vmatpush.bf16.msra.mxu0 %v8690
  %9066 = vmatpush.bf16.msra.mxu0 %v8685
  %9067 = vmatpush.bf16.msra.mxu0 %v8680
  %9068 = vmatpush.bf16.msra.mxu0 %v8675
  %9069 = vmatpush.bf16.msra.mxu0 %v8670
  %9070 = vmatmul.bf16.gmra.mxu0 %v7842
  %v9071 = vpop.f32.mrf.mxu0
  %v9072 = vadd.f32 %v9059, %v9071
  %v9073 = vpop.f32.mrf.mxu0
  %9074 = vdwg.mxu0
  %9075 = vmatpush.bf16.msra.mxu0 %v8586
  %9076 = vmatpush.bf16.msra.mxu0 %v8581
  %9077 = vmatpush.bf16.msra.mxu0 %v8576
  %9078 = vmatpush.bf16.msra.mxu0 %v8571
  %9079 = vmatpush.bf16.msra.mxu0 %v8566
  %9080 = vmatpush.bf16.msra.mxu0 %v8561
  %9081 = vmatpush.bf16.msra.mxu0 %v8556
  %9082 = vmatpush.bf16.msra.mxu0 %v8551
  %9083 = vmatmul.bf16.gmra.mxu0 %v7839
  %v9084 = vpop.f32.mrf.mxu0
  %v9085 = vadd.f32 0.0, %v9084
  %v9086 = vpop.f32.mrf.mxu0
  %9087 = vdwg.mxu0
  %9088 = vmatpush.bf16.msra.mxu0 %v8626
  %9089 = vmatpush.bf16.msra.mxu0 %v8621
  %9090 = vmatpush.bf16.msra.mxu0 %v8616
  %9091 = vmatpush.bf16.msra.mxu0 %v8611
  %9092 = vmatpush.bf16.msra.mxu0 %v8606
  %9093 = vmatpush.bf16.msra.mxu0 %v8601
  %9094 = vmatpush.bf16.msra.mxu0 %v8596
  %9095 = vmatpush.bf16.msra.mxu0 %v8591
  %9096 = vmatmul.bf16.gmra.mxu0 %v7840
  %v9097 = vpop.f32.mrf.mxu0
  %v9098 = vadd.f32 %v9085, %v9097
  %v9099 = vpop.f32.mrf.mxu0
  %9100 = vdwg.mxu0
  %9101 = vmatpush.bf16.msra.mxu0 %v8666
  %9102 = vmatpush.bf16.msra.mxu0 %v8661
  %9103 = vmatpush.bf16.msra.mxu0 %v8656
  %9104 = vmatpush.bf16.msra.mxu0 %v8651
  %9105 = vmatpush.bf16.msra.mxu0 %v8646
  %9106 = vmatpush.bf16.msra.mxu0 %v8641
  %9107 = vmatpush.bf16.msra.mxu0 %v8636
  %9108 = vmatpush.bf16.msra.mxu0 %v8631
  %9109 = vmatmul.bf16.gmra.mxu0 %v7841
  %v9110 = vpop.f32.mrf.mxu0
  %v9111 = vadd.f32 %v9098, %v9110
  %v9112 = vpop.f32.mrf.mxu0
  %9113 = vdwg.mxu0
  %9114 = vmatpush.bf16.msra.mxu0 %v8706
  %9115 = vmatpush.bf16.msra.mxu0 %v8701
  %9116 = vmatpush.bf16.msra.mxu0 %v8696
  %9117 = vmatpush.bf16.msra.mxu0 %v8691
  %9118 = vmatpush.bf16.msra.mxu0 %v8686
  %9119 = vmatpush.bf16.msra.mxu0 %v8681
  %9120 = vmatpush.bf16.msra.mxu0 %v8676
  %9121 = vmatpush.bf16.msra.mxu0 %v8671
  %9122 = vmatmul.bf16.gmra.mxu0 %v7842
  %v9123 = vpop.f32.mrf.mxu0
  %v9124 = vadd.f32 %v9111, %v9123
  %v9125 = vpop.f32.mrf.mxu0
  %9126 = vdwg.mxu0
  %v9127 = vadd.f32 %v7834, %v8916
  %v9128 = vadd.f32 %v7835, %v8968
  %v9129 = vadd.f32 %v7836, %v9020
  %v9130 = vadd.f32 %v7837, %v9072
  %v9131 = vadd.f32 %v7838, %v9124
  %v9132 = vtanh.pop %v9127
  %v9133 = vtanh.pop %v9128
  %v9134 = vtanh.pop %v9129
  %v9135 = vtanh.pop %v9130
  %v9136 = vtanh.pop %v9131
  %9137 = vst [vmem:[%s2] sm:$0xff] %v9132
  %9138 = vst [vmem:[%s2 + $0x8] sm:$0xff] %v9133
  %9139 = vst [vmem:[%s2 + $0x10] sm:$0xff] %v9134
  %9140 = vst [vmem:[%s2 + $0x18] sm:$0xff] %v9135
  %vm9141 = vcmask 523264
  %9142 = vst.msk [vmem:[%s2 + $0x20] sm:$0xff] %vm9141, %v9136
  // Predicated region
  $region10: #{conv_transpose_tanh.1} parent=0 // pred_check
    _
  $region11: #{conv_transpose_tanh.1} parent=0 // pred_check_branch
    %9144 = sbr.rel (0) target = $region13
  $region12: #{conv_transpose_tanh.1} parent=0 // pred_region
    _
  $region13: #{conv_transpose_tanh.1} parent=0 // pred_fallthru
    _
  // Predicated region
  $region14: #{conv_transpose_tanh.1} parent=0 // pred_check
    _
  $region15: #{conv_transpose_tanh.1} parent=0 // pred_check_branch
    %9146 = sbr.rel (0) target = $region17
  $region16: #{conv_transpose_tanh.1} parent=0 // pred_region
    _
  $region17: #{conv_transpose_tanh.1} parent=0 // pred_fallthru
    _

</llo_original>
